<compile_context>
chip_gen: v6e
topology: v6e:2x2x1
jax: 0.10.0
libtpu: 0.0.40
codegen_flags: <defaults>
</compile_context>

<pallas_src>
import functools

import jax
import jax.numpy as jnp
from jax.experimental import pallas as pl
from jax.experimental.pallas import tpu as pltpu


# ----------------------------------------------------------------------------
# In-kernel helpers
# ----------------------------------------------------------------------------
def _ln(x, g, b, eps):
    mu = jnp.mean(x, axis=-1, keepdims=True)
    var = jnp.mean((x - mu) ** 2, axis=-1, keepdims=True)
    return (x - mu) * jax.lax.rsqrt(var + eps) * g + b


# ----------------------------------------------------------------------------
# Fused transformer stack kernel: grid = (B, L), activation resident in VMEM scratch
# across the layer axis.  One grid step == (batch element, layer).
# ----------------------------------------------------------------------------
def _stack_kernel(x_ref, mask_ref, g0_ref, b0_ref,
                  wq_ref, bq_ref, wk_ref, bk_ref, wv_ref, bv_ref,
                  wo_ref, bo_ref, g1_ref, be1_ref,
                  w1_ref, b1_ref, w2_ref, b2_ref, g2_ref, be2_ref,
                  out_ref, h_ref,
                  *, n_heads, temperature, eps, activation,
                  use_mask, pre_ln, pre_ln_eps, attn_bias):
    l = pl.program_id(1)

    # Layer 0: load this batch element's input (optionally applying the fused
    # embedding LayerNorm) into the resident VMEM activation buffer.
    @pl.when(l == 0)
    def _():
        x0 = x_ref[0].astype(jnp.float32)
        if pre_ln:
            x0 = _ln(x0, g0_ref[...], b0_ref[...], pre_ln_eps)
        h_ref[...] = x0

    x = h_ref[...]                                           # (S, D), carried across layers

    # ---- multi-head self-attention: head-batched matmuls ----
    xb = jnp.broadcast_to(x, (n_heads,) + x.shape)           # (H, S, D)
    qh = jnp.einsum('hsd,hdk->hsk', xb, wq_ref[...], preferred_element_type=jnp.float32)
    kh = jnp.einsum('hsd,hdk->hsk', xb, wk_ref[...], preferred_element_type=jnp.float32)
    vh = jnp.einsum('hsd,hdk->hsk', xb, wv_ref[...], preferred_element_type=jnp.float32)
    if attn_bias:
        qh = qh + bq_ref[...]
        kh = kh + bk_ref[...]
        vh = vh + bv_ref[...]

    qh = qh * (1.0 / temperature)
    scores = jnp.einsum('hqd,hkd->hqk', qh, kh, preferred_element_type=jnp.float32)  # (H,S,S)
    if use_mask:
        scores = jnp.where(mask_ref[0] == 0.0, -1e9, scores)                         # key mask
    scores = scores - jnp.max(scores, axis=-1, keepdims=True)                        # stable softmax
    p = jnp.exp(scores)
    attn = p * pl.reciprocal(jnp.sum(p, axis=-1, keepdims=True), approx=True)
    ctx = jnp.einsum('hqk,hkd->hqd', attn, vh, preferred_element_type=jnp.float32)   # (H,S,d_v)
    attn_out = jnp.sum(
        jnp.einsum('hqd,hdm->hqm', ctx, wo_ref[...], preferred_element_type=jnp.float32),
        axis=0)                                                                      # (S, D)
    if attn_bias:
        attn_out = attn_out + bo_ref[0]

    # residual + post-LN (dropout == identity in eval)
    x1 = _ln(attn_out + x, g1_ref[0], be1_ref[0], eps)

    # ---- position-wise feed-forward ----
    h1 = activation(jnp.dot(x1, w1_ref[0], preferred_element_type=jnp.float32) + b1_ref[0])
    h2 = jnp.dot(h1, w2_ref[0], preferred_element_type=jnp.float32) + b2_ref[0]
    x2 = _ln(h2 + x1, g2_ref[0], be2_ref[0], eps)

    h_ref[...] = x2                                          # stays in VMEM for the next layer

    @pl.when(l == pl.num_programs(1) - 1)
    def _():
        out_ref[0] = x2.astype(out_ref.dtype)


def encoder_stack(x, mask, sp, g0, b0, *, n_heads, temperature, eps, activation,
                  use_mask, pre_ln, pre_ln_eps, attn_bias):
    """Run all L layers of a stack in one pallas_call.

    x: (B, S, D) float32; mask: (B, 1, S) float32 (1 keep / 0 mask).
    sp: stacked per-layer params (see init_stack_params). g0/b0: optional pre-LN params.
    """
    B, S, D = x.shape
    H = n_heads
    L = sp["w1"].shape[0]

    def per_layer(arr):      # (L, ...) arrays, one layer slab per step
        nd = arr.ndim - 1
        return pl.BlockSpec((1,) + arr.shape[1:], lambda b, l, nd=nd: (l,) + (0,) * nd)

    def per_layer_heads(arr):  # (L*H, ...) arrays, H head slabs of layer l per step
        nd = arr.ndim - 1
        return pl.BlockSpec((H,) + arr.shape[1:], lambda b, l, nd=nd: (l,) + (0,) * nd)

    def const(arr):
        nd = arr.ndim
        return pl.BlockSpec(arr.shape, lambda b, l, nd=nd: (0,) * nd)

    kernel = functools.partial(
        _stack_kernel, n_heads=H, temperature=temperature, eps=eps,
        activation=activation, use_mask=use_mask, pre_ln=pre_ln,
        pre_ln_eps=pre_ln_eps, attn_bias=attn_bias)

    in_specs = [
        pl.BlockSpec((1, S, D), lambda b, l: (b, 0, 0)),     # x
        pl.BlockSpec((1, 1, S), lambda b, l: (b, 0, 0)),     # key-side mask
        const(g0), const(b0),                                # fused pre-LN params (maybe unused)
        per_layer_heads(sp["wq"]), per_layer_heads(sp["bq"]),
        per_layer_heads(sp["wk"]), per_layer_heads(sp["bk"]),
        per_layer_heads(sp["wv"]), per_layer_heads(sp["bv"]),
        per_layer_heads(sp["wo"]), per_layer(sp["bo"]),
        per_layer(sp["g1"]), per_layer(sp["be1"]),
        per_layer(sp["w1"]), per_layer(sp["b1"]),
        per_layer(sp["w2"]), per_layer(sp["b2"]),
        per_layer(sp["g2"]), per_layer(sp["be2"]),
    ]
    return pl.pallas_call(
        kernel,
        out_shape=jax.ShapeDtypeStruct((B, S, D), jnp.float32),
        grid=(B, L),
        in_specs=in_specs,
        out_specs=pl.BlockSpec((1, S, D), lambda b, l: (b, 0, 0)),
        scratch_shapes=[pltpu.VMEM((S, D), jnp.float32)],     # resident activation
        compiler_params=pltpu.CompilerParams(
            dimension_semantics=("parallel", "arbitrary")),
    )(x, mask, g0, b0,
      sp["wq"], sp["bq"], sp["wk"], sp["bk"], sp["wv"], sp["bv"],
      sp["wo"], sp["bo"], sp["g1"], sp["be1"],
      sp["w1"], sp["b1"], sp["w2"], sp["b2"], sp["g2"], sp["be2"])


# ----------------------------------------------------------------------------
# Bias-free Linear kernel, output-tiled along the last dim (lane-dense tiles)
# ----------------------------------------------------------------------------
def _pick_out_tile(dout):
    for tn in (2048, 1024, 512, 256, 128):
        if dout % tn == 0:
            return tn
    return dout


def _linear_kernel(x_ref, w_ref, out_ref):
    out_ref[...] = jnp.dot(x_ref[...], w_ref[...],
                           preferred_element_type=jnp.float32).astype(out_ref.dtype)


def linear_pallas(x2d, w):
    """y = x @ w (no bias), tiled over output columns so big vocab weights stream."""
    N, Din = x2d.shape
    Dout = w.shape[1]
    tn = _pick_out_tile(Dout)
    return pl.pallas_call(
        _linear_kernel,
        out_shape=jax.ShapeDtypeStruct((N, Dout), jnp.float32),
        grid=(Dout // tn,),
        in_specs=[pl.BlockSpec((N, Din), lambda j: (0, 0)),
                  pl.BlockSpec((Din, tn), lambda j: (0, j))],
        out_specs=pl.BlockSpec((N, tn), lambda j: (0, j)),
        compiler_params=pltpu.CompilerParams(dimension_semantics=("parallel",)),
    )(x2d, w)


# ----------------------------------------------------------------------------
# Parameter initialization (deterministic, synthetic; stacked along a leading L axis)
# ----------------------------------------------------------------------------
def _normal(key, shape, scale=0.02):
    return scale * jax.random.normal(key, shape, dtype=jnp.float32)


def init_stack_params(key, n_layers, d_model, n_heads, d_k, d_v, d_inner):
    ks = jax.random.split(key, 6)
    L, LH = n_layers, n_layers * n_heads
    z = lambda *s: jnp.zeros(s, jnp.float32)
    o = lambda *s: jnp.ones(s, jnp.float32)
    return dict(
        wq=_normal(ks[0], (LH, d_model, d_k)), bq=z(LH, 1, d_k),
        wk=_normal(ks[1], (LH, d_model, d_k)), bk=z(LH, 1, d_k),
        wv=_normal(ks[2], (LH, d_model, d_v)), bv=z(LH, 1, d_v),
        wo=_normal(ks[3], (LH, d_v, d_model)), bo=z(L, 1, d_model),
        g1=o(L, 1, d_model), be1=z(L, 1, d_model),
        w1=_normal(ks[4], (L, d_model, d_inner)), b1=z(L, 1, d_inner),
        w2=_normal(ks[5], (L, d_inner, d_model)), b2=z(L, 1, d_model),
        g2=o(L, 1, d_model), be2=z(L, 1, d_model),
    )


def init_params(key, cfg):
    D, H, DK, DV, DI = cfg["d_model"], cfg["n_heads"], cfg["d_k"], cfg["d_v"], cfg["d_inner"]
    k_we, k_pe, k_te, k_bl, k_enh, k_dl, k_voc = jax.random.split(key, 7)
    bert = dict(
        word_emb=_normal(k_we, (cfg["n_vocab_bert"], D)),
        pos_emb=_normal(k_pe, (cfg["max_pos"], D)),
        type_emb=_normal(k_te, (2, D)),
        emb_ln_g=jnp.ones((1, D), jnp.float32),
        emb_ln_b=jnp.zeros((1, D), jnp.float32),
        stack=init_stack_params(k_bl, cfg["n_bert_layers"], D, H, DK, DV, DI),
    )
    dec = dict(
        enh_w=_normal(k_enh, (D, D * cfg["inp_len"])),       # MatmulBegin: bias=False
        stack=init_stack_params(k_dl, cfg["n_dec_layers"], D, H, DK, DV, DI),
        vocab_w=_normal(k_voc, (D, cfg["n_vocab_out"])),
    )
    return dict(bert=bert, dec=dec)


# ----------------------------------------------------------------------------
# Full EncdecBert forward
# ----------------------------------------------------------------------------
def encdec_bert_forward(params, inp_toks, inp_mask, cfg):
    B, S = inp_toks.shape
    D, H, DK = cfg["d_model"], cfg["n_heads"], cfg["d_k"]
    inp_len = cfg["inp_len"]
    temperature = float(DK) ** 0.5

    # --- EncoderBert: synthetic BertModel (from_pretrained load replaced), emb_type=Cls ---
    bert = params["bert"]
    emb = (bert["word_emb"][inp_toks]
           + bert["pos_emb"][None, :S, :]
           + bert["type_emb"][0][None, None, :])
    mask3 = inp_mask.astype(jnp.float32).reshape(B, 1, S)
    # NOTE: HF BERT uses exact (erf) GELU; tanh approximation is used here (EUP-friendly).
    gelu = functools.partial(jax.nn.gelu, approximate=True)
    x = encoder_stack(emb, mask3, bert["stack"], bert["emb_ln_g"], bert["emb_ln_b"],
                      n_heads=H, temperature=temperature, eps=1e-12, activation=gelu,
                      use_mask=True, pre_ln=True, pre_ln_eps=1e-12, attn_bias=True)
    cls = x[:, 0, :]                                          # last_hidden_state[:, 0]

    # --- DecoderPyramid, enhance_type = MatmulBegin (bias-free) ---
    dec = params["dec"]
    out = linear_pallas(cls, dec["enh_w"]).reshape(B, inp_len, D)
    ones_mask = jnp.ones((B, 1, inp_len), jnp.float32)        # slf_attn_mask is None
    relu = lambda t: jnp.maximum(t, 0.0)
    dummy_g = jnp.ones((1, D), jnp.float32)                   # pre-LN disabled for decoder
    dummy_b = jnp.zeros((1, D), jnp.float32)
    out = encoder_stack(out, ones_mask, dec["stack"], dummy_g, dummy_b,
                        n_heads=H, temperature=temperature, eps=1e-6, activation=relu,
                        use_mask=False, pre_ln=False, pre_ln_eps=1e-6, attn_bias=False)

    # TODO(synk): VocabDecoder definition not provided in the reference; implemented as a
    # bias-free Linear(d_model -> n_vocab) projection.
    logits = linear_pallas(out.reshape(B * inp_len, D), dec["vocab_w"])
    return logits.reshape(B, inp_len, cfg["n_vocab_out"])


# ----------------------------------------------------------------------------
if __name__ == "__main__":
    cfg = dict(
        d_model=32, n_heads=4, d_k=8, d_v=8, d_inner=64,
        n_bert_layers=2,
        inp_len=4, n_dec_layers=2,          # n_layers=1 * n_similar_layers=2
        n_vocab_bert=64, max_pos=16, n_vocab_out=64,
        pad_token_id=0,
    )
    B, S = 2, 8

    key = jax.random.PRNGKey(0)
    k_params, k_inp = jax.random.split(key)
    params = init_params(k_params, cfg)

    inp_toks = jax.random.randint(k_inp, (B, S), 1, cfg["n_vocab_bert"], dtype=jnp.int32)
    inp_mask = jnp.array([[1] * S, [1] * (S - 2) + [0] * 2], dtype=jnp.int32)

    fwd = jax.jit(lambda p, t, m: encdec_bert_forward(p, t, m, cfg))
    out = jax.block_until_ready(fwd(params, inp_toks, inp_mask))
    assert out.shape == (B, cfg["inp_len"], cfg["n_vocab_out"]), out.shape
    assert out.dtype == jnp.float32
    assert bool(jnp.all(jnp.isfinite(out)))
    print("KERNEL_OK")
</pallas_src>

<mosaic_0001>
module attributes {stable_mosaic.version = 11 : i64} {
  func.func @_linear_kernel(%arg0: i32, %arg1: memref<2x32xf32, #tpu.memory_space<vmem>>, %arg2: memref<32x128xf32, #tpu.memory_space<vmem>>, %arg3: memref<2x128xf32, #tpu.memory_space<vmem>>) attributes {dimension_semantics = [#tpu.dimension_semantics<parallel>], iteration_bounds = array<i64: 1>, scalar_prefetch = 0 : i64, scratch_operands = 0 : i64, tpu.core_type = #tpu.core_type<tc>, window_params = [{pipeline_mode = #tpu.pipeline_mode<synchronous>, transform_indices = @transform_0, window_bounds = array<i64: 2, 32>}, {transform_indices = @transform_1, window_bounds = array<i64: 32, 128>}, {transform_indices = @transform_2, window_bounds = array<i64: 2, 128>}]} {
    %c0 = arith.constant 0 : index
    %c0_0 = arith.constant 0 : index
    %0 = vector.load %arg1[%c0, %c0_0] : memref<2x32xf32, #tpu.memory_space<vmem>>, vector<2x32xf32>
    %c0_1 = arith.constant 0 : index
    %c0_2 = arith.constant 0 : index
    %1 = vector.load %arg2[%c0_1, %c0_2] : memref<32x128xf32, #tpu.memory_space<vmem>>, vector<32x128xf32>
    %cst = arith.constant dense<0.000000e+00> : vector<2x128xf32>
    %2 = tpu.matmul %0, %1, %cst {dimension_numbers = #tpu.dot_dimension_numbers<[1], [0], [0], [1], [0, 0, 1, 1], [], []>} : vector<2x32xf32>, vector<32x128xf32>, vector<2x128xf32> -> vector<2x128xf32>
    %c0_3 = arith.constant 0 : index
    %c0_4 = arith.constant 0 : index
    %3 = vector.load %arg3[%c0_3, %c0_4] : memref<2x128xf32, #tpu.memory_space<vmem>>, vector<2x128xf32>
    tpu.vector_store %arg3[%c0_3, %c0_4], %2 {strides = array<i32>} : memref<2x128xf32, #tpu.memory_space<vmem>>, vector<2x128xf32>,
    return
  }
  func.func @transform_0(%arg0: i32) -> (i32, i32) {
    %c0_i32 = arith.constant 0 : i32
    %c0_i32_0 = arith.constant 0 : i32
    %c0_i32_1 = arith.constant 0 : i32
    return %c0_i32, %c0_i32_0 : i32, i32
  }
  func.func @transform_1(%arg0: i32) -> (i32, i32) {
    %c0_i32 = arith.constant 0 : i32
    %c0_i32_0 = arith.constant 0 : i32
    return %c0_i32, %arg0 : i32, i32
  }
  func.func @transform_2(%arg0: i32) -> (i32, i32) {
    %c0_i32 = arith.constant 0 : i32
    %c0_i32_0 = arith.constant 0 : i32
    return %c0_i32, %arg0 : i32, i32
  }
}

module attributes {stable_mosaic.version = 11 : i64} {
  func.func @_stack_kernel(%arg0: i32, %arg1: i32, %arg2: memref<1x8x32xf32, #tpu.memory_space<vmem>>, %arg3: memref<1x1x8xf32, #tpu.memory_space<vmem>>, %arg4: memref<1x32xf32, #tpu.memory_space<vmem>>, %arg5: memref<1x32xf32, #tpu.memory_space<vmem>>, %arg6: memref<4x32x8xf32, #tpu.memory_space<vmem>>, %arg7: memref<4x1x8xf32, #tpu.memory_space<vmem>>, %arg8: memref<4x32x8xf32, #tpu.memory_space<vmem>>, %arg9: memref<4x1x8xf32, #tpu.memory_space<vmem>>, %arg10: memref<4x32x8xf32, #tpu.memory_space<vmem>>, %arg11: memref<4x1x8xf32, #tpu.memory_space<vmem>>, %arg12: memref<4x8x32xf32, #tpu.memory_space<vmem>>, %arg13: memref<1x1x32xf32, #tpu.memory_space<vmem>>, %arg14: memref<1x1x32xf32, #tpu.memory_space<vmem>>, %arg15: memref<1x1x32xf32, #tpu.memory_space<vmem>>, %arg16: memref<1x32x64xf32, #tpu.memory_space<vmem>>, %arg17: memref<1x1x64xf32, #tpu.memory_space<vmem>>, %arg18: memref<1x64x32xf32, #tpu.memory_space<vmem>>, %arg19: memref<1x1x32xf32, #tpu.memory_space<vmem>>, %arg20: memref<1x1x32xf32, #tpu.memory_space<vmem>>, %arg21: memref<1x1x32xf32, #tpu.memory_space<vmem>>, %arg22: memref<1x8x32xf32, #tpu.memory_space<vmem>>, %arg23: memref<8x32xf32, #tpu.memory_space<vmem>>) attributes {dimension_semantics = [#tpu.dimension_semantics<parallel>, #tpu.dimension_semantics<arbitrary>], iteration_bounds = array<i64: 2, 2>, scalar_prefetch = 0 : i64, scratch_operands = 1 : i64, tpu.core_type = #tpu.core_type<tc>, window_params = [{transform_indices = @transform_0, window_bounds = array<i64: 1, 8, 32>}, {transform_indices = @transform_1, window_bounds = array<i64: 1, 1, 8>}, {pipeline_mode = #tpu.pipeline_mode<synchronous>, transform_indices = @transform_2, window_bounds = array<i64: 1, 32>}, {pipeline_mode = #tpu.pipeline_mode<synchronous>, transform_indices = @transform_3, window_bounds = array<i64: 1, 32>}, {transform_indices = @transform_4, window_bounds = array<i64: 4, 32, 8>}, {transform_indices = @transform_5, window_bounds = array<i64: 4, 1, 8>}, {transform_indices = @transform_6, window_bounds = array<i64: 4, 32, 8>}, {transform_indices = @transform_7, window_bounds = array<i64: 4, 1, 8>}, {transform_indices = @transform_8, window_bounds = array<i64: 4, 32, 8>}, {transform_indices = @transform_9, window_bounds = array<i64: 4, 1, 8>}, {transform_indices = @transform_10, window_bounds = array<i64: 4, 8, 32>}, {transform_indices = @transform_11, window_bounds = array<i64: 1, 1, 32>}, {transform_indices = @transform_12, window_bounds = array<i64: 1, 1, 32>}, {transform_indices = @transform_13, window_bounds = array<i64: 1, 1, 32>}, {transform_indices = @transform_14, window_bounds = array<i64: 1, 32, 64>}, {transform_indices = @transform_15, window_bounds = array<i64: 1, 1, 64>}, {transform_indices = @transform_16, window_bounds = array<i64: 1, 64, 32>}, {transform_indices = @transform_17, window_bounds = array<i64: 1, 1, 32>}, {transform_indices = @transform_18, window_bounds = array<i64: 1, 1, 32>}, {transform_indices = @transform_19, window_bounds = array<i64: 1, 1, 32>}, {transform_indices = @transform_20, window_bounds = array<i64: 1, 8, 32>}]} {
    %c0_i32 = arith.constant 0 : i32
    %0 = arith.cmpi eq, %arg1, %c0_i32 : i32
    %1 = arith.extui %0 : i1 to i32
    %c0_i32_0 = arith.constant 0 : i32
    %2 = arith.cmpi ne, %1, %c0_i32_0 : i32
    scf.if %2 {
      %c0_83 = arith.constant 0 : index
      %c0_84 = arith.constant 0 : index
      %c0_85 = arith.constant 0 : index
      %135 = vector.load %arg2[%c0_83, %c0_84, %c0_85] : memref<1x8x32xf32, #tpu.memory_space<vmem>>, vector<1x8x32xf32>
      %136 = vector.shape_cast %135 : vector<1x8x32xf32> to vector<8x32xf32>
      %c0_86 = arith.constant 0 : index
      %c0_87 = arith.constant 0 : index
      %137 = vector.load %arg4[%c0_86, %c0_87] : memref<1x32xf32, #tpu.memory_space<vmem>>, vector<1x32xf32>
      %c0_88 = arith.constant 0 : index
      %c0_89 = arith.constant 0 : index
      %138 = vector.load %arg5[%c0_88, %c0_89] : memref<1x32xf32, #tpu.memory_space<vmem>>, vector<1x32xf32>
      %cst_90 = arith.constant dense<0.000000e+00> : vector<8xf32>
      %139 = vector.multi_reduction <add>, %136, %cst_90 [1] : vector<8x32xf32> to vector<8xf32>
      %140 = vector.shape_cast %139 : vector<8xf32> to vector<8x1xf32>
      %cst_91 = arith.constant 3.200000e+01 : f32
      %141 = vector.broadcast %cst_91 : f32 to vector<8x1xf32>
      %142 = arith.divf %140, %141 : vector<8x1xf32>
      %143 = vector.broadcast %142 : vector<8x1xf32> to vector<8x32xf32>
      %144 = arith.subf %136, %143 : vector<8x32xf32>
      %145 = arith.mulf %144, %144 : vector<8x32xf32>
      %cst_92 = arith.constant dense<0.000000e+00> : vector<8xf32>
      %146 = vector.multi_reduction <add>, %145, %cst_92 [1] : vector<8x32xf32> to vector<8xf32>
      %147 = vector.shape_cast %146 : vector<8xf32> to vector<8x1xf32>
      %cst_93 = arith.constant 3.200000e+01 : f32
      %148 = vector.broadcast %cst_93 : f32 to vector<8x1xf32>
      %149 = arith.divf %147, %148 : vector<8x1xf32>
      %150 = vector.broadcast %142 : vector<8x1xf32> to vector<8x32xf32>
      %151 = arith.subf %136, %150 : vector<8x32xf32>
      %cst_94 = arith.constant 9.99999996E-13 : f32
      %152 = vector.broadcast %cst_94 : f32 to vector<8x1xf32>
      %153 = arith.addf %149, %152 : vector<8x1xf32>
      %154 = math.rsqrt %153 : vector<8x1xf32>
      %155 = vector.broadcast %154 : vector<8x1xf32> to vector<8x32xf32>
      %156 = arith.mulf %151, %155 : vector<8x32xf32>
      %157 = vector.broadcast %137 : vector<1x32xf32> to vector<8x32xf32>
      %158 = arith.mulf %156, %157 : vector<8x32xf32>
      %159 = vector.broadcast %138 : vector<1x32xf32> to vector<8x32xf32>
      %160 = arith.addf %158, %159 : vector<8x32xf32>
      %c0_95 = arith.constant 0 : index
      %c0_96 = arith.constant 0 : index
      %161 = vector.load %arg23[%c0_95, %c0_96] : memref<8x32xf32, #tpu.memory_space<vmem>>, vector<8x32xf32>
      tpu.vector_store %arg23[%c0_95, %c0_96], %160 {strides = array<i32>} : memref<8x32xf32, #tpu.memory_space<vmem>>, vector<8x32xf32>,
    } else {
    }
    %c0 = arith.constant 0 : index
    %c0_1 = arith.constant 0 : index
    %3 = vector.load %arg23[%c0, %c0_1] : memref<8x32xf32, #tpu.memory_space<vmem>>, vector<8x32xf32>
    %4 = vector.shape_cast %3 : vector<8x32xf32> to vector<1x8x32xf32>
    %5 = vector.broadcast %4 : vector<1x8x32xf32> to vector<4x8x32xf32>
    %c0_2 = arith.constant 0 : index
    %c0_3 = arith.constant 0 : index
    %c0_4 = arith.constant 0 : index
    %6 = vector.load %arg6[%c0_2, %c0_3, %c0_4] : memref<4x32x8xf32, #tpu.memory_space<vmem>>, vector<4x32x8xf32>
    "tpu.trace_start"() <{level = 10 : i32, message = "hsd,hdk->hsk"}> : () -> ()
    %cst = arith.constant dense<0.000000e+00> : vector<4x8x8xf32>
    %7 = tpu.matmul %5, %6, %cst {dimension_numbers = #tpu.dot_dimension_numbers<[2], [1], [1], [2], [0, 0, 0, 1, 1, 2], [0], [0]>} : vector<4x8x32xf32>, vector<4x32x8xf32>, vector<4x8x8xf32> -> vector<4x8x8xf32>
    "tpu.trace_stop"() : () -> ()
    %c0_5 = arith.constant 0 : index
    %c0_6 = arith.constant 0 : index
    %c0_7 = arith.constant 0 : index
    %8 = vector.load %arg8[%c0_5, %c0_6, %c0_7] : memref<4x32x8xf32, #tpu.memory_space<vmem>>, vector<4x32x8xf32>
    "tpu.trace_start"() <{level = 10 : i32, message = "hsd,hdk->hsk"}> : () -> ()
    %cst_8 = arith.constant dense<0.000000e+00> : vector<4x8x8xf32>
    %9 = tpu.matmul %5, %8, %cst_8 {dimension_numbers = #tpu.dot_dimension_numbers<[2], [1], [1], [2], [0, 0, 0, 1, 1, 2], [0], [0]>} : vector<4x8x32xf32>, vector<4x32x8xf32>, vector<4x8x8xf32> -> vector<4x8x8xf32>
    "tpu.trace_stop"() : () -> ()
    %c0_9 = arith.constant 0 : index
    %c0_10 = arith.constant 0 : index
    %c0_11 = arith.constant 0 : index
    %10 = vector.load %arg10[%c0_9, %c0_10, %c0_11] : memref<4x32x8xf32, #tpu.memory_space<vmem>>, vector<4x32x8xf32>
    "tpu.trace_start"() <{level = 10 : i32, message = "hsd,hdk->hsk"}> : () -> ()
    %cst_12 = arith.constant dense<0.000000e+00> : vector<4x8x8xf32>
    %11 = tpu.matmul %5, %10, %cst_12 {dimension_numbers = #tpu.dot_dimension_numbers<[2], [1], [1], [2], [0, 0, 0, 1, 1, 2], [0], [0]>} : vector<4x8x32xf32>, vector<4x32x8xf32>, vector<4x8x8xf32> -> vector<4x8x8xf32>
    "tpu.trace_stop"() : () -> ()
    %c0_13 = arith.constant 0 : index
    %c0_14 = arith.constant 0 : index
    %c0_15 = arith.constant 0 : index
    %12 = vector.load %arg7[%c0_13, %c0_14, %c0_15] : memref<4x1x8xf32, #tpu.memory_space<vmem>>, vector<4x1x8xf32>
    %13 = vector.broadcast %12 : vector<4x1x8xf32> to vector<4x8x8xf32>
    %14 = arith.addf %7, %13 : vector<4x8x8xf32>
    %c0_16 = arith.constant 0 : index
    %c0_17 = arith.constant 0 : index
    %c0_18 = arith.constant 0 : index
    %15 = vector.load %arg9[%c0_16, %c0_17, %c0_18] : memref<4x1x8xf32, #tpu.memory_space<vmem>>, vector<4x1x8xf32>
    %16 = vector.broadcast %15 : vector<4x1x8xf32> to vector<4x8x8xf32>
    %17 = arith.addf %9, %16 : vector<4x8x8xf32>
    %c0_19 = arith.constant 0 : index
    %c0_20 = arith.constant 0 : index
    %c0_21 = arith.constant 0 : index
    %18 = vector.load %arg11[%c0_19, %c0_20, %c0_21] : memref<4x1x8xf32, #tpu.memory_space<vmem>>, vector<4x1x8xf32>
    %19 = vector.broadcast %18 : vector<4x1x8xf32> to vector<4x8x8xf32>
    %20 = arith.addf %11, %19 : vector<4x8x8xf32>
    %cst_22 = arith.constant 0.353553385 : f32
    %21 = vector.broadcast %cst_22 : f32 to vector<4x8x8xf32>
    %22 = arith.mulf %14, %21 : vector<4x8x8xf32>
    "tpu.trace_start"() <{level = 10 : i32, message = "hqd,hkd->hqk"}> : () -> ()
    %cst_23 = arith.constant dense<0.000000e+00> : vector<4x8x8xf32>
    %23 = tpu.matmul %22, %17, %cst_23 {dimension_numbers = #tpu.dot_dimension_numbers<[2], [2], [1], [1], [0, 0, 0, 1, 1, 1], [0], [0]>} : vector<4x8x8xf32>, vector<4x8x8xf32>, vector<4x8x8xf32> -> vector<4x8x8xf32>
    "tpu.trace_stop"() : () -> ()
    %c0_24 = arith.constant 0 : index
    %c0_25 = arith.constant 0 : index
    %c0_26 = arith.constant 0 : index
    %24 = vector.load %arg3[%c0_24, %c0_25, %c0_26] : memref<1x1x8xf32, #tpu.memory_space<vmem>>, vector<1x1x8xf32>
    %25 = vector.shape_cast %24 : vector<1x1x8xf32> to vector<1x8xf32>
    %cst_27 = arith.constant 0.000000e+00 : f32
    %26 = vector.broadcast %cst_27 : f32 to vector<1x8xf32>
    %27 = arith.cmpf oeq, %25, %26 : vector<1x8xf32>
    %cst_28 = arith.constant -1.000000e+09 : f32
    %28 = vector.shape_cast %27 : vector<1x8xi1> to vector<1x1x8xi1>
    %29 = vector.broadcast %28 : vector<1x1x8xi1> to vector<4x8x8xi1>
    %30 = vector.broadcast %cst_28 : f32 to vector<4x8x8xf32>
    %31 = arith.select %29, %30, %23 : vector<4x8x8xi1>, vector<4x8x8xf32>
    %cst_29 = arith.constant dense<0xFF800000> : vector<4x8xf32>
    %32 = vector.multi_reduction <maximumf>, %31, %cst_29 [2] : vector<4x8x8xf32> to vector<4x8xf32>
    %33 = vector.shape_cast %32 : vector<4x8xf32> to vector<4x8x1xf32>
    %34 = vector.broadcast %33 : vector<4x8x1xf32> to vector<4x8x8xf32>
    %35 = arith.subf %31, %34 : vector<4x8x8xf32>
    %36 = math.exp %35 : vector<4x8x8xf32>
    %cst_30 = arith.constant dense<0.000000e+00> : vector<4x8xf32>
    %37 = vector.multi_reduction <add>, %36, %cst_30 [2] : vector<4x8x8xf32> to vector<4x8xf32>
    %38 = vector.shape_cast %37 : vector<4x8xf32> to vector<4x8x1xf32>
    %39 = tpu.reciprocal %38 {approx = true} : vector<4x8x1xf32> -> vector<4x8x1xf32>
    %40 = vector.broadcast %39 : vector<4x8x1xf32> to vector<4x8x8xf32>
    %41 = arith.mulf %36, %40 : vector<4x8x8xf32>
    "tpu.trace_start"() <{level = 10 : i32, message = "hqk,hkd->hqd"}> : () -> ()
    %cst_31 = arith.constant dense<0.000000e+00> : vector<4x8x8xf32>
    %42 = tpu.matmul %41, %20, %cst_31 {dimension_numbers = #tpu.dot_dimension_numbers<[2], [1], [1], [2], [0, 0, 0, 1, 1, 2], [0], [0]>} : vector<4x8x8xf32>, vector<4x8x8xf32>, vector<4x8x8xf32> -> vector<4x8x8xf32>
    "tpu.trace_stop"() : () -> ()
    %c0_32 = arith.constant 0 : index
    %c0_33 = arith.constant 0 : index
    %c0_34 = arith.constant 0 : index
    %43 = vector.load %arg12[%c0_32, %c0_33, %c0_34] : memref<4x8x32xf32, #tpu.memory_space<vmem>>, vector<4x8x32xf32>
    "tpu.trace_start"() <{level = 10 : i32, message = "hqd,hdm->hqm"}> : () -> ()
    %cst_35 = arith.constant dense<0.000000e+00> : vector<4x8x32xf32>
    %44 = tpu.matmul %42, %43, %cst_35 {dimension_numbers = #tpu.dot_dimension_numbers<[2], [1], [1], [2], [0, 0, 0, 1, 1, 2], [0], [0]>} : vector<4x8x8xf32>, vector<4x8x32xf32>, vector<4x8x32xf32> -> vector<4x8x32xf32>
    "tpu.trace_stop"() : () -> ()
    %cst_36 = arith.constant dense<0.000000e+00> : vector<8x32xf32>
    %45 = vector.multi_reduction <add>, %44, %cst_36 [0] : vector<4x8x32xf32> to vector<8x32xf32>
    %c0_37 = arith.constant 0 : index
    %c0_38 = arith.constant 0 : index
    %c0_39 = arith.constant 0 : index
    %46 = vector.load %arg13[%c0_37, %c0_38, %c0_39] : memref<1x1x32xf32, #tpu.memory_space<vmem>>, vector<1x1x32xf32>
    %47 = vector.shape_cast %46 : vector<1x1x32xf32> to vector<1x32xf32>
    %48 = vector.broadcast %47 : vector<1x32xf32> to vector<8x32xf32>
    %49 = arith.addf %45, %48 : vector<8x32xf32>
    %50 = arith.addf %49, %3 : vector<8x32xf32>
    %c0_40 = arith.constant 0 : index
    %c0_41 = arith.constant 0 : index
    %c0_42 = arith.constant 0 : index
    %51 = vector.load %arg14[%c0_40, %c0_41, %c0_42] : memref<1x1x32xf32, #tpu.memory_space<vmem>>, vector<1x1x32xf32>
    %52 = vector.shape_cast %51 : vector<1x1x32xf32> to vector<1x32xf32>
    %c0_43 = arith.constant 0 : index
    %c0_44 = arith.constant 0 : index
    %c0_45 = arith.constant 0 : index
    %53 = vector.load %arg15[%c0_43, %c0_44, %c0_45] : memref<1x1x32xf32, #tpu.memory_space<vmem>>, vector<1x1x32xf32>
    %54 = vector.shape_cast %53 : vector<1x1x32xf32> to vector<1x32xf32>
    %cst_46 = arith.constant dense<0.000000e+00> : vector<8xf32>
    %55 = vector.multi_reduction <add>, %50, %cst_46 [1] : vector<8x32xf32> to vector<8xf32>
    %56 = vector.shape_cast %55 : vector<8xf32> to vector<8x1xf32>
    %cst_47 = arith.constant 3.200000e+01 : f32
    %57 = vector.broadcast %cst_47 : f32 to vector<8x1xf32>
    %58 = arith.divf %56, %57 : vector<8x1xf32>
    %59 = vector.broadcast %58 : vector<8x1xf32> to vector<8x32xf32>
    %60 = arith.subf %50, %59 : vector<8x32xf32>
    %61 = arith.mulf %60, %60 : vector<8x32xf32>
    %cst_48 = arith.constant dense<0.000000e+00> : vector<8xf32>
    %62 = vector.multi_reduction <add>, %61, %cst_48 [1] : vector<8x32xf32> to vector<8xf32>
    %63 = vector.shape_cast %62 : vector<8xf32> to vector<8x1xf32>
    %cst_49 = arith.constant 3.200000e+01 : f32
    %64 = vector.broadcast %cst_49 : f32 to vector<8x1xf32>
    %65 = arith.divf %63, %64 : vector<8x1xf32>
    %66 = vector.broadcast %58 : vector<8x1xf32> to vector<8x32xf32>
    %67 = arith.subf %50, %66 : vector<8x32xf32>
    %cst_50 = arith.constant 9.99999996E-13 : f32
    %68 = vector.broadcast %cst_50 : f32 to vector<8x1xf32>
    %69 = arith.addf %65, %68 : vector<8x1xf32>
    %70 = math.rsqrt %69 : vector<8x1xf32>
    %71 = vector.broadcast %70 : vector<8x1xf32> to vector<8x32xf32>
    %72 = arith.mulf %67, %71 : vector<8x32xf32>
    %73 = vector.broadcast %52 : vector<1x32xf32> to vector<8x32xf32>
    %74 = arith.mulf %72, %73 : vector<8x32xf32>
    %75 = vector.broadcast %54 : vector<1x32xf32> to vector<8x32xf32>
    %76 = arith.addf %74, %75 : vector<8x32xf32>
    %c0_51 = arith.constant 0 : index
    %c0_52 = arith.constant 0 : index
    %c0_53 = arith.constant 0 : index
    %77 = vector.load %arg16[%c0_51, %c0_52, %c0_53] : memref<1x32x64xf32, #tpu.memory_space<vmem>>, vector<1x32x64xf32>
    %78 = vector.shape_cast %77 : vector<1x32x64xf32> to vector<32x64xf32>
    %cst_54 = arith.constant dense<0.000000e+00> : vector<8x64xf32>
    %79 = tpu.matmul %76, %78, %cst_54 {dimension_numbers = #tpu.dot_dimension_numbers<[1], [0], [0], [1], [0, 0, 1, 1], [], []>} : vector<8x32xf32>, vector<32x64xf32>, vector<8x64xf32> -> vector<8x64xf32>
    %c0_55 = arith.constant 0 : index
    %c0_56 = arith.constant 0 : index
    %c0_57 = arith.constant 0 : index
    %80 = vector.load %arg17[%c0_55, %c0_56, %c0_57] : memref<1x1x64xf32, #tpu.memory_space<vmem>>, vector<1x1x64xf32>
    %81 = vector.shape_cast %80 : vector<1x1x64xf32> to vector<1x64xf32>
    %82 = vector.broadcast %81 : vector<1x64xf32> to vector<8x64xf32>
    %83 = arith.addf %79, %82 : vector<8x64xf32>
    %84 = arith.mulf %83, %83 : vector<8x64xf32>
    %85 = arith.mulf %83, %84 : vector<8x64xf32>
    %cst_58 = arith.constant 4.471500e-02 : f32
    %86 = vector.broadcast %cst_58 : f32 to vector<8x64xf32>
    %87 = arith.mulf %86, %85 : vector<8x64xf32>
    %88 = arith.addf %83, %87 : vector<8x64xf32>
    %cst_59 = arith.constant 0.797884583 : f32
    %89 = vector.broadcast %cst_59 : f32 to vector<8x64xf32>
    %90 = arith.mulf %89, %88 : vector<8x64xf32>
    %91 = math.tanh %90 : vector<8x64xf32>
    %cst_60 = arith.constant 1.000000e+00 : f32
    %92 = vector.broadcast %cst_60 : f32 to vector<8x64xf32>
    %93 = arith.addf %92, %91 : vector<8x64xf32>
    %cst_61 = arith.constant 5.000000e-01 : f32
    %94 = vector.broadcast %cst_61 : f32 to vector<8x64xf32>
    %95 = arith.mulf %94, %93 : vector<8x64xf32>
    %96 = arith.mulf %83, %95 : vector<8x64xf32>
    %c0_62 = arith.constant 0 : index
    %c0_63 = arith.constant 0 : index
    %c0_64 = arith.constant 0 : index
    %97 = vector.load %arg18[%c0_62, %c0_63, %c0_64] : memref<1x64x32xf32, #tpu.memory_space<vmem>>, vector<1x64x32xf32>
    %98 = vector.shape_cast %97 : vector<1x64x32xf32> to vector<64x32xf32>
    %cst_65 = arith.constant dense<0.000000e+00> : vector<8x32xf32>
    %99 = tpu.matmul %96, %98, %cst_65 {dimension_numbers = #tpu.dot_dimension_numbers<[1], [0], [0], [1], [0, 0, 1, 1], [], []>} : vector<8x64xf32>, vector<64x32xf32>, vector<8x32xf32> -> vector<8x32xf32>
    %c0_66 = arith.constant 0 : index
    %c0_67 = arith.constant 0 : index
    %c0_68 = arith.constant 0 : index
    %100 = vector.load %arg19[%c0_66, %c0_67, %c0_68] : memref<1x1x32xf32, #tpu.memory_space<vmem>>, vector<1x1x32xf32>
    %101 = vector.shape_cast %100 : vector<1x1x32xf32> to vector<1x32xf32>
    %102 = vector.broadcast %101 : vector<1x32xf32> to vector<8x32xf32>
    %103 = arith.addf %99, %102 : vector<8x32xf32>
    %104 = arith.addf %103, %76 : vector<8x32xf32>
    %c0_69 = arith.constant 0 : index
    %c0_70 = arith.constant 0 : index
    %c0_71 = arith.constant 0 : index
    %105 = vector.load %arg20[%c0_69, %c0_70, %c0_71] : memref<1x1x32xf32, #tpu.memory_space<vmem>>, vector<1x1x32xf32>
    %106 = vector.shape_cast %105 : vector<1x1x32xf32> to vector<1x32xf32>
    %c0_72 = arith.constant 0 : index
    %c0_73 = arith.constant 0 : index
    %c0_74 = arith.constant 0 : index
    %107 = vector.load %arg21[%c0_72, %c0_73, %c0_74] : memref<1x1x32xf32, #tpu.memory_space<vmem>>, vector<1x1x32xf32>
    %108 = vector.shape_cast %107 : vector<1x1x32xf32> to vector<1x32xf32>
    %cst_75 = arith.constant dense<0.000000e+00> : vector<8xf32>
    %109 = vector.multi_reduction <add>, %104, %cst_75 [1] : vector<8x32xf32> to vector<8xf32>
    %110 = vector.shape_cast %109 : vector<8xf32> to vector<8x1xf32>
    %cst_76 = arith.constant 3.200000e+01 : f32
    %111 = vector.broadcast %cst_76 : f32 to vector<8x1xf32>
    %112 = arith.divf %110, %111 : vector<8x1xf32>
    %113 = vector.broadcast %112 : vector<8x1xf32> to vector<8x32xf32>
    %114 = arith.subf %104, %113 : vector<8x32xf32>
    %115 = arith.mulf %114, %114 : vector<8x32xf32>
    %cst_77 = arith.constant dense<0.000000e+00> : vector<8xf32>
    %116 = vector.multi_reduction <add>, %115, %cst_77 [1] : vector<8x32xf32> to vector<8xf32>
    %117 = vector.shape_cast %116 : vector<8xf32> to vector<8x1xf32>
    %cst_78 = arith.constant 3.200000e+01 : f32
    %118 = vector.broadcast %cst_78 : f32 to vector<8x1xf32>
    %119 = arith.divf %117, %118 : vector<8x1xf32>
    %120 = vector.broadcast %112 : vector<8x1xf32> to vector<8x32xf32>
    %121 = arith.subf %104, %120 : vector<8x32xf32>
    %cst_79 = arith.constant 9.99999996E-13 : f32
    %122 = vector.broadcast %cst_79 : f32 to vector<8x1xf32>
    %123 = arith.addf %119, %122 : vector<8x1xf32>
    %124 = math.rsqrt %123 : vector<8x1xf32>
    %125 = vector.broadcast %124 : vector<8x1xf32> to vector<8x32xf32>
    %126 = arith.mulf %121, %125 : vector<8x32xf32>
    %127 = vector.broadcast %106 : vector<1x32xf32> to vector<8x32xf32>
    %128 = arith.mulf %126, %127 : vector<8x32xf32>
    %129 = vector.broadcast %108 : vector<1x32xf32> to vector<8x32xf32>
    %130 = arith.addf %128, %129 : vector<8x32xf32>
    %c0_80 = arith.constant 0 : index
    %c0_81 = arith.constant 0 : index
    %131 = vector.load %arg23[%c0_80, %c0_81] : memref<8x32xf32, #tpu.memory_space<vmem>>, vector<8x32xf32>
    tpu.vector_store %arg23[%c0_80, %c0_81], %130 {strides = array<i32>} : memref<8x32xf32, #tpu.memory_space<vmem>>, vector<8x32xf32>,
    %c1_i32 = arith.constant 1 : i32
    %132 = arith.cmpi eq, %arg1, %c1_i32 : i32
    %133 = arith.extui %132 : i1 to i32
    %c0_i32_82 = arith.constant 0 : i32
    %134 = arith.cmpi ne, %133, %c0_i32_82 : i32
    scf.if %134 {
      %c0_83 = arith.constant 0 : index
      %c0_84 = arith.constant 0 : index
      %c0_85 = arith.constant 0 : index
      %135 = vector.load %arg22[%c0_83, %c0_84, %c0_85] : memref<1x8x32xf32, #tpu.memory_space<vmem>>, vector<1x8x32xf32>
      %136 = vector.shape_cast %135 : vector<1x8x32xf32> to vector<8x32xf32>
      %137 = vector.shape_cast %130 : vector<8x32xf32> to vector<1x8x32xf32>
      tpu.vector_store %arg22[%c0_83, %c0_84, %c0_85], %137 {strides = array<i32>} : memref<1x8x32xf32, #tpu.memory_space<vmem>>, vector<1x8x32xf32>,
    } else {
    }
    return
  }
  func.func @transform_0(%arg0: i32, %arg1: i32) -> (i32, i32, i32) {
    %c0_i32 = arith.constant 0 : i32
    %c0_i32_0 = arith.constant 0 : i32
    %c0_i32_1 = arith.constant 0 : i32
    return %arg0, %c0_i32, %c0_i32_0 : i32, i32, i32
  }
  func.func @transform_1(%arg0: i32, %arg1: i32) -> (i32, i32, i32) {
    %c0_i32 = arith.constant 0 : i32
    %c0_i32_0 = arith.constant 0 : i32
    %c0_i32_1 = arith.constant 0 : i32
    return %arg0, %c0_i32, %c0_i32_0 : i32, i32, i32
  }
  func.func @transform_2(%arg0: i32, %arg1: i32) -> (i32, i32) {
    %c0_i32 = arith.constant 0 : i32
    %c0_i32_0 = arith.constant 0 : i32
    %c0_i32_1 = arith.constant 0 : i32
    return %c0_i32, %c0_i32_0 : i32, i32
  }
  func.func @transform_3(%arg0: i32, %arg1: i32) -> (i32, i32) {
    %c0_i32 = arith.constant 0 : i32
    %c0_i32_0 = arith.constant 0 : i32
    %c0_i32_1 = arith.constant 0 : i32
    return %c0_i32, %c0_i32_0 : i32, i32
  }
  func.func @transform_4(%arg0: i32, %arg1: i32) -> (i32, i32, i32) {
    %c0_i32 = arith.constant 0 : i32
    %c0_i32_0 = arith.constant 0 : i32
    %c0_i32_1 = arith.constant 0 : i32
    return %arg1, %c0_i32, %c0_i32_0 : i32, i32, i32
  }
  func.func @transform_5(%arg0: i32, %arg1: i32) -> (i32, i32, i32) {
    %c0_i32 = arith.constant 0 : i32
    %c0_i32_0 = arith.constant 0 : i32
    %c0_i32_1 = arith.constant 0 : i32
    return %arg1, %c0_i32, %c0_i32_0 : i32, i32, i32
  }
  func.func @transform_6(%arg0: i32, %arg1: i32) -> (i32, i32, i32) {
    %c0_i32 = arith.constant 0 : i32
    %c0_i32_0 = arith.constant 0 : i32
    %c0_i32_1 = arith.constant 0 : i32
    return %arg1, %c0_i32, %c0_i32_0 : i32, i32, i32
  }
  func.func @transform_7(%arg0: i32, %arg1: i32) -> (i32, i32, i32) {
    %c0_i32 = arith.constant 0 : i32
    %c0_i32_0 = arith.constant 0 : i32
    %c0_i32_1 = arith.constant 0 : i32
    return %arg1, %c0_i32, %c0_i32_0 : i32, i32, i32
  }
  func.func @transform_8(%arg0: i32, %arg1: i32) -> (i32, i32, i32) {
    %c0_i32 = arith.constant 0 : i32
    %c0_i32_0 = arith.constant 0 : i32
    %c0_i32_1 = arith.constant 0 : i32
    return %arg1, %c0_i32, %c0_i32_0 : i32, i32, i32
  }
  func.func @transform_9(%arg0: i32, %arg1: i32) -> (i32, i32, i32) {
    %c0_i32 = arith.constant 0 : i32
    %c0_i32_0 = arith.constant 0 : i32
    %c0_i32_1 = arith.constant 0 : i32
    return %arg1, %c0_i32, %c0_i32_0 : i32, i32, i32
  }
  func.func @transform_10(%arg0: i32, %arg1: i32) -> (i32, i32, i32) {
    %c0_i32 = arith.constant 0 : i32
    %c0_i32_0 = arith.constant 0 : i32
    %c0_i32_1 = arith.constant 0 : i32
    return %arg1, %c0_i32, %c0_i32_0 : i32, i32, i32
  }
  func.func @transform_11(%arg0: i32, %arg1: i32) -> (i32, i32, i32) {
    %c0_i32 = arith.constant 0 : i32
    %c0_i32_0 = arith.constant 0 : i32
    %c0_i32_1 = arith.constant 0 : i32
    return %arg1, %c0_i32, %c0_i32_0 : i32, i32, i32
  }
  func.func @transform_12(%arg0: i32, %arg1: i32) -> (i32, i32, i32) {
    %c0_i32 = arith.constant 0 : i32
    %c0_i32_0 = arith.constant 0 : i32
    %c0_i32_1 = arith.constant 0 : i32
    return %arg1, %c0_i32, %c0_i32_0 : i32, i32, i32
  }
  func.func @transform_13(%arg0: i32, %arg1: i32) -> (i32, i32, i32) {
    %c0_i32 = arith.constant 0 : i32
    %c0_i32_0 = arith.constant 0 : i32
    %c0_i32_1 = arith.constant 0 : i32
    return %arg1, %c0_i32, %c0_i32_0 : i32, i32, i32
  }
  func.func @transform_14(%arg0: i32, %arg1: i32) -> (i32, i32, i32) {
    %c0_i32 = arith.constant 0 : i32
    %c0_i32_0 = arith.constant 0 : i32
    %c0_i32_1 = arith.constant 0 : i32
    return %arg1, %c0_i32, %c0_i32_0 : i32, i32, i32
  }
  func.func @transform_15(%arg0: i32, %arg1: i32) -> (i32, i32, i32) {
    %c0_i32 = arith.constant 0 : i32
    %c0_i32_0 = arith.constant 0 : i32
    %c0_i32_1 = arith.constant 0 : i32
    return %arg1, %c0_i32, %c0_i32_0 : i32, i32, i32
  }
  func.func @transform_16(%arg0: i32, %arg1: i32) -> (i32, i32, i32) {
    %c0_i32 = arith.constant 0 : i32
    %c0_i32_0 = arith.constant 0 : i32
    %c0_i32_1 = arith.constant 0 : i32
    return %arg1, %c0_i32, %c0_i32_0 : i32, i32, i32
  }
  func.func @transform_17(%arg0: i32, %arg1: i32) -> (i32, i32, i32) {
    %c0_i32 = arith.constant 0 : i32
    %c0_i32_0 = arith.constant 0 : i32
    %c0_i32_1 = arith.constant 0 : i32
    return %arg1, %c0_i32, %c0_i32_0 : i32, i32, i32
  }
  func.func @transform_18(%arg0: i32, %arg1: i32) -> (i32, i32, i32) {
    %c0_i32 = arith.constant 0 : i32
    %c0_i32_0 = arith.constant 0 : i32
    %c0_i32_1 = arith.constant 0 : i32
    return %arg1, %c0_i32, %c0_i32_0 : i32, i32, i32
  }
  func.func @transform_19(%arg0: i32, %arg1: i32) -> (i32, i32, i32) {
    %c0_i32 = arith.constant 0 : i32
    %c0_i32_0 = arith.constant 0 : i32
    %c0_i32_1 = arith.constant 0 : i32
    return %arg1, %c0_i32, %c0_i32_0 : i32, i32, i32
  }
  func.func @transform_20(%arg0: i32, %arg1: i32) -> (i32, i32, i32) {
    %c0_i32 = arith.constant 0 : i32
    %c0_i32_0 = arith.constant 0 : i32
    %c0_i32_1 = arith.constant 0 : i32
    return %arg0, %c0_i32, %c0_i32_0 : i32, i32, i32
  }
}

module attributes {stable_mosaic.version = 11 : i64} {
  func.func @_linear_kernel(%arg0: i32, %arg1: memref<8x32xf32, #tpu.memory_space<vmem>>, %arg2: memref<32x64xf32, #tpu.memory_space<vmem>>, %arg3: memref<8x64xf32, #tpu.memory_space<vmem>>) attributes {dimension_semantics = [#tpu.dimension_semantics<parallel>], iteration_bounds = array<i64: 1>, scalar_prefetch = 0 : i64, scratch_operands = 0 : i64, tpu.core_type = #tpu.core_type<tc>, window_params = [{pipeline_mode = #tpu.pipeline_mode<synchronous>, transform_indices = @transform_0, window_bounds = array<i64: 8, 32>}, {transform_indices = @transform_1, window_bounds = array<i64: 32, 64>}, {transform_indices = @transform_2, window_bounds = array<i64: 8, 64>}]} {
    %c0 = arith.constant 0 : index
    %c0_0 = arith.constant 0 : index
    %0 = vector.load %arg1[%c0, %c0_0] : memref<8x32xf32, #tpu.memory_space<vmem>>, vector<8x32xf32>
    %c0_1 = arith.constant 0 : index
    %c0_2 = arith.constant 0 : index
    %1 = vector.load %arg2[%c0_1, %c0_2] : memref<32x64xf32, #tpu.memory_space<vmem>>, vector<32x64xf32>
    %cst = arith.constant dense<0.000000e+00> : vector<8x64xf32>
    %2 = tpu.matmul %0, %1, %cst {dimension_numbers = #tpu.dot_dimension_numbers<[1], [0], [0], [1], [0, 0, 1, 1], [], []>} : vector<8x32xf32>, vector<32x64xf32>, vector<8x64xf32> -> vector<8x64xf32>
    %c0_3 = arith.constant 0 : index
    %c0_4 = arith.constant 0 : index
    %3 = vector.load %arg3[%c0_3, %c0_4] : memref<8x64xf32, #tpu.memory_space<vmem>>, vector<8x64xf32>
    tpu.vector_store %arg3[%c0_3, %c0_4], %2 {strides = array<i32>} : memref<8x64xf32, #tpu.memory_space<vmem>>, vector<8x64xf32>,
    return
  }
  func.func @transform_0(%arg0: i32) -> (i32, i32) {
    %c0_i32 = arith.constant 0 : i32
    %c0_i32_0 = arith.constant 0 : i32
    %c0_i32_1 = arith.constant 0 : i32
    return %c0_i32, %c0_i32_0 : i32, i32
  }
  func.func @transform_1(%arg0: i32) -> (i32, i32) {
    %c0_i32 = arith.constant 0 : i32
    %c0_i32_0 = arith.constant 0 : i32
    return %c0_i32, %arg0 : i32, i32
  }
  func.func @transform_2(%arg0: i32) -> (i32, i32) {
    %c0_i32 = arith.constant 0 : i32
    %c0_i32_0 = arith.constant 0 : i32
    return %c0_i32, %arg0 : i32, i32
  }
}

module attributes {stable_mosaic.version = 11 : i64} {
  func.func @_stack_kernel(%arg0: i32, %arg1: i32, %arg2: memref<1x4x32xf32, #tpu.memory_space<vmem>>, %arg3: memref<1x1x4xf32, #tpu.memory_space<vmem>>, %arg4: memref<1x32xf32, #tpu.memory_space<vmem>>, %arg5: memref<1x32xf32, #tpu.memory_space<vmem>>, %arg6: memref<4x32x8xf32, #tpu.memory_space<vmem>>, %arg7: memref<4x1x8xf32, #tpu.memory_space<vmem>>, %arg8: memref<4x32x8xf32, #tpu.memory_space<vmem>>, %arg9: memref<4x1x8xf32, #tpu.memory_space<vmem>>, %arg10: memref<4x32x8xf32, #tpu.memory_space<vmem>>, %arg11: memref<4x1x8xf32, #tpu.memory_space<vmem>>, %arg12: memref<4x8x32xf32, #tpu.memory_space<vmem>>, %arg13: memref<1x1x32xf32, #tpu.memory_space<vmem>>, %arg14: memref<1x1x32xf32, #tpu.memory_space<vmem>>, %arg15: memref<1x1x32xf32, #tpu.memory_space<vmem>>, %arg16: memref<1x32x64xf32, #tpu.memory_space<vmem>>, %arg17: memref<1x1x64xf32, #tpu.memory_space<vmem>>, %arg18: memref<1x64x32xf32, #tpu.memory_space<vmem>>, %arg19: memref<1x1x32xf32, #tpu.memory_space<vmem>>, %arg20: memref<1x1x32xf32, #tpu.memory_space<vmem>>, %arg21: memref<1x1x32xf32, #tpu.memory_space<vmem>>, %arg22: memref<1x4x32xf32, #tpu.memory_space<vmem>>, %arg23: memref<4x32xf32, #tpu.memory_space<vmem>>) attributes {dimension_semantics = [#tpu.dimension_semantics<parallel>, #tpu.dimension_semantics<arbitrary>], iteration_bounds = array<i64: 2, 2>, scalar_prefetch = 0 : i64, scratch_operands = 1 : i64, tpu.core_type = #tpu.core_type<tc>, window_params = [{transform_indices = @transform_0, window_bounds = array<i64: 1, 4, 32>}, {transform_indices = @transform_1, window_bounds = array<i64: 1, 1, 4>}, {pipeline_mode = #tpu.pipeline_mode<synchronous>, transform_indices = @transform_2, window_bounds = array<i64: 1, 32>}, {pipeline_mode = #tpu.pipeline_mode<synchronous>, transform_indices = @transform_3, window_bounds = array<i64: 1, 32>}, {transform_indices = @transform_4, window_bounds = array<i64: 4, 32, 8>}, {transform_indices = @transform_5, window_bounds = array<i64: 4, 1, 8>}, {transform_indices = @transform_6, window_bounds = array<i64: 4, 32, 8>}, {transform_indices = @transform_7, window_bounds = array<i64: 4, 1, 8>}, {transform_indices = @transform_8, window_bounds = array<i64: 4, 32, 8>}, {transform_indices = @transform_9, window_bounds = array<i64: 4, 1, 8>}, {transform_indices = @transform_10, window_bounds = array<i64: 4, 8, 32>}, {transform_indices = @transform_11, window_bounds = array<i64: 1, 1, 32>}, {transform_indices = @transform_12, window_bounds = array<i64: 1, 1, 32>}, {transform_indices = @transform_13, window_bounds = array<i64: 1, 1, 32>}, {transform_indices = @transform_14, window_bounds = array<i64: 1, 32, 64>}, {transform_indices = @transform_15, window_bounds = array<i64: 1, 1, 64>}, {transform_indices = @transform_16, window_bounds = array<i64: 1, 64, 32>}, {transform_indices = @transform_17, window_bounds = array<i64: 1, 1, 32>}, {transform_indices = @transform_18, window_bounds = array<i64: 1, 1, 32>}, {transform_indices = @transform_19, window_bounds = array<i64: 1, 1, 32>}, {transform_indices = @transform_20, window_bounds = array<i64: 1, 4, 32>}]} {
    %c0_i32 = arith.constant 0 : i32
    %0 = arith.cmpi eq, %arg1, %c0_i32 : i32
    %1 = arith.extui %0 : i1 to i32
    %c0_i32_0 = arith.constant 0 : i32
    %2 = arith.cmpi ne, %1, %c0_i32_0 : i32
    scf.if %2 {
      %c0_63 = arith.constant 0 : index
      %c0_64 = arith.constant 0 : index
      %c0_65 = arith.constant 0 : index
      %103 = vector.load %arg2[%c0_63, %c0_64, %c0_65] : memref<1x4x32xf32, #tpu.memory_space<vmem>>, vector<1x4x32xf32>
      %104 = vector.shape_cast %103 : vector<1x4x32xf32> to vector<4x32xf32>
      %c0_66 = arith.constant 0 : index
      %c0_67 = arith.constant 0 : index
      %105 = vector.load %arg23[%c0_66, %c0_67] : memref<4x32xf32, #tpu.memory_space<vmem>>, vector<4x32xf32>
      tpu.vector_store %arg23[%c0_66, %c0_67], %104 {strides = array<i32>} : memref<4x32xf32, #tpu.memory_space<vmem>>, vector<4x32xf32>,
    } else {
    }
    %c0 = arith.constant 0 : index
    %c0_1 = arith.constant 0 : index
    %3 = vector.load %arg23[%c0, %c0_1] : memref<4x32xf32, #tpu.memory_space<vmem>>, vector<4x32xf32>
    %4 = vector.shape_cast %3 : vector<4x32xf32> to vector<1x4x32xf32>
    %5 = vector.broadcast %4 : vector<1x4x32xf32> to vector<4x4x32xf32>
    %c0_2 = arith.constant 0 : index
    %c0_3 = arith.constant 0 : index
    %c0_4 = arith.constant 0 : index
    %6 = vector.load %arg6[%c0_2, %c0_3, %c0_4] : memref<4x32x8xf32, #tpu.memory_space<vmem>>, vector<4x32x8xf32>
    "tpu.trace_start"() <{level = 10 : i32, message = "hsd,hdk->hsk"}> : () -> ()
    %cst = arith.constant dense<0.000000e+00> : vector<4x4x8xf32>
    %7 = tpu.matmul %5, %6, %cst {dimension_numbers = #tpu.dot_dimension_numbers<[2], [1], [1], [2], [0, 0, 0, 1, 1, 2], [0], [0]>} : vector<4x4x32xf32>, vector<4x32x8xf32>, vector<4x4x8xf32> -> vector<4x4x8xf32>
    "tpu.trace_stop"() : () -> ()
    %c0_5 = arith.constant 0 : index
    %c0_6 = arith.constant 0 : index
    %c0_7 = arith.constant 0 : index
    %8 = vector.load %arg8[%c0_5, %c0_6, %c0_7] : memref<4x32x8xf32, #tpu.memory_space<vmem>>, vector<4x32x8xf32>
    "tpu.trace_start"() <{level = 10 : i32, message = "hsd,hdk->hsk"}> : () -> ()
    %cst_8 = arith.constant dense<0.000000e+00> : vector<4x4x8xf32>
    %9 = tpu.matmul %5, %8, %cst_8 {dimension_numbers = #tpu.dot_dimension_numbers<[2], [1], [1], [2], [0, 0, 0, 1, 1, 2], [0], [0]>} : vector<4x4x32xf32>, vector<4x32x8xf32>, vector<4x4x8xf32> -> vector<4x4x8xf32>
    "tpu.trace_stop"() : () -> ()
    %c0_9 = arith.constant 0 : index
    %c0_10 = arith.constant 0 : index
    %c0_11 = arith.constant 0 : index
    %10 = vector.load %arg10[%c0_9, %c0_10, %c0_11] : memref<4x32x8xf32, #tpu.memory_space<vmem>>, vector<4x32x8xf32>
    "tpu.trace_start"() <{level = 10 : i32, message = "hsd,hdk->hsk"}> : () -> ()
    %cst_12 = arith.constant dense<0.000000e+00> : vector<4x4x8xf32>
    %11 = tpu.matmul %5, %10, %cst_12 {dimension_numbers = #tpu.dot_dimension_numbers<[2], [1], [1], [2], [0, 0, 0, 1, 1, 2], [0], [0]>} : vector<4x4x32xf32>, vector<4x32x8xf32>, vector<4x4x8xf32> -> vector<4x4x8xf32>
    "tpu.trace_stop"() : () -> ()
    %cst_13 = arith.constant 0.353553385 : f32
    %12 = vector.broadcast %cst_13 : f32 to vector<4x4x8xf32>
    %13 = arith.mulf %7, %12 : vector<4x4x8xf32>
    "tpu.trace_start"() <{level = 10 : i32, message = "hqd,hkd->hqk"}> : () -> ()
    %cst_14 = arith.constant dense<0.000000e+00> : vector<4x4x4xf32>
    %14 = tpu.matmul %13, %9, %cst_14 {dimension_numbers = #tpu.dot_dimension_numbers<[2], [2], [1], [1], [0, 0, 0, 1, 1, 1], [0], [0]>} : vector<4x4x8xf32>, vector<4x4x8xf32>, vector<4x4x4xf32> -> vector<4x4x4xf32>
    "tpu.trace_stop"() : () -> ()
    %cst_15 = arith.constant dense<0xFF800000> : vector<4x4xf32>
    %15 = vector.multi_reduction <maximumf>, %14, %cst_15 [2] : vector<4x4x4xf32> to vector<4x4xf32>
    %16 = vector.shape_cast %15 : vector<4x4xf32> to vector<4x4x1xf32>
    %17 = vector.broadcast %16 : vector<4x4x1xf32> to vector<4x4x4xf32>
    %18 = arith.subf %14, %17 : vector<4x4x4xf32>
    %19 = math.exp %18 : vector<4x4x4xf32>
    %cst_16 = arith.constant dense<0.000000e+00> : vector<4x4xf32>
    %20 = vector.multi_reduction <add>, %19, %cst_16 [2] : vector<4x4x4xf32> to vector<4x4xf32>
    %21 = vector.shape_cast %20 : vector<4x4xf32> to vector<4x4x1xf32>
    %22 = tpu.reciprocal %21 {approx = true} : vector<4x4x1xf32> -> vector<4x4x1xf32>
    %23 = vector.broadcast %22 : vector<4x4x1xf32> to vector<4x4x4xf32>
    %24 = arith.mulf %19, %23 : vector<4x4x4xf32>
    "tpu.trace_start"() <{level = 10 : i32, message = "hqk,hkd->hqd"}> : () -> ()
    %cst_17 = arith.constant dense<0.000000e+00> : vector<4x4x8xf32>
    %25 = tpu.matmul %24, %11, %cst_17 {dimension_numbers = #tpu.dot_dimension_numbers<[2], [1], [1], [2], [0, 0, 0, 1, 1, 2], [0], [0]>} : vector<4x4x4xf32>, vector<4x4x8xf32>, vector<4x4x8xf32> -> vector<4x4x8xf32>
    "tpu.trace_stop"() : () -> ()
    %c0_18 = arith.constant 0 : index
    %c0_19 = arith.constant 0 : index
    %c0_20 = arith.constant 0 : index
    %26 = vector.load %arg12[%c0_18, %c0_19, %c0_20] : memref<4x8x32xf32, #tpu.memory_space<vmem>>, vector<4x8x32xf32>
    "tpu.trace_start"() <{level = 10 : i32, message = "hqd,hdm->hqm"}> : () -> ()
    %cst_21 = arith.constant dense<0.000000e+00> : vector<4x4x32xf32>
    %27 = tpu.matmul %25, %26, %cst_21 {dimension_numbers = #tpu.dot_dimension_numbers<[2], [1], [1], [2], [0, 0, 0, 1, 1, 2], [0], [0]>} : vector<4x4x8xf32>, vector<4x8x32xf32>, vector<4x4x32xf32> -> vector<4x4x32xf32>
    "tpu.trace_stop"() : () -> ()
    %cst_22 = arith.constant dense<0.000000e+00> : vector<4x32xf32>
    %28 = vector.multi_reduction <add>, %27, %cst_22 [0] : vector<4x4x32xf32> to vector<4x32xf32>
    %29 = arith.addf %28, %3 : vector<4x32xf32>
    %c0_23 = arith.constant 0 : index
    %c0_24 = arith.constant 0 : index
    %c0_25 = arith.constant 0 : index
    %30 = vector.load %arg14[%c0_23, %c0_24, %c0_25] : memref<1x1x32xf32, #tpu.memory_space<vmem>>, vector<1x1x32xf32>
    %31 = vector.shape_cast %30 : vector<1x1x32xf32> to vector<1x32xf32>
    %c0_26 = arith.constant 0 : index
    %c0_27 = arith.constant 0 : index
    %c0_28 = arith.constant 0 : index
    %32 = vector.load %arg15[%c0_26, %c0_27, %c0_28] : memref<1x1x32xf32, #tpu.memory_space<vmem>>, vector<1x1x32xf32>
    %33 = vector.shape_cast %32 : vector<1x1x32xf32> to vector<1x32xf32>
    %cst_29 = arith.constant dense<0.000000e+00> : vector<4xf32>
    %34 = vector.multi_reduction <add>, %29, %cst_29 [1] : vector<4x32xf32> to vector<4xf32>
    %35 = vector.shape_cast %34 : vector<4xf32> to vector<4x1xf32>
    %cst_30 = arith.constant 3.200000e+01 : f32
    %36 = vector.broadcast %cst_30 : f32 to vector<4x1xf32>
    %37 = arith.divf %35, %36 : vector<4x1xf32>
    %38 = vector.broadcast %37 : vector<4x1xf32> to vector<4x32xf32>
    %39 = arith.subf %29, %38 : vector<4x32xf32>
    %40 = arith.mulf %39, %39 : vector<4x32xf32>
    %cst_31 = arith.constant dense<0.000000e+00> : vector<4xf32>
    %41 = vector.multi_reduction <add>, %40, %cst_31 [1] : vector<4x32xf32> to vector<4xf32>
    %42 = vector.shape_cast %41 : vector<4xf32> to vector<4x1xf32>
    %cst_32 = arith.constant 3.200000e+01 : f32
    %43 = vector.broadcast %cst_32 : f32 to vector<4x1xf32>
    %44 = arith.divf %42, %43 : vector<4x1xf32>
    %45 = vector.broadcast %37 : vector<4x1xf32> to vector<4x32xf32>
    %46 = arith.subf %29, %45 : vector<4x32xf32>
    %cst_33 = arith.constant 9.99999997E-7 : f32
    %47 = vector.broadcast %cst_33 : f32 to vector<4x1xf32>
    %48 = arith.addf %44, %47 : vector<4x1xf32>
    %49 = math.rsqrt %48 : vector<4x1xf32>
    %50 = vector.broadcast %49 : vector<4x1xf32> to vector<4x32xf32>
    %51 = arith.mulf %46, %50 : vector<4x32xf32>
    %52 = vector.broadcast %31 : vector<1x32xf32> to vector<4x32xf32>
    %53 = arith.mulf %51, %52 : vector<4x32xf32>
    %54 = vector.broadcast %33 : vector<1x32xf32> to vector<4x32xf32>
    %55 = arith.addf %53, %54 : vector<4x32xf32>
    %c0_34 = arith.constant 0 : index
    %c0_35 = arith.constant 0 : index
    %c0_36 = arith.constant 0 : index
    %56 = vector.load %arg16[%c0_34, %c0_35, %c0_36] : memref<1x32x64xf32, #tpu.memory_space<vmem>>, vector<1x32x64xf32>
    %57 = vector.shape_cast %56 : vector<1x32x64xf32> to vector<32x64xf32>
    %cst_37 = arith.constant dense<0.000000e+00> : vector<4x64xf32>
    %58 = tpu.matmul %55, %57, %cst_37 {dimension_numbers = #tpu.dot_dimension_numbers<[1], [0], [0], [1], [0, 0, 1, 1], [], []>} : vector<4x32xf32>, vector<32x64xf32>, vector<4x64xf32> -> vector<4x64xf32>
    %c0_38 = arith.constant 0 : index
    %c0_39 = arith.constant 0 : index
    %c0_40 = arith.constant 0 : index
    %59 = vector.load %arg17[%c0_38, %c0_39, %c0_40] : memref<1x1x64xf32, #tpu.memory_space<vmem>>, vector<1x1x64xf32>
    %60 = vector.shape_cast %59 : vector<1x1x64xf32> to vector<1x64xf32>
    %61 = vector.broadcast %60 : vector<1x64xf32> to vector<4x64xf32>
    %62 = arith.addf %58, %61 : vector<4x64xf32>
    %cst_41 = arith.constant 0.000000e+00 : f32
    %63 = vector.broadcast %cst_41 : f32 to vector<4x64xf32>
    %64 = arith.maximumf %62, %63 : vector<4x64xf32>
    %c0_42 = arith.constant 0 : index
    %c0_43 = arith.constant 0 : index
    %c0_44 = arith.constant 0 : index
    %65 = vector.load %arg18[%c0_42, %c0_43, %c0_44] : memref<1x64x32xf32, #tpu.memory_space<vmem>>, vector<1x64x32xf32>
    %66 = vector.shape_cast %65 : vector<1x64x32xf32> to vector<64x32xf32>
    %cst_45 = arith.constant dense<0.000000e+00> : vector<4x32xf32>
    %67 = tpu.matmul %64, %66, %cst_45 {dimension_numbers = #tpu.dot_dimension_numbers<[1], [0], [0], [1], [0, 0, 1, 1], [], []>} : vector<4x64xf32>, vector<64x32xf32>, vector<4x32xf32> -> vector<4x32xf32>
    %c0_46 = arith.constant 0 : index
    %c0_47 = arith.constant 0 : index
    %c0_48 = arith.constant 0 : index
    %68 = vector.load %arg19[%c0_46, %c0_47, %c0_48] : memref<1x1x32xf32, #tpu.memory_space<vmem>>, vector<1x1x32xf32>
    %69 = vector.shape_cast %68 : vector<1x1x32xf32> to vector<1x32xf32>
    %70 = vector.broadcast %69 : vector<1x32xf32> to vector<4x32xf32>
    %71 = arith.addf %67, %70 : vector<4x32xf32>
    %72 = arith.addf %71, %55 : vector<4x32xf32>
    %c0_49 = arith.constant 0 : index
    %c0_50 = arith.constant 0 : index
    %c0_51 = arith.constant 0 : index
    %73 = vector.load %arg20[%c0_49, %c0_50, %c0_51] : memref<1x1x32xf32, #tpu.memory_space<vmem>>, vector<1x1x32xf32>
    %74 = vector.shape_cast %73 : vector<1x1x32xf32> to vector<1x32xf32>
    %c0_52 = arith.constant 0 : index
    %c0_53 = arith.constant 0 : index
    %c0_54 = arith.constant 0 : index
    %75 = vector.load %arg21[%c0_52, %c0_53, %c0_54] : memref<1x1x32xf32, #tpu.memory_space<vmem>>, vector<1x1x32xf32>
    %76 = vector.shape_cast %75 : vector<1x1x32xf32> to vector<1x32xf32>
    %cst_55 = arith.constant dense<0.000000e+00> : vector<4xf32>
    %77 = vector.multi_reduction <add>, %72, %cst_55 [1] : vector<4x32xf32> to vector<4xf32>
    %78 = vector.shape_cast %77 : vector<4xf32> to vector<4x1xf32>
    %cst_56 = arith.constant 3.200000e+01 : f32
    %79 = vector.broadcast %cst_56 : f32 to vector<4x1xf32>
    %80 = arith.divf %78, %79 : vector<4x1xf32>
    %81 = vector.broadcast %80 : vector<4x1xf32> to vector<4x32xf32>
    %82 = arith.subf %72, %81 : vector<4x32xf32>
    %83 = arith.mulf %82, %82 : vector<4x32xf32>
    %cst_57 = arith.constant dense<0.000000e+00> : vector<4xf32>
    %84 = vector.multi_reduction <add>, %83, %cst_57 [1] : vector<4x32xf32> to vector<4xf32>
    %85 = vector.shape_cast %84 : vector<4xf32> to vector<4x1xf32>
    %cst_58 = arith.constant 3.200000e+01 : f32
    %86 = vector.broadcast %cst_58 : f32 to vector<4x1xf32>
    %87 = arith.divf %85, %86 : vector<4x1xf32>
    %88 = vector.broadcast %80 : vector<4x1xf32> to vector<4x32xf32>
    %89 = arith.subf %72, %88 : vector<4x32xf32>
    %cst_59 = arith.constant 9.99999997E-7 : f32
    %90 = vector.broadcast %cst_59 : f32 to vector<4x1xf32>
    %91 = arith.addf %87, %90 : vector<4x1xf32>
    %92 = math.rsqrt %91 : vector<4x1xf32>
    %93 = vector.broadcast %92 : vector<4x1xf32> to vector<4x32xf32>
    %94 = arith.mulf %89, %93 : vector<4x32xf32>
    %95 = vector.broadcast %74 : vector<1x32xf32> to vector<4x32xf32>
    %96 = arith.mulf %94, %95 : vector<4x32xf32>
    %97 = vector.broadcast %76 : vector<1x32xf32> to vector<4x32xf32>
    %98 = arith.addf %96, %97 : vector<4x32xf32>
    %c0_60 = arith.constant 0 : index
    %c0_61 = arith.constant 0 : index
    %99 = vector.load %arg23[%c0_60, %c0_61] : memref<4x32xf32, #tpu.memory_space<vmem>>, vector<4x32xf32>
    tpu.vector_store %arg23[%c0_60, %c0_61], %98 {strides = array<i32>} : memref<4x32xf32, #tpu.memory_space<vmem>>, vector<4x32xf32>,
    %c1_i32 = arith.constant 1 : i32
    %100 = arith.cmpi eq, %arg1, %c1_i32 : i32
    %101 = arith.extui %100 : i1 to i32
    %c0_i32_62 = arith.constant 0 : i32
    %102 = arith.cmpi ne, %101, %c0_i32_62 : i32
    scf.if %102 {
      %c0_63 = arith.constant 0 : index
      %c0_64 = arith.constant 0 : index
      %c0_65 = arith.constant 0 : index
      %103 = vector.load %arg22[%c0_63, %c0_64, %c0_65] : memref<1x4x32xf32, #tpu.memory_space<vmem>>, vector<1x4x32xf32>
      %104 = vector.shape_cast %103 : vector<1x4x32xf32> to vector<4x32xf32>
      %105 = vector.shape_cast %98 : vector<4x32xf32> to vector<1x4x32xf32>
      tpu.vector_store %arg22[%c0_63, %c0_64, %c0_65], %105 {strides = array<i32>} : memref<1x4x32xf32, #tpu.memory_space<vmem>>, vector<1x4x32xf32>,
    } else {
    }
    return
  }
  func.func @transform_0(%arg0: i32, %arg1: i32) -> (i32, i32, i32) {
    %c0_i32 = arith.constant 0 : i32
    %c0_i32_0 = arith.constant 0 : i32
    %c0_i32_1 = arith.constant 0 : i32
    return %arg0, %c0_i32, %c0_i32_0 : i32, i32, i32
  }
  func.func @transform_1(%arg0: i32, %arg1: i32) -> (i32, i32, i32) {
    %c0_i32 = arith.constant 0 : i32
    %c0_i32_0 = arith.constant 0 : i32
    %c0_i32_1 = arith.constant 0 : i32
    return %arg0, %c0_i32, %c0_i32_0 : i32, i32, i32
  }
  func.func @transform_2(%arg0: i32, %arg1: i32) -> (i32, i32) {
    %c0_i32 = arith.constant 0 : i32
    %c0_i32_0 = arith.constant 0 : i32
    %c0_i32_1 = arith.constant 0 : i32
    return %c0_i32, %c0_i32_0 : i32, i32
  }
  func.func @transform_3(%arg0: i32, %arg1: i32) -> (i32, i32) {
    %c0_i32 = arith.constant 0 : i32
    %c0_i32_0 = arith.constant 0 : i32
    %c0_i32_1 = arith.constant 0 : i32
    return %c0_i32, %c0_i32_0 : i32, i32
  }
  func.func @transform_4(%arg0: i32, %arg1: i32) -> (i32, i32, i32) {
    %c0_i32 = arith.constant 0 : i32
    %c0_i32_0 = arith.constant 0 : i32
    %c0_i32_1 = arith.constant 0 : i32
    return %arg1, %c0_i32, %c0_i32_0 : i32, i32, i32
  }
  func.func @transform_5(%arg0: i32, %arg1: i32) -> (i32, i32, i32) {
    %c0_i32 = arith.constant 0 : i32
    %c0_i32_0 = arith.constant 0 : i32
    %c0_i32_1 = arith.constant 0 : i32
    return %arg1, %c0_i32, %c0_i32_0 : i32, i32, i32
  }
  func.func @transform_6(%arg0: i32, %arg1: i32) -> (i32, i32, i32) {
    %c0_i32 = arith.constant 0 : i32
    %c0_i32_0 = arith.constant 0 : i32
    %c0_i32_1 = arith.constant 0 : i32
    return %arg1, %c0_i32, %c0_i32_0 : i32, i32, i32
  }
  func.func @transform_7(%arg0: i32, %arg1: i32) -> (i32, i32, i32) {
    %c0_i32 = arith.constant 0 : i32
    %c0_i32_0 = arith.constant 0 : i32
    %c0_i32_1 = arith.constant 0 : i32
    return %arg1, %c0_i32, %c0_i32_0 : i32, i32, i32
  }
  func.func @transform_8(%arg0: i32, %arg1: i32) -> (i32, i32, i32) {
    %c0_i32 = arith.constant 0 : i32
    %c0_i32_0 = arith.constant 0 : i32
    %c0_i32_1 = arith.constant 0 : i32
    return %arg1, %c0_i32, %c0_i32_0 : i32, i32, i32
  }
  func.func @transform_9(%arg0: i32, %arg1: i32) -> (i32, i32, i32) {
    %c0_i32 = arith.constant 0 : i32
    %c0_i32_0 = arith.constant 0 : i32
    %c0_i32_1 = arith.constant 0 : i32
    return %arg1, %c0_i32, %c0_i32_0 : i32, i32, i32
  }
  func.func @transform_10(%arg0: i32, %arg1: i32) -> (i32, i32, i32) {
    %c0_i32 = arith.constant 0 : i32
    %c0_i32_0 = arith.constant 0 : i32
    %c0_i32_1 = arith.constant 0 : i32
    return %arg1, %c0_i32, %c0_i32_0 : i32, i32, i32
  }
  func.func @transform_11(%arg0: i32, %arg1: i32) -> (i32, i32, i32) {
    %c0_i32 = arith.constant 0 : i32
    %c0_i32_0 = arith.constant 0 : i32
    %c0_i32_1 = arith.constant 0 : i32
    return %arg1, %c0_i32, %c0_i32_0 : i32, i32, i32
  }
  func.func @transform_12(%arg0: i32, %arg1: i32) -> (i32, i32, i32) {
    %c0_i32 = arith.constant 0 : i32
    %c0_i32_0 = arith.constant 0 : i32
    %c0_i32_1 = arith.constant 0 : i32
    return %arg1, %c0_i32, %c0_i32_0 : i32, i32, i32
  }
  func.func @transform_13(%arg0: i32, %arg1: i32) -> (i32, i32, i32) {
    %c0_i32 = arith.constant 0 : i32
    %c0_i32_0 = arith.constant 0 : i32
    %c0_i32_1 = arith.constant 0 : i32
    return %arg1, %c0_i32, %c0_i32_0 : i32, i32, i32
  }
  func.func @transform_14(%arg0: i32, %arg1: i32) -> (i32, i32, i32) {
    %c0_i32 = arith.constant 0 : i32
    %c0_i32_0 = arith.constant 0 : i32
    %c0_i32_1 = arith.constant 0 : i32
    return %arg1, %c0_i32, %c0_i32_0 : i32, i32, i32
  }
  func.func @transform_15(%arg0: i32, %arg1: i32) -> (i32, i32, i32) {
    %c0_i32 = arith.constant 0 : i32
    %c0_i32_0 = arith.constant 0 : i32
    %c0_i32_1 = arith.constant 0 : i32
    return %arg1, %c0_i32, %c0_i32_0 : i32, i32, i32
  }
  func.func @transform_16(%arg0: i32, %arg1: i32) -> (i32, i32, i32) {
    %c0_i32 = arith.constant 0 : i32
    %c0_i32_0 = arith.constant 0 : i32
    %c0_i32_1 = arith.constant 0 : i32
    return %arg1, %c0_i32, %c0_i32_0 : i32, i32, i32
  }
  func.func @transform_17(%arg0: i32, %arg1: i32) -> (i32, i32, i32) {
    %c0_i32 = arith.constant 0 : i32
    %c0_i32_0 = arith.constant 0 : i32
    %c0_i32_1 = arith.constant 0 : i32
    return %arg1, %c0_i32, %c0_i32_0 : i32, i32, i32
  }
  func.func @transform_18(%arg0: i32, %arg1: i32) -> (i32, i32, i32) {
    %c0_i32 = arith.constant 0 : i32
    %c0_i32_0 = arith.constant 0 : i32
    %c0_i32_1 = arith.constant 0 : i32
    return %arg1, %c0_i32, %c0_i32_0 : i32, i32, i32
  }
  func.func @transform_19(%arg0: i32, %arg1: i32) -> (i32, i32, i32) {
    %c0_i32 = arith.constant 0 : i32
    %c0_i32_0 = arith.constant 0 : i32
    %c0_i32_1 = arith.constant 0 : i32
    return %arg1, %c0_i32, %c0_i32_0 : i32, i32, i32
  }
  func.func @transform_20(%arg0: i32, %arg1: i32) -> (i32, i32, i32) {
    %c0_i32 = arith.constant 0 : i32
    %c0_i32_0 = arith.constant 0 : i32
    %c0_i32_1 = arith.constant 0 : i32
    return %arg0, %c0_i32, %c0_i32_0 : i32, i32, i32
  }
}

</mosaic_0001>

<llo_original>
// kernel: _lambda_.5
$region0: #{_lambda_.5}
  #allocation0 [shape = 'u32[]', space=smem, size = 0x4, offset = 0x4, fixed_abs, tag = 'smem constant byte address 0x4 - core index']
  #allocation1 [shape = 'u32[144,128]{1,0:T(1,128)}', space=vmem, size = 0x12000, scoped, tag = 'internal scratch']
  %s0 = inlined_call_operand.vmem [shape: f32[2,32], index: 0, kind: input, shape index: {}]
  %s1 = inlined_call_operand.vmem [shape: f32[32,128], index: 1, kind: input, shape index: {}]
  %s2 = inlined_call_operand.vmem [shape: f32[2,128], index: 2, kind: output, shape index: {}]
  %s3 = sld [smem:[#allocation0]]
  $region18: #{_lambda_.5} parent=0
    _
  %s5 = ssub.s32 1, %s3
  %s6 = scalar_select 0, %s5, %s3
  // Predicated region
  $region2: #{_lambda_.5} parent=0 // pred_check
    _
  $region3: #{_lambda_.5} parent=0 // pred_check_branch
    %8 = sbr.rel (0) target = $region5
  $region4: #{_lambda_.5} parent=0 // pred_region
    _
  $region5: #{_lambda_.5} parent=0 // pred_fallthru
    _
  // Predicated region
  $region6: #{_lambda_.5} parent=0 // pred_check
    _
  $region7: #{_lambda_.5} parent=0 // pred_check_branch
    %10 = sbr.rel (0) target = $region9
  $region8: #{_lambda_.5} parent=0 // pred_region
    _
  $region9: #{_lambda_.5} parent=0 // pred_fallthru
    _
  %v11 = vld [vmem:[%s0] sm:$0x3]
  %v12 = vld [vmem:[%s1] sm:$0xff]
  %v13 = vld [vmem:[%s1 + $0x8] sm:$0xff]
  %v14 = vld [vmem:[%s1 + $0x10] sm:$0xff]
  %v15 = vld [vmem:[%s1 + $0x18] sm:$0xff]
  %vm16 = vcmask 261120
  %v18 = vsel %vm16, %v11, 0
  %20 = vmatprep.subr.mxu0 0.0
  %21 = vmatpush1.msra.mxu0 0.0
  %22 = vmatprep.subr.mxu0 0.0
  %23 = vmatpush1.msra.mxu0 0.0
  %24 = vmatprep.subr.mxu0 0.0
  %25 = vmatpush1.msra.mxu0 0.0
  %26 = vmatprep.subr.mxu0 0.0
  %27 = vmatpush1.msra.mxu0 0.0
  %28 = vmatprep.subr.mxu0 0.0
  %29 = vmatpush1.msra.mxu0 0.0
  %30 = vmatprep.subr.mxu0 0.0
  %31 = vmatpush1.msra.mxu0 0.0
  %32 = vmatprep.subr.mxu0 0.0
  %33 = vmatpush1.msra.mxu0 0.0
  %34 = vmatprep.subr.mxu0 0.0
  %35 = vmatpush1.msra.mxu0 0.0
  %36 = vmatprep.subr.mxu0 0.0
  %37 = vmatpush1.msra.mxu0 0.0
  %38 = vmatprep.subr.mxu0 0.0
  %39 = vmatpush1.msra.mxu0 0.0
  %40 = vmatprep.subr.mxu0 0.0
  %41 = vmatpush1.msra.mxu0 0.0
  %42 = vmatprep.subr.mxu0 0.0
  %43 = vmatpush1.msra.mxu0 0.0
  %44 = vmatprep.subr.mxu0 0.0
  %45 = vmatpush1.msra.mxu0 %v15
  %46 = vmatprep.subr.mxu0 0.0
  %47 = vmatpush1.msra.mxu0 %v14
  %48 = vmatprep.subr.mxu0 0.0
  %49 = vmatpush1.msra.mxu0 %v13
  %50 = vmatprep.subr.mxu0 0.0
  %51 = vmatpush1.msra.mxu0 %v12
  %52 = vmatprep.subr.mxu0 0.0
  %53 = vmatpush2.msra.mxu0 0.0
  %54 = vmatprep.subr.mxu0 0.0
  %55 = vmatpush2.msra.mxu0 0.0
  %56 = vmatprep.subr.mxu0 0.0
  %57 = vmatpush2.msra.mxu0 0.0
  %58 = vmatprep.subr.mxu0 0.0
  %59 = vmatpush2.msra.mxu0 0.0
  %60 = vmatprep.subr.mxu0 0.0
  %61 = vmatpush2.msra.mxu0 0.0
  %62 = vmatprep.subr.mxu0 0.0
  %63 = vmatpush2.msra.mxu0 0.0
  %64 = vmatprep.subr.mxu0 0.0
  %65 = vmatpush2.msra.mxu0 0.0
  %66 = vmatprep.subr.mxu0 0.0
  %67 = vmatpush2.msra.mxu0 0.0
  %68 = vmatprep.subr.mxu0 0.0
  %69 = vmatpush2.msra.mxu0 0.0
  %70 = vmatprep.subr.mxu0 0.0
  %71 = vmatpush2.msra.mxu0 0.0
  %72 = vmatprep.subr.mxu0 0.0
  %73 = vmatpush2.msra.mxu0 0.0
  %74 = vmatprep.subr.mxu0 0.0
  %75 = vmatpush2.msra.mxu0 0.0
  %76 = vmatprep.subr.mxu0 0.0
  %77 = vmatpush2.msra.mxu0 0.0
  %78 = vmatprep.subr.mxu0 0.0
  %79 = vmatpush2.msra.mxu0 0.0
  %80 = vmatprep.subr.mxu0 0.0
  %81 = vmatpush2.msra.mxu0 0.0
  %82 = vmatprep.subr.mxu0 0.0
  %83 = vmatpush2.msra.mxu0 0.0
  %84 = vmatprep.mubr.f32.mxu0 0.0
  %85 = vmatmul.mubr.f32.gmra.mxu0 %v18
  %v86 = vpop.f32.mrf.mxu0
  %v87 = vadd.f32 0.0, %v86
  %v88 = vpop.f32.mrf.mxu0
  %89 = vdwg.mxu0
  %90 = vst [vmem:[%s2] sm:$0x3] %v87
  // Predicated region
  $region10: #{_lambda_.5} parent=0 // pred_check
    _
  $region11: #{_lambda_.5} parent=0 // pred_check_branch
    %92 = sbr.rel (0) target = $region13
  $region12: #{_lambda_.5} parent=0 // pred_region
    _
  $region13: #{_lambda_.5} parent=0 // pred_fallthru
    _
  // Predicated region
  $region14: #{_lambda_.5} parent=0 // pred_check
    _
  $region15: #{_lambda_.5} parent=0 // pred_check_branch
    %94 = sbr.rel (0) target = $region17
  $region16: #{_lambda_.5} parent=0 // pred_region
    _
  $region17: #{_lambda_.5} parent=0 // pred_fallthru
    _

// kernel: _lambda_.7
$region0: #{_lambda_.7}
  #allocation0 [shape = 'u32[]', space=smem, size = 0x4, offset = 0x4, fixed_abs, tag = 'smem constant byte address 0x4 - core index']
  #allocation1 [shape = 'u32[144,128]{1,0:T(1,128)}', space=vmem, size = 0x12000, scoped, tag = 'internal scratch']
  %s0 = inlined_call_operand.vmem [shape: f32[8,32], index: 0, kind: input, shape index: {}]
  %s1 = inlined_call_operand.vmem [shape: f32[32,64], index: 1, kind: input, shape index: {}]
  %s2 = inlined_call_operand.hbm [shape: f32[8,64], index: 2, kind: output, shape index: {}]
  %s3 = sld [smem:[#allocation0]]
  $region18: #{_lambda_.7} parent=0
    _
  %s5 = ssub.s32 1, %s3
  %s6 = scalar_select 0, %s5, %s3
  $region1: #{_lambda_.7} parent=0
    #allocation2 [shape = 'u8[4096]{0}', space=vmem, size = 0x1000, scoped, tag = 'output window, operand 0, single buffered']
    #allocation3 [shape = 's32[1]{0}', space=sflag, size = 0x4, scoped, tag = 'scoped memory for _lambda_.7']
    %7 = vsyncpa [#allocation3], 0
    // Predicated region
    $region2: #{_lambda_.7} parent=1 // pred_check
      _
    $region3: #{_lambda_.7} parent=1 // pred_check_branch
      %9 = sbr.rel (0) target = $region5
    $region4: #{_lambda_.7} parent=1 // pred_region
      _
    $region5: #{_lambda_.7} parent=1 // pred_fallthru
      _
    // Predicated region
    $region6: #{_lambda_.7} parent=1 // pred_check
      _
    $region7: #{_lambda_.7} parent=1 // pred_check_branch
      %11 = sbr.rel (0) target = $region9
    $region8: #{_lambda_.7} parent=1 // pred_region
      _
    $region9: #{_lambda_.7} parent=1 // pred_fallthru
      _
    %v12 = vld [vmem:[%s0] sm:$0xff]
    %v13 = vld [vmem:[%s1] sm:$0xff]
    %v14 = vld [vmem:[%s1 + $0x8] sm:$0xff]
    %v15 = vld [vmem:[%s1 + $0x10] sm:$0xff]
    %v16 = vld [vmem:[%s1 + $0x18] sm:$0xff]
    %vm17 = vcmask 261120
    %v19 = vsel %vm17, %v12, 0
    %21 = vmatprep.subr.mxu0 0.0
    %22 = vmatpush1.msra.mxu0 0.0
    %23 = vmatprep.subr.mxu0 0.0
    %24 = vmatpush1.msra.mxu0 0.0
    %25 = vmatprep.subr.mxu0 0.0
    %26 = vmatpush1.msra.mxu0 0.0
    %27 = vmatprep.subr.mxu0 0.0
    %28 = vmatpush1.msra.mxu0 0.0
    %29 = vmatprep.subr.mxu0 0.0
    %30 = vmatpush1.msra.mxu0 0.0
    %31 = vmatprep.subr.mxu0 0.0
    %32 = vmatpush1.msra.mxu0 0.0
    %33 = vmatprep.subr.mxu0 0.0
    %34 = vmatpush1.msra.mxu0 0.0
    %35 = vmatprep.subr.mxu0 0.0
    %36 = vmatpush1.msra.mxu0 0.0
    %37 = vmatprep.subr.mxu0 0.0
    %38 = vmatpush1.msra.mxu0 0.0
    %39 = vmatprep.subr.mxu0 0.0
    %40 = vmatpush1.msra.mxu0 0.0
    %41 = vmatprep.subr.mxu0 0.0
    %42 = vmatpush1.msra.mxu0 0.0
    %43 = vmatprep.subr.mxu0 0.0
    %44 = vmatpush1.msra.mxu0 0.0
    %45 = vmatprep.subr.mxu0 0.0
    %46 = vmatpush1.msra.mxu0 %v16
    %47 = vmatprep.subr.mxu0 0.0
    %48 = vmatpush1.msra.mxu0 %v15
    %49 = vmatprep.subr.mxu0 0.0
    %50 = vmatpush1.msra.mxu0 %v14
    %51 = vmatprep.subr.mxu0 0.0
    %52 = vmatpush1.msra.mxu0 %v13
    %53 = vmatprep.subr.mxu0 0.0
    %54 = vmatpush2.msra.mxu0 0.0
    %55 = vmatprep.subr.mxu0 0.0
    %56 = vmatpush2.msra.mxu0 0.0
    %57 = vmatprep.subr.mxu0 0.0
    %58 = vmatpush2.msra.mxu0 0.0
    %59 = vmatprep.subr.mxu0 0.0
    %60 = vmatpush2.msra.mxu0 0.0
    %61 = vmatprep.subr.mxu0 0.0
    %62 = vmatpush2.msra.mxu0 0.0
    %63 = vmatprep.subr.mxu0 0.0
    %64 = vmatpush2.msra.mxu0 0.0
    %65 = vmatprep.subr.mxu0 0.0
    %66 = vmatpush2.msra.mxu0 0.0
    %67 = vmatprep.subr.mxu0 0.0
    %68 = vmatpush2.msra.mxu0 0.0
    %69 = vmatprep.subr.mxu0 0.0
    %70 = vmatpush2.msra.mxu0 0.0
    %71 = vmatprep.subr.mxu0 0.0
    %72 = vmatpush2.msra.mxu0 0.0
    %73 = vmatprep.subr.mxu0 0.0
    %74 = vmatpush2.msra.mxu0 0.0
    %75 = vmatprep.subr.mxu0 0.0
    %76 = vmatpush2.msra.mxu0 0.0
    %77 = vmatprep.subr.mxu0 0.0
    %78 = vmatpush2.msra.mxu0 0.0
    %79 = vmatprep.subr.mxu0 0.0
    %80 = vmatpush2.msra.mxu0 0.0
    %81 = vmatprep.subr.mxu0 0.0
    %82 = vmatpush2.msra.mxu0 0.0
    %83 = vmatprep.subr.mxu0 0.0
    %84 = vmatpush2.msra.mxu0 0.0
    %85 = vmatprep.mubr.f32.mxu0 0.0
    %86 = vmatmul.mubr.f32.gmra.mxu0 %v19
    %v87 = vpop.f32.mrf.mxu0
    %v88 = vadd.f32 0.0, %v87
    %v89 = vpop.f32.mrf.mxu0
    %90 = vdwg.mxu0
    %vm91 = vcmask 523264
    %92 = vst.msk [vmem:[#allocation2] sm:$0xff] %vm91, %v88
    // Predicated region
    $region10: #{_lambda_.7} parent=1 // pred_check
      _
    $region11: #{_lambda_.7} parent=1 // pred_check_branch
      %94 = sbr.rel (0) target = $region13
    $region12: #{_lambda_.7} parent=1 // pred_region
      %s96 = ssub.s32 128, 128
      %97 = vsyncadd [#allocation3], %s96
      %s99 = sshll.u32 [#allocation2], 4
      %s100 = int_to_ptr.vmem [resolvable:$true] %s99
      %102 = dma.vmem_to_hbm [thread:$0]  %s100, 128, %s2, [#allocation3]
    $region13: #{_lambda_.7} parent=1 // pred_fallthru
      _
    // Predicated region
    $region14: #{_lambda_.7} parent=1 // pred_check
      _
    $region15: #{_lambda_.7} parent=1 // pred_check_branch
      %104 = sbr.rel (0) target = $region17
    $region16: #{_lambda_.7} parent=1 // pred_region
      %105 = dma.done [#allocation3], 128
    $region17: #{_lambda_.7} parent=1 // pred_fallthru
      _
    %106 = vsyncpa [#allocation3], 1

// kernel: _lambda_.4
$region0: #{_lambda_.4}
  #allocation0 [shape = 'u32[]', space=smem, size = 0x4, offset = 0x4, fixed_abs, tag = 'smem constant byte address 0x4 - core index']
  #allocation1 [shape = 'u32[144,128]{1,0:T(1,128)}', space=vmem, size = 0x12000, scoped, tag = 'internal scratch']
  #allocation2 [shape = 'f32[8,32]{1,0:T(8,128)}', space=vmem, size = 0x1000, scoped, tag = 'scratch operand']
  %s0 = inlined_call_operand.vmem [shape: f32[2,8,32], index: 0, kind: input, shape index: {}]
  %s1 = inlined_call_operand.vmem [shape: f32[2,1,8], index: 1, kind: input, shape index: {}]
  %s2 = inlined_call_operand.vmem [shape: f32[1,32], index: 2, kind: input, shape index: {}]
  %s3 = inlined_call_operand.vmem [shape: f32[1,32], index: 3, kind: input, shape index: {}]
  %s4 = inlined_call_operand.vmem [shape: f32[8,32,8], index: 4, kind: input, shape index: {}]
  %s5 = inlined_call_operand.vmem [shape: f32[8,1,8], index: 5, kind: input, shape index: {}]
  %s6 = inlined_call_operand.vmem [shape: f32[8,32,8], index: 6, kind: input, shape index: {}]
  %s7 = inlined_call_operand.vmem [shape: f32[8,1,8], index: 7, kind: input, shape index: {}]
  %s8 = inlined_call_operand.vmem [shape: f32[8,32,8], index: 8, kind: input, shape index: {}]
  %s9 = inlined_call_operand.vmem [shape: f32[8,1,8], index: 9, kind: input, shape index: {}]
  %s10 = inlined_call_operand.vmem [shape: f32[8,8,32], index: 10, kind: input, shape index: {}]
  %s11 = inlined_call_operand.vmem [shape: f32[2,1,32], index: 11, kind: input, shape index: {}]
  %s12 = inlined_call_operand.vmem [shape: f32[2,1,32], index: 12, kind: input, shape index: {}]
  %s13 = inlined_call_operand.vmem [shape: f32[2,1,32], index: 13, kind: input, shape index: {}]
  %s14 = inlined_call_operand.vmem [shape: f32[2,32,64], index: 14, kind: input, shape index: {}]
  %s15 = inlined_call_operand.vmem [shape: f32[2,1,64], index: 15, kind: input, shape index: {}]
  %s16 = inlined_call_operand.vmem [shape: f32[2,64,32], index: 16, kind: input, shape index: {}]
  %s17 = inlined_call_operand.vmem [shape: f32[2,1,32], index: 17, kind: input, shape index: {}]
  %s18 = inlined_call_operand.vmem [shape: f32[2,1,32], index: 18, kind: input, shape index: {}]
  %s19 = inlined_call_operand.vmem [shape: f32[2,1,32], index: 19, kind: input, shape index: {}]
  %s20 = inlined_call_operand.vmem [shape: f32[2,8,32], index: 20, kind: output, shape index: {}]
  %s21 = sld [smem:[#allocation0]]
  $region121: #{_lambda_.4} parent=0
    _
  %s23 = ssub.s32 1, %s21
  %s24 = scalar_select 0, %s23, %s21
  loop: start=0, step=1, limit=6
  $region2: #{_lambda_.4} parent=0 // loop_pre_header
    _
  $region3: #{_lambda_.4} parent=0 // loop_header
    %s26 = sphi 0, %s30
    %p27 = scmp.ge.s32.totalorder %s26, 6
    %s33 = sphi 0, %s45
    %s34 = sphi 0, %s41
    %s35 = sphi 0, %s33
    %s36 = sphi 0, %s34
    %s37 = sphi 0, %s35
    %s38 = sphi 0, %s36
    %s48 = sphi 0, %s50
    %s51 = sphi 0, %s48
    %s52 = sphi 0, %s51
    %s68 = sphi 0, %s52
    %s74 = sphi 0, %s76
    %s77 = sphi 0, %s74
    %s78 = sphi 0, %s77
    %s94 = sphi 0, %s78
    %s98 = sphi 0, %s98
    %s100 = sphi 0, %s98
    %s101 = sphi 0, %s100
    %s115 = sphi 0, %s101
    %s119 = sphi 0, %s119
    %s121 = sphi 0, %s119
    %s122 = sphi 0, %s121
    %s136 = sphi 0, %s122
    %s142 = sphi 0, %s144
    %s145 = sphi 0, %s142
    %s146 = sphi 0, %s145
    %s162 = sphi 0, %s146
    %s168 = sphi 0, %s170
    %s171 = sphi 0, %s168
    %s172 = sphi 0, %s171
    %s188 = sphi 0, %s172
    %s194 = sphi 0, %s196
    %s197 = sphi 0, %s194
    %s198 = sphi 0, %s197
    %s214 = sphi 0, %s198
    %s220 = sphi 0, %s222
    %s223 = sphi 0, %s220
    %s224 = sphi 0, %s223
    %s240 = sphi 0, %s224
    %s246 = sphi 0, %s248
    %s249 = sphi 0, %s246
    %s250 = sphi 0, %s249
    %s266 = sphi 0, %s250
    %s272 = sphi 0, %s274
    %s275 = sphi 0, %s272
    %s276 = sphi 0, %s275
    %s292 = sphi 0, %s276
    %s298 = sphi 0, %s300
    %s301 = sphi 0, %s298
    %s302 = sphi 0, %s301
    %s318 = sphi 0, %s302
    %s324 = sphi 0, %s326
    %s327 = sphi 0, %s324
    %s328 = sphi 0, %s327
    %s344 = sphi 0, %s328
    %s350 = sphi 0, %s352
    %s353 = sphi 0, %s350
    %s354 = sphi 0, %s353
    %s370 = sphi 0, %s354
    %s376 = sphi 0, %s378
    %s379 = sphi 0, %s376
    %s380 = sphi 0, %s379
    %s396 = sphi 0, %s380
    %s402 = sphi 0, %s404
    %s405 = sphi 0, %s402
    %s406 = sphi 0, %s405
    %s422 = sphi 0, %s406
    %s428 = sphi 0, %s430
    %s431 = sphi 0, %s428
    %s432 = sphi 0, %s431
    %s448 = sphi 0, %s432
    %s454 = sphi 0, %s456
    %s457 = sphi 0, %s454
    %s458 = sphi 0, %s457
    %s474 = sphi 0, %s458
    %s480 = sphi 0, %s482
    %s483 = sphi 0, %s480
    %s484 = sphi 0, %s483
    %s500 = sphi 0, %s484
    %s506 = sphi 0, %s508
    %s509 = sphi 0, %s506
    %s510 = sphi 0, %s509
    %s526 = sphi 0, %s510
    %s532 = sphi 0, %s534
    %s535 = sphi 0, %s532
    %s536 = sphi 0, %s535
    %s552 = sphi 0, %s536
    %s558 = sphi 0, %s560
    %s561 = sphi 0, %s558
    %s562 = sphi 0, %s561
    %s578 = sphi 0, %s562
  $region4: #{_lambda_.4} parent=0 // loop_header_branch
    %29 = sbr.rel (%p27) target = $region8
  $region5: #{_lambda_.4} parent=0 // loop_body
    %s31 = ssub.s32 %s26, 1
    %s32 = ssub.s32 %s26, 2
    %s39 = sadd.s32 1, %s34
    %p40 = scmp.ge.s32.totalorder %s39, 2
    %s41 = scalar_select %p40, 0, %s39
    %s42 = sadd.s32 1, %s33
    %s43 = scalar_select %p40, %s42, %s33
    %p44 = scmp.ge.s32.totalorder %s43, 2
    %s45 = scalar_select %p44, 0, %s43
    %s46 = ssub.s32 %s33, %s45
    %p47 = scmp.eq.s32.totalorder %s46, 0
    %s49 = sadd.s32 %s48, 1
    %s50 = scalar_select %p47, %s48, %s49
    %p53 = pneg %p47
    %p54 = scmp.eq.s32.totalorder %s26, 3
    %p55 = por %p53, %p54
    %p56 = scmp.ne.s32.totalorder %s48, %s51
    %p57 = scmp.eq.s32.totalorder %s26, 0
    %p58 = por %p56, %p57
    %p59 = scmp.ne.s32.totalorder %s48, %s51
    %p60 = scmp.eq.s32.totalorder %s31, 3
    %p61 = por %p59, %p60
    %p62 = scmp.ne.s32.totalorder %s51, %s52
    %p63 = scmp.eq.s32.totalorder %s31, 0
    %p64 = por %p62, %p63
    %p65 = scmp.ne.s32.totalorder %s51, %s52
    %p66 = scmp.eq.s32.totalorder %s32, 3
    %p67 = por %p65, %p66
    %p69 = scmp.ne.s32.totalorder %s52, %s68
    %p70 = scmp.eq.s32.totalorder %s32, 0
    %p71 = por %p69, %p70
    %s72 = ssub.s32 %s33, %s45
    %p73 = scmp.eq.s32.totalorder %s72, 0
    %s75 = sadd.s32 %s74, 1
    %s76 = scalar_select %p73, %s74, %s75
    %p79 = pneg %p73
    %p80 = scmp.eq.s32.totalorder %s26, 3
    %p81 = por %p79, %p80
    %p82 = scmp.ne.s32.totalorder %s74, %s77
    %p83 = scmp.eq.s32.totalorder %s26, 0
    %p84 = por %p82, %p83
    %p85 = scmp.ne.s32.totalorder %s74, %s77
    %p86 = scmp.eq.s32.totalorder %s31, 3
    %p87 = por %p85, %p86
    %p88 = scmp.ne.s32.totalorder %s77, %s78
    %p89 = scmp.eq.s32.totalorder %s31, 0
    %p90 = por %p88, %p89
    %p91 = scmp.ne.s32.totalorder %s77, %s78
    %p92 = scmp.eq.s32.totalorder %s32, 3
    %p93 = por %p91, %p92
    %p95 = scmp.ne.s32.totalorder %s78, %s94
    %p96 = scmp.eq.s32.totalorder %s32, 0
    %p97 = por %p95, %p96
    %s99 = sadd.s32 %s98, 1
    %p102 = scmp.eq.s32.totalorder %s26, 3
    %p103 = scmp.ne.s32.totalorder %s98, %s100
    %p104 = scmp.eq.s32.totalorder %s26, 0
    %p105 = por %p103, %p104
    %p106 = scmp.ne.s32.totalorder %s98, %s100
    %p107 = scmp.eq.s32.totalorder %s31, 3
    %p108 = por %p106, %p107
    %p109 = scmp.ne.s32.totalorder %s100, %s101
    %p110 = scmp.eq.s32.totalorder %s31, 0
    %p111 = por %p109, %p110
    %p112 = scmp.ne.s32.totalorder %s100, %s101
    %p113 = scmp.eq.s32.totalorder %s32, 3
    %p114 = por %p112, %p113
    %p116 = scmp.ne.s32.totalorder %s101, %s115
    %p117 = scmp.eq.s32.totalorder %s32, 0
    %p118 = por %p116, %p117
    %s120 = sadd.s32 %s119, 1
    %p123 = scmp.eq.s32.totalorder %s26, 3
    %p124 = scmp.ne.s32.totalorder %s119, %s121
    %p125 = scmp.eq.s32.totalorder %s26, 0
    %p126 = por %p124, %p125
    %p127 = scmp.ne.s32.totalorder %s119, %s121
    %p128 = scmp.eq.s32.totalorder %s31, 3
    %p129 = por %p127, %p128
    %p130 = scmp.ne.s32.totalorder %s121, %s122
    %p131 = scmp.eq.s32.totalorder %s31, 0
    %p132 = por %p130, %p131
    %p133 = scmp.ne.s32.totalorder %s121, %s122
    %p134 = scmp.eq.s32.totalorder %s32, 3
    %p135 = por %p133, %p134
    %p137 = scmp.ne.s32.totalorder %s122, %s136
    %p138 = scmp.eq.s32.totalorder %s32, 0
    %p139 = por %p137, %p138
    %s140 = ssub.s32 %s34, %s41
    %p141 = scmp.eq.s32.totalorder %s140, 0
    %s143 = sadd.s32 %s142, 1
    %s144 = scalar_select %p141, %s142, %s143
    %p147 = pneg %p141
    %p148 = scmp.eq.s32.totalorder %s26, 3
    %p149 = por %p147, %p148
    %p150 = scmp.ne.s32.totalorder %s142, %s145
    %p151 = scmp.eq.s32.totalorder %s26, 0
    %p152 = por %p150, %p151
    %p153 = scmp.ne.s32.totalorder %s142, %s145
    %p154 = scmp.eq.s32.totalorder %s31, 3
    %p155 = por %p153, %p154
    %p156 = scmp.ne.s32.totalorder %s145, %s146
    %p157 = scmp.eq.s32.totalorder %s31, 0
    %p158 = por %p156, %p157
    %p159 = scmp.ne.s32.totalorder %s145, %s146
    %p160 = scmp.eq.s32.totalorder %s32, 3
    %p161 = por %p159, %p160
    %p163 = scmp.ne.s32.totalorder %s146, %s162
    %p164 = scmp.eq.s32.totalorder %s32, 0
    %p165 = por %p163, %p164
    %s166 = ssub.s32 %s34, %s41
    %p167 = scmp.eq.s32.totalorder %s166, 0
    %s169 = sadd.s32 %s168, 1
    %s170 = scalar_select %p167, %s168, %s169
    %p173 = pneg %p167
    %p174 = scmp.eq.s32.totalorder %s26, 3
    %p175 = por %p173, %p174
    %p176 = scmp.ne.s32.totalorder %s168, %s171
    %p177 = scmp.eq.s32.totalorder %s26, 0
    %p178 = por %p176, %p177
    %p179 = scmp.ne.s32.totalorder %s168, %s171
    %p180 = scmp.eq.s32.totalorder %s31, 3
    %p181 = por %p179, %p180
    %p182 = scmp.ne.s32.totalorder %s171, %s172
    %p183 = scmp.eq.s32.totalorder %s31, 0
    %p184 = por %p182, %p183
    %p185 = scmp.ne.s32.totalorder %s171, %s172
    %p186 = scmp.eq.s32.totalorder %s32, 3
    %p187 = por %p185, %p186
    %p189 = scmp.ne.s32.totalorder %s172, %s188
    %p190 = scmp.eq.s32.totalorder %s32, 0
    %p191 = por %p189, %p190
    %s192 = ssub.s32 %s34, %s41
    %p193 = scmp.eq.s32.totalorder %s192, 0
    %s195 = sadd.s32 %s194, 1
    %s196 = scalar_select %p193, %s194, %s195
    %p199 = pneg %p193
    %p200 = scmp.eq.s32.totalorder %s26, 3
    %p201 = por %p199, %p200
    %p202 = scmp.ne.s32.totalorder %s194, %s197
    %p203 = scmp.eq.s32.totalorder %s26, 0
    %p204 = por %p202, %p203
    %p205 = scmp.ne.s32.totalorder %s194, %s197
    %p206 = scmp.eq.s32.totalorder %s31, 3
    %p207 = por %p205, %p206
    %p208 = scmp.ne.s32.totalorder %s197, %s198
    %p209 = scmp.eq.s32.totalorder %s31, 0
    %p210 = por %p208, %p209
    %p211 = scmp.ne.s32.totalorder %s197, %s198
    %p212 = scmp.eq.s32.totalorder %s32, 3
    %p213 = por %p211, %p212
    %p215 = scmp.ne.s32.totalorder %s198, %s214
    %p216 = scmp.eq.s32.totalorder %s32, 0
    %p217 = por %p215, %p216
    %s218 = ssub.s32 %s34, %s41
    %p219 = scmp.eq.s32.totalorder %s218, 0
    %s221 = sadd.s32 %s220, 1
    %s222 = scalar_select %p219, %s220, %s221
    %p225 = pneg %p219
    %p226 = scmp.eq.s32.totalorder %s26, 3
    %p227 = por %p225, %p226
    %p228 = scmp.ne.s32.totalorder %s220, %s223
    %p229 = scmp.eq.s32.totalorder %s26, 0
    %p230 = por %p228, %p229
    %p231 = scmp.ne.s32.totalorder %s220, %s223
    %p232 = scmp.eq.s32.totalorder %s31, 3
    %p233 = por %p231, %p232
    %p234 = scmp.ne.s32.totalorder %s223, %s224
    %p235 = scmp.eq.s32.totalorder %s31, 0
    %p236 = por %p234, %p235
    %p237 = scmp.ne.s32.totalorder %s223, %s224
    %p238 = scmp.eq.s32.totalorder %s32, 3
    %p239 = por %p237, %p238
    %p241 = scmp.ne.s32.totalorder %s224, %s240
    %p242 = scmp.eq.s32.totalorder %s32, 0
    %p243 = por %p241, %p242
    %s244 = ssub.s32 %s34, %s41
    %p245 = scmp.eq.s32.totalorder %s244, 0
    %s247 = sadd.s32 %s246, 1
    %s248 = scalar_select %p245, %s246, %s247
    %p251 = pneg %p245
    %p252 = scmp.eq.s32.totalorder %s26, 3
    %p253 = por %p251, %p252
    %p254 = scmp.ne.s32.totalorder %s246, %s249
    %p255 = scmp.eq.s32.totalorder %s26, 0
    %p256 = por %p254, %p255
    %p257 = scmp.ne.s32.totalorder %s246, %s249
    %p258 = scmp.eq.s32.totalorder %s31, 3
    %p259 = por %p257, %p258
    %p260 = scmp.ne.s32.totalorder %s249, %s250
    %p261 = scmp.eq.s32.totalorder %s31, 0
    %p262 = por %p260, %p261
    %p263 = scmp.ne.s32.totalorder %s249, %s250
    %p264 = scmp.eq.s32.totalorder %s32, 3
    %p265 = por %p263, %p264
    %p267 = scmp.ne.s32.totalorder %s250, %s266
    %p268 = scmp.eq.s32.totalorder %s32, 0
    %p269 = por %p267, %p268
    %s270 = ssub.s32 %s34, %s41
    %p271 = scmp.eq.s32.totalorder %s270, 0
    %s273 = sadd.s32 %s272, 1
    %s274 = scalar_select %p271, %s272, %s273
    %p277 = pneg %p271
    %p278 = scmp.eq.s32.totalorder %s26, 3
    %p279 = por %p277, %p278
    %p280 = scmp.ne.s32.totalorder %s272, %s275
    %p281 = scmp.eq.s32.totalorder %s26, 0
    %p282 = por %p280, %p281
    %p283 = scmp.ne.s32.totalorder %s272, %s275
    %p284 = scmp.eq.s32.totalorder %s31, 3
    %p285 = por %p283, %p284
    %p286 = scmp.ne.s32.totalorder %s275, %s276
    %p287 = scmp.eq.s32.totalorder %s31, 0
    %p288 = por %p286, %p287
    %p289 = scmp.ne.s32.totalorder %s275, %s276
    %p290 = scmp.eq.s32.totalorder %s32, 3
    %p291 = por %p289, %p290
    %p293 = scmp.ne.s32.totalorder %s276, %s292
    %p294 = scmp.eq.s32.totalorder %s32, 0
    %p295 = por %p293, %p294
    %s296 = ssub.s32 %s34, %s41
    %p297 = scmp.eq.s32.totalorder %s296, 0
    %s299 = sadd.s32 %s298, 1
    %s300 = scalar_select %p297, %s298, %s299
    %p303 = pneg %p297
    %p304 = scmp.eq.s32.totalorder %s26, 3
    %p305 = por %p303, %p304
    %p306 = scmp.ne.s32.totalorder %s298, %s301
    %p307 = scmp.eq.s32.totalorder %s26, 0
    %p308 = por %p306, %p307
    %p309 = scmp.ne.s32.totalorder %s298, %s301
    %p310 = scmp.eq.s32.totalorder %s31, 3
    %p311 = por %p309, %p310
    %p312 = scmp.ne.s32.totalorder %s301, %s302
    %p313 = scmp.eq.s32.totalorder %s31, 0
    %p314 = por %p312, %p313
    %p315 = scmp.ne.s32.totalorder %s301, %s302
    %p316 = scmp.eq.s32.totalorder %s32, 3
    %p317 = por %p315, %p316
    %p319 = scmp.ne.s32.totalorder %s302, %s318
    %p320 = scmp.eq.s32.totalorder %s32, 0
    %p321 = por %p319, %p320
    %s322 = ssub.s32 %s34, %s41
    %p323 = scmp.eq.s32.totalorder %s322, 0
    %s325 = sadd.s32 %s324, 1
    %s326 = scalar_select %p323, %s324, %s325
    %p329 = pneg %p323
    %p330 = scmp.eq.s32.totalorder %s26, 3
    %p331 = por %p329, %p330
    %p332 = scmp.ne.s32.totalorder %s324, %s327
    %p333 = scmp.eq.s32.totalorder %s26, 0
    %p334 = por %p332, %p333
    %p335 = scmp.ne.s32.totalorder %s324, %s327
    %p336 = scmp.eq.s32.totalorder %s31, 3
    %p337 = por %p335, %p336
    %p338 = scmp.ne.s32.totalorder %s327, %s328
    %p339 = scmp.eq.s32.totalorder %s31, 0
    %p340 = por %p338, %p339
    %p341 = scmp.ne.s32.totalorder %s327, %s328
    %p342 = scmp.eq.s32.totalorder %s32, 3
    %p343 = por %p341, %p342
    %p345 = scmp.ne.s32.totalorder %s328, %s344
    %p346 = scmp.eq.s32.totalorder %s32, 0
    %p347 = por %p345, %p346
    %s348 = ssub.s32 %s34, %s41
    %p349 = scmp.eq.s32.totalorder %s348, 0
    %s351 = sadd.s32 %s350, 1
    %s352 = scalar_select %p349, %s350, %s351
    %p355 = pneg %p349
    %p356 = scmp.eq.s32.totalorder %s26, 3
    %p357 = por %p355, %p356
    %p358 = scmp.ne.s32.totalorder %s350, %s353
    %p359 = scmp.eq.s32.totalorder %s26, 0
    %p360 = por %p358, %p359
    %p361 = scmp.ne.s32.totalorder %s350, %s353
    %p362 = scmp.eq.s32.totalorder %s31, 3
    %p363 = por %p361, %p362
    %p364 = scmp.ne.s32.totalorder %s353, %s354
    %p365 = scmp.eq.s32.totalorder %s31, 0
    %p366 = por %p364, %p365
    %p367 = scmp.ne.s32.totalorder %s353, %s354
    %p368 = scmp.eq.s32.totalorder %s32, 3
    %p369 = por %p367, %p368
    %p371 = scmp.ne.s32.totalorder %s354, %s370
    %p372 = scmp.eq.s32.totalorder %s32, 0
    %p373 = por %p371, %p372
    %s374 = ssub.s32 %s34, %s41
    %p375 = scmp.eq.s32.totalorder %s374, 0
    %s377 = sadd.s32 %s376, 1
    %s378 = scalar_select %p375, %s376, %s377
    %p381 = pneg %p375
    %p382 = scmp.eq.s32.totalorder %s26, 3
    %p383 = por %p381, %p382
    %p384 = scmp.ne.s32.totalorder %s376, %s379
    %p385 = scmp.eq.s32.totalorder %s26, 0
    %p386 = por %p384, %p385
    %p387 = scmp.ne.s32.totalorder %s376, %s379
    %p388 = scmp.eq.s32.totalorder %s31, 3
    %p389 = por %p387, %p388
    %p390 = scmp.ne.s32.totalorder %s379, %s380
    %p391 = scmp.eq.s32.totalorder %s31, 0
    %p392 = por %p390, %p391
    %p393 = scmp.ne.s32.totalorder %s379, %s380
    %p394 = scmp.eq.s32.totalorder %s32, 3
    %p395 = por %p393, %p394
    %p397 = scmp.ne.s32.totalorder %s380, %s396
    %p398 = scmp.eq.s32.totalorder %s32, 0
    %p399 = por %p397, %p398
    %s400 = ssub.s32 %s34, %s41
    %p401 = scmp.eq.s32.totalorder %s400, 0
    %s403 = sadd.s32 %s402, 1
    %s404 = scalar_select %p401, %s402, %s403
    %p407 = pneg %p401
    %p408 = scmp.eq.s32.totalorder %s26, 3
    %p409 = por %p407, %p408
    %p410 = scmp.ne.s32.totalorder %s402, %s405
    %p411 = scmp.eq.s32.totalorder %s26, 0
    %p412 = por %p410, %p411
    %p413 = scmp.ne.s32.totalorder %s402, %s405
    %p414 = scmp.eq.s32.totalorder %s31, 3
    %p415 = por %p413, %p414
    %p416 = scmp.ne.s32.totalorder %s405, %s406
    %p417 = scmp.eq.s32.totalorder %s31, 0
    %p418 = por %p416, %p417
    %p419 = scmp.ne.s32.totalorder %s405, %s406
    %p420 = scmp.eq.s32.totalorder %s32, 3
    %p421 = por %p419, %p420
    %p423 = scmp.ne.s32.totalorder %s406, %s422
    %p424 = scmp.eq.s32.totalorder %s32, 0
    %p425 = por %p423, %p424
    %s426 = ssub.s32 %s34, %s41
    %p427 = scmp.eq.s32.totalorder %s426, 0
    %s429 = sadd.s32 %s428, 1
    %s430 = scalar_select %p427, %s428, %s429
    %p433 = pneg %p427
    %p434 = scmp.eq.s32.totalorder %s26, 3
    %p435 = por %p433, %p434
    %p436 = scmp.ne.s32.totalorder %s428, %s431
    %p437 = scmp.eq.s32.totalorder %s26, 0
    %p438 = por %p436, %p437
    %p439 = scmp.ne.s32.totalorder %s428, %s431
    %p440 = scmp.eq.s32.totalorder %s31, 3
    %p441 = por %p439, %p440
    %p442 = scmp.ne.s32.totalorder %s431, %s432
    %p443 = scmp.eq.s32.totalorder %s31, 0
    %p444 = por %p442, %p443
    %p445 = scmp.ne.s32.totalorder %s431, %s432
    %p446 = scmp.eq.s32.totalorder %s32, 3
    %p447 = por %p445, %p446
    %p449 = scmp.ne.s32.totalorder %s432, %s448
    %p450 = scmp.eq.s32.totalorder %s32, 0
    %p451 = por %p449, %p450
    %s452 = ssub.s32 %s34, %s41
    %p453 = scmp.eq.s32.totalorder %s452, 0
    %s455 = sadd.s32 %s454, 1
    %s456 = scalar_select %p453, %s454, %s455
    %p459 = pneg %p453
    %p460 = scmp.eq.s32.totalorder %s26, 3
    %p461 = por %p459, %p460
    %p462 = scmp.ne.s32.totalorder %s454, %s457
    %p463 = scmp.eq.s32.totalorder %s26, 0
    %p464 = por %p462, %p463
    %p465 = scmp.ne.s32.totalorder %s454, %s457
    %p466 = scmp.eq.s32.totalorder %s31, 3
    %p467 = por %p465, %p466
    %p468 = scmp.ne.s32.totalorder %s457, %s458
    %p469 = scmp.eq.s32.totalorder %s31, 0
    %p470 = por %p468, %p469
    %p471 = scmp.ne.s32.totalorder %s457, %s458
    %p472 = scmp.eq.s32.totalorder %s32, 3
    %p473 = por %p471, %p472
    %p475 = scmp.ne.s32.totalorder %s458, %s474
    %p476 = scmp.eq.s32.totalorder %s32, 0
    %p477 = por %p475, %p476
    %s478 = ssub.s32 %s34, %s41
    %p479 = scmp.eq.s32.totalorder %s478, 0
    %s481 = sadd.s32 %s480, 1
    %s482 = scalar_select %p479, %s480, %s481
    %p485 = pneg %p479
    %p486 = scmp.eq.s32.totalorder %s26, 3
    %p487 = por %p485, %p486
    %p488 = scmp.ne.s32.totalorder %s480, %s483
    %p489 = scmp.eq.s32.totalorder %s26, 0
    %p490 = por %p488, %p489
    %p491 = scmp.ne.s32.totalorder %s480, %s483
    %p492 = scmp.eq.s32.totalorder %s31, 3
    %p493 = por %p491, %p492
    %p494 = scmp.ne.s32.totalorder %s483, %s484
    %p495 = scmp.eq.s32.totalorder %s31, 0
    %p496 = por %p494, %p495
    %p497 = scmp.ne.s32.totalorder %s483, %s484
    %p498 = scmp.eq.s32.totalorder %s32, 3
    %p499 = por %p497, %p498
    %p501 = scmp.ne.s32.totalorder %s484, %s500
    %p502 = scmp.eq.s32.totalorder %s32, 0
    %p503 = por %p501, %p502
    %s504 = ssub.s32 %s34, %s41
    %p505 = scmp.eq.s32.totalorder %s504, 0
    %s507 = sadd.s32 %s506, 1
    %s508 = scalar_select %p505, %s506, %s507
    %p511 = pneg %p505
    %p512 = scmp.eq.s32.totalorder %s26, 3
    %p513 = por %p511, %p512
    %p514 = scmp.ne.s32.totalorder %s506, %s509
    %p515 = scmp.eq.s32.totalorder %s26, 0
    %p516 = por %p514, %p515
    %p517 = scmp.ne.s32.totalorder %s506, %s509
    %p518 = scmp.eq.s32.totalorder %s31, 3
    %p519 = por %p517, %p518
    %p520 = scmp.ne.s32.totalorder %s509, %s510
    %p521 = scmp.eq.s32.totalorder %s31, 0
    %p522 = por %p520, %p521
    %p523 = scmp.ne.s32.totalorder %s509, %s510
    %p524 = scmp.eq.s32.totalorder %s32, 3
    %p525 = por %p523, %p524
    %p527 = scmp.ne.s32.totalorder %s510, %s526
    %p528 = scmp.eq.s32.totalorder %s32, 0
    %p529 = por %p527, %p528
    %s530 = ssub.s32 %s34, %s41
    %p531 = scmp.eq.s32.totalorder %s530, 0
    %s533 = sadd.s32 %s532, 1
    %s534 = scalar_select %p531, %s532, %s533
    %p537 = pneg %p531
    %p538 = scmp.eq.s32.totalorder %s26, 3
    %p539 = por %p537, %p538
    %p540 = scmp.ne.s32.totalorder %s532, %s535
    %p541 = scmp.eq.s32.totalorder %s26, 0
    %p542 = por %p540, %p541
    %p543 = scmp.ne.s32.totalorder %s532, %s535
    %p544 = scmp.eq.s32.totalorder %s31, 3
    %p545 = por %p543, %p544
    %p546 = scmp.ne.s32.totalorder %s535, %s536
    %p547 = scmp.eq.s32.totalorder %s31, 0
    %p548 = por %p546, %p547
    %p549 = scmp.ne.s32.totalorder %s535, %s536
    %p550 = scmp.eq.s32.totalorder %s32, 3
    %p551 = por %p549, %p550
    %p553 = scmp.ne.s32.totalorder %s536, %s552
    %p554 = scmp.eq.s32.totalorder %s32, 0
    %p555 = por %p553, %p554
    %s556 = ssub.s32 %s33, %s45
    %p557 = scmp.eq.s32.totalorder %s556, 0
    %s559 = sadd.s32 %s558, 1
    %s560 = scalar_select %p557, %s558, %s559
    %p563 = pneg %p557
    %p564 = scmp.eq.s32.totalorder %s26, 3
    %p565 = por %p563, %p564
    %p566 = scmp.ne.s32.totalorder %s558, %s561
    %p567 = scmp.eq.s32.totalorder %s26, 0
    %p568 = por %p566, %p567
    %p569 = scmp.ne.s32.totalorder %s558, %s561
    %p570 = scmp.eq.s32.totalorder %s31, 3
    %p571 = por %p569, %p570
    %p572 = scmp.ne.s32.totalorder %s561, %s562
    %p573 = scmp.eq.s32.totalorder %s31, 0
    %p574 = por %p572, %p573
    %p575 = scmp.ne.s32.totalorder %s561, %s562
    %p576 = scmp.eq.s32.totalorder %s32, 3
    %p577 = por %p575, %p576
    %p579 = scmp.ne.s32.totalorder %s562, %s578
    %p580 = scmp.eq.s32.totalorder %s32, 0
    %p581 = por %p579, %p580
    %p582 = scmp.le.s32.totalorder 1, %s26
    %p583 = scmp.lt.s32.totalorder %s26, 5
    %p584 = pnand %p582, %p583
    %p585 = pneg %p584
    // Predicated region
    $region9: #{_lambda_.4} parent=5 // pred_check
      _
    $region10: #{_lambda_.4} parent=5 // pred_check_branch
      %587 = sbr.rel (%p584) target = $region12
    $region11: #{_lambda_.4} parent=5 // pred_region
      %s588 = ssub.s32 %s26, 1
      // Predicated region
      $region13: #{_lambda_.4} parent=11 // pred_check
        %p589 = pneg %p111
      $region14: #{_lambda_.4} parent=11 // pred_check_branch
        %591 = sbr.rel (%p589) target = $region16
      $region15: #{_lambda_.4} parent=11 // pred_region
        _
      $region16: #{_lambda_.4} parent=11 // pred_fallthru
        _
      // Predicated region
      $region17: #{_lambda_.4} parent=11 // pred_check
        %p592 = pneg %p132
      $region18: #{_lambda_.4} parent=11 // pred_check_branch
        %594 = sbr.rel (%p592) target = $region20
      $region19: #{_lambda_.4} parent=11 // pred_region
        _
      $region20: #{_lambda_.4} parent=11 // pred_fallthru
        _
    $region12: #{_lambda_.4} parent=5 // pred_fallthru
      _
    %p595 = scmp.lt.s32.totalorder %s26, 4
    // Predicated region
    $region21: #{_lambda_.4} parent=5 // pred_check
      %p596 = pneg %p595
    $region22: #{_lambda_.4} parent=5 // pred_check_branch
      %598 = sbr.rel (%p596) target = $region24
    $region23: #{_lambda_.4} parent=5 // pred_region
      // Predicated region
      $region25: #{_lambda_.4} parent=23 // pred_check
        %p599 = pneg %p58
      $region26: #{_lambda_.4} parent=23 // pred_check_branch
        %601 = sbr.rel (%p599) target = $region28
      $region27: #{_lambda_.4} parent=23 // pred_region
        %p602 = scmp.lt.s32.totalorder %s33, 1
        %s603 = scalar_select %p602, %s33, 1
        %s604 = smul.addr %s603, 8
        %s605 = scalar_lea.vmem %s0, %s604
      $region28: #{_lambda_.4} parent=23 // pred_fallthru
        _
      // Predicated region
      $region29: #{_lambda_.4} parent=23 // pred_check
        %p606 = pneg %p84
      $region30: #{_lambda_.4} parent=23 // pred_check_branch
        %608 = sbr.rel (%p606) target = $region32
      $region31: #{_lambda_.4} parent=23 // pred_region
        %p609 = scmp.lt.s32.totalorder %s33, 1
        %s610 = scalar_select %p609, %s33, 1
        %s611 = scalar_lea.vmem %s1, %s610
      $region32: #{_lambda_.4} parent=23 // pred_fallthru
        _
      // Predicated region
      $region33: #{_lambda_.4} parent=23 // pred_check
        %p612 = pneg %p152
      $region34: #{_lambda_.4} parent=23 // pred_check_branch
        %614 = sbr.rel (%p612) target = $region36
      $region35: #{_lambda_.4} parent=23 // pred_region
        %s615 = smul.u32 4, %s34
        %p616 = scmp.lt.s32.totalorder %s615, 7
        %s617 = scalar_select %p616, %s615, 7
        %s618 = smul.addr %s617, 4
        %s619 = smul.addr %s618, 8
        %s620 = scalar_lea.vmem %s4, %s619
        %s621 = smul.u32 4, %s34
      $region36: #{_lambda_.4} parent=23 // pred_fallthru
        _
      // Predicated region
      $region37: #{_lambda_.4} parent=23 // pred_check
        %p622 = pneg %p178
      $region38: #{_lambda_.4} parent=23 // pred_check_branch
        %624 = sbr.rel (%p622) target = $region40
      $region39: #{_lambda_.4} parent=23 // pred_region
        %s625 = smul.u32 4, %s34
        %p626 = scmp.lt.s32.totalorder %s625, 7
        %s627 = scalar_select %p626, %s625, 7
        %s628 = scalar_lea.vmem %s5, %s627
        %s629 = smul.u32 4, %s34
      $region40: #{_lambda_.4} parent=23 // pred_fallthru
        _
      // Predicated region
      $region41: #{_lambda_.4} parent=23 // pred_check
        %p630 = pneg %p204
      $region42: #{_lambda_.4} parent=23 // pred_check_branch
        %632 = sbr.rel (%p630) target = $region44
      $region43: #{_lambda_.4} parent=23 // pred_region
        %s633 = smul.u32 4, %s34
        %p634 = scmp.lt.s32.totalorder %s633, 7
        %s635 = scalar_select %p634, %s633, 7
        %s636 = smul.addr %s635, 4
        %s637 = smul.addr %s636, 8
        %s638 = scalar_lea.vmem %s6, %s637
        %s639 = smul.u32 4, %s34
      $region44: #{_lambda_.4} parent=23 // pred_fallthru
        _
      // Predicated region
      $region45: #{_lambda_.4} parent=23 // pred_check
        %p640 = pneg %p230
      $region46: #{_lambda_.4} parent=23 // pred_check_branch
        %642 = sbr.rel (%p640) target = $region48
      $region47: #{_lambda_.4} parent=23 // pred_region
        %s643 = smul.u32 4, %s34
        %p644 = scmp.lt.s32.totalorder %s643, 7
        %s645 = scalar_select %p644, %s643, 7
        %s646 = scalar_lea.vmem %s7, %s645
        %s647 = smul.u32 4, %s34
      $region48: #{_lambda_.4} parent=23 // pred_fallthru
        _
      // Predicated region
      $region49: #{_lambda_.4} parent=23 // pred_check
        %p648 = pneg %p256
      $region50: #{_lambda_.4} parent=23 // pred_check_branch
        %650 = sbr.rel (%p648) target = $region52
      $region51: #{_lambda_.4} parent=23 // pred_region
        %s651 = smul.u32 4, %s34
        %p652 = scmp.lt.s32.totalorder %s651, 7
        %s653 = scalar_select %p652, %s651, 7
        %s654 = smul.addr %s653, 4
        %s655 = smul.addr %s654, 8
        %s656 = scalar_lea.vmem %s8, %s655
        %s657 = smul.u32 4, %s34
      $region52: #{_lambda_.4} parent=23 // pred_fallthru
        _
      // Predicated region
      $region53: #{_lambda_.4} parent=23 // pred_check
        %p658 = pneg %p282
      $region54: #{_lambda_.4} parent=23 // pred_check_branch
        %660 = sbr.rel (%p658) target = $region56
      $region55: #{_lambda_.4} parent=23 // pred_region
        %s661 = smul.u32 4, %s34
        %p662 = scmp.lt.s32.totalorder %s661, 7
        %s663 = scalar_select %p662, %s661, 7
        %s664 = scalar_lea.vmem %s9, %s663
        %s665 = smul.u32 4, %s34
      $region56: #{_lambda_.4} parent=23 // pred_fallthru
        _
      // Predicated region
      $region57: #{_lambda_.4} parent=23 // pred_check
        %p666 = pneg %p308
      $region58: #{_lambda_.4} parent=23 // pred_check_branch
        %668 = sbr.rel (%p666) target = $region60
      $region59: #{_lambda_.4} parent=23 // pred_region
        %s669 = smul.u32 4, %s34
        %p670 = scmp.lt.s32.totalorder %s669, 7
        %s671 = scalar_select %p670, %s669, 7
        %s672 = smul.addr %s671, 8
        %s673 = scalar_lea.vmem %s10, %s672
        %s674 = smul.u32 4, %s34
      $region60: #{_lambda_.4} parent=23 // pred_fallthru
        _
      // Predicated region
      $region61: #{_lambda_.4} parent=23 // pred_check
        %p675 = pneg %p334
      $region62: #{_lambda_.4} parent=23 // pred_check_branch
        %677 = sbr.rel (%p675) target = $region64
      $region63: #{_lambda_.4} parent=23 // pred_region
        %p678 = scmp.lt.s32.totalorder %s34, 1
        %s679 = scalar_select %p678, %s34, 1
        %s680 = scalar_lea.vmem %s11, %s679
      $region64: #{_lambda_.4} parent=23 // pred_fallthru
        _
      // Predicated region
      $region65: #{_lambda_.4} parent=23 // pred_check
        %p681 = pneg %p360
      $region66: #{_lambda_.4} parent=23 // pred_check_branch
        %683 = sbr.rel (%p681) target = $region68
      $region67: #{_lambda_.4} parent=23 // pred_region
        %p684 = scmp.lt.s32.totalorder %s34, 1
        %s685 = scalar_select %p684, %s34, 1
        %s686 = scalar_lea.vmem %s12, %s685
      $region68: #{_lambda_.4} parent=23 // pred_fallthru
        _
      // Predicated region
      $region69: #{_lambda_.4} parent=23 // pred_check
        %p687 = pneg %p386
      $region70: #{_lambda_.4} parent=23 // pred_check_branch
        %689 = sbr.rel (%p687) target = $region72
      $region71: #{_lambda_.4} parent=23 // pred_region
        %p690 = scmp.lt.s32.totalorder %s34, 1
        %s691 = scalar_select %p690, %s34, 1
        %s692 = scalar_lea.vmem %s13, %s691
      $region72: #{_lambda_.4} parent=23 // pred_fallthru
        _
      // Predicated region
      $region73: #{_lambda_.4} parent=23 // pred_check
        %p693 = pneg %p412
      $region74: #{_lambda_.4} parent=23 // pred_check_branch
        %695 = sbr.rel (%p693) target = $region76
      $region75: #{_lambda_.4} parent=23 // pred_region
        %p696 = scmp.lt.s32.totalorder %s34, 1
        %s697 = scalar_select %p696, %s34, 1
        %s698 = smul.addr %s697, 4
        %s699 = smul.addr %s698, 8
        %s700 = scalar_lea.vmem %s14, %s699
      $region76: #{_lambda_.4} parent=23 // pred_fallthru
        _
      // Predicated region
      $region77: #{_lambda_.4} parent=23 // pred_check
        %p701 = pneg %p438
      $region78: #{_lambda_.4} parent=23 // pred_check_branch
        %703 = sbr.rel (%p701) target = $region80
      $region79: #{_lambda_.4} parent=23 // pred_region
        %p704 = scmp.lt.s32.totalorder %s34, 1
        %s705 = scalar_select %p704, %s34, 1
        %s706 = scalar_lea.vmem %s15, %s705
      $region80: #{_lambda_.4} parent=23 // pred_fallthru
        _
      // Predicated region
      $region81: #{_lambda_.4} parent=23 // pred_check
        %p707 = pneg %p464
      $region82: #{_lambda_.4} parent=23 // pred_check_branch
        %709 = sbr.rel (%p707) target = $region84
      $region83: #{_lambda_.4} parent=23 // pred_region
        %p710 = scmp.lt.s32.totalorder %s34, 1
        %s711 = scalar_select %p710, %s34, 1
        %s712 = smul.addr %s711, 8
        %s713 = smul.addr %s712, 8
        %s714 = scalar_lea.vmem %s16, %s713
      $region84: #{_lambda_.4} parent=23 // pred_fallthru
        _
      // Predicated region
      $region85: #{_lambda_.4} parent=23 // pred_check
        %p715 = pneg %p490
      $region86: #{_lambda_.4} parent=23 // pred_check_branch
        %717 = sbr.rel (%p715) target = $region88
      $region87: #{_lambda_.4} parent=23 // pred_region
        %p718 = scmp.lt.s32.totalorder %s34, 1
        %s719 = scalar_select %p718, %s34, 1
        %s720 = scalar_lea.vmem %s17, %s719
      $region88: #{_lambda_.4} parent=23 // pred_fallthru
        _
      // Predicated region
      $region89: #{_lambda_.4} parent=23 // pred_check
        %p721 = pneg %p516
      $region90: #{_lambda_.4} parent=23 // pred_check_branch
        %723 = sbr.rel (%p721) target = $region92
      $region91: #{_lambda_.4} parent=23 // pred_region
        %p724 = scmp.lt.s32.totalorder %s34, 1
        %s725 = scalar_select %p724, %s34, 1
        %s726 = scalar_lea.vmem %s18, %s725
      $region92: #{_lambda_.4} parent=23 // pred_fallthru
        _
      // Predicated region
      $region93: #{_lambda_.4} parent=23 // pred_check
        %p727 = pneg %p542
      $region94: #{_lambda_.4} parent=23 // pred_check_branch
        %729 = sbr.rel (%p727) target = $region96
      $region95: #{_lambda_.4} parent=23 // pred_region
        %p730 = scmp.lt.s32.totalorder %s34, 1
        %s731 = scalar_select %p730, %s34, 1
        %s732 = scalar_lea.vmem %s19, %s731
      $region96: #{_lambda_.4} parent=23 // pred_fallthru
        _
    $region24: #{_lambda_.4} parent=5 // pred_fallthru
      _
    %p733 = scmp.le.s32.totalorder 1, %s26
    %p734 = scmp.lt.s32.totalorder %s26, 5
    %p735 = pnand %p733, %p734
    %p736 = pneg %p735
    // Predicated region
    $region97: #{_lambda_.4} parent=5 // pred_check
      _
    $region98: #{_lambda_.4} parent=5 // pred_check_branch
      %738 = sbr.rel (%p735) target = $region100
    $region99: #{_lambda_.4} parent=5 // pred_region
      %s739 = ssub.s32 %s26, 1
      %p740 = scmp.lt.s32.totalorder %s35, 1
      %s741 = scalar_select %p740, %s35, 1
      %s742 = smul.addr %s741, 8
      %s743 = scalar_lea.vmem %s0, %s742
      %p744 = pneg %p64
      %p745 = pneg %p61
      %p746 = scmp.lt.s32.totalorder %s35, 1
      %s747 = scalar_select %p746, %s35, 1
      %s748 = scalar_lea.vmem %s1, %s747
      %p749 = pneg %p90
      %p750 = pneg %p87
      %p751 = pneg %p111
      %p752 = pneg %p108
      %p753 = pneg %p132
      %p754 = pneg %p129
      %s755 = smul.u32 4, %s36
      %p756 = scmp.lt.s32.totalorder %s755, 7
      %s757 = scalar_select %p756, %s755, 7
      %s758 = smul.addr %s757, 4
      %s759 = smul.addr %s758, 8
      %s760 = scalar_lea.vmem %s4, %s759
      %p761 = pneg %p158
      %p762 = pneg %p155
      %s763 = smul.u32 4, %s36
      %p764 = scmp.lt.s32.totalorder %s763, 7
      %s765 = scalar_select %p764, %s763, 7
      %s766 = scalar_lea.vmem %s5, %s765
      %p767 = pneg %p184
      %p768 = pneg %p181
      %s769 = smul.u32 4, %s36
      %p770 = scmp.lt.s32.totalorder %s769, 7
      %s771 = scalar_select %p770, %s769, 7
      %s772 = smul.addr %s771, 4
      %s773 = smul.addr %s772, 8
      %s774 = scalar_lea.vmem %s6, %s773
      %p775 = pneg %p210
      %p776 = pneg %p207
      %s777 = smul.u32 4, %s36
      %p778 = scmp.lt.s32.totalorder %s777, 7
      %s779 = scalar_select %p778, %s777, 7
      %s780 = scalar_lea.vmem %s7, %s779
      %p781 = pneg %p236
      %p782 = pneg %p233
      %s783 = smul.u32 4, %s36
      %p784 = scmp.lt.s32.totalorder %s783, 7
      %s785 = scalar_select %p784, %s783, 7
      %s786 = smul.addr %s785, 4
      %s787 = smul.addr %s786, 8
      %s788 = scalar_lea.vmem %s8, %s787
      %p789 = pneg %p262
      %p790 = pneg %p259
      %s791 = smul.u32 4, %s36
      %p792 = scmp.lt.s32.totalorder %s791, 7
      %s793 = scalar_select %p792, %s791, 7
      %s794 = scalar_lea.vmem %s9, %s793
      %p795 = pneg %p288
      %p796 = pneg %p285
      %s797 = smul.u32 4, %s36
      %p798 = scmp.lt.s32.totalorder %s797, 7
      %s799 = scalar_select %p798, %s797, 7
      %s800 = smul.addr %s799, 8
      %s801 = scalar_lea.vmem %s10, %s800
      %p802 = pneg %p314
      %p803 = pneg %p311
      %p804 = scmp.lt.s32.totalorder %s36, 1
      %s805 = scalar_select %p804, %s36, 1
      %s806 = scalar_lea.vmem %s11, %s805
      %p807 = pneg %p340
      %p808 = pneg %p337
      %p809 = scmp.lt.s32.totalorder %s36, 1
      %s810 = scalar_select %p809, %s36, 1
      %s811 = scalar_lea.vmem %s12, %s810
      %p812 = pneg %p366
      %p813 = pneg %p363
      %p814 = scmp.lt.s32.totalorder %s36, 1
      %s815 = scalar_select %p814, %s36, 1
      %s816 = scalar_lea.vmem %s13, %s815
      %p817 = pneg %p392
      %p818 = pneg %p389
      %p819 = scmp.lt.s32.totalorder %s36, 1
      %s820 = scalar_select %p819, %s36, 1
      %s821 = smul.addr %s820, 4
      %s822 = smul.addr %s821, 8
      %s823 = scalar_lea.vmem %s14, %s822
      %p824 = pneg %p418
      %p825 = pneg %p415
      %p826 = scmp.lt.s32.totalorder %s36, 1
      %s827 = scalar_select %p826, %s36, 1
      %s828 = scalar_lea.vmem %s15, %s827
      %p829 = pneg %p444
      %p830 = pneg %p441
      %p831 = scmp.lt.s32.totalorder %s36, 1
      %s832 = scalar_select %p831, %s36, 1
      %s833 = smul.addr %s832, 8
      %s834 = smul.addr %s833, 8
      %s835 = scalar_lea.vmem %s16, %s834
      %p836 = pneg %p470
      %p837 = pneg %p467
      %p838 = scmp.lt.s32.totalorder %s36, 1
      %s839 = scalar_select %p838, %s36, 1
      %s840 = scalar_lea.vmem %s17, %s839
      %p841 = pneg %p496
      %p842 = pneg %p493
      %p843 = scmp.lt.s32.totalorder %s36, 1
      %s844 = scalar_select %p843, %s36, 1
      %s845 = scalar_lea.vmem %s18, %s844
      %p846 = pneg %p522
      %p847 = pneg %p519
      %p848 = scmp.lt.s32.totalorder %s36, 1
      %s849 = scalar_select %p848, %s36, 1
      %s850 = scalar_lea.vmem %s19, %s849
      %p851 = pneg %p548
      %p852 = pneg %p545
      %p853 = pneg %p574
      %p854 = pneg %p571
      %p855 = scmp.lt.s32.totalorder %s35, 1
      %s856 = scalar_select %p855, %s35, 1
      %s857 = smul.addr %s856, 8
      %s858 = scalar_lea.vmem %s20, %s857
      %p859 = scmp.lt.s32.totalorder %s35, 1
      %s860 = scalar_select %p859, %s35, 1
      %s861 = smul.addr %s860, 8
      %s862 = scalar_lea.vmem %s0, %s861
      %p863 = scmp.lt.s32.totalorder %s35, 1
      %s864 = scalar_select %p863, %s35, 1
      %s865 = scalar_lea.vmem %s1, %s864
      %s866 = smul.u32 4, %s36
      %p867 = scmp.lt.s32.totalorder %s866, 7
      %s868 = scalar_select %p867, %s866, 7
      %s869 = smul.addr %s868, 4
      %s870 = smul.addr %s869, 8
      %s871 = scalar_lea.vmem %s4, %s870
      %s872 = smul.u32 4, %s36
      %s873 = smul.u32 4, %s36
      %p874 = scmp.lt.s32.totalorder %s873, 7
      %s875 = scalar_select %p874, %s873, 7
      %s876 = scalar_lea.vmem %s5, %s875
      %s877 = smul.u32 4, %s36
      %s878 = smul.u32 4, %s36
      %p879 = scmp.lt.s32.totalorder %s878, 7
      %s880 = scalar_select %p879, %s878, 7
      %s881 = smul.addr %s880, 4
      %s882 = smul.addr %s881, 8
      %s883 = scalar_lea.vmem %s6, %s882
      %s884 = smul.u32 4, %s36
      %s885 = smul.u32 4, %s36
      %p886 = scmp.lt.s32.totalorder %s885, 7
      %s887 = scalar_select %p886, %s885, 7
      %s888 = scalar_lea.vmem %s7, %s887
      %s889 = smul.u32 4, %s36
      %s890 = smul.u32 4, %s36
      %p891 = scmp.lt.s32.totalorder %s890, 7
      %s892 = scalar_select %p891, %s890, 7
      %s893 = smul.addr %s892, 4
      %s894 = smul.addr %s893, 8
      %s895 = scalar_lea.vmem %s8, %s894
      %s896 = smul.u32 4, %s36
      %s897 = smul.u32 4, %s36
      %p898 = scmp.lt.s32.totalorder %s897, 7
      %s899 = scalar_select %p898, %s897, 7
      %s900 = scalar_lea.vmem %s9, %s899
      %s901 = smul.u32 4, %s36
      %s902 = smul.u32 4, %s36
      %p903 = scmp.lt.s32.totalorder %s902, 7
      %s904 = scalar_select %p903, %s902, 7
      %s905 = smul.addr %s904, 8
      %s906 = scalar_lea.vmem %s10, %s905
      %s907 = smul.u32 4, %s36
      %p908 = scmp.lt.s32.totalorder %s36, 1
      %s909 = scalar_select %p908, %s36, 1
      %s910 = scalar_lea.vmem %s11, %s909
      %p911 = scmp.lt.s32.totalorder %s36, 1
      %s912 = scalar_select %p911, %s36, 1
      %s913 = scalar_lea.vmem %s12, %s912
      %p914 = scmp.lt.s32.totalorder %s36, 1
      %s915 = scalar_select %p914, %s36, 1
      %s916 = scalar_lea.vmem %s13, %s915
      %p917 = scmp.lt.s32.totalorder %s36, 1
      %s918 = scalar_select %p917, %s36, 1
      %s919 = smul.addr %s918, 4
      %s920 = smul.addr %s919, 8
      %s921 = scalar_lea.vmem %s14, %s920
      %p922 = scmp.lt.s32.totalorder %s36, 1
      %s923 = scalar_select %p922, %s36, 1
      %s924 = scalar_lea.vmem %s15, %s923
      %p925 = scmp.lt.s32.totalorder %s36, 1
      %s926 = scalar_select %p925, %s36, 1
      %s927 = smul.addr %s926, 8
      %s928 = smul.addr %s927, 8
      %s929 = scalar_lea.vmem %s16, %s928
      %p930 = scmp.lt.s32.totalorder %s36, 1
      %s931 = scalar_select %p930, %s36, 1
      %s932 = scalar_lea.vmem %s17, %s931
      %p933 = scmp.lt.s32.totalorder %s36, 1
      %s934 = scalar_select %p933, %s36, 1
      %s935 = scalar_lea.vmem %s18, %s934
      %p936 = scmp.lt.s32.totalorder %s36, 1
      %s937 = scalar_select %p936, %s36, 1
      %s938 = scalar_lea.vmem %s19, %s937
      %p939 = scmp.lt.s32.totalorder %s35, 1
      %s940 = scalar_select %p939, %s35, 1
      %s941 = smul.addr %s940, 8
      %s942 = scalar_lea.vmem %s20, %s941
      %p943 = scmp.eq.s32.totalorder %s36, 0
      // Predicated region
      $region101: #{_lambda_.4} parent=99 // pred_check
        %p944 = pneg %p943
      $region102: #{_lambda_.4} parent=99 // pred_check_branch
        %946 = sbr.rel (%p944) target = $region104
      $region103: #{_lambda_.4} parent=99 // pred_region
        %v947 = vld [vmem:[%s862] sm:$0xff]
        %v948 = vld [vmem:[%s2] sm:$0x1]
        %v949 = vld [vmem:[%s3] sm:$0x1]
        %vm950 = vcmask 261120
        %v951 = vsel %vm950, %v947, 0.0
        %952 = vadd.xlane.f32.xlu0 %v951
        %v953 = vpop.xlane.xlu0 %952
        %v954 = vrcp.pop 32.0
        %v955 = vmul.f32 %v953, %v954
        %v956 = vsub.f32 %v947, %v955
        %v957 = vmul.f32 %v956, %v956
        %v958 = vsel %vm950, %v957, 0.0
        %959 = vadd.xlane.f32.xlu0 %v958
        %v960 = vpop.xlane.xlu0 %959
        %v961 = vmul.f32 %v960, %v954
        %v962 = vadd.f32 %v961, 1e-12
        %v963 = vrsqrt.pop %v962
        %v964 = vmul.f32 %v956, %v963
        %v966 = vlaneseq
        %v967 = vshrl.u32 %v966, 7
        %v968 = vsub.s32 0, %v967
        %v969 = vrot.slane %v948, %v968
        %v971 = vmul.f32 %v964, %v969
        %v973 = vlaneseq
        %v974 = vshrl.u32 %v973, 7
        %v975 = vsub.s32 0, %v974
        %v976 = vrot.slane %v949, %v975
        %v978 = vadd.f32 %v971, %v976
        %979 = vst.msk [vmem:[#allocation2] sm:$0xff] %vm950, %v978
      $region104: #{_lambda_.4} parent=99 // pred_fallthru
        _
      %v980 = vld [vmem:[#allocation2] sm:$0xff]
      %v981 = vld [vmem:[%s871] sm:$0xff]
      %v982 = vld [vmem:[%s871 + $0x8] sm:$0xff]
      %v983 = vld [vmem:[%s871 + $0x10] sm:$0xff]
      %v984 = vld [vmem:[%s871 + $0x18] sm:$0xff]
      %v985 = vld [vmem:[%s871 + $0x20] sm:$0xff]
      %v986 = vld [vmem:[%s871 + $0x28] sm:$0xff]
      %v987 = vld [vmem:[%s871 + $0x30] sm:$0xff]
      %v988 = vld [vmem:[%s871 + $0x38] sm:$0xff]
      %v989 = vld [vmem:[%s871 + $0x40] sm:$0xff]
      %v990 = vld [vmem:[%s871 + $0x48] sm:$0xff]
      %v991 = vld [vmem:[%s871 + $0x50] sm:$0xff]
      %v992 = vld [vmem:[%s871 + $0x58] sm:$0xff]
      %v993 = vld [vmem:[%s871 + $0x60] sm:$0xff]
      %v994 = vld [vmem:[%s871 + $0x68] sm:$0xff]
      %v995 = vld [vmem:[%s871 + $0x70] sm:$0xff]
      %v996 = vld [vmem:[%s871 + $0x78] sm:$0xff]
      %v997 = vld [vmem:[%s883] sm:$0xff]
      %v998 = vld [vmem:[%s883 + $0x8] sm:$0xff]
      %v999 = vld [vmem:[%s883 + $0x10] sm:$0xff]
      %v1000 = vld [vmem:[%s883 + $0x18] sm:$0xff]
      %v1001 = vld [vmem:[%s883 + $0x20] sm:$0xff]
      %v1002 = vld [vmem:[%s883 + $0x28] sm:$0xff]
      %v1003 = vld [vmem:[%s883 + $0x30] sm:$0xff]
      %v1004 = vld [vmem:[%s883 + $0x38] sm:$0xff]
      %v1005 = vld [vmem:[%s883 + $0x40] sm:$0xff]
      %v1006 = vld [vmem:[%s883 + $0x48] sm:$0xff]
      %v1007 = vld [vmem:[%s883 + $0x50] sm:$0xff]
      %v1008 = vld [vmem:[%s883 + $0x58] sm:$0xff]
      %v1009 = vld [vmem:[%s883 + $0x60] sm:$0xff]
      %v1010 = vld [vmem:[%s883 + $0x68] sm:$0xff]
      %v1011 = vld [vmem:[%s883 + $0x70] sm:$0xff]
      %v1012 = vld [vmem:[%s883 + $0x78] sm:$0xff]
      %v1013 = vld [vmem:[%s895] sm:$0xff]
      %v1014 = vld [vmem:[%s895 + $0x8] sm:$0xff]
      %v1015 = vld [vmem:[%s895 + $0x10] sm:$0xff]
      %v1016 = vld [vmem:[%s895 + $0x18] sm:$0xff]
      %v1017 = vld [vmem:[%s895 + $0x20] sm:$0xff]
      %v1018 = vld [vmem:[%s895 + $0x28] sm:$0xff]
      %v1019 = vld [vmem:[%s895 + $0x30] sm:$0xff]
      %v1020 = vld [vmem:[%s895 + $0x38] sm:$0xff]
      %v1021 = vld [vmem:[%s895 + $0x40] sm:$0xff]
      %v1022 = vld [vmem:[%s895 + $0x48] sm:$0xff]
      %v1023 = vld [vmem:[%s895 + $0x50] sm:$0xff]
      %v1024 = vld [vmem:[%s895 + $0x58] sm:$0xff]
      %v1025 = vld [vmem:[%s895 + $0x60] sm:$0xff]
      %v1026 = vld [vmem:[%s895 + $0x68] sm:$0xff]
      %v1027 = vld [vmem:[%s895 + $0x70] sm:$0xff]
      %v1028 = vld [vmem:[%s895 + $0x78] sm:$0xff]
      %v1029 = vld [vmem:[%s876] sm:$0x1]
      %v1030 = vld [vmem:[%s876 + $0x1] sm:$0x1]
      %v1031 = vld [vmem:[%s876 + $0x2] sm:$0x1]
      %v1032 = vld [vmem:[%s876 + $0x3] sm:$0x1]
      %v1037 = vlaneseq
      %v1038 = vshrl.u32 %v1037, 7
      %v1039 = vsub.s32 0, %v1038
      %v1040 = vrot.slane %v1029, %v1039
      %v1041 = vlaneseq
      %v1042 = vshrl.u32 %v1041, 7
      %v1043 = vsub.s32 0, %v1042
      %v1044 = vrot.slane %v1030, %v1043
      %v1045 = vlaneseq
      %v1046 = vshrl.u32 %v1045, 7
      %v1047 = vsub.s32 0, %v1046
      %v1048 = vrot.slane %v1031, %v1047
      %v1049 = vlaneseq
      %v1050 = vshrl.u32 %v1049, 7
      %v1051 = vsub.s32 0, %v1050
      %v1052 = vrot.slane %v1032, %v1051
      %vm1057 = vcmask 261120
      %v1059 = vsel %vm1057, %v980, 0
      %1061 = vmatprep.subr.mxu0 0.0
      %1062 = vmatpush1.msra.mxu0 0.0
      %1063 = vmatprep.subr.mxu0 0.0
      %1064 = vmatpush1.msra.mxu0 0.0
      %1065 = vmatprep.subr.mxu0 0.0
      %1066 = vmatpush1.msra.mxu0 0.0
      %1067 = vmatprep.subr.mxu0 0.0
      %1068 = vmatpush1.msra.mxu0 0.0
      %1069 = vmatprep.subr.mxu0 0.0
      %1070 = vmatpush1.msra.mxu0 0.0
      %1071 = vmatprep.subr.mxu0 0.0
      %1072 = vmatpush1.msra.mxu0 0.0
      %1073 = vmatprep.subr.mxu0 0.0
      %1074 = vmatpush1.msra.mxu0 0.0
      %1075 = vmatprep.subr.mxu0 0.0
      %1076 = vmatpush1.msra.mxu0 0.0
      %1077 = vmatprep.subr.mxu0 0.0
      %1078 = vmatpush1.msra.mxu0 0.0
      %1079 = vmatprep.subr.mxu0 0.0
      %1080 = vmatpush1.msra.mxu0 0.0
      %1081 = vmatprep.subr.mxu0 0.0
      %1082 = vmatpush1.msra.mxu0 0.0
      %1083 = vmatprep.subr.mxu0 0.0
      %1084 = vmatpush1.msra.mxu0 0.0
      %1085 = vmatprep.subr.mxu0 0.0
      %1086 = vmatpush1.msra.mxu0 %v984
      %1087 = vmatprep.subr.mxu0 0.0
      %1088 = vmatpush1.msra.mxu0 %v983
      %1089 = vmatprep.subr.mxu0 0.0
      %1090 = vmatpush1.msra.mxu0 %v982
      %1091 = vmatprep.subr.mxu0 0.0
      %1092 = vmatpush1.msra.mxu0 %v981
      %1093 = vmatprep.subr.mxu0 0.0
      %1094 = vmatpush2.msra.mxu0 0.0
      %1095 = vmatprep.subr.mxu0 0.0
      %1096 = vmatpush2.msra.mxu0 0.0
      %1097 = vmatprep.subr.mxu0 0.0
      %1098 = vmatpush2.msra.mxu0 0.0
      %1099 = vmatprep.subr.mxu0 0.0
      %1100 = vmatpush2.msra.mxu0 0.0
      %1101 = vmatprep.subr.mxu0 0.0
      %1102 = vmatpush2.msra.mxu0 0.0
      %1103 = vmatprep.subr.mxu0 0.0
      %1104 = vmatpush2.msra.mxu0 0.0
      %1105 = vmatprep.subr.mxu0 0.0
      %1106 = vmatpush2.msra.mxu0 0.0
      %1107 = vmatprep.subr.mxu0 0.0
      %1108 = vmatpush2.msra.mxu0 0.0
      %1109 = vmatprep.subr.mxu0 0.0
      %1110 = vmatpush2.msra.mxu0 0.0
      %1111 = vmatprep.subr.mxu0 0.0
      %1112 = vmatpush2.msra.mxu0 0.0
      %1113 = vmatprep.subr.mxu0 0.0
      %1114 = vmatpush2.msra.mxu0 0.0
      %1115 = vmatprep.subr.mxu0 0.0
      %1116 = vmatpush2.msra.mxu0 0.0
      %1117 = vmatprep.subr.mxu0 0.0
      %1118 = vmatpush2.msra.mxu0 0.0
      %1119 = vmatprep.subr.mxu0 0.0
      %1120 = vmatpush2.msra.mxu0 0.0
      %1121 = vmatprep.subr.mxu0 0.0
      %1122 = vmatpush2.msra.mxu0 0.0
      %1123 = vmatprep.subr.mxu0 0.0
      %1124 = vmatpush2.msra.mxu0 0.0
      %1125 = vmatprep.mubr.f32.mxu0 0.0
      %1126 = vmatmul.mubr.f32.gmra.mxu0 %v1059
      %v1127 = vpop.f32.mrf.mxu0
      %v1128 = vadd.f32 %v1040, %v1127
      %v1129 = vpop.f32.mrf.mxu0
      %1130 = vdwg.mxu0
      %1131 = vmatprep.subr.mxu0 0.0
      %1132 = vmatpush1.msra.mxu0 0.0
      %1133 = vmatprep.subr.mxu0 0.0
      %1134 = vmatpush1.msra.mxu0 0.0
      %1135 = vmatprep.subr.mxu0 0.0
      %1136 = vmatpush1.msra.mxu0 0.0
      %1137 = vmatprep.subr.mxu0 0.0
      %1138 = vmatpush1.msra.mxu0 0.0
      %1139 = vmatprep.subr.mxu0 0.0
      %1140 = vmatpush1.msra.mxu0 0.0
      %1141 = vmatprep.subr.mxu0 0.0
      %1142 = vmatpush1.msra.mxu0 0.0
      %1143 = vmatprep.subr.mxu0 0.0
      %1144 = vmatpush1.msra.mxu0 0.0
      %1145 = vmatprep.subr.mxu0 0.0
      %1146 = vmatpush1.msra.mxu0 0.0
      %1147 = vmatprep.subr.mxu0 0.0
      %1148 = vmatpush1.msra.mxu0 0.0
      %1149 = vmatprep.subr.mxu0 0.0
      %1150 = vmatpush1.msra.mxu0 0.0
      %1151 = vmatprep.subr.mxu0 0.0
      %1152 = vmatpush1.msra.mxu0 0.0
      %1153 = vmatprep.subr.mxu0 0.0
      %1154 = vmatpush1.msra.mxu0 0.0
      %1155 = vmatprep.subr.mxu0 0.0
      %1156 = vmatpush1.msra.mxu0 %v988
      %1157 = vmatprep.subr.mxu0 0.0
      %1158 = vmatpush1.msra.mxu0 %v987
      %1159 = vmatprep.subr.mxu0 0.0
      %1160 = vmatpush1.msra.mxu0 %v986
      %1161 = vmatprep.subr.mxu0 0.0
      %1162 = vmatpush1.msra.mxu0 %v985
      %1163 = vmatprep.subr.mxu0 0.0
      %1164 = vmatpush2.msra.mxu0 0.0
      %1165 = vmatprep.subr.mxu0 0.0
      %1166 = vmatpush2.msra.mxu0 0.0
      %1167 = vmatprep.subr.mxu0 0.0
      %1168 = vmatpush2.msra.mxu0 0.0
      %1169 = vmatprep.subr.mxu0 0.0
      %1170 = vmatpush2.msra.mxu0 0.0
      %1171 = vmatprep.subr.mxu0 0.0
      %1172 = vmatpush2.msra.mxu0 0.0
      %1173 = vmatprep.subr.mxu0 0.0
      %1174 = vmatpush2.msra.mxu0 0.0
      %1175 = vmatprep.subr.mxu0 0.0
      %1176 = vmatpush2.msra.mxu0 0.0
      %1177 = vmatprep.subr.mxu0 0.0
      %1178 = vmatpush2.msra.mxu0 0.0
      %1179 = vmatprep.subr.mxu0 0.0
      %1180 = vmatpush2.msra.mxu0 0.0
      %1181 = vmatprep.subr.mxu0 0.0
      %1182 = vmatpush2.msra.mxu0 0.0
      %1183 = vmatprep.subr.mxu0 0.0
      %1184 = vmatpush2.msra.mxu0 0.0
      %1185 = vmatprep.subr.mxu0 0.0
      %1186 = vmatpush2.msra.mxu0 0.0
      %1187 = vmatprep.subr.mxu0 0.0
      %1188 = vmatpush2.msra.mxu0 0.0
      %1189 = vmatprep.subr.mxu0 0.0
      %1190 = vmatpush2.msra.mxu0 0.0
      %1191 = vmatprep.subr.mxu0 0.0
      %1192 = vmatpush2.msra.mxu0 0.0
      %1193 = vmatprep.subr.mxu0 0.0
      %1194 = vmatpush2.msra.mxu0 0.0
      %1195 = vmatprep.mubr.f32.mxu0 0.0
      %1196 = vmatmul.mubr.f32.gmra.mxu0 %v1059
      %v1197 = vpop.f32.mrf.mxu0
      %v1198 = vadd.f32 %v1044, %v1197
      %v1199 = vpop.f32.mrf.mxu0
      %1200 = vdwg.mxu0
      %1201 = vmatprep.subr.mxu0 0.0
      %1202 = vmatpush1.msra.mxu0 0.0
      %1203 = vmatprep.subr.mxu0 0.0
      %1204 = vmatpush1.msra.mxu0 0.0
      %1205 = vmatprep.subr.mxu0 0.0
      %1206 = vmatpush1.msra.mxu0 0.0
      %1207 = vmatprep.subr.mxu0 0.0
      %1208 = vmatpush1.msra.mxu0 0.0
      %1209 = vmatprep.subr.mxu0 0.0
      %1210 = vmatpush1.msra.mxu0 0.0
      %1211 = vmatprep.subr.mxu0 0.0
      %1212 = vmatpush1.msra.mxu0 0.0
      %1213 = vmatprep.subr.mxu0 0.0
      %1214 = vmatpush1.msra.mxu0 0.0
      %1215 = vmatprep.subr.mxu0 0.0
      %1216 = vmatpush1.msra.mxu0 0.0
      %1217 = vmatprep.subr.mxu0 0.0
      %1218 = vmatpush1.msra.mxu0 0.0
      %1219 = vmatprep.subr.mxu0 0.0
      %1220 = vmatpush1.msra.mxu0 0.0
      %1221 = vmatprep.subr.mxu0 0.0
      %1222 = vmatpush1.msra.mxu0 0.0
      %1223 = vmatprep.subr.mxu0 0.0
      %1224 = vmatpush1.msra.mxu0 0.0
      %1225 = vmatprep.subr.mxu0 0.0
      %1226 = vmatpush1.msra.mxu0 %v992
      %1227 = vmatprep.subr.mxu0 0.0
      %1228 = vmatpush1.msra.mxu0 %v991
      %1229 = vmatprep.subr.mxu0 0.0
      %1230 = vmatpush1.msra.mxu0 %v990
      %1231 = vmatprep.subr.mxu0 0.0
      %1232 = vmatpush1.msra.mxu0 %v989
      %1233 = vmatprep.subr.mxu0 0.0
      %1234 = vmatpush2.msra.mxu0 0.0
      %1235 = vmatprep.subr.mxu0 0.0
      %1236 = vmatpush2.msra.mxu0 0.0
      %1237 = vmatprep.subr.mxu0 0.0
      %1238 = vmatpush2.msra.mxu0 0.0
      %1239 = vmatprep.subr.mxu0 0.0
      %1240 = vmatpush2.msra.mxu0 0.0
      %1241 = vmatprep.subr.mxu0 0.0
      %1242 = vmatpush2.msra.mxu0 0.0
      %1243 = vmatprep.subr.mxu0 0.0
      %1244 = vmatpush2.msra.mxu0 0.0
      %1245 = vmatprep.subr.mxu0 0.0
      %1246 = vmatpush2.msra.mxu0 0.0
      %1247 = vmatprep.subr.mxu0 0.0
      %1248 = vmatpush2.msra.mxu0 0.0
      %1249 = vmatprep.subr.mxu0 0.0
      %1250 = vmatpush2.msra.mxu0 0.0
      %1251 = vmatprep.subr.mxu0 0.0
      %1252 = vmatpush2.msra.mxu0 0.0
      %1253 = vmatprep.subr.mxu0 0.0
      %1254 = vmatpush2.msra.mxu0 0.0
      %1255 = vmatprep.subr.mxu0 0.0
      %1256 = vmatpush2.msra.mxu0 0.0
      %1257 = vmatprep.subr.mxu0 0.0
      %1258 = vmatpush2.msra.mxu0 0.0
      %1259 = vmatprep.subr.mxu0 0.0
      %1260 = vmatpush2.msra.mxu0 0.0
      %1261 = vmatprep.subr.mxu0 0.0
      %1262 = vmatpush2.msra.mxu0 0.0
      %1263 = vmatprep.subr.mxu0 0.0
      %1264 = vmatpush2.msra.mxu0 0.0
      %1265 = vmatprep.mubr.f32.mxu0 0.0
      %1266 = vmatmul.mubr.f32.gmra.mxu0 %v1059
      %v1267 = vpop.f32.mrf.mxu0
      %v1268 = vadd.f32 %v1048, %v1267
      %v1269 = vpop.f32.mrf.mxu0
      %1270 = vdwg.mxu0
      %1271 = vmatprep.subr.mxu0 0.0
      %1272 = vmatpush1.msra.mxu0 0.0
      %1273 = vmatprep.subr.mxu0 0.0
      %1274 = vmatpush1.msra.mxu0 0.0
      %1275 = vmatprep.subr.mxu0 0.0
      %1276 = vmatpush1.msra.mxu0 0.0
      %1277 = vmatprep.subr.mxu0 0.0
      %1278 = vmatpush1.msra.mxu0 0.0
      %1279 = vmatprep.subr.mxu0 0.0
      %1280 = vmatpush1.msra.mxu0 0.0
      %1281 = vmatprep.subr.mxu0 0.0
      %1282 = vmatpush1.msra.mxu0 0.0
      %1283 = vmatprep.subr.mxu0 0.0
      %1284 = vmatpush1.msra.mxu0 0.0
      %1285 = vmatprep.subr.mxu0 0.0
      %1286 = vmatpush1.msra.mxu0 0.0
      %1287 = vmatprep.subr.mxu0 0.0
      %1288 = vmatpush1.msra.mxu0 0.0
      %1289 = vmatprep.subr.mxu0 0.0
      %1290 = vmatpush1.msra.mxu0 0.0
      %1291 = vmatprep.subr.mxu0 0.0
      %1292 = vmatpush1.msra.mxu0 0.0
      %1293 = vmatprep.subr.mxu0 0.0
      %1294 = vmatpush1.msra.mxu0 0.0
      %1295 = vmatprep.subr.mxu0 0.0
      %1296 = vmatpush1.msra.mxu0 %v996
      %1297 = vmatprep.subr.mxu0 0.0
      %1298 = vmatpush1.msra.mxu0 %v995
      %1299 = vmatprep.subr.mxu0 0.0
      %1300 = vmatpush1.msra.mxu0 %v994
      %1301 = vmatprep.subr.mxu0 0.0
      %1302 = vmatpush1.msra.mxu0 %v993
      %1303 = vmatprep.subr.mxu0 0.0
      %1304 = vmatpush2.msra.mxu0 0.0
      %1305 = vmatprep.subr.mxu0 0.0
      %1306 = vmatpush2.msra.mxu0 0.0
      %1307 = vmatprep.subr.mxu0 0.0
      %1308 = vmatpush2.msra.mxu0 0.0
      %1309 = vmatprep.subr.mxu0 0.0
      %1310 = vmatpush2.msra.mxu0 0.0
      %1311 = vmatprep.subr.mxu0 0.0
      %1312 = vmatpush2.msra.mxu0 0.0
      %1313 = vmatprep.subr.mxu0 0.0
      %1314 = vmatpush2.msra.mxu0 0.0
      %1315 = vmatprep.subr.mxu0 0.0
      %1316 = vmatpush2.msra.mxu0 0.0
      %1317 = vmatprep.subr.mxu0 0.0
      %1318 = vmatpush2.msra.mxu0 0.0
      %1319 = vmatprep.subr.mxu0 0.0
      %1320 = vmatpush2.msra.mxu0 0.0
      %1321 = vmatprep.subr.mxu0 0.0
      %1322 = vmatpush2.msra.mxu0 0.0
      %1323 = vmatprep.subr.mxu0 0.0
      %1324 = vmatpush2.msra.mxu0 0.0
      %1325 = vmatprep.subr.mxu0 0.0
      %1326 = vmatpush2.msra.mxu0 0.0
      %1327 = vmatprep.subr.mxu0 0.0
      %1328 = vmatpush2.msra.mxu0 0.0
      %1329 = vmatprep.subr.mxu0 0.0
      %1330 = vmatpush2.msra.mxu0 0.0
      %1331 = vmatprep.subr.mxu0 0.0
      %1332 = vmatpush2.msra.mxu0 0.0
      %1333 = vmatprep.subr.mxu0 0.0
      %1334 = vmatpush2.msra.mxu0 0.0
      %1335 = vmatprep.mubr.f32.mxu0 0.0
      %1336 = vmatmul.mubr.f32.gmra.mxu0 %v1059
      %v1337 = vpop.f32.mrf.mxu0
      %v1338 = vadd.f32 %v1052, %v1337
      %v1339 = vpop.f32.mrf.mxu0
      %1340 = vdwg.mxu0
      %v1341 = vld [vmem:[%s888] sm:$0x1]
      %v1342 = vld [vmem:[%s888 + $0x1] sm:$0x1]
      %v1343 = vld [vmem:[%s888 + $0x2] sm:$0x1]
      %v1344 = vld [vmem:[%s888 + $0x3] sm:$0x1]
      %v1349 = vlaneseq
      %v1350 = vshrl.u32 %v1349, 7
      %v1351 = vsub.s32 0, %v1350
      %v1352 = vrot.slane %v1341, %v1351
      %v1353 = vlaneseq
      %v1354 = vshrl.u32 %v1353, 7
      %v1355 = vsub.s32 0, %v1354
      %v1356 = vrot.slane %v1342, %v1355
      %v1357 = vlaneseq
      %v1358 = vshrl.u32 %v1357, 7
      %v1359 = vsub.s32 0, %v1358
      %v1360 = vrot.slane %v1343, %v1359
      %v1361 = vlaneseq
      %v1362 = vshrl.u32 %v1361, 7
      %v1363 = vsub.s32 0, %v1362
      %v1364 = vrot.slane %v1344, %v1363
      %1369 = vmatprep.subr.mxu0 0.0
      %1370 = vmatpush1.msra.mxu0 0.0
      %1371 = vmatprep.subr.mxu0 0.0
      %1372 = vmatpush1.msra.mxu0 0.0
      %1373 = vmatprep.subr.mxu0 0.0
      %1374 = vmatpush1.msra.mxu0 0.0
      %1375 = vmatprep.subr.mxu0 0.0
      %1376 = vmatpush1.msra.mxu0 0.0
      %1377 = vmatprep.subr.mxu0 0.0
      %1378 = vmatpush1.msra.mxu0 0.0
      %1379 = vmatprep.subr.mxu0 0.0
      %1380 = vmatpush1.msra.mxu0 0.0
      %1381 = vmatprep.subr.mxu0 0.0
      %1382 = vmatpush1.msra.mxu0 0.0
      %1383 = vmatprep.subr.mxu0 0.0
      %1384 = vmatpush1.msra.mxu0 0.0
      %1385 = vmatprep.subr.mxu0 0.0
      %1386 = vmatpush1.msra.mxu0 0.0
      %1387 = vmatprep.subr.mxu0 0.0
      %1388 = vmatpush1.msra.mxu0 0.0
      %1389 = vmatprep.subr.mxu0 0.0
      %1390 = vmatpush1.msra.mxu0 0.0
      %1391 = vmatprep.subr.mxu0 0.0
      %1392 = vmatpush1.msra.mxu0 0.0
      %1393 = vmatprep.subr.mxu0 0.0
      %1394 = vmatpush1.msra.mxu0 %v1000
      %1395 = vmatprep.subr.mxu0 0.0
      %1396 = vmatpush1.msra.mxu0 %v999
      %1397 = vmatprep.subr.mxu0 0.0
      %1398 = vmatpush1.msra.mxu0 %v998
      %1399 = vmatprep.subr.mxu0 0.0
      %1400 = vmatpush1.msra.mxu0 %v997
      %1401 = vmatprep.subr.mxu0 0.0
      %1402 = vmatpush2.msra.mxu0 0.0
      %1403 = vmatprep.subr.mxu0 0.0
      %1404 = vmatpush2.msra.mxu0 0.0
      %1405 = vmatprep.subr.mxu0 0.0
      %1406 = vmatpush2.msra.mxu0 0.0
      %1407 = vmatprep.subr.mxu0 0.0
      %1408 = vmatpush2.msra.mxu0 0.0
      %1409 = vmatprep.subr.mxu0 0.0
      %1410 = vmatpush2.msra.mxu0 0.0
      %1411 = vmatprep.subr.mxu0 0.0
      %1412 = vmatpush2.msra.mxu0 0.0
      %1413 = vmatprep.subr.mxu0 0.0
      %1414 = vmatpush2.msra.mxu0 0.0
      %1415 = vmatprep.subr.mxu0 0.0
      %1416 = vmatpush2.msra.mxu0 0.0
      %1417 = vmatprep.subr.mxu0 0.0
      %1418 = vmatpush2.msra.mxu0 0.0
      %1419 = vmatprep.subr.mxu0 0.0
      %1420 = vmatpush2.msra.mxu0 0.0
      %1421 = vmatprep.subr.mxu0 0.0
      %1422 = vmatpush2.msra.mxu0 0.0
      %1423 = vmatprep.subr.mxu0 0.0
      %1424 = vmatpush2.msra.mxu0 0.0
      %1425 = vmatprep.subr.mxu0 0.0
      %1426 = vmatpush2.msra.mxu0 0.0
      %1427 = vmatprep.subr.mxu0 0.0
      %1428 = vmatpush2.msra.mxu0 0.0
      %1429 = vmatprep.subr.mxu0 0.0
      %1430 = vmatpush2.msra.mxu0 0.0
      %1431 = vmatprep.subr.mxu0 0.0
      %1432 = vmatpush2.msra.mxu0 0.0
      %1433 = vmatprep.mubr.f32.mxu0 0.0
      %1434 = vmatmul.mubr.f32.gmra.mxu0 %v1059
      %v1435 = vpop.f32.mrf.mxu0
      %v1436 = vadd.f32 %v1352, %v1435
      %v1437 = vpop.f32.mrf.mxu0
      %1438 = vdwg.mxu0
      %1439 = vmatprep.subr.mxu0 0.0
      %1440 = vmatpush1.msra.mxu0 0.0
      %1441 = vmatprep.subr.mxu0 0.0
      %1442 = vmatpush1.msra.mxu0 0.0
      %1443 = vmatprep.subr.mxu0 0.0
      %1444 = vmatpush1.msra.mxu0 0.0
      %1445 = vmatprep.subr.mxu0 0.0
      %1446 = vmatpush1.msra.mxu0 0.0
      %1447 = vmatprep.subr.mxu0 0.0
      %1448 = vmatpush1.msra.mxu0 0.0
      %1449 = vmatprep.subr.mxu0 0.0
      %1450 = vmatpush1.msra.mxu0 0.0
      %1451 = vmatprep.subr.mxu0 0.0
      %1452 = vmatpush1.msra.mxu0 0.0
      %1453 = vmatprep.subr.mxu0 0.0
      %1454 = vmatpush1.msra.mxu0 0.0
      %1455 = vmatprep.subr.mxu0 0.0
      %1456 = vmatpush1.msra.mxu0 0.0
      %1457 = vmatprep.subr.mxu0 0.0
      %1458 = vmatpush1.msra.mxu0 0.0
      %1459 = vmatprep.subr.mxu0 0.0
      %1460 = vmatpush1.msra.mxu0 0.0
      %1461 = vmatprep.subr.mxu0 0.0
      %1462 = vmatpush1.msra.mxu0 0.0
      %1463 = vmatprep.subr.mxu0 0.0
      %1464 = vmatpush1.msra.mxu0 %v1004
      %1465 = vmatprep.subr.mxu0 0.0
      %1466 = vmatpush1.msra.mxu0 %v1003
      %1467 = vmatprep.subr.mxu0 0.0
      %1468 = vmatpush1.msra.mxu0 %v1002
      %1469 = vmatprep.subr.mxu0 0.0
      %1470 = vmatpush1.msra.mxu0 %v1001
      %1471 = vmatprep.subr.mxu0 0.0
      %1472 = vmatpush2.msra.mxu0 0.0
      %1473 = vmatprep.subr.mxu0 0.0
      %1474 = vmatpush2.msra.mxu0 0.0
      %1475 = vmatprep.subr.mxu0 0.0
      %1476 = vmatpush2.msra.mxu0 0.0
      %1477 = vmatprep.subr.mxu0 0.0
      %1478 = vmatpush2.msra.mxu0 0.0
      %1479 = vmatprep.subr.mxu0 0.0
      %1480 = vmatpush2.msra.mxu0 0.0
      %1481 = vmatprep.subr.mxu0 0.0
      %1482 = vmatpush2.msra.mxu0 0.0
      %1483 = vmatprep.subr.mxu0 0.0
      %1484 = vmatpush2.msra.mxu0 0.0
      %1485 = vmatprep.subr.mxu0 0.0
      %1486 = vmatpush2.msra.mxu0 0.0
      %1487 = vmatprep.subr.mxu0 0.0
      %1488 = vmatpush2.msra.mxu0 0.0
      %1489 = vmatprep.subr.mxu0 0.0
      %1490 = vmatpush2.msra.mxu0 0.0
      %1491 = vmatprep.subr.mxu0 0.0
      %1492 = vmatpush2.msra.mxu0 0.0
      %1493 = vmatprep.subr.mxu0 0.0
      %1494 = vmatpush2.msra.mxu0 0.0
      %1495 = vmatprep.subr.mxu0 0.0
      %1496 = vmatpush2.msra.mxu0 0.0
      %1497 = vmatprep.subr.mxu0 0.0
      %1498 = vmatpush2.msra.mxu0 0.0
      %1499 = vmatprep.subr.mxu0 0.0
      %1500 = vmatpush2.msra.mxu0 0.0
      %1501 = vmatprep.subr.mxu0 0.0
      %1502 = vmatpush2.msra.mxu0 0.0
      %1503 = vmatprep.mubr.f32.mxu0 0.0
      %1504 = vmatmul.mubr.f32.gmra.mxu0 %v1059
      %v1505 = vpop.f32.mrf.mxu0
      %v1506 = vadd.f32 %v1356, %v1505
      %v1507 = vpop.f32.mrf.mxu0
      %1508 = vdwg.mxu0
      %1509 = vmatprep.subr.mxu0 0.0
      %1510 = vmatpush1.msra.mxu0 0.0
      %1511 = vmatprep.subr.mxu0 0.0
      %1512 = vmatpush1.msra.mxu0 0.0
      %1513 = vmatprep.subr.mxu0 0.0
      %1514 = vmatpush1.msra.mxu0 0.0
      %1515 = vmatprep.subr.mxu0 0.0
      %1516 = vmatpush1.msra.mxu0 0.0
      %1517 = vmatprep.subr.mxu0 0.0
      %1518 = vmatpush1.msra.mxu0 0.0
      %1519 = vmatprep.subr.mxu0 0.0
      %1520 = vmatpush1.msra.mxu0 0.0
      %1521 = vmatprep.subr.mxu0 0.0
      %1522 = vmatpush1.msra.mxu0 0.0
      %1523 = vmatprep.subr.mxu0 0.0
      %1524 = vmatpush1.msra.mxu0 0.0
      %1525 = vmatprep.subr.mxu0 0.0
      %1526 = vmatpush1.msra.mxu0 0.0
      %1527 = vmatprep.subr.mxu0 0.0
      %1528 = vmatpush1.msra.mxu0 0.0
      %1529 = vmatprep.subr.mxu0 0.0
      %1530 = vmatpush1.msra.mxu0 0.0
      %1531 = vmatprep.subr.mxu0 0.0
      %1532 = vmatpush1.msra.mxu0 0.0
      %1533 = vmatprep.subr.mxu0 0.0
      %1534 = vmatpush1.msra.mxu0 %v1008
      %1535 = vmatprep.subr.mxu0 0.0
      %1536 = vmatpush1.msra.mxu0 %v1007
      %1537 = vmatprep.subr.mxu0 0.0
      %1538 = vmatpush1.msra.mxu0 %v1006
      %1539 = vmatprep.subr.mxu0 0.0
      %1540 = vmatpush1.msra.mxu0 %v1005
      %1541 = vmatprep.subr.mxu0 0.0
      %1542 = vmatpush2.msra.mxu0 0.0
      %1543 = vmatprep.subr.mxu0 0.0
      %1544 = vmatpush2.msra.mxu0 0.0
      %1545 = vmatprep.subr.mxu0 0.0
      %1546 = vmatpush2.msra.mxu0 0.0
      %1547 = vmatprep.subr.mxu0 0.0
      %1548 = vmatpush2.msra.mxu0 0.0
      %1549 = vmatprep.subr.mxu0 0.0
      %1550 = vmatpush2.msra.mxu0 0.0
      %1551 = vmatprep.subr.mxu0 0.0
      %1552 = vmatpush2.msra.mxu0 0.0
      %1553 = vmatprep.subr.mxu0 0.0
      %1554 = vmatpush2.msra.mxu0 0.0
      %1555 = vmatprep.subr.mxu0 0.0
      %1556 = vmatpush2.msra.mxu0 0.0
      %1557 = vmatprep.subr.mxu0 0.0
      %1558 = vmatpush2.msra.mxu0 0.0
      %1559 = vmatprep.subr.mxu0 0.0
      %1560 = vmatpush2.msra.mxu0 0.0
      %1561 = vmatprep.subr.mxu0 0.0
      %1562 = vmatpush2.msra.mxu0 0.0
      %1563 = vmatprep.subr.mxu0 0.0
      %1564 = vmatpush2.msra.mxu0 0.0
      %1565 = vmatprep.subr.mxu0 0.0
      %1566 = vmatpush2.msra.mxu0 0.0
      %1567 = vmatprep.subr.mxu0 0.0
      %1568 = vmatpush2.msra.mxu0 0.0
      %1569 = vmatprep.subr.mxu0 0.0
      %1570 = vmatpush2.msra.mxu0 0.0
      %1571 = vmatprep.subr.mxu0 0.0
      %1572 = vmatpush2.msra.mxu0 0.0
      %1573 = vmatprep.mubr.f32.mxu0 0.0
      %1574 = vmatmul.mubr.f32.gmra.mxu0 %v1059
      %v1575 = vpop.f32.mrf.mxu0
      %v1576 = vadd.f32 %v1360, %v1575
      %v1577 = vpop.f32.mrf.mxu0
      %1578 = vdwg.mxu0
      %1579 = vmatprep.subr.mxu0 0.0
      %1580 = vmatpush1.msra.mxu0 0.0
      %1581 = vmatprep.subr.mxu0 0.0
      %1582 = vmatpush1.msra.mxu0 0.0
      %1583 = vmatprep.subr.mxu0 0.0
      %1584 = vmatpush1.msra.mxu0 0.0
      %1585 = vmatprep.subr.mxu0 0.0
      %1586 = vmatpush1.msra.mxu0 0.0
      %1587 = vmatprep.subr.mxu0 0.0
      %1588 = vmatpush1.msra.mxu0 0.0
      %1589 = vmatprep.subr.mxu0 0.0
      %1590 = vmatpush1.msra.mxu0 0.0
      %1591 = vmatprep.subr.mxu0 0.0
      %1592 = vmatpush1.msra.mxu0 0.0
      %1593 = vmatprep.subr.mxu0 0.0
      %1594 = vmatpush1.msra.mxu0 0.0
      %1595 = vmatprep.subr.mxu0 0.0
      %1596 = vmatpush1.msra.mxu0 0.0
      %1597 = vmatprep.subr.mxu0 0.0
      %1598 = vmatpush1.msra.mxu0 0.0
      %1599 = vmatprep.subr.mxu0 0.0
      %1600 = vmatpush1.msra.mxu0 0.0
      %1601 = vmatprep.subr.mxu0 0.0
      %1602 = vmatpush1.msra.mxu0 0.0
      %1603 = vmatprep.subr.mxu0 0.0
      %1604 = vmatpush1.msra.mxu0 %v1012
      %1605 = vmatprep.subr.mxu0 0.0
      %1606 = vmatpush1.msra.mxu0 %v1011
      %1607 = vmatprep.subr.mxu0 0.0
      %1608 = vmatpush1.msra.mxu0 %v1010
      %1609 = vmatprep.subr.mxu0 0.0
      %1610 = vmatpush1.msra.mxu0 %v1009
      %1611 = vmatprep.subr.mxu0 0.0
      %1612 = vmatpush2.msra.mxu0 0.0
      %1613 = vmatprep.subr.mxu0 0.0
      %1614 = vmatpush2.msra.mxu0 0.0
      %1615 = vmatprep.subr.mxu0 0.0
      %1616 = vmatpush2.msra.mxu0 0.0
      %1617 = vmatprep.subr.mxu0 0.0
      %1618 = vmatpush2.msra.mxu0 0.0
      %1619 = vmatprep.subr.mxu0 0.0
      %1620 = vmatpush2.msra.mxu0 0.0
      %1621 = vmatprep.subr.mxu0 0.0
      %1622 = vmatpush2.msra.mxu0 0.0
      %1623 = vmatprep.subr.mxu0 0.0
      %1624 = vmatpush2.msra.mxu0 0.0
      %1625 = vmatprep.subr.mxu0 0.0
      %1626 = vmatpush2.msra.mxu0 0.0
      %1627 = vmatprep.subr.mxu0 0.0
      %1628 = vmatpush2.msra.mxu0 0.0
      %1629 = vmatprep.subr.mxu0 0.0
      %1630 = vmatpush2.msra.mxu0 0.0
      %1631 = vmatprep.subr.mxu0 0.0
      %1632 = vmatpush2.msra.mxu0 0.0
      %1633 = vmatprep.subr.mxu0 0.0
      %1634 = vmatpush2.msra.mxu0 0.0
      %1635 = vmatprep.subr.mxu0 0.0
      %1636 = vmatpush2.msra.mxu0 0.0
      %1637 = vmatprep.subr.mxu0 0.0
      %1638 = vmatpush2.msra.mxu0 0.0
      %1639 = vmatprep.subr.mxu0 0.0
      %1640 = vmatpush2.msra.mxu0 0.0
      %1641 = vmatprep.subr.mxu0 0.0
      %1642 = vmatpush2.msra.mxu0 0.0
      %1643 = vmatprep.mubr.f32.mxu0 0.0
      %1644 = vmatmul.mubr.f32.gmra.mxu0 %v1059
      %v1645 = vpop.f32.mrf.mxu0
      %v1646 = vadd.f32 %v1364, %v1645
      %v1647 = vpop.f32.mrf.mxu0
      %1648 = vdwg.mxu0
      %v1649 = vld [vmem:[%s900] sm:$0x1]
      %v1650 = vld [vmem:[%s900 + $0x1] sm:$0x1]
      %v1651 = vld [vmem:[%s900 + $0x2] sm:$0x1]
      %v1652 = vld [vmem:[%s900 + $0x3] sm:$0x1]
      %v1657 = vlaneseq
      %v1658 = vshrl.u32 %v1657, 7
      %v1659 = vsub.s32 0, %v1658
      %v1660 = vrot.slane %v1649, %v1659
      %v1661 = vlaneseq
      %v1662 = vshrl.u32 %v1661, 7
      %v1663 = vsub.s32 0, %v1662
      %v1664 = vrot.slane %v1650, %v1663
      %v1665 = vlaneseq
      %v1666 = vshrl.u32 %v1665, 7
      %v1667 = vsub.s32 0, %v1666
      %v1668 = vrot.slane %v1651, %v1667
      %v1669 = vlaneseq
      %v1670 = vshrl.u32 %v1669, 7
      %v1671 = vsub.s32 0, %v1670
      %v1672 = vrot.slane %v1652, %v1671
      %1677 = vmatprep.subr.mxu0 0.0
      %1678 = vmatpush1.msra.mxu0 0.0
      %1679 = vmatprep.subr.mxu0 0.0
      %1680 = vmatpush1.msra.mxu0 0.0
      %1681 = vmatprep.subr.mxu0 0.0
      %1682 = vmatpush1.msra.mxu0 0.0
      %1683 = vmatprep.subr.mxu0 0.0
      %1684 = vmatpush1.msra.mxu0 0.0
      %1685 = vmatprep.subr.mxu0 0.0
      %1686 = vmatpush1.msra.mxu0 0.0
      %1687 = vmatprep.subr.mxu0 0.0
      %1688 = vmatpush1.msra.mxu0 0.0
      %1689 = vmatprep.subr.mxu0 0.0
      %1690 = vmatpush1.msra.mxu0 0.0
      %1691 = vmatprep.subr.mxu0 0.0
      %1692 = vmatpush1.msra.mxu0 0.0
      %1693 = vmatprep.subr.mxu0 0.0
      %1694 = vmatpush1.msra.mxu0 0.0
      %1695 = vmatprep.subr.mxu0 0.0
      %1696 = vmatpush1.msra.mxu0 0.0
      %1697 = vmatprep.subr.mxu0 0.0
      %1698 = vmatpush1.msra.mxu0 0.0
      %1699 = vmatprep.subr.mxu0 0.0
      %1700 = vmatpush1.msra.mxu0 0.0
      %1701 = vmatprep.subr.mxu0 0.0
      %1702 = vmatpush1.msra.mxu0 %v1016
      %1703 = vmatprep.subr.mxu0 0.0
      %1704 = vmatpush1.msra.mxu0 %v1015
      %1705 = vmatprep.subr.mxu0 0.0
      %1706 = vmatpush1.msra.mxu0 %v1014
      %1707 = vmatprep.subr.mxu0 0.0
      %1708 = vmatpush1.msra.mxu0 %v1013
      %1709 = vmatprep.subr.mxu0 0.0
      %1710 = vmatpush2.msra.mxu0 0.0
      %1711 = vmatprep.subr.mxu0 0.0
      %1712 = vmatpush2.msra.mxu0 0.0
      %1713 = vmatprep.subr.mxu0 0.0
      %1714 = vmatpush2.msra.mxu0 0.0
      %1715 = vmatprep.subr.mxu0 0.0
      %1716 = vmatpush2.msra.mxu0 0.0
      %1717 = vmatprep.subr.mxu0 0.0
      %1718 = vmatpush2.msra.mxu0 0.0
      %1719 = vmatprep.subr.mxu0 0.0
      %1720 = vmatpush2.msra.mxu0 0.0
      %1721 = vmatprep.subr.mxu0 0.0
      %1722 = vmatpush2.msra.mxu0 0.0
      %1723 = vmatprep.subr.mxu0 0.0
      %1724 = vmatpush2.msra.mxu0 0.0
      %1725 = vmatprep.subr.mxu0 0.0
      %1726 = vmatpush2.msra.mxu0 0.0
      %1727 = vmatprep.subr.mxu0 0.0
      %1728 = vmatpush2.msra.mxu0 0.0
      %1729 = vmatprep.subr.mxu0 0.0
      %1730 = vmatpush2.msra.mxu0 0.0
      %1731 = vmatprep.subr.mxu0 0.0
      %1732 = vmatpush2.msra.mxu0 0.0
      %1733 = vmatprep.subr.mxu0 0.0
      %1734 = vmatpush2.msra.mxu0 0.0
      %1735 = vmatprep.subr.mxu0 0.0
      %1736 = vmatpush2.msra.mxu0 0.0
      %1737 = vmatprep.subr.mxu0 0.0
      %1738 = vmatpush2.msra.mxu0 0.0
      %1739 = vmatprep.subr.mxu0 0.0
      %1740 = vmatpush2.msra.mxu0 0.0
      %1741 = vmatprep.mubr.f32.mxu0 0.0
      %1742 = vmatmul.mubr.f32.gmra.mxu0 %v1059
      %v1743 = vpop.f32.mrf.mxu0
      %v1744 = vadd.f32 %v1660, %v1743
      %v1745 = vpop.f32.mrf.mxu0
      %1746 = vdwg.mxu0
      %1747 = vmatprep.subr.mxu0 0.0
      %1748 = vmatpush1.msra.mxu0 0.0
      %1749 = vmatprep.subr.mxu0 0.0
      %1750 = vmatpush1.msra.mxu0 0.0
      %1751 = vmatprep.subr.mxu0 0.0
      %1752 = vmatpush1.msra.mxu0 0.0
      %1753 = vmatprep.subr.mxu0 0.0
      %1754 = vmatpush1.msra.mxu0 0.0
      %1755 = vmatprep.subr.mxu0 0.0
      %1756 = vmatpush1.msra.mxu0 0.0
      %1757 = vmatprep.subr.mxu0 0.0
      %1758 = vmatpush1.msra.mxu0 0.0
      %1759 = vmatprep.subr.mxu0 0.0
      %1760 = vmatpush1.msra.mxu0 0.0
      %1761 = vmatprep.subr.mxu0 0.0
      %1762 = vmatpush1.msra.mxu0 0.0
      %1763 = vmatprep.subr.mxu0 0.0
      %1764 = vmatpush1.msra.mxu0 0.0
      %1765 = vmatprep.subr.mxu0 0.0
      %1766 = vmatpush1.msra.mxu0 0.0
      %1767 = vmatprep.subr.mxu0 0.0
      %1768 = vmatpush1.msra.mxu0 0.0
      %1769 = vmatprep.subr.mxu0 0.0
      %1770 = vmatpush1.msra.mxu0 0.0
      %1771 = vmatprep.subr.mxu0 0.0
      %1772 = vmatpush1.msra.mxu0 %v1020
      %1773 = vmatprep.subr.mxu0 0.0
      %1774 = vmatpush1.msra.mxu0 %v1019
      %1775 = vmatprep.subr.mxu0 0.0
      %1776 = vmatpush1.msra.mxu0 %v1018
      %1777 = vmatprep.subr.mxu0 0.0
      %1778 = vmatpush1.msra.mxu0 %v1017
      %1779 = vmatprep.subr.mxu0 0.0
      %1780 = vmatpush2.msra.mxu0 0.0
      %1781 = vmatprep.subr.mxu0 0.0
      %1782 = vmatpush2.msra.mxu0 0.0
      %1783 = vmatprep.subr.mxu0 0.0
      %1784 = vmatpush2.msra.mxu0 0.0
      %1785 = vmatprep.subr.mxu0 0.0
      %1786 = vmatpush2.msra.mxu0 0.0
      %1787 = vmatprep.subr.mxu0 0.0
      %1788 = vmatpush2.msra.mxu0 0.0
      %1789 = vmatprep.subr.mxu0 0.0
      %1790 = vmatpush2.msra.mxu0 0.0
      %1791 = vmatprep.subr.mxu0 0.0
      %1792 = vmatpush2.msra.mxu0 0.0
      %1793 = vmatprep.subr.mxu0 0.0
      %1794 = vmatpush2.msra.mxu0 0.0
      %1795 = vmatprep.subr.mxu0 0.0
      %1796 = vmatpush2.msra.mxu0 0.0
      %1797 = vmatprep.subr.mxu0 0.0
      %1798 = vmatpush2.msra.mxu0 0.0
      %1799 = vmatprep.subr.mxu0 0.0
      %1800 = vmatpush2.msra.mxu0 0.0
      %1801 = vmatprep.subr.mxu0 0.0
      %1802 = vmatpush2.msra.mxu0 0.0
      %1803 = vmatprep.subr.mxu0 0.0
      %1804 = vmatpush2.msra.mxu0 0.0
      %1805 = vmatprep.subr.mxu0 0.0
      %1806 = vmatpush2.msra.mxu0 0.0
      %1807 = vmatprep.subr.mxu0 0.0
      %1808 = vmatpush2.msra.mxu0 0.0
      %1809 = vmatprep.subr.mxu0 0.0
      %1810 = vmatpush2.msra.mxu0 0.0
      %1811 = vmatprep.mubr.f32.mxu0 0.0
      %1812 = vmatmul.mubr.f32.gmra.mxu0 %v1059
      %v1813 = vpop.f32.mrf.mxu0
      %v1814 = vadd.f32 %v1664, %v1813
      %v1815 = vpop.f32.mrf.mxu0
      %1816 = vdwg.mxu0
      %1817 = vmatprep.subr.mxu0 0.0
      %1818 = vmatpush1.msra.mxu0 0.0
      %1819 = vmatprep.subr.mxu0 0.0
      %1820 = vmatpush1.msra.mxu0 0.0
      %1821 = vmatprep.subr.mxu0 0.0
      %1822 = vmatpush1.msra.mxu0 0.0
      %1823 = vmatprep.subr.mxu0 0.0
      %1824 = vmatpush1.msra.mxu0 0.0
      %1825 = vmatprep.subr.mxu0 0.0
      %1826 = vmatpush1.msra.mxu0 0.0
      %1827 = vmatprep.subr.mxu0 0.0
      %1828 = vmatpush1.msra.mxu0 0.0
      %1829 = vmatprep.subr.mxu0 0.0
      %1830 = vmatpush1.msra.mxu0 0.0
      %1831 = vmatprep.subr.mxu0 0.0
      %1832 = vmatpush1.msra.mxu0 0.0
      %1833 = vmatprep.subr.mxu0 0.0
      %1834 = vmatpush1.msra.mxu0 0.0
      %1835 = vmatprep.subr.mxu0 0.0
      %1836 = vmatpush1.msra.mxu0 0.0
      %1837 = vmatprep.subr.mxu0 0.0
      %1838 = vmatpush1.msra.mxu0 0.0
      %1839 = vmatprep.subr.mxu0 0.0
      %1840 = vmatpush1.msra.mxu0 0.0
      %1841 = vmatprep.subr.mxu0 0.0
      %1842 = vmatpush1.msra.mxu0 %v1024
      %1843 = vmatprep.subr.mxu0 0.0
      %1844 = vmatpush1.msra.mxu0 %v1023
      %1845 = vmatprep.subr.mxu0 0.0
      %1846 = vmatpush1.msra.mxu0 %v1022
      %1847 = vmatprep.subr.mxu0 0.0
      %1848 = vmatpush1.msra.mxu0 %v1021
      %1849 = vmatprep.subr.mxu0 0.0
      %1850 = vmatpush2.msra.mxu0 0.0
      %1851 = vmatprep.subr.mxu0 0.0
      %1852 = vmatpush2.msra.mxu0 0.0
      %1853 = vmatprep.subr.mxu0 0.0
      %1854 = vmatpush2.msra.mxu0 0.0
      %1855 = vmatprep.subr.mxu0 0.0
      %1856 = vmatpush2.msra.mxu0 0.0
      %1857 = vmatprep.subr.mxu0 0.0
      %1858 = vmatpush2.msra.mxu0 0.0
      %1859 = vmatprep.subr.mxu0 0.0
      %1860 = vmatpush2.msra.mxu0 0.0
      %1861 = vmatprep.subr.mxu0 0.0
      %1862 = vmatpush2.msra.mxu0 0.0
      %1863 = vmatprep.subr.mxu0 0.0
      %1864 = vmatpush2.msra.mxu0 0.0
      %1865 = vmatprep.subr.mxu0 0.0
      %1866 = vmatpush2.msra.mxu0 0.0
      %1867 = vmatprep.subr.mxu0 0.0
      %1868 = vmatpush2.msra.mxu0 0.0
      %1869 = vmatprep.subr.mxu0 0.0
      %1870 = vmatpush2.msra.mxu0 0.0
      %1871 = vmatprep.subr.mxu0 0.0
      %1872 = vmatpush2.msra.mxu0 0.0
      %1873 = vmatprep.subr.mxu0 0.0
      %1874 = vmatpush2.msra.mxu0 0.0
      %1875 = vmatprep.subr.mxu0 0.0
      %1876 = vmatpush2.msra.mxu0 0.0
      %1877 = vmatprep.subr.mxu0 0.0
      %1878 = vmatpush2.msra.mxu0 0.0
      %1879 = vmatprep.subr.mxu0 0.0
      %1880 = vmatpush2.msra.mxu0 0.0
      %1881 = vmatprep.mubr.f32.mxu0 0.0
      %1882 = vmatmul.mubr.f32.gmra.mxu0 %v1059
      %v1883 = vpop.f32.mrf.mxu0
      %v1884 = vadd.f32 %v1668, %v1883
      %v1885 = vpop.f32.mrf.mxu0
      %1886 = vdwg.mxu0
      %1887 = vmatprep.subr.mxu0 0.0
      %1888 = vmatpush1.msra.mxu0 0.0
      %1889 = vmatprep.subr.mxu0 0.0
      %1890 = vmatpush1.msra.mxu0 0.0
      %1891 = vmatprep.subr.mxu0 0.0
      %1892 = vmatpush1.msra.mxu0 0.0
      %1893 = vmatprep.subr.mxu0 0.0
      %1894 = vmatpush1.msra.mxu0 0.0
      %1895 = vmatprep.subr.mxu0 0.0
      %1896 = vmatpush1.msra.mxu0 0.0
      %1897 = vmatprep.subr.mxu0 0.0
      %1898 = vmatpush1.msra.mxu0 0.0
      %1899 = vmatprep.subr.mxu0 0.0
      %1900 = vmatpush1.msra.mxu0 0.0
      %1901 = vmatprep.subr.mxu0 0.0
      %1902 = vmatpush1.msra.mxu0 0.0
      %1903 = vmatprep.subr.mxu0 0.0
      %1904 = vmatpush1.msra.mxu0 0.0
      %1905 = vmatprep.subr.mxu0 0.0
      %1906 = vmatpush1.msra.mxu0 0.0
      %1907 = vmatprep.subr.mxu0 0.0
      %1908 = vmatpush1.msra.mxu0 0.0
      %1909 = vmatprep.subr.mxu0 0.0
      %1910 = vmatpush1.msra.mxu0 0.0
      %1911 = vmatprep.subr.mxu0 0.0
      %1912 = vmatpush1.msra.mxu0 %v1028
      %1913 = vmatprep.subr.mxu0 0.0
      %1914 = vmatpush1.msra.mxu0 %v1027
      %1915 = vmatprep.subr.mxu0 0.0
      %1916 = vmatpush1.msra.mxu0 %v1026
      %1917 = vmatprep.subr.mxu0 0.0
      %1918 = vmatpush1.msra.mxu0 %v1025
      %1919 = vmatprep.subr.mxu0 0.0
      %1920 = vmatpush2.msra.mxu0 0.0
      %1921 = vmatprep.subr.mxu0 0.0
      %1922 = vmatpush2.msra.mxu0 0.0
      %1923 = vmatprep.subr.mxu0 0.0
      %1924 = vmatpush2.msra.mxu0 0.0
      %1925 = vmatprep.subr.mxu0 0.0
      %1926 = vmatpush2.msra.mxu0 0.0
      %1927 = vmatprep.subr.mxu0 0.0
      %1928 = vmatpush2.msra.mxu0 0.0
      %1929 = vmatprep.subr.mxu0 0.0
      %1930 = vmatpush2.msra.mxu0 0.0
      %1931 = vmatprep.subr.mxu0 0.0
      %1932 = vmatpush2.msra.mxu0 0.0
      %1933 = vmatprep.subr.mxu0 0.0
      %1934 = vmatpush2.msra.mxu0 0.0
      %1935 = vmatprep.subr.mxu0 0.0
      %1936 = vmatpush2.msra.mxu0 0.0
      %1937 = vmatprep.subr.mxu0 0.0
      %1938 = vmatpush2.msra.mxu0 0.0
      %1939 = vmatprep.subr.mxu0 0.0
      %1940 = vmatpush2.msra.mxu0 0.0
      %1941 = vmatprep.subr.mxu0 0.0
      %1942 = vmatpush2.msra.mxu0 0.0
      %1943 = vmatprep.subr.mxu0 0.0
      %1944 = vmatpush2.msra.mxu0 0.0
      %1945 = vmatprep.subr.mxu0 0.0
      %1946 = vmatpush2.msra.mxu0 0.0
      %1947 = vmatprep.subr.mxu0 0.0
      %1948 = vmatpush2.msra.mxu0 0.0
      %1949 = vmatprep.subr.mxu0 0.0
      %1950 = vmatpush2.msra.mxu0 0.0
      %1951 = vmatprep.mubr.f32.mxu0 0.0
      %1952 = vmatmul.mubr.f32.gmra.mxu0 %v1059
      %v1953 = vpop.f32.mrf.mxu0
      %v1954 = vadd.f32 %v1672, %v1953
      %v1955 = vpop.f32.mrf.mxu0
      %1956 = vdwg.mxu0
      %v1957 = vmul.f32 %v1128, 0.35355338
      %v1958 = vmul.f32 %v1198, 0.35355338
      %v1959 = vmul.f32 %v1268, 0.35355338
      %v1960 = vmul.f32 %v1338, 0.35355338
      %vm1961 = vcmask 64512
      %v1963 = vsel %vm1961, %v1957, 0
      %v1966 = vsel %vm1961, %v1436, 0
      %1968 = vmatprep.subr.mxu0 0.0
      %1969 = vmatpush1.xpose.msra.mxu0 0.0
      %1970 = vmatprep.subr.mxu0 0.0
      %1971 = vmatpush1.xpose.msra.mxu0 0.0
      %1972 = vmatprep.subr.mxu0 0.0
      %1973 = vmatpush1.xpose.msra.mxu0 0.0
      %1974 = vmatprep.subr.mxu0 0.0
      %1975 = vmatpush1.xpose.msra.mxu0 0.0
      %1976 = vmatprep.subr.mxu0 0.0
      %1977 = vmatpush1.xpose.msra.mxu0 0.0
      %1978 = vmatprep.subr.mxu0 0.0
      %1979 = vmatpush1.xpose.msra.mxu0 0.0
      %1980 = vmatprep.subr.mxu0 0.0
      %1981 = vmatpush1.xpose.msra.mxu0 0.0
      %1982 = vmatprep.subr.mxu0 0.0
      %1983 = vmatpush1.xpose.msra.mxu0 0.0
      %1984 = vmatprep.subr.mxu0 0.0
      %1985 = vmatpush1.xpose.msra.mxu0 0.0
      %1986 = vmatprep.subr.mxu0 0.0
      %1987 = vmatpush1.xpose.msra.mxu0 0.0
      %1988 = vmatprep.subr.mxu0 0.0
      %1989 = vmatpush1.xpose.msra.mxu0 0.0
      %1990 = vmatprep.subr.mxu0 0.0
      %1991 = vmatpush1.xpose.msra.mxu0 0.0
      %1992 = vmatprep.subr.mxu0 0.0
      %1993 = vmatpush1.xpose.msra.mxu0 0.0
      %1994 = vmatprep.subr.mxu0 0.0
      %1995 = vmatpush1.xpose.msra.mxu0 0.0
      %1996 = vmatprep.subr.mxu0 0.0
      %1997 = vmatpush1.xpose.msra.mxu0 0.0
      %1998 = vmatprep.subr.mxu0 0.0
      %1999 = vmatpush1.xpose.msra.mxu0 %v1966
      %2000 = vmatprep.subr.mxu0 0.0
      %2001 = vmatpush2.xpose.msra.mxu0 0.0
      %2002 = vmatprep.subr.mxu0 0.0
      %2003 = vmatpush2.xpose.msra.mxu0 0.0
      %2004 = vmatprep.subr.mxu0 0.0
      %2005 = vmatpush2.xpose.msra.mxu0 0.0
      %2006 = vmatprep.subr.mxu0 0.0
      %2007 = vmatpush2.xpose.msra.mxu0 0.0
      %2008 = vmatprep.subr.mxu0 0.0
      %2009 = vmatpush2.xpose.msra.mxu0 0.0
      %2010 = vmatprep.subr.mxu0 0.0
      %2011 = vmatpush2.xpose.msra.mxu0 0.0
      %2012 = vmatprep.subr.mxu0 0.0
      %2013 = vmatpush2.xpose.msra.mxu0 0.0
      %2014 = vmatprep.subr.mxu0 0.0
      %2015 = vmatpush2.xpose.msra.mxu0 0.0
      %2016 = vmatprep.subr.mxu0 0.0
      %2017 = vmatpush2.xpose.msra.mxu0 0.0
      %2018 = vmatprep.subr.mxu0 0.0
      %2019 = vmatpush2.xpose.msra.mxu0 0.0
      %2020 = vmatprep.subr.mxu0 0.0
      %2021 = vmatpush2.xpose.msra.mxu0 0.0
      %2022 = vmatprep.subr.mxu0 0.0
      %2023 = vmatpush2.xpose.msra.mxu0 0.0
      %2024 = vmatprep.subr.mxu0 0.0
      %2025 = vmatpush2.xpose.msra.mxu0 0.0
      %2026 = vmatprep.subr.mxu0 0.0
      %2027 = vmatpush2.xpose.msra.mxu0 0.0
      %2028 = vmatprep.subr.mxu0 0.0
      %2029 = vmatpush2.xpose.msra.mxu0 0.0
      %2030 = vmatprep.subr.mxu0 0.0
      %2031 = vmatpush2.xpose.msra.mxu0 0.0
      %2032 = vmatprep.mubr.f32.mxu0 0.0
      %2033 = vmatmul.mubr.f32.gmra.mxu0 %v1963
      %v2034 = vpop.f32.mrf.mxu0
      %v2035 = vadd.f32 0.0, %v2034
      %v2036 = vpop.f32.mrf.mxu0
      %2037 = vdwg.mxu0
      %v2039 = vsel %vm1961, %v1958, 0
      %v2042 = vsel %vm1961, %v1506, 0
      %2044 = vmatprep.subr.mxu0 0.0
      %2045 = vmatpush1.xpose.msra.mxu0 0.0
      %2046 = vmatprep.subr.mxu0 0.0
      %2047 = vmatpush1.xpose.msra.mxu0 0.0
      %2048 = vmatprep.subr.mxu0 0.0
      %2049 = vmatpush1.xpose.msra.mxu0 0.0
      %2050 = vmatprep.subr.mxu0 0.0
      %2051 = vmatpush1.xpose.msra.mxu0 0.0
      %2052 = vmatprep.subr.mxu0 0.0
      %2053 = vmatpush1.xpose.msra.mxu0 0.0
      %2054 = vmatprep.subr.mxu0 0.0
      %2055 = vmatpush1.xpose.msra.mxu0 0.0
      %2056 = vmatprep.subr.mxu0 0.0
      %2057 = vmatpush1.xpose.msra.mxu0 0.0
      %2058 = vmatprep.subr.mxu0 0.0
      %2059 = vmatpush1.xpose.msra.mxu0 0.0
      %2060 = vmatprep.subr.mxu0 0.0
      %2061 = vmatpush1.xpose.msra.mxu0 0.0
      %2062 = vmatprep.subr.mxu0 0.0
      %2063 = vmatpush1.xpose.msra.mxu0 0.0
      %2064 = vmatprep.subr.mxu0 0.0
      %2065 = vmatpush1.xpose.msra.mxu0 0.0
      %2066 = vmatprep.subr.mxu0 0.0
      %2067 = vmatpush1.xpose.msra.mxu0 0.0
      %2068 = vmatprep.subr.mxu0 0.0
      %2069 = vmatpush1.xpose.msra.mxu0 0.0
      %2070 = vmatprep.subr.mxu0 0.0
      %2071 = vmatpush1.xpose.msra.mxu0 0.0
      %2072 = vmatprep.subr.mxu0 0.0
      %2073 = vmatpush1.xpose.msra.mxu0 0.0
      %2074 = vmatprep.subr.mxu0 0.0
      %2075 = vmatpush1.xpose.msra.mxu0 %v2042
      %2076 = vmatprep.subr.mxu0 0.0
      %2077 = vmatpush2.xpose.msra.mxu0 0.0
      %2078 = vmatprep.subr.mxu0 0.0
      %2079 = vmatpush2.xpose.msra.mxu0 0.0
      %2080 = vmatprep.subr.mxu0 0.0
      %2081 = vmatpush2.xpose.msra.mxu0 0.0
      %2082 = vmatprep.subr.mxu0 0.0
      %2083 = vmatpush2.xpose.msra.mxu0 0.0
      %2084 = vmatprep.subr.mxu0 0.0
      %2085 = vmatpush2.xpose.msra.mxu0 0.0
      %2086 = vmatprep.subr.mxu0 0.0
      %2087 = vmatpush2.xpose.msra.mxu0 0.0
      %2088 = vmatprep.subr.mxu0 0.0
      %2089 = vmatpush2.xpose.msra.mxu0 0.0
      %2090 = vmatprep.subr.mxu0 0.0
      %2091 = vmatpush2.xpose.msra.mxu0 0.0
      %2092 = vmatprep.subr.mxu0 0.0
      %2093 = vmatpush2.xpose.msra.mxu0 0.0
      %2094 = vmatprep.subr.mxu0 0.0
      %2095 = vmatpush2.xpose.msra.mxu0 0.0
      %2096 = vmatprep.subr.mxu0 0.0
      %2097 = vmatpush2.xpose.msra.mxu0 0.0
      %2098 = vmatprep.subr.mxu0 0.0
      %2099 = vmatpush2.xpose.msra.mxu0 0.0
      %2100 = vmatprep.subr.mxu0 0.0
      %2101 = vmatpush2.xpose.msra.mxu0 0.0
      %2102 = vmatprep.subr.mxu0 0.0
      %2103 = vmatpush2.xpose.msra.mxu0 0.0
      %2104 = vmatprep.subr.mxu0 0.0
      %2105 = vmatpush2.xpose.msra.mxu0 0.0
      %2106 = vmatprep.subr.mxu0 0.0
      %2107 = vmatpush2.xpose.msra.mxu0 0.0
      %2108 = vmatprep.mubr.f32.mxu0 0.0
      %2109 = vmatmul.mubr.f32.gmra.mxu0 %v2039
      %v2110 = vpop.f32.mrf.mxu0
      %v2111 = vadd.f32 0.0, %v2110
      %v2112 = vpop.f32.mrf.mxu0
      %2113 = vdwg.mxu0
      %v2115 = vsel %vm1961, %v1959, 0
      %v2118 = vsel %vm1961, %v1576, 0
      %2120 = vmatprep.subr.mxu0 0.0
      %2121 = vmatpush1.xpose.msra.mxu0 0.0
      %2122 = vmatprep.subr.mxu0 0.0
      %2123 = vmatpush1.xpose.msra.mxu0 0.0
      %2124 = vmatprep.subr.mxu0 0.0
      %2125 = vmatpush1.xpose.msra.mxu0 0.0
      %2126 = vmatprep.subr.mxu0 0.0
      %2127 = vmatpush1.xpose.msra.mxu0 0.0
      %2128 = vmatprep.subr.mxu0 0.0
      %2129 = vmatpush1.xpose.msra.mxu0 0.0
      %2130 = vmatprep.subr.mxu0 0.0
      %2131 = vmatpush1.xpose.msra.mxu0 0.0
      %2132 = vmatprep.subr.mxu0 0.0
      %2133 = vmatpush1.xpose.msra.mxu0 0.0
      %2134 = vmatprep.subr.mxu0 0.0
      %2135 = vmatpush1.xpose.msra.mxu0 0.0
      %2136 = vmatprep.subr.mxu0 0.0
      %2137 = vmatpush1.xpose.msra.mxu0 0.0
      %2138 = vmatprep.subr.mxu0 0.0
      %2139 = vmatpush1.xpose.msra.mxu0 0.0
      %2140 = vmatprep.subr.mxu0 0.0
      %2141 = vmatpush1.xpose.msra.mxu0 0.0
      %2142 = vmatprep.subr.mxu0 0.0
      %2143 = vmatpush1.xpose.msra.mxu0 0.0
      %2144 = vmatprep.subr.mxu0 0.0
      %2145 = vmatpush1.xpose.msra.mxu0 0.0
      %2146 = vmatprep.subr.mxu0 0.0
      %2147 = vmatpush1.xpose.msra.mxu0 0.0
      %2148 = vmatprep.subr.mxu0 0.0
      %2149 = vmatpush1.xpose.msra.mxu0 0.0
      %2150 = vmatprep.subr.mxu0 0.0
      %2151 = vmatpush1.xpose.msra.mxu0 %v2118
      %2152 = vmatprep.subr.mxu0 0.0
      %2153 = vmatpush2.xpose.msra.mxu0 0.0
      %2154 = vmatprep.subr.mxu0 0.0
      %2155 = vmatpush2.xpose.msra.mxu0 0.0
      %2156 = vmatprep.subr.mxu0 0.0
      %2157 = vmatpush2.xpose.msra.mxu0 0.0
      %2158 = vmatprep.subr.mxu0 0.0
      %2159 = vmatpush2.xpose.msra.mxu0 0.0
      %2160 = vmatprep.subr.mxu0 0.0
      %2161 = vmatpush2.xpose.msra.mxu0 0.0
      %2162 = vmatprep.subr.mxu0 0.0
      %2163 = vmatpush2.xpose.msra.mxu0 0.0
      %2164 = vmatprep.subr.mxu0 0.0
      %2165 = vmatpush2.xpose.msra.mxu0 0.0
      %2166 = vmatprep.subr.mxu0 0.0
      %2167 = vmatpush2.xpose.msra.mxu0 0.0
      %2168 = vmatprep.subr.mxu0 0.0
      %2169 = vmatpush2.xpose.msra.mxu0 0.0
      %2170 = vmatprep.subr.mxu0 0.0
      %2171 = vmatpush2.xpose.msra.mxu0 0.0
      %2172 = vmatprep.subr.mxu0 0.0
      %2173 = vmatpush2.xpose.msra.mxu0 0.0
      %2174 = vmatprep.subr.mxu0 0.0
      %2175 = vmatpush2.xpose.msra.mxu0 0.0
      %2176 = vmatprep.subr.mxu0 0.0
      %2177 = vmatpush2.xpose.msra.mxu0 0.0
      %2178 = vmatprep.subr.mxu0 0.0
      %2179 = vmatpush2.xpose.msra.mxu0 0.0
      %2180 = vmatprep.subr.mxu0 0.0
      %2181 = vmatpush2.xpose.msra.mxu0 0.0
      %2182 = vmatprep.subr.mxu0 0.0
      %2183 = vmatpush2.xpose.msra.mxu0 0.0
      %2184 = vmatprep.mubr.f32.mxu0 0.0
      %2185 = vmatmul.mubr.f32.gmra.mxu0 %v2115
      %v2186 = vpop.f32.mrf.mxu0
      %v2187 = vadd.f32 0.0, %v2186
      %v2188 = vpop.f32.mrf.mxu0
      %2189 = vdwg.mxu0
      %v2191 = vsel %vm1961, %v1960, 0
      %v2194 = vsel %vm1961, %v1646, 0
      %2196 = vmatprep.subr.mxu0 0.0
      %2197 = vmatpush1.xpose.msra.mxu0 0.0
      %2198 = vmatprep.subr.mxu0 0.0
      %2199 = vmatpush1.xpose.msra.mxu0 0.0
      %2200 = vmatprep.subr.mxu0 0.0
      %2201 = vmatpush1.xpose.msra.mxu0 0.0
      %2202 = vmatprep.subr.mxu0 0.0
      %2203 = vmatpush1.xpose.msra.mxu0 0.0
      %2204 = vmatprep.subr.mxu0 0.0
      %2205 = vmatpush1.xpose.msra.mxu0 0.0
      %2206 = vmatprep.subr.mxu0 0.0
      %2207 = vmatpush1.xpose.msra.mxu0 0.0
      %2208 = vmatprep.subr.mxu0 0.0
      %2209 = vmatpush1.xpose.msra.mxu0 0.0
      %2210 = vmatprep.subr.mxu0 0.0
      %2211 = vmatpush1.xpose.msra.mxu0 0.0
      %2212 = vmatprep.subr.mxu0 0.0
      %2213 = vmatpush1.xpose.msra.mxu0 0.0
      %2214 = vmatprep.subr.mxu0 0.0
      %2215 = vmatpush1.xpose.msra.mxu0 0.0
      %2216 = vmatprep.subr.mxu0 0.0
      %2217 = vmatpush1.xpose.msra.mxu0 0.0
      %2218 = vmatprep.subr.mxu0 0.0
      %2219 = vmatpush1.xpose.msra.mxu0 0.0
      %2220 = vmatprep.subr.mxu0 0.0
      %2221 = vmatpush1.xpose.msra.mxu0 0.0
      %2222 = vmatprep.subr.mxu0 0.0
      %2223 = vmatpush1.xpose.msra.mxu0 0.0
      %2224 = vmatprep.subr.mxu0 0.0
      %2225 = vmatpush1.xpose.msra.mxu0 0.0
      %2226 = vmatprep.subr.mxu0 0.0
      %2227 = vmatpush1.xpose.msra.mxu0 %v2194
      %2228 = vmatprep.subr.mxu0 0.0
      %2229 = vmatpush2.xpose.msra.mxu0 0.0
      %2230 = vmatprep.subr.mxu0 0.0
      %2231 = vmatpush2.xpose.msra.mxu0 0.0
      %2232 = vmatprep.subr.mxu0 0.0
      %2233 = vmatpush2.xpose.msra.mxu0 0.0
      %2234 = vmatprep.subr.mxu0 0.0
      %2235 = vmatpush2.xpose.msra.mxu0 0.0
      %2236 = vmatprep.subr.mxu0 0.0
      %2237 = vmatpush2.xpose.msra.mxu0 0.0
      %2238 = vmatprep.subr.mxu0 0.0
      %2239 = vmatpush2.xpose.msra.mxu0 0.0
      %2240 = vmatprep.subr.mxu0 0.0
      %2241 = vmatpush2.xpose.msra.mxu0 0.0
      %2242 = vmatprep.subr.mxu0 0.0
      %2243 = vmatpush2.xpose.msra.mxu0 0.0
      %2244 = vmatprep.subr.mxu0 0.0
      %2245 = vmatpush2.xpose.msra.mxu0 0.0
      %2246 = vmatprep.subr.mxu0 0.0
      %2247 = vmatpush2.xpose.msra.mxu0 0.0
      %2248 = vmatprep.subr.mxu0 0.0
      %2249 = vmatpush2.xpose.msra.mxu0 0.0
      %2250 = vmatprep.subr.mxu0 0.0
      %2251 = vmatpush2.xpose.msra.mxu0 0.0
      %2252 = vmatprep.subr.mxu0 0.0
      %2253 = vmatpush2.xpose.msra.mxu0 0.0
      %2254 = vmatprep.subr.mxu0 0.0
      %2255 = vmatpush2.xpose.msra.mxu0 0.0
      %2256 = vmatprep.subr.mxu0 0.0
      %2257 = vmatpush2.xpose.msra.mxu0 0.0
      %2258 = vmatprep.subr.mxu0 0.0
      %2259 = vmatpush2.xpose.msra.mxu0 0.0
      %2260 = vmatprep.mubr.f32.mxu0 0.0
      %2261 = vmatmul.mubr.f32.gmra.mxu0 %v2191
      %v2262 = vpop.f32.mrf.mxu0
      %v2263 = vadd.f32 0.0, %v2262
      %v2264 = vpop.f32.mrf.mxu0
      %2265 = vdwg.mxu0
      %v2266 = vld [vmem:[%s865] sm:$0x1]
      %vm2267 = vcmp.eq.f32.partialorder %v2266, 0.0
      %v2268 = vsel %vm2267, 1, 0
      %v2269 = vlaneseq
      %v2270 = vshrl.u32 %v2269, 7
      %v2271 = vsub.s32 0, %v2270
      %v2272 = vrot.slane %v2268, %v2271
      %vm2273 = vcmp.eq.s32.totalorder %v2272, 1
      %v2274 = vsel %vm2273, -1e+09, %v2035
      %v2275 = vsel %vm2273, -1e+09, %v2111
      %v2276 = vsel %vm2273, -1e+09, %v2187
      %v2277 = vsel %vm2273, -1e+09, %v2263
      %v2278 = vsel %vm1961, %v2274, -inf
      %2279 = vmax.xlane.f32.xlu0 %v2278
      %v2280 = vpop.xlane.xlu0 %2279
      %v2281 = vsel %vm1961, %v2275, -inf
      %2282 = vmax.xlane.f32.xlu0 %v2281
      %v2283 = vpop.xlane.xlu0 %2282
      %v2284 = vsel %vm1961, %v2276, -inf
      %2285 = vmax.xlane.f32.xlu0 %v2284
      %v2286 = vpop.xlane.xlu0 %2285
      %v2287 = vsel %vm1961, %v2277, -inf
      %2288 = vmax.xlane.f32.xlu0 %v2287
      %v2289 = vpop.xlane.xlu0 %2288
      %v2290 = vsub.f32 %v2274, %v2280
      %v2291 = vsub.f32 %v2275, %v2283
      %v2292 = vsub.f32 %v2276, %v2286
      %v2293 = vsub.f32 %v2277, %v2289
      %v2294 = vmul.f32 %v2290, 1.442695
      %v2295 = vpow.pop %v2294
      %v2296 = vmul.f32 %v2291, 1.442695
      %v2297 = vpow.pop %v2296
      %v2298 = vmul.f32 %v2292, 1.442695
      %v2299 = vpow.pop %v2298
      %v2300 = vmul.f32 %v2293, 1.442695
      %v2301 = vpow.pop %v2300
      %v2302 = vsel %vm1961, %v2295, 0.0
      %2303 = vadd.xlane.f32.xlu0 %v2302
      %v2304 = vpop.xlane.xlu0 %2303
      %v2305 = vsel %vm1961, %v2297, 0.0
      %2306 = vadd.xlane.f32.xlu0 %v2305
      %v2307 = vpop.xlane.xlu0 %2306
      %v2308 = vsel %vm1961, %v2299, 0.0
      %2309 = vadd.xlane.f32.xlu0 %v2308
      %v2310 = vpop.xlane.xlu0 %2309
      %v2311 = vsel %vm1961, %v2301, 0.0
      %2312 = vadd.xlane.f32.xlu0 %v2311
      %v2313 = vpop.xlane.xlu0 %2312
      %v2314 = vrcp.pop %v2304
      %v2315 = vrcp.pop %v2307
      %v2316 = vrcp.pop %v2310
      %v2317 = vrcp.pop %v2313
      %v2318 = vmul.f32 %v2295, %v2314
      %v2319 = vmul.f32 %v2297, %v2315
      %v2320 = vmul.f32 %v2299, %v2316
      %v2321 = vmul.f32 %v2301, %v2317
      %v2323 = vsel %vm1961, %v2318, 0
      %2325 = vmatprep.subr.mxu0 0.0
      %2326 = vmatpush1.msra.mxu0 0.0
      %2327 = vmatprep.subr.mxu0 0.0
      %2328 = vmatpush1.msra.mxu0 0.0
      %2329 = vmatprep.subr.mxu0 0.0
      %2330 = vmatpush1.msra.mxu0 0.0
      %2331 = vmatprep.subr.mxu0 0.0
      %2332 = vmatpush1.msra.mxu0 0.0
      %2333 = vmatprep.subr.mxu0 0.0
      %2334 = vmatpush1.msra.mxu0 0.0
      %2335 = vmatprep.subr.mxu0 0.0
      %2336 = vmatpush1.msra.mxu0 0.0
      %2337 = vmatprep.subr.mxu0 0.0
      %2338 = vmatpush1.msra.mxu0 0.0
      %2339 = vmatprep.subr.mxu0 0.0
      %2340 = vmatpush1.msra.mxu0 0.0
      %2341 = vmatprep.subr.mxu0 0.0
      %2342 = vmatpush1.msra.mxu0 0.0
      %2343 = vmatprep.subr.mxu0 0.0
      %2344 = vmatpush1.msra.mxu0 0.0
      %2345 = vmatprep.subr.mxu0 0.0
      %2346 = vmatpush1.msra.mxu0 0.0
      %2347 = vmatprep.subr.mxu0 0.0
      %2348 = vmatpush1.msra.mxu0 0.0
      %2349 = vmatprep.subr.mxu0 0.0
      %2350 = vmatpush1.msra.mxu0 0.0
      %2351 = vmatprep.subr.mxu0 0.0
      %2352 = vmatpush1.msra.mxu0 0.0
      %2353 = vmatprep.subr.mxu0 0.0
      %2354 = vmatpush1.msra.mxu0 0.0
      %2355 = vmatprep.subr.mxu0 0.0
      %2356 = vmatpush1.msra.mxu0 %v1744
      %2357 = vmatprep.subr.mxu0 0.0
      %2358 = vmatpush2.msra.mxu0 0.0
      %2359 = vmatprep.subr.mxu0 0.0
      %2360 = vmatpush2.msra.mxu0 0.0
      %2361 = vmatprep.subr.mxu0 0.0
      %2362 = vmatpush2.msra.mxu0 0.0
      %2363 = vmatprep.subr.mxu0 0.0
      %2364 = vmatpush2.msra.mxu0 0.0
      %2365 = vmatprep.subr.mxu0 0.0
      %2366 = vmatpush2.msra.mxu0 0.0
      %2367 = vmatprep.subr.mxu0 0.0
      %2368 = vmatpush2.msra.mxu0 0.0
      %2369 = vmatprep.subr.mxu0 0.0
      %2370 = vmatpush2.msra.mxu0 0.0
      %2371 = vmatprep.subr.mxu0 0.0
      %2372 = vmatpush2.msra.mxu0 0.0
      %2373 = vmatprep.subr.mxu0 0.0
      %2374 = vmatpush2.msra.mxu0 0.0
      %2375 = vmatprep.subr.mxu0 0.0
      %2376 = vmatpush2.msra.mxu0 0.0
      %2377 = vmatprep.subr.mxu0 0.0
      %2378 = vmatpush2.msra.mxu0 0.0
      %2379 = vmatprep.subr.mxu0 0.0
      %2380 = vmatpush2.msra.mxu0 0.0
      %2381 = vmatprep.subr.mxu0 0.0
      %2382 = vmatpush2.msra.mxu0 0.0
      %2383 = vmatprep.subr.mxu0 0.0
      %2384 = vmatpush2.msra.mxu0 0.0
      %2385 = vmatprep.subr.mxu0 0.0
      %2386 = vmatpush2.msra.mxu0 0.0
      %2387 = vmatprep.subr.mxu0 0.0
      %2388 = vmatpush2.msra.mxu0 0.0
      %2389 = vmatprep.mubr.f32.mxu0 0.0
      %2390 = vmatmul.mubr.f32.gmra.mxu0 %v2323
      %v2391 = vpop.f32.mrf.mxu0
      %v2392 = vadd.f32 0.0, %v2391
      %v2393 = vpop.f32.mrf.mxu0
      %2394 = vdwg.mxu0
      %v2396 = vsel %vm1961, %v2319, 0
      %2398 = vmatprep.subr.mxu0 0.0
      %2399 = vmatpush1.msra.mxu0 0.0
      %2400 = vmatprep.subr.mxu0 0.0
      %2401 = vmatpush1.msra.mxu0 0.0
      %2402 = vmatprep.subr.mxu0 0.0
      %2403 = vmatpush1.msra.mxu0 0.0
      %2404 = vmatprep.subr.mxu0 0.0
      %2405 = vmatpush1.msra.mxu0 0.0
      %2406 = vmatprep.subr.mxu0 0.0
      %2407 = vmatpush1.msra.mxu0 0.0
      %2408 = vmatprep.subr.mxu0 0.0
      %2409 = vmatpush1.msra.mxu0 0.0
      %2410 = vmatprep.subr.mxu0 0.0
      %2411 = vmatpush1.msra.mxu0 0.0
      %2412 = vmatprep.subr.mxu0 0.0
      %2413 = vmatpush1.msra.mxu0 0.0
      %2414 = vmatprep.subr.mxu0 0.0
      %2415 = vmatpush1.msra.mxu0 0.0
      %2416 = vmatprep.subr.mxu0 0.0
      %2417 = vmatpush1.msra.mxu0 0.0
      %2418 = vmatprep.subr.mxu0 0.0
      %2419 = vmatpush1.msra.mxu0 0.0
      %2420 = vmatprep.subr.mxu0 0.0
      %2421 = vmatpush1.msra.mxu0 0.0
      %2422 = vmatprep.subr.mxu0 0.0
      %2423 = vmatpush1.msra.mxu0 0.0
      %2424 = vmatprep.subr.mxu0 0.0
      %2425 = vmatpush1.msra.mxu0 0.0
      %2426 = vmatprep.subr.mxu0 0.0
      %2427 = vmatpush1.msra.mxu0 0.0
      %2428 = vmatprep.subr.mxu0 0.0
      %2429 = vmatpush1.msra.mxu0 %v1814
      %2430 = vmatprep.subr.mxu0 0.0
      %2431 = vmatpush2.msra.mxu0 0.0
      %2432 = vmatprep.subr.mxu0 0.0
      %2433 = vmatpush2.msra.mxu0 0.0
      %2434 = vmatprep.subr.mxu0 0.0
      %2435 = vmatpush2.msra.mxu0 0.0
      %2436 = vmatprep.subr.mxu0 0.0
      %2437 = vmatpush2.msra.mxu0 0.0
      %2438 = vmatprep.subr.mxu0 0.0
      %2439 = vmatpush2.msra.mxu0 0.0
      %2440 = vmatprep.subr.mxu0 0.0
      %2441 = vmatpush2.msra.mxu0 0.0
      %2442 = vmatprep.subr.mxu0 0.0
      %2443 = vmatpush2.msra.mxu0 0.0
      %2444 = vmatprep.subr.mxu0 0.0
      %2445 = vmatpush2.msra.mxu0 0.0
      %2446 = vmatprep.subr.mxu0 0.0
      %2447 = vmatpush2.msra.mxu0 0.0
      %2448 = vmatprep.subr.mxu0 0.0
      %2449 = vmatpush2.msra.mxu0 0.0
      %2450 = vmatprep.subr.mxu0 0.0
      %2451 = vmatpush2.msra.mxu0 0.0
      %2452 = vmatprep.subr.mxu0 0.0
      %2453 = vmatpush2.msra.mxu0 0.0
      %2454 = vmatprep.subr.mxu0 0.0
      %2455 = vmatpush2.msra.mxu0 0.0
      %2456 = vmatprep.subr.mxu0 0.0
      %2457 = vmatpush2.msra.mxu0 0.0
      %2458 = vmatprep.subr.mxu0 0.0
      %2459 = vmatpush2.msra.mxu0 0.0
      %2460 = vmatprep.subr.mxu0 0.0
      %2461 = vmatpush2.msra.mxu0 0.0
      %2462 = vmatprep.mubr.f32.mxu0 0.0
      %2463 = vmatmul.mubr.f32.gmra.mxu0 %v2396
      %v2464 = vpop.f32.mrf.mxu0
      %v2465 = vadd.f32 0.0, %v2464
      %v2466 = vpop.f32.mrf.mxu0
      %2467 = vdwg.mxu0
      %v2469 = vsel %vm1961, %v2320, 0
      %2471 = vmatprep.subr.mxu0 0.0
      %2472 = vmatpush1.msra.mxu0 0.0
      %2473 = vmatprep.subr.mxu0 0.0
      %2474 = vmatpush1.msra.mxu0 0.0
      %2475 = vmatprep.subr.mxu0 0.0
      %2476 = vmatpush1.msra.mxu0 0.0
      %2477 = vmatprep.subr.mxu0 0.0
      %2478 = vmatpush1.msra.mxu0 0.0
      %2479 = vmatprep.subr.mxu0 0.0
      %2480 = vmatpush1.msra.mxu0 0.0
      %2481 = vmatprep.subr.mxu0 0.0
      %2482 = vmatpush1.msra.mxu0 0.0
      %2483 = vmatprep.subr.mxu0 0.0
      %2484 = vmatpush1.msra.mxu0 0.0
      %2485 = vmatprep.subr.mxu0 0.0
      %2486 = vmatpush1.msra.mxu0 0.0
      %2487 = vmatprep.subr.mxu0 0.0
      %2488 = vmatpush1.msra.mxu0 0.0
      %2489 = vmatprep.subr.mxu0 0.0
      %2490 = vmatpush1.msra.mxu0 0.0
      %2491 = vmatprep.subr.mxu0 0.0
      %2492 = vmatpush1.msra.mxu0 0.0
      %2493 = vmatprep.subr.mxu0 0.0
      %2494 = vmatpush1.msra.mxu0 0.0
      %2495 = vmatprep.subr.mxu0 0.0
      %2496 = vmatpush1.msra.mxu0 0.0
      %2497 = vmatprep.subr.mxu0 0.0
      %2498 = vmatpush1.msra.mxu0 0.0
      %2499 = vmatprep.subr.mxu0 0.0
      %2500 = vmatpush1.msra.mxu0 0.0
      %2501 = vmatprep.subr.mxu0 0.0
      %2502 = vmatpush1.msra.mxu0 %v1884
      %2503 = vmatprep.subr.mxu0 0.0
      %2504 = vmatpush2.msra.mxu0 0.0
      %2505 = vmatprep.subr.mxu0 0.0
      %2506 = vmatpush2.msra.mxu0 0.0
      %2507 = vmatprep.subr.mxu0 0.0
      %2508 = vmatpush2.msra.mxu0 0.0
      %2509 = vmatprep.subr.mxu0 0.0
      %2510 = vmatpush2.msra.mxu0 0.0
      %2511 = vmatprep.subr.mxu0 0.0
      %2512 = vmatpush2.msra.mxu0 0.0
      %2513 = vmatprep.subr.mxu0 0.0
      %2514 = vmatpush2.msra.mxu0 0.0
      %2515 = vmatprep.subr.mxu0 0.0
      %2516 = vmatpush2.msra.mxu0 0.0
      %2517 = vmatprep.subr.mxu0 0.0
      %2518 = vmatpush2.msra.mxu0 0.0
      %2519 = vmatprep.subr.mxu0 0.0
      %2520 = vmatpush2.msra.mxu0 0.0
      %2521 = vmatprep.subr.mxu0 0.0
      %2522 = vmatpush2.msra.mxu0 0.0
      %2523 = vmatprep.subr.mxu0 0.0
      %2524 = vmatpush2.msra.mxu0 0.0
      %2525 = vmatprep.subr.mxu0 0.0
      %2526 = vmatpush2.msra.mxu0 0.0
      %2527 = vmatprep.subr.mxu0 0.0
      %2528 = vmatpush2.msra.mxu0 0.0
      %2529 = vmatprep.subr.mxu0 0.0
      %2530 = vmatpush2.msra.mxu0 0.0
      %2531 = vmatprep.subr.mxu0 0.0
      %2532 = vmatpush2.msra.mxu0 0.0
      %2533 = vmatprep.subr.mxu0 0.0
      %2534 = vmatpush2.msra.mxu0 0.0
      %2535 = vmatprep.mubr.f32.mxu0 0.0
      %2536 = vmatmul.mubr.f32.gmra.mxu0 %v2469
      %v2537 = vpop.f32.mrf.mxu0
      %v2538 = vadd.f32 0.0, %v2537
      %v2539 = vpop.f32.mrf.mxu0
      %2540 = vdwg.mxu0
      %v2542 = vsel %vm1961, %v2321, 0
      %2544 = vmatprep.subr.mxu0 0.0
      %2545 = vmatpush1.msra.mxu0 0.0
      %2546 = vmatprep.subr.mxu0 0.0
      %2547 = vmatpush1.msra.mxu0 0.0
      %2548 = vmatprep.subr.mxu0 0.0
      %2549 = vmatpush1.msra.mxu0 0.0
      %2550 = vmatprep.subr.mxu0 0.0
      %2551 = vmatpush1.msra.mxu0 0.0
      %2552 = vmatprep.subr.mxu0 0.0
      %2553 = vmatpush1.msra.mxu0 0.0
      %2554 = vmatprep.subr.mxu0 0.0
      %2555 = vmatpush1.msra.mxu0 0.0
      %2556 = vmatprep.subr.mxu0 0.0
      %2557 = vmatpush1.msra.mxu0 0.0
      %2558 = vmatprep.subr.mxu0 0.0
      %2559 = vmatpush1.msra.mxu0 0.0
      %2560 = vmatprep.subr.mxu0 0.0
      %2561 = vmatpush1.msra.mxu0 0.0
      %2562 = vmatprep.subr.mxu0 0.0
      %2563 = vmatpush1.msra.mxu0 0.0
      %2564 = vmatprep.subr.mxu0 0.0
      %2565 = vmatpush1.msra.mxu0 0.0
      %2566 = vmatprep.subr.mxu0 0.0
      %2567 = vmatpush1.msra.mxu0 0.0
      %2568 = vmatprep.subr.mxu0 0.0
      %2569 = vmatpush1.msra.mxu0 0.0
      %2570 = vmatprep.subr.mxu0 0.0
      %2571 = vmatpush1.msra.mxu0 0.0
      %2572 = vmatprep.subr.mxu0 0.0
      %2573 = vmatpush1.msra.mxu0 0.0
      %2574 = vmatprep.subr.mxu0 0.0
      %2575 = vmatpush1.msra.mxu0 %v1954
      %2576 = vmatprep.subr.mxu0 0.0
      %2577 = vmatpush2.msra.mxu0 0.0
      %2578 = vmatprep.subr.mxu0 0.0
      %2579 = vmatpush2.msra.mxu0 0.0
      %2580 = vmatprep.subr.mxu0 0.0
      %2581 = vmatpush2.msra.mxu0 0.0
      %2582 = vmatprep.subr.mxu0 0.0
      %2583 = vmatpush2.msra.mxu0 0.0
      %2584 = vmatprep.subr.mxu0 0.0
      %2585 = vmatpush2.msra.mxu0 0.0
      %2586 = vmatprep.subr.mxu0 0.0
      %2587 = vmatpush2.msra.mxu0 0.0
      %2588 = vmatprep.subr.mxu0 0.0
      %2589 = vmatpush2.msra.mxu0 0.0
      %2590 = vmatprep.subr.mxu0 0.0
      %2591 = vmatpush2.msra.mxu0 0.0
      %2592 = vmatprep.subr.mxu0 0.0
      %2593 = vmatpush2.msra.mxu0 0.0
      %2594 = vmatprep.subr.mxu0 0.0
      %2595 = vmatpush2.msra.mxu0 0.0
      %2596 = vmatprep.subr.mxu0 0.0
      %2597 = vmatpush2.msra.mxu0 0.0
      %2598 = vmatprep.subr.mxu0 0.0
      %2599 = vmatpush2.msra.mxu0 0.0
      %2600 = vmatprep.subr.mxu0 0.0
      %2601 = vmatpush2.msra.mxu0 0.0
      %2602 = vmatprep.subr.mxu0 0.0
      %2603 = vmatpush2.msra.mxu0 0.0
      %2604 = vmatprep.subr.mxu0 0.0
      %2605 = vmatpush2.msra.mxu0 0.0
      %2606 = vmatprep.subr.mxu0 0.0
      %2607 = vmatpush2.msra.mxu0 0.0
      %2608 = vmatprep.mubr.f32.mxu0 0.0
      %2609 = vmatmul.mubr.f32.gmra.mxu0 %v2542
      %v2610 = vpop.f32.mrf.mxu0
      %v2611 = vadd.f32 0.0, %v2610
      %v2612 = vpop.f32.mrf.mxu0
      %2613 = vdwg.mxu0
      %v2614 = vld [vmem:[%s906] sm:$0xff]
      %v2615 = vld [vmem:[%s906 + $0x8] sm:$0xff]
      %v2616 = vld [vmem:[%s906 + $0x10] sm:$0xff]
      %v2617 = vld [vmem:[%s906 + $0x18] sm:$0xff]
      %v2619 = vsel %vm1961, %v2392, 0
      %2621 = vmatprep.subr.mxu0 0.0
      %2622 = vmatpush1.msra.mxu0 0.0
      %2623 = vmatprep.subr.mxu0 0.0
      %2624 = vmatpush1.msra.mxu0 0.0
      %2625 = vmatprep.subr.mxu0 0.0
      %2626 = vmatpush1.msra.mxu0 0.0
      %2627 = vmatprep.subr.mxu0 0.0
      %2628 = vmatpush1.msra.mxu0 0.0
      %2629 = vmatprep.subr.mxu0 0.0
      %2630 = vmatpush1.msra.mxu0 0.0
      %2631 = vmatprep.subr.mxu0 0.0
      %2632 = vmatpush1.msra.mxu0 0.0
      %2633 = vmatprep.subr.mxu0 0.0
      %2634 = vmatpush1.msra.mxu0 0.0
      %2635 = vmatprep.subr.mxu0 0.0
      %2636 = vmatpush1.msra.mxu0 0.0
      %2637 = vmatprep.subr.mxu0 0.0
      %2638 = vmatpush1.msra.mxu0 0.0
      %2639 = vmatprep.subr.mxu0 0.0
      %2640 = vmatpush1.msra.mxu0 0.0
      %2641 = vmatprep.subr.mxu0 0.0
      %2642 = vmatpush1.msra.mxu0 0.0
      %2643 = vmatprep.subr.mxu0 0.0
      %2644 = vmatpush1.msra.mxu0 0.0
      %2645 = vmatprep.subr.mxu0 0.0
      %2646 = vmatpush1.msra.mxu0 0.0
      %2647 = vmatprep.subr.mxu0 0.0
      %2648 = vmatpush1.msra.mxu0 0.0
      %2649 = vmatprep.subr.mxu0 0.0
      %2650 = vmatpush1.msra.mxu0 0.0
      %2651 = vmatprep.subr.mxu0 0.0
      %2652 = vmatpush1.msra.mxu0 %v2614
      %2653 = vmatprep.subr.mxu0 0.0
      %2654 = vmatpush2.msra.mxu0 0.0
      %2655 = vmatprep.subr.mxu0 0.0
      %2656 = vmatpush2.msra.mxu0 0.0
      %2657 = vmatprep.subr.mxu0 0.0
      %2658 = vmatpush2.msra.mxu0 0.0
      %2659 = vmatprep.subr.mxu0 0.0
      %2660 = vmatpush2.msra.mxu0 0.0
      %2661 = vmatprep.subr.mxu0 0.0
      %2662 = vmatpush2.msra.mxu0 0.0
      %2663 = vmatprep.subr.mxu0 0.0
      %2664 = vmatpush2.msra.mxu0 0.0
      %2665 = vmatprep.subr.mxu0 0.0
      %2666 = vmatpush2.msra.mxu0 0.0
      %2667 = vmatprep.subr.mxu0 0.0
      %2668 = vmatpush2.msra.mxu0 0.0
      %2669 = vmatprep.subr.mxu0 0.0
      %2670 = vmatpush2.msra.mxu0 0.0
      %2671 = vmatprep.subr.mxu0 0.0
      %2672 = vmatpush2.msra.mxu0 0.0
      %2673 = vmatprep.subr.mxu0 0.0
      %2674 = vmatpush2.msra.mxu0 0.0
      %2675 = vmatprep.subr.mxu0 0.0
      %2676 = vmatpush2.msra.mxu0 0.0
      %2677 = vmatprep.subr.mxu0 0.0
      %2678 = vmatpush2.msra.mxu0 0.0
      %2679 = vmatprep.subr.mxu0 0.0
      %2680 = vmatpush2.msra.mxu0 0.0
      %2681 = vmatprep.subr.mxu0 0.0
      %2682 = vmatpush2.msra.mxu0 0.0
      %2683 = vmatprep.subr.mxu0 0.0
      %2684 = vmatpush2.msra.mxu0 0.0
      %2685 = vmatprep.mubr.f32.mxu0 0.0
      %2686 = vmatmul.mubr.f32.gmra.mxu0 %v2619
      %v2687 = vpop.f32.mrf.mxu0
      %v2688 = vadd.f32 0.0, %v2687
      %v2689 = vpop.f32.mrf.mxu0
      %2690 = vdwg.mxu0
      %v2692 = vsel %vm1961, %v2465, 0
      %2694 = vmatprep.subr.mxu0 0.0
      %2695 = vmatpush1.msra.mxu0 0.0
      %2696 = vmatprep.subr.mxu0 0.0
      %2697 = vmatpush1.msra.mxu0 0.0
      %2698 = vmatprep.subr.mxu0 0.0
      %2699 = vmatpush1.msra.mxu0 0.0
      %2700 = vmatprep.subr.mxu0 0.0
      %2701 = vmatpush1.msra.mxu0 0.0
      %2702 = vmatprep.subr.mxu0 0.0
      %2703 = vmatpush1.msra.mxu0 0.0
      %2704 = vmatprep.subr.mxu0 0.0
      %2705 = vmatpush1.msra.mxu0 0.0
      %2706 = vmatprep.subr.mxu0 0.0
      %2707 = vmatpush1.msra.mxu0 0.0
      %2708 = vmatprep.subr.mxu0 0.0
      %2709 = vmatpush1.msra.mxu0 0.0
      %2710 = vmatprep.subr.mxu0 0.0
      %2711 = vmatpush1.msra.mxu0 0.0
      %2712 = vmatprep.subr.mxu0 0.0
      %2713 = vmatpush1.msra.mxu0 0.0
      %2714 = vmatprep.subr.mxu0 0.0
      %2715 = vmatpush1.msra.mxu0 0.0
      %2716 = vmatprep.subr.mxu0 0.0
      %2717 = vmatpush1.msra.mxu0 0.0
      %2718 = vmatprep.subr.mxu0 0.0
      %2719 = vmatpush1.msra.mxu0 0.0
      %2720 = vmatprep.subr.mxu0 0.0
      %2721 = vmatpush1.msra.mxu0 0.0
      %2722 = vmatprep.subr.mxu0 0.0
      %2723 = vmatpush1.msra.mxu0 0.0
      %2724 = vmatprep.subr.mxu0 0.0
      %2725 = vmatpush1.msra.mxu0 %v2615
      %2726 = vmatprep.subr.mxu0 0.0
      %2727 = vmatpush2.msra.mxu0 0.0
      %2728 = vmatprep.subr.mxu0 0.0
      %2729 = vmatpush2.msra.mxu0 0.0
      %2730 = vmatprep.subr.mxu0 0.0
      %2731 = vmatpush2.msra.mxu0 0.0
      %2732 = vmatprep.subr.mxu0 0.0
      %2733 = vmatpush2.msra.mxu0 0.0
      %2734 = vmatprep.subr.mxu0 0.0
      %2735 = vmatpush2.msra.mxu0 0.0
      %2736 = vmatprep.subr.mxu0 0.0
      %2737 = vmatpush2.msra.mxu0 0.0
      %2738 = vmatprep.subr.mxu0 0.0
      %2739 = vmatpush2.msra.mxu0 0.0
      %2740 = vmatprep.subr.mxu0 0.0
      %2741 = vmatpush2.msra.mxu0 0.0
      %2742 = vmatprep.subr.mxu0 0.0
      %2743 = vmatpush2.msra.mxu0 0.0
      %2744 = vmatprep.subr.mxu0 0.0
      %2745 = vmatpush2.msra.mxu0 0.0
      %2746 = vmatprep.subr.mxu0 0.0
      %2747 = vmatpush2.msra.mxu0 0.0
      %2748 = vmatprep.subr.mxu0 0.0
      %2749 = vmatpush2.msra.mxu0 0.0
      %2750 = vmatprep.subr.mxu0 0.0
      %2751 = vmatpush2.msra.mxu0 0.0
      %2752 = vmatprep.subr.mxu0 0.0
      %2753 = vmatpush2.msra.mxu0 0.0
      %2754 = vmatprep.subr.mxu0 0.0
      %2755 = vmatpush2.msra.mxu0 0.0
      %2756 = vmatprep.subr.mxu0 0.0
      %2757 = vmatpush2.msra.mxu0 0.0
      %2758 = vmatprep.mubr.f32.mxu0 0.0
      %2759 = vmatmul.mubr.f32.gmra.mxu0 %v2692
      %v2760 = vpop.f32.mrf.mxu0
      %v2761 = vadd.f32 0.0, %v2760
      %v2762 = vpop.f32.mrf.mxu0
      %2763 = vdwg.mxu0
      %v2765 = vsel %vm1961, %v2538, 0
      %2767 = vmatprep.subr.mxu0 0.0
      %2768 = vmatpush1.msra.mxu0 0.0
      %2769 = vmatprep.subr.mxu0 0.0
      %2770 = vmatpush1.msra.mxu0 0.0
      %2771 = vmatprep.subr.mxu0 0.0
      %2772 = vmatpush1.msra.mxu0 0.0
      %2773 = vmatprep.subr.mxu0 0.0
      %2774 = vmatpush1.msra.mxu0 0.0
      %2775 = vmatprep.subr.mxu0 0.0
      %2776 = vmatpush1.msra.mxu0 0.0
      %2777 = vmatprep.subr.mxu0 0.0
      %2778 = vmatpush1.msra.mxu0 0.0
      %2779 = vmatprep.subr.mxu0 0.0
      %2780 = vmatpush1.msra.mxu0 0.0
      %2781 = vmatprep.subr.mxu0 0.0
      %2782 = vmatpush1.msra.mxu0 0.0
      %2783 = vmatprep.subr.mxu0 0.0
      %2784 = vmatpush1.msra.mxu0 0.0
      %2785 = vmatprep.subr.mxu0 0.0
      %2786 = vmatpush1.msra.mxu0 0.0
      %2787 = vmatprep.subr.mxu0 0.0
      %2788 = vmatpush1.msra.mxu0 0.0
      %2789 = vmatprep.subr.mxu0 0.0
      %2790 = vmatpush1.msra.mxu0 0.0
      %2791 = vmatprep.subr.mxu0 0.0
      %2792 = vmatpush1.msra.mxu0 0.0
      %2793 = vmatprep.subr.mxu0 0.0
      %2794 = vmatpush1.msra.mxu0 0.0
      %2795 = vmatprep.subr.mxu0 0.0
      %2796 = vmatpush1.msra.mxu0 0.0
      %2797 = vmatprep.subr.mxu0 0.0
      %2798 = vmatpush1.msra.mxu0 %v2616
      %2799 = vmatprep.subr.mxu0 0.0
      %2800 = vmatpush2.msra.mxu0 0.0
      %2801 = vmatprep.subr.mxu0 0.0
      %2802 = vmatpush2.msra.mxu0 0.0
      %2803 = vmatprep.subr.mxu0 0.0
      %2804 = vmatpush2.msra.mxu0 0.0
      %2805 = vmatprep.subr.mxu0 0.0
      %2806 = vmatpush2.msra.mxu0 0.0
      %2807 = vmatprep.subr.mxu0 0.0
      %2808 = vmatpush2.msra.mxu0 0.0
      %2809 = vmatprep.subr.mxu0 0.0
      %2810 = vmatpush2.msra.mxu0 0.0
      %2811 = vmatprep.subr.mxu0 0.0
      %2812 = vmatpush2.msra.mxu0 0.0
      %2813 = vmatprep.subr.mxu0 0.0
      %2814 = vmatpush2.msra.mxu0 0.0
      %2815 = vmatprep.subr.mxu0 0.0
      %2816 = vmatpush2.msra.mxu0 0.0
      %2817 = vmatprep.subr.mxu0 0.0
      %2818 = vmatpush2.msra.mxu0 0.0
      %2819 = vmatprep.subr.mxu0 0.0
      %2820 = vmatpush2.msra.mxu0 0.0
      %2821 = vmatprep.subr.mxu0 0.0
      %2822 = vmatpush2.msra.mxu0 0.0
      %2823 = vmatprep.subr.mxu0 0.0
      %2824 = vmatpush2.msra.mxu0 0.0
      %2825 = vmatprep.subr.mxu0 0.0
      %2826 = vmatpush2.msra.mxu0 0.0
      %2827 = vmatprep.subr.mxu0 0.0
      %2828 = vmatpush2.msra.mxu0 0.0
      %2829 = vmatprep.subr.mxu0 0.0
      %2830 = vmatpush2.msra.mxu0 0.0
      %2831 = vmatprep.mubr.f32.mxu0 0.0
      %2832 = vmatmul.mubr.f32.gmra.mxu0 %v2765
      %v2833 = vpop.f32.mrf.mxu0
      %v2834 = vadd.f32 0.0, %v2833
      %v2835 = vpop.f32.mrf.mxu0
      %2836 = vdwg.mxu0
      %v2838 = vsel %vm1961, %v2611, 0
      %2840 = vmatprep.subr.mxu0 0.0
      %2841 = vmatpush1.msra.mxu0 0.0
      %2842 = vmatprep.subr.mxu0 0.0
      %2843 = vmatpush1.msra.mxu0 0.0
      %2844 = vmatprep.subr.mxu0 0.0
      %2845 = vmatpush1.msra.mxu0 0.0
      %2846 = vmatprep.subr.mxu0 0.0
      %2847 = vmatpush1.msra.mxu0 0.0
      %2848 = vmatprep.subr.mxu0 0.0
      %2849 = vmatpush1.msra.mxu0 0.0
      %2850 = vmatprep.subr.mxu0 0.0
      %2851 = vmatpush1.msra.mxu0 0.0
      %2852 = vmatprep.subr.mxu0 0.0
      %2853 = vmatpush1.msra.mxu0 0.0
      %2854 = vmatprep.subr.mxu0 0.0
      %2855 = vmatpush1.msra.mxu0 0.0
      %2856 = vmatprep.subr.mxu0 0.0
      %2857 = vmatpush1.msra.mxu0 0.0
      %2858 = vmatprep.subr.mxu0 0.0
      %2859 = vmatpush1.msra.mxu0 0.0
      %2860 = vmatprep.subr.mxu0 0.0
      %2861 = vmatpush1.msra.mxu0 0.0
      %2862 = vmatprep.subr.mxu0 0.0
      %2863 = vmatpush1.msra.mxu0 0.0
      %2864 = vmatprep.subr.mxu0 0.0
      %2865 = vmatpush1.msra.mxu0 0.0
      %2866 = vmatprep.subr.mxu0 0.0
      %2867 = vmatpush1.msra.mxu0 0.0
      %2868 = vmatprep.subr.mxu0 0.0
      %2869 = vmatpush1.msra.mxu0 0.0
      %2870 = vmatprep.subr.mxu0 0.0
      %2871 = vmatpush1.msra.mxu0 %v2617
      %2872 = vmatprep.subr.mxu0 0.0
      %2873 = vmatpush2.msra.mxu0 0.0
      %2874 = vmatprep.subr.mxu0 0.0
      %2875 = vmatpush2.msra.mxu0 0.0
      %2876 = vmatprep.subr.mxu0 0.0
      %2877 = vmatpush2.msra.mxu0 0.0
      %2878 = vmatprep.subr.mxu0 0.0
      %2879 = vmatpush2.msra.mxu0 0.0
      %2880 = vmatprep.subr.mxu0 0.0
      %2881 = vmatpush2.msra.mxu0 0.0
      %2882 = vmatprep.subr.mxu0 0.0
      %2883 = vmatpush2.msra.mxu0 0.0
      %2884 = vmatprep.subr.mxu0 0.0
      %2885 = vmatpush2.msra.mxu0 0.0
      %2886 = vmatprep.subr.mxu0 0.0
      %2887 = vmatpush2.msra.mxu0 0.0
      %2888 = vmatprep.subr.mxu0 0.0
      %2889 = vmatpush2.msra.mxu0 0.0
      %2890 = vmatprep.subr.mxu0 0.0
      %2891 = vmatpush2.msra.mxu0 0.0
      %2892 = vmatprep.subr.mxu0 0.0
      %2893 = vmatpush2.msra.mxu0 0.0
      %2894 = vmatprep.subr.mxu0 0.0
      %2895 = vmatpush2.msra.mxu0 0.0
      %2896 = vmatprep.subr.mxu0 0.0
      %2897 = vmatpush2.msra.mxu0 0.0
      %2898 = vmatprep.subr.mxu0 0.0
      %2899 = vmatpush2.msra.mxu0 0.0
      %2900 = vmatprep.subr.mxu0 0.0
      %2901 = vmatpush2.msra.mxu0 0.0
      %2902 = vmatprep.subr.mxu0 0.0
      %2903 = vmatpush2.msra.mxu0 0.0
      %2904 = vmatprep.mubr.f32.mxu0 0.0
      %2905 = vmatmul.mubr.f32.gmra.mxu0 %v2838
      %v2906 = vpop.f32.mrf.mxu0
      %v2907 = vadd.f32 0.0, %v2906
      %v2908 = vpop.f32.mrf.mxu0
      %2909 = vdwg.mxu0
      %v2910 = vsel %vm1057, %v2688, 0.0
      %v2911 = vsel %vm1057, %v2761, 0.0
      %v2912 = vadd.f32 %v2910, %v2911
      %v2913 = vsel %vm1057, %v2834, 0.0
      %v2914 = vadd.f32 %v2912, %v2913
      %v2915 = vsel %vm1057, %v2907, 0.0
      %v2916 = vadd.f32 %v2914, %v2915
      %v2917 = vld [vmem:[%s910] sm:$0x1]
      %v2919 = vlaneseq
      %v2920 = vshrl.u32 %v2919, 7
      %v2921 = vsub.s32 0, %v2920
      %v2922 = vrot.slane %v2917, %v2921
      %v2924 = vadd.f32 %v2916, %v2922
      %v2925 = vadd.f32 %v2924, %v980
      %v2926 = vld [vmem:[%s913] sm:$0x1]
      %v2927 = vld [vmem:[%s916] sm:$0x1]
      %v2928 = vsel %vm1057, %v2925, 0.0
      %2929 = vadd.xlane.f32.xlu0 %v2928
      %v2930 = vpop.xlane.xlu0 %2929
      %v2931 = vrcp.pop 32.0
      %v2932 = vmul.f32 %v2930, %v2931
      %v2933 = vsub.f32 %v2925, %v2932
      %v2934 = vmul.f32 %v2933, %v2933
      %v2935 = vsel %vm1057, %v2934, 0.0
      %2936 = vadd.xlane.f32.xlu0 %v2935
      %v2937 = vpop.xlane.xlu0 %2936
      %v2938 = vmul.f32 %v2937, %v2931
      %v2939 = vadd.f32 %v2938, 1e-12
      %v2940 = vrsqrt.pop %v2939
      %v2941 = vmul.f32 %v2933, %v2940
      %v2943 = vlaneseq
      %v2944 = vshrl.u32 %v2943, 7
      %v2945 = vsub.s32 0, %v2944
      %v2946 = vrot.slane %v2926, %v2945
      %v2948 = vmul.f32 %v2941, %v2946
      %v2950 = vlaneseq
      %v2951 = vshrl.u32 %v2950, 7
      %v2952 = vsub.s32 0, %v2951
      %v2953 = vrot.slane %v2927, %v2952
      %v2955 = vadd.f32 %v2948, %v2953
      %v2956 = vld [vmem:[%s921] sm:$0xff]
      %v2957 = vld [vmem:[%s921 + $0x8] sm:$0xff]
      %v2958 = vld [vmem:[%s921 + $0x10] sm:$0xff]
      %v2959 = vld [vmem:[%s921 + $0x18] sm:$0xff]
      %v2960 = vld [vmem:[%s924] sm:$0x1]
      %v2962 = vlaneseq
      %v2963 = vshrl.u32 %v2962, 7
      %v2964 = vsub.s32 0, %v2963
      %v2965 = vrot.slane %v2960, %v2964
      %v2968 = vsel %vm1057, %v2955, 0
      %2970 = vmatprep.subr.mxu0 0.0
      %2971 = vmatpush1.msra.mxu0 0.0
      %2972 = vmatprep.subr.mxu0 0.0
      %2973 = vmatpush1.msra.mxu0 0.0
      %2974 = vmatprep.subr.mxu0 0.0
      %2975 = vmatpush1.msra.mxu0 0.0
      %2976 = vmatprep.subr.mxu0 0.0
      %2977 = vmatpush1.msra.mxu0 0.0
      %2978 = vmatprep.subr.mxu0 0.0
      %2979 = vmatpush1.msra.mxu0 0.0
      %2980 = vmatprep.subr.mxu0 0.0
      %2981 = vmatpush1.msra.mxu0 0.0
      %2982 = vmatprep.subr.mxu0 0.0
      %2983 = vmatpush1.msra.mxu0 0.0
      %2984 = vmatprep.subr.mxu0 0.0
      %2985 = vmatpush1.msra.mxu0 0.0
      %2986 = vmatprep.subr.mxu0 0.0
      %2987 = vmatpush1.msra.mxu0 0.0
      %2988 = vmatprep.subr.mxu0 0.0
      %2989 = vmatpush1.msra.mxu0 0.0
      %2990 = vmatprep.subr.mxu0 0.0
      %2991 = vmatpush1.msra.mxu0 0.0
      %2992 = vmatprep.subr.mxu0 0.0
      %2993 = vmatpush1.msra.mxu0 0.0
      %2994 = vmatprep.subr.mxu0 0.0
      %2995 = vmatpush1.msra.mxu0 %v2959
      %2996 = vmatprep.subr.mxu0 0.0
      %2997 = vmatpush1.msra.mxu0 %v2958
      %2998 = vmatprep.subr.mxu0 0.0
      %2999 = vmatpush1.msra.mxu0 %v2957
      %3000 = vmatprep.subr.mxu0 0.0
      %3001 = vmatpush1.msra.mxu0 %v2956
      %3002 = vmatprep.subr.mxu0 0.0
      %3003 = vmatpush2.msra.mxu0 0.0
      %3004 = vmatprep.subr.mxu0 0.0
      %3005 = vmatpush2.msra.mxu0 0.0
      %3006 = vmatprep.subr.mxu0 0.0
      %3007 = vmatpush2.msra.mxu0 0.0
      %3008 = vmatprep.subr.mxu0 0.0
      %3009 = vmatpush2.msra.mxu0 0.0
      %3010 = vmatprep.subr.mxu0 0.0
      %3011 = vmatpush2.msra.mxu0 0.0
      %3012 = vmatprep.subr.mxu0 0.0
      %3013 = vmatpush2.msra.mxu0 0.0
      %3014 = vmatprep.subr.mxu0 0.0
      %3015 = vmatpush2.msra.mxu0 0.0
      %3016 = vmatprep.subr.mxu0 0.0
      %3017 = vmatpush2.msra.mxu0 0.0
      %3018 = vmatprep.subr.mxu0 0.0
      %3019 = vmatpush2.msra.mxu0 0.0
      %3020 = vmatprep.subr.mxu0 0.0
      %3021 = vmatpush2.msra.mxu0 0.0
      %3022 = vmatprep.subr.mxu0 0.0
      %3023 = vmatpush2.msra.mxu0 0.0
      %3024 = vmatprep.subr.mxu0 0.0
      %3025 = vmatpush2.msra.mxu0 0.0
      %3026 = vmatprep.subr.mxu0 0.0
      %3027 = vmatpush2.msra.mxu0 0.0
      %3028 = vmatprep.subr.mxu0 0.0
      %3029 = vmatpush2.msra.mxu0 0.0
      %3030 = vmatprep.subr.mxu0 0.0
      %3031 = vmatpush2.msra.mxu0 0.0
      %3032 = vmatprep.subr.mxu0 0.0
      %3033 = vmatpush2.msra.mxu0 0.0
      %3034 = vmatprep.mubr.f32.mxu0 0.0
      %3035 = vmatmul.mubr.f32.gmra.mxu0 %v2968
      %v3036 = vpop.f32.mrf.mxu0
      %v3037 = vadd.f32 %v2965, %v3036
      %v3038 = vpop.f32.mrf.mxu0
      %3039 = vdwg.mxu0
      %v3040 = vmul.f32 %v3037, %v3037
      %v3041 = vmul.f32 %v3037, %v3040
      %v3042 = vmul.f32 %v3041, 0.044715
      %v3043 = vadd.f32 %v3037, %v3042
      %v3044 = vmul.f32 %v3043, 0.7978846
      %v3045 = vtanh.pop %v3044
      %v3046 = vadd.f32 %v3045, 1.0
      %v3047 = vmul.f32 %v3046, 0.5
      %v3048 = vmul.f32 %v3037, %v3047
      %v3049 = vld [vmem:[%s929] sm:$0xff]
      %v3050 = vld [vmem:[%s929 + $0x8] sm:$0xff]
      %v3051 = vld [vmem:[%s929 + $0x10] sm:$0xff]
      %v3052 = vld [vmem:[%s929 + $0x18] sm:$0xff]
      %v3053 = vld [vmem:[%s929 + $0x20] sm:$0xff]
      %v3054 = vld [vmem:[%s929 + $0x28] sm:$0xff]
      %v3055 = vld [vmem:[%s929 + $0x30] sm:$0xff]
      %v3056 = vld [vmem:[%s929 + $0x38] sm:$0xff]
      %v3057 = vld [vmem:[%s932] sm:$0x1]
      %v3059 = vlaneseq
      %v3060 = vshrl.u32 %v3059, 7
      %v3061 = vsub.s32 0, %v3060
      %v3062 = vrot.slane %v3057, %v3061
      %vm3064 = vcmask 523264
      %v3066 = vsel %vm3064, %v3048, 0
      %3068 = vmatprep.subr.mxu0 0.0
      %3069 = vmatpush1.msra.mxu0 0.0
      %3070 = vmatprep.subr.mxu0 0.0
      %3071 = vmatpush1.msra.mxu0 0.0
      %3072 = vmatprep.subr.mxu0 0.0
      %3073 = vmatpush1.msra.mxu0 0.0
      %3074 = vmatprep.subr.mxu0 0.0
      %3075 = vmatpush1.msra.mxu0 0.0
      %3076 = vmatprep.subr.mxu0 0.0
      %3077 = vmatpush1.msra.mxu0 0.0
      %3078 = vmatprep.subr.mxu0 0.0
      %3079 = vmatpush1.msra.mxu0 0.0
      %3080 = vmatprep.subr.mxu0 0.0
      %3081 = vmatpush1.msra.mxu0 0.0
      %3082 = vmatprep.subr.mxu0 0.0
      %3083 = vmatpush1.msra.mxu0 0.0
      %3084 = vmatprep.subr.mxu0 0.0
      %3085 = vmatpush1.msra.mxu0 %v3056
      %3086 = vmatprep.subr.mxu0 0.0
      %3087 = vmatpush1.msra.mxu0 %v3055
      %3088 = vmatprep.subr.mxu0 0.0
      %3089 = vmatpush1.msra.mxu0 %v3054
      %3090 = vmatprep.subr.mxu0 0.0
      %3091 = vmatpush1.msra.mxu0 %v3053
      %3092 = vmatprep.subr.mxu0 0.0
      %3093 = vmatpush1.msra.mxu0 %v3052
      %3094 = vmatprep.subr.mxu0 0.0
      %3095 = vmatpush1.msra.mxu0 %v3051
      %3096 = vmatprep.subr.mxu0 0.0
      %3097 = vmatpush1.msra.mxu0 %v3050
      %3098 = vmatprep.subr.mxu0 0.0
      %3099 = vmatpush1.msra.mxu0 %v3049
      %3100 = vmatprep.subr.mxu0 0.0
      %3101 = vmatpush2.msra.mxu0 0.0
      %3102 = vmatprep.subr.mxu0 0.0
      %3103 = vmatpush2.msra.mxu0 0.0
      %3104 = vmatprep.subr.mxu0 0.0
      %3105 = vmatpush2.msra.mxu0 0.0
      %3106 = vmatprep.subr.mxu0 0.0
      %3107 = vmatpush2.msra.mxu0 0.0
      %3108 = vmatprep.subr.mxu0 0.0
      %3109 = vmatpush2.msra.mxu0 0.0
      %3110 = vmatprep.subr.mxu0 0.0
      %3111 = vmatpush2.msra.mxu0 0.0
      %3112 = vmatprep.subr.mxu0 0.0
      %3113 = vmatpush2.msra.mxu0 0.0
      %3114 = vmatprep.subr.mxu0 0.0
      %3115 = vmatpush2.msra.mxu0 0.0
      %3116 = vmatprep.subr.mxu0 0.0
      %3117 = vmatpush2.msra.mxu0 0.0
      %3118 = vmatprep.subr.mxu0 0.0
      %3119 = vmatpush2.msra.mxu0 0.0
      %3120 = vmatprep.subr.mxu0 0.0
      %3121 = vmatpush2.msra.mxu0 0.0
      %3122 = vmatprep.subr.mxu0 0.0
      %3123 = vmatpush2.msra.mxu0 0.0
      %3124 = vmatprep.subr.mxu0 0.0
      %3125 = vmatpush2.msra.mxu0 0.0
      %3126 = vmatprep.subr.mxu0 0.0
      %3127 = vmatpush2.msra.mxu0 0.0
      %3128 = vmatprep.subr.mxu0 0.0
      %3129 = vmatpush2.msra.mxu0 0.0
      %3130 = vmatprep.subr.mxu0 0.0
      %3131 = vmatpush2.msra.mxu0 0.0
      %3132 = vmatprep.mubr.f32.mxu0 0.0
      %3133 = vmatmul.mubr.f32.gmra.mxu0 %v3066
      %v3134 = vpop.f32.mrf.mxu0
      %v3135 = vadd.f32 %v3062, %v3134
      %v3136 = vpop.f32.mrf.mxu0
      %3137 = vdwg.mxu0
      %v3138 = vadd.f32 %v3135, %v2955
      %v3139 = vld [vmem:[%s935] sm:$0x1]
      %v3140 = vld [vmem:[%s938] sm:$0x1]
      %v3141 = vsel %vm1057, %v3138, 0.0
      %3142 = vadd.xlane.f32.xlu0 %v3141
      %v3143 = vpop.xlane.xlu0 %3142
      %v3144 = vmul.f32 %v3143, %v2931
      %v3145 = vsub.f32 %v3138, %v3144
      %v3146 = vmul.f32 %v3145, %v3145
      %v3147 = vsel %vm1057, %v3146, 0.0
      %3148 = vadd.xlane.f32.xlu0 %v3147
      %v3149 = vpop.xlane.xlu0 %3148
      %v3150 = vmul.f32 %v3149, %v2931
      %v3151 = vadd.f32 %v3150, 1e-12
      %v3152 = vrsqrt.pop %v3151
      %v3153 = vmul.f32 %v3145, %v3152
      %v3155 = vlaneseq
      %v3156 = vshrl.u32 %v3155, 7
      %v3157 = vsub.s32 0, %v3156
      %v3158 = vrot.slane %v3139, %v3157
      %v3160 = vmul.f32 %v3153, %v3158
      %v3162 = vlaneseq
      %v3163 = vshrl.u32 %v3162, 7
      %v3164 = vsub.s32 0, %v3163
      %v3165 = vrot.slane %v3140, %v3164
      %v3167 = vadd.f32 %v3160, %v3165
      %3168 = vst.msk [vmem:[#allocation2] sm:$0xff] %vm1057, %v3167
      %p3169 = scmp.eq.s32.totalorder %s36, 1
      // Predicated region
      $region105: #{_lambda_.4} parent=99 // pred_check
        %p3170 = pneg %p3169
      $region106: #{_lambda_.4} parent=99 // pred_check_branch
        %3172 = sbr.rel (%p3170) target = $region108
      $region107: #{_lambda_.4} parent=99 // pred_region
        %3173 = vst.msk [vmem:[%s942] sm:$0xff] %vm1057, %v3167
      $region108: #{_lambda_.4} parent=99 // pred_fallthru
        _
      %p3174 = scmp.lt.s32.totalorder %s35, 1
      %s3175 = scalar_select %p3174, %s35, 1
      %s3176 = smul.addr %s3175, 8
      %s3177 = scalar_lea.vmem %s20, %s3176
      // Predicated region
      $region109: #{_lambda_.4} parent=99 // pred_check
        %p3178 = pneg %p571
      $region110: #{_lambda_.4} parent=99 // pred_check_branch
        %3180 = sbr.rel (%p3178) target = $region112
      $region111: #{_lambda_.4} parent=99 // pred_region
        _
      $region112: #{_lambda_.4} parent=99 // pred_fallthru
        _
    $region100: #{_lambda_.4} parent=5 // pred_fallthru
      _
    %p3181 = scmp.le.s32.totalorder 2, %s26
    // Predicated region
    $region113: #{_lambda_.4} parent=5 // pred_check
      %p3182 = pneg %p3181
    $region114: #{_lambda_.4} parent=5 // pred_check_branch
      %3184 = sbr.rel (%p3182) target = $region116
    $region115: #{_lambda_.4} parent=5 // pred_region
      %s3185 = ssub.s32 %s26, 2
      // Predicated region
      $region117: #{_lambda_.4} parent=115 // pred_check
        %p3186 = pneg %p577
      $region118: #{_lambda_.4} parent=115 // pred_check_branch
        %3188 = sbr.rel (%p3186) target = $region120
      $region119: #{_lambda_.4} parent=115 // pred_region
        %p3189 = scmp.lt.s32.totalorder %s37, 1
        %s3190 = scalar_select %p3189, %s37, 1
        %s3191 = smul.addr %s3190, 8
        %s3192 = scalar_lea.vmem %s20, %s3191
      $region120: #{_lambda_.4} parent=115 // pred_fallthru
        _
    $region116: #{_lambda_.4} parent=5 // pred_fallthru
      _
  $region6: #{_lambda_.4} parent=0 // loop_footer
    %s30 = sadd.s32 1, %s26
  $region7: #{_lambda_.4} parent=0 // loop_footer_branch
    %25 = sbr.rel target = $region3
  $region8: #{_lambda_.4} parent=0 // loop_exit
    _

// kernel: _lambda_.6
$region0: #{_lambda_.6}
  #allocation0 [shape = 'u32[]', space=smem, size = 0x4, offset = 0x4, fixed_abs, tag = 'smem constant byte address 0x4 - core index']
  #allocation1 [shape = 'u32[144,128]{1,0:T(1,128)}', space=vmem, size = 0x12000, scoped, tag = 'internal scratch']
  #allocation2 [shape = 'f32[4,32]{1,0:T(4,128)}', space=vmem, size = 0x800, scoped, tag = 'scratch operand']
  %s0 = inlined_call_operand.vmem [shape: f32[2,4,32], index: 0, kind: input, shape index: {}]
  %s1 = inlined_call_operand.vmem [shape: f32[2,1,4], index: 1, kind: input, shape index: {}]
  %s2 = inlined_call_operand.vmem [shape: f32[1,32], index: 2, kind: input, shape index: {}]
  %s3 = inlined_call_operand.vmem [shape: f32[1,32], index: 3, kind: input, shape index: {}]
  %s4 = inlined_call_operand.vmem [shape: f32[8,32,8], index: 4, kind: input, shape index: {}]
  %s5 = inlined_call_operand.vmem [shape: f32[8,1,8], index: 5, kind: input, shape index: {}]
  %s6 = inlined_call_operand.vmem [shape: f32[8,32,8], index: 6, kind: input, shape index: {}]
  %s7 = inlined_call_operand.vmem [shape: f32[8,1,8], index: 7, kind: input, shape index: {}]
  %s8 = inlined_call_operand.vmem [shape: f32[8,32,8], index: 8, kind: input, shape index: {}]
  %s9 = inlined_call_operand.vmem [shape: f32[8,1,8], index: 9, kind: input, shape index: {}]
  %s10 = inlined_call_operand.vmem [shape: f32[8,8,32], index: 10, kind: input, shape index: {}]
  %s11 = inlined_call_operand.vmem [shape: f32[2,1,32], index: 11, kind: input, shape index: {}]
  %s12 = inlined_call_operand.vmem [shape: f32[2,1,32], index: 12, kind: input, shape index: {}]
  %s13 = inlined_call_operand.vmem [shape: f32[2,1,32], index: 13, kind: input, shape index: {}]
  %s14 = inlined_call_operand.vmem [shape: f32[2,32,64], index: 14, kind: input, shape index: {}]
  %s15 = inlined_call_operand.vmem [shape: f32[2,1,64], index: 15, kind: input, shape index: {}]
  %s16 = inlined_call_operand.vmem [shape: f32[2,64,32], index: 16, kind: input, shape index: {}]
  %s17 = inlined_call_operand.vmem [shape: f32[2,1,32], index: 17, kind: input, shape index: {}]
  %s18 = inlined_call_operand.vmem [shape: f32[2,1,32], index: 18, kind: input, shape index: {}]
  %s19 = inlined_call_operand.vmem [shape: f32[2,1,32], index: 19, kind: input, shape index: {}]
  %s20 = inlined_call_operand.vmem [shape: f32[2,4,32], index: 20, kind: output, shape index: {}]
  %s21 = sld [smem:[#allocation0]]
  $region121: #{_lambda_.6} parent=0
    _
  %s23 = ssub.s32 1, %s21
  %s24 = scalar_select 0, %s23, %s21
  loop: start=0, step=1, limit=6
  $region2: #{_lambda_.6} parent=0 // loop_pre_header
    _
  $region3: #{_lambda_.6} parent=0 // loop_header
    %s26 = sphi 0, %s30
    %p27 = scmp.ge.s32.totalorder %s26, 6
    %s33 = sphi 0, %s45
    %s34 = sphi 0, %s41
    %s35 = sphi 0, %s33
    %s36 = sphi 0, %s34
    %s37 = sphi 0, %s35
    %s38 = sphi 0, %s36
    %s48 = sphi 0, %s50
    %s51 = sphi 0, %s48
    %s52 = sphi 0, %s51
    %s68 = sphi 0, %s52
    %s74 = sphi 0, %s76
    %s77 = sphi 0, %s74
    %s78 = sphi 0, %s77
    %s94 = sphi 0, %s78
    %s98 = sphi 0, %s98
    %s100 = sphi 0, %s98
    %s101 = sphi 0, %s100
    %s115 = sphi 0, %s101
    %s119 = sphi 0, %s119
    %s121 = sphi 0, %s119
    %s122 = sphi 0, %s121
    %s136 = sphi 0, %s122
    %s142 = sphi 0, %s144
    %s145 = sphi 0, %s142
    %s146 = sphi 0, %s145
    %s162 = sphi 0, %s146
    %s168 = sphi 0, %s170
    %s171 = sphi 0, %s168
    %s172 = sphi 0, %s171
    %s188 = sphi 0, %s172
    %s194 = sphi 0, %s196
    %s197 = sphi 0, %s194
    %s198 = sphi 0, %s197
    %s214 = sphi 0, %s198
    %s220 = sphi 0, %s222
    %s223 = sphi 0, %s220
    %s224 = sphi 0, %s223
    %s240 = sphi 0, %s224
    %s246 = sphi 0, %s248
    %s249 = sphi 0, %s246
    %s250 = sphi 0, %s249
    %s266 = sphi 0, %s250
    %s272 = sphi 0, %s274
    %s275 = sphi 0, %s272
    %s276 = sphi 0, %s275
    %s292 = sphi 0, %s276
    %s298 = sphi 0, %s300
    %s301 = sphi 0, %s298
    %s302 = sphi 0, %s301
    %s318 = sphi 0, %s302
    %s324 = sphi 0, %s326
    %s327 = sphi 0, %s324
    %s328 = sphi 0, %s327
    %s344 = sphi 0, %s328
    %s350 = sphi 0, %s352
    %s353 = sphi 0, %s350
    %s354 = sphi 0, %s353
    %s370 = sphi 0, %s354
    %s376 = sphi 0, %s378
    %s379 = sphi 0, %s376
    %s380 = sphi 0, %s379
    %s396 = sphi 0, %s380
    %s402 = sphi 0, %s404
    %s405 = sphi 0, %s402
    %s406 = sphi 0, %s405
    %s422 = sphi 0, %s406
    %s428 = sphi 0, %s430
    %s431 = sphi 0, %s428
    %s432 = sphi 0, %s431
    %s448 = sphi 0, %s432
    %s454 = sphi 0, %s456
    %s457 = sphi 0, %s454
    %s458 = sphi 0, %s457
    %s474 = sphi 0, %s458
    %s480 = sphi 0, %s482
    %s483 = sphi 0, %s480
    %s484 = sphi 0, %s483
    %s500 = sphi 0, %s484
    %s506 = sphi 0, %s508
    %s509 = sphi 0, %s506
    %s510 = sphi 0, %s509
    %s526 = sphi 0, %s510
    %s532 = sphi 0, %s534
    %s535 = sphi 0, %s532
    %s536 = sphi 0, %s535
    %s552 = sphi 0, %s536
    %s558 = sphi 0, %s560
    %s561 = sphi 0, %s558
    %s562 = sphi 0, %s561
    %s578 = sphi 0, %s562
  $region4: #{_lambda_.6} parent=0 // loop_header_branch
    %29 = sbr.rel (%p27) target = $region8
  $region5: #{_lambda_.6} parent=0 // loop_body
    %s31 = ssub.s32 %s26, 1
    %s32 = ssub.s32 %s26, 2
    %s39 = sadd.s32 1, %s34
    %p40 = scmp.ge.s32.totalorder %s39, 2
    %s41 = scalar_select %p40, 0, %s39
    %s42 = sadd.s32 1, %s33
    %s43 = scalar_select %p40, %s42, %s33
    %p44 = scmp.ge.s32.totalorder %s43, 2
    %s45 = scalar_select %p44, 0, %s43
    %s46 = ssub.s32 %s33, %s45
    %p47 = scmp.eq.s32.totalorder %s46, 0
    %s49 = sadd.s32 %s48, 1
    %s50 = scalar_select %p47, %s48, %s49
    %p53 = pneg %p47
    %p54 = scmp.eq.s32.totalorder %s26, 3
    %p55 = por %p53, %p54
    %p56 = scmp.ne.s32.totalorder %s48, %s51
    %p57 = scmp.eq.s32.totalorder %s26, 0
    %p58 = por %p56, %p57
    %p59 = scmp.ne.s32.totalorder %s48, %s51
    %p60 = scmp.eq.s32.totalorder %s31, 3
    %p61 = por %p59, %p60
    %p62 = scmp.ne.s32.totalorder %s51, %s52
    %p63 = scmp.eq.s32.totalorder %s31, 0
    %p64 = por %p62, %p63
    %p65 = scmp.ne.s32.totalorder %s51, %s52
    %p66 = scmp.eq.s32.totalorder %s32, 3
    %p67 = por %p65, %p66
    %p69 = scmp.ne.s32.totalorder %s52, %s68
    %p70 = scmp.eq.s32.totalorder %s32, 0
    %p71 = por %p69, %p70
    %s72 = ssub.s32 %s33, %s45
    %p73 = scmp.eq.s32.totalorder %s72, 0
    %s75 = sadd.s32 %s74, 1
    %s76 = scalar_select %p73, %s74, %s75
    %p79 = pneg %p73
    %p80 = scmp.eq.s32.totalorder %s26, 3
    %p81 = por %p79, %p80
    %p82 = scmp.ne.s32.totalorder %s74, %s77
    %p83 = scmp.eq.s32.totalorder %s26, 0
    %p84 = por %p82, %p83
    %p85 = scmp.ne.s32.totalorder %s74, %s77
    %p86 = scmp.eq.s32.totalorder %s31, 3
    %p87 = por %p85, %p86
    %p88 = scmp.ne.s32.totalorder %s77, %s78
    %p89 = scmp.eq.s32.totalorder %s31, 0
    %p90 = por %p88, %p89
    %p91 = scmp.ne.s32.totalorder %s77, %s78
    %p92 = scmp.eq.s32.totalorder %s32, 3
    %p93 = por %p91, %p92
    %p95 = scmp.ne.s32.totalorder %s78, %s94
    %p96 = scmp.eq.s32.totalorder %s32, 0
    %p97 = por %p95, %p96
    %s99 = sadd.s32 %s98, 1
    %p102 = scmp.eq.s32.totalorder %s26, 3
    %p103 = scmp.ne.s32.totalorder %s98, %s100
    %p104 = scmp.eq.s32.totalorder %s26, 0
    %p105 = por %p103, %p104
    %p106 = scmp.ne.s32.totalorder %s98, %s100
    %p107 = scmp.eq.s32.totalorder %s31, 3
    %p108 = por %p106, %p107
    %p109 = scmp.ne.s32.totalorder %s100, %s101
    %p110 = scmp.eq.s32.totalorder %s31, 0
    %p111 = por %p109, %p110
    %p112 = scmp.ne.s32.totalorder %s100, %s101
    %p113 = scmp.eq.s32.totalorder %s32, 3
    %p114 = por %p112, %p113
    %p116 = scmp.ne.s32.totalorder %s101, %s115
    %p117 = scmp.eq.s32.totalorder %s32, 0
    %p118 = por %p116, %p117
    %s120 = sadd.s32 %s119, 1
    %p123 = scmp.eq.s32.totalorder %s26, 3
    %p124 = scmp.ne.s32.totalorder %s119, %s121
    %p125 = scmp.eq.s32.totalorder %s26, 0
    %p126 = por %p124, %p125
    %p127 = scmp.ne.s32.totalorder %s119, %s121
    %p128 = scmp.eq.s32.totalorder %s31, 3
    %p129 = por %p127, %p128
    %p130 = scmp.ne.s32.totalorder %s121, %s122
    %p131 = scmp.eq.s32.totalorder %s31, 0
    %p132 = por %p130, %p131
    %p133 = scmp.ne.s32.totalorder %s121, %s122
    %p134 = scmp.eq.s32.totalorder %s32, 3
    %p135 = por %p133, %p134
    %p137 = scmp.ne.s32.totalorder %s122, %s136
    %p138 = scmp.eq.s32.totalorder %s32, 0
    %p139 = por %p137, %p138
    %s140 = ssub.s32 %s34, %s41
    %p141 = scmp.eq.s32.totalorder %s140, 0
    %s143 = sadd.s32 %s142, 1
    %s144 = scalar_select %p141, %s142, %s143
    %p147 = pneg %p141
    %p148 = scmp.eq.s32.totalorder %s26, 3
    %p149 = por %p147, %p148
    %p150 = scmp.ne.s32.totalorder %s142, %s145
    %p151 = scmp.eq.s32.totalorder %s26, 0
    %p152 = por %p150, %p151
    %p153 = scmp.ne.s32.totalorder %s142, %s145
    %p154 = scmp.eq.s32.totalorder %s31, 3
    %p155 = por %p153, %p154
    %p156 = scmp.ne.s32.totalorder %s145, %s146
    %p157 = scmp.eq.s32.totalorder %s31, 0
    %p158 = por %p156, %p157
    %p159 = scmp.ne.s32.totalorder %s145, %s146
    %p160 = scmp.eq.s32.totalorder %s32, 3
    %p161 = por %p159, %p160
    %p163 = scmp.ne.s32.totalorder %s146, %s162
    %p164 = scmp.eq.s32.totalorder %s32, 0
    %p165 = por %p163, %p164
    %s166 = ssub.s32 %s34, %s41
    %p167 = scmp.eq.s32.totalorder %s166, 0
    %s169 = sadd.s32 %s168, 1
    %s170 = scalar_select %p167, %s168, %s169
    %p173 = pneg %p167
    %p174 = scmp.eq.s32.totalorder %s26, 3
    %p175 = por %p173, %p174
    %p176 = scmp.ne.s32.totalorder %s168, %s171
    %p177 = scmp.eq.s32.totalorder %s26, 0
    %p178 = por %p176, %p177
    %p179 = scmp.ne.s32.totalorder %s168, %s171
    %p180 = scmp.eq.s32.totalorder %s31, 3
    %p181 = por %p179, %p180
    %p182 = scmp.ne.s32.totalorder %s171, %s172
    %p183 = scmp.eq.s32.totalorder %s31, 0
    %p184 = por %p182, %p183
    %p185 = scmp.ne.s32.totalorder %s171, %s172
    %p186 = scmp.eq.s32.totalorder %s32, 3
    %p187 = por %p185, %p186
    %p189 = scmp.ne.s32.totalorder %s172, %s188
    %p190 = scmp.eq.s32.totalorder %s32, 0
    %p191 = por %p189, %p190
    %s192 = ssub.s32 %s34, %s41
    %p193 = scmp.eq.s32.totalorder %s192, 0
    %s195 = sadd.s32 %s194, 1
    %s196 = scalar_select %p193, %s194, %s195
    %p199 = pneg %p193
    %p200 = scmp.eq.s32.totalorder %s26, 3
    %p201 = por %p199, %p200
    %p202 = scmp.ne.s32.totalorder %s194, %s197
    %p203 = scmp.eq.s32.totalorder %s26, 0
    %p204 = por %p202, %p203
    %p205 = scmp.ne.s32.totalorder %s194, %s197
    %p206 = scmp.eq.s32.totalorder %s31, 3
    %p207 = por %p205, %p206
    %p208 = scmp.ne.s32.totalorder %s197, %s198
    %p209 = scmp.eq.s32.totalorder %s31, 0
    %p210 = por %p208, %p209
    %p211 = scmp.ne.s32.totalorder %s197, %s198
    %p212 = scmp.eq.s32.totalorder %s32, 3
    %p213 = por %p211, %p212
    %p215 = scmp.ne.s32.totalorder %s198, %s214
    %p216 = scmp.eq.s32.totalorder %s32, 0
    %p217 = por %p215, %p216
    %s218 = ssub.s32 %s34, %s41
    %p219 = scmp.eq.s32.totalorder %s218, 0
    %s221 = sadd.s32 %s220, 1
    %s222 = scalar_select %p219, %s220, %s221
    %p225 = pneg %p219
    %p226 = scmp.eq.s32.totalorder %s26, 3
    %p227 = por %p225, %p226
    %p228 = scmp.ne.s32.totalorder %s220, %s223
    %p229 = scmp.eq.s32.totalorder %s26, 0
    %p230 = por %p228, %p229
    %p231 = scmp.ne.s32.totalorder %s220, %s223
    %p232 = scmp.eq.s32.totalorder %s31, 3
    %p233 = por %p231, %p232
    %p234 = scmp.ne.s32.totalorder %s223, %s224
    %p235 = scmp.eq.s32.totalorder %s31, 0
    %p236 = por %p234, %p235
    %p237 = scmp.ne.s32.totalorder %s223, %s224
    %p238 = scmp.eq.s32.totalorder %s32, 3
    %p239 = por %p237, %p238
    %p241 = scmp.ne.s32.totalorder %s224, %s240
    %p242 = scmp.eq.s32.totalorder %s32, 0
    %p243 = por %p241, %p242
    %s244 = ssub.s32 %s34, %s41
    %p245 = scmp.eq.s32.totalorder %s244, 0
    %s247 = sadd.s32 %s246, 1
    %s248 = scalar_select %p245, %s246, %s247
    %p251 = pneg %p245
    %p252 = scmp.eq.s32.totalorder %s26, 3
    %p253 = por %p251, %p252
    %p254 = scmp.ne.s32.totalorder %s246, %s249
    %p255 = scmp.eq.s32.totalorder %s26, 0
    %p256 = por %p254, %p255
    %p257 = scmp.ne.s32.totalorder %s246, %s249
    %p258 = scmp.eq.s32.totalorder %s31, 3
    %p259 = por %p257, %p258
    %p260 = scmp.ne.s32.totalorder %s249, %s250
    %p261 = scmp.eq.s32.totalorder %s31, 0
    %p262 = por %p260, %p261
    %p263 = scmp.ne.s32.totalorder %s249, %s250
    %p264 = scmp.eq.s32.totalorder %s32, 3
    %p265 = por %p263, %p264
    %p267 = scmp.ne.s32.totalorder %s250, %s266
    %p268 = scmp.eq.s32.totalorder %s32, 0
    %p269 = por %p267, %p268
    %s270 = ssub.s32 %s34, %s41
    %p271 = scmp.eq.s32.totalorder %s270, 0
    %s273 = sadd.s32 %s272, 1
    %s274 = scalar_select %p271, %s272, %s273
    %p277 = pneg %p271
    %p278 = scmp.eq.s32.totalorder %s26, 3
    %p279 = por %p277, %p278
    %p280 = scmp.ne.s32.totalorder %s272, %s275
    %p281 = scmp.eq.s32.totalorder %s26, 0
    %p282 = por %p280, %p281
    %p283 = scmp.ne.s32.totalorder %s272, %s275
    %p284 = scmp.eq.s32.totalorder %s31, 3
    %p285 = por %p283, %p284
    %p286 = scmp.ne.s32.totalorder %s275, %s276
    %p287 = scmp.eq.s32.totalorder %s31, 0
    %p288 = por %p286, %p287
    %p289 = scmp.ne.s32.totalorder %s275, %s276
    %p290 = scmp.eq.s32.totalorder %s32, 3
    %p291 = por %p289, %p290
    %p293 = scmp.ne.s32.totalorder %s276, %s292
    %p294 = scmp.eq.s32.totalorder %s32, 0
    %p295 = por %p293, %p294
    %s296 = ssub.s32 %s34, %s41
    %p297 = scmp.eq.s32.totalorder %s296, 0
    %s299 = sadd.s32 %s298, 1
    %s300 = scalar_select %p297, %s298, %s299
    %p303 = pneg %p297
    %p304 = scmp.eq.s32.totalorder %s26, 3
    %p305 = por %p303, %p304
    %p306 = scmp.ne.s32.totalorder %s298, %s301
    %p307 = scmp.eq.s32.totalorder %s26, 0
    %p308 = por %p306, %p307
    %p309 = scmp.ne.s32.totalorder %s298, %s301
    %p310 = scmp.eq.s32.totalorder %s31, 3
    %p311 = por %p309, %p310
    %p312 = scmp.ne.s32.totalorder %s301, %s302
    %p313 = scmp.eq.s32.totalorder %s31, 0
    %p314 = por %p312, %p313
    %p315 = scmp.ne.s32.totalorder %s301, %s302
    %p316 = scmp.eq.s32.totalorder %s32, 3
    %p317 = por %p315, %p316
    %p319 = scmp.ne.s32.totalorder %s302, %s318
    %p320 = scmp.eq.s32.totalorder %s32, 0
    %p321 = por %p319, %p320
    %s322 = ssub.s32 %s34, %s41
    %p323 = scmp.eq.s32.totalorder %s322, 0
    %s325 = sadd.s32 %s324, 1
    %s326 = scalar_select %p323, %s324, %s325
    %p329 = pneg %p323
    %p330 = scmp.eq.s32.totalorder %s26, 3
    %p331 = por %p329, %p330
    %p332 = scmp.ne.s32.totalorder %s324, %s327
    %p333 = scmp.eq.s32.totalorder %s26, 0
    %p334 = por %p332, %p333
    %p335 = scmp.ne.s32.totalorder %s324, %s327
    %p336 = scmp.eq.s32.totalorder %s31, 3
    %p337 = por %p335, %p336
    %p338 = scmp.ne.s32.totalorder %s327, %s328
    %p339 = scmp.eq.s32.totalorder %s31, 0
    %p340 = por %p338, %p339
    %p341 = scmp.ne.s32.totalorder %s327, %s328
    %p342 = scmp.eq.s32.totalorder %s32, 3
    %p343 = por %p341, %p342
    %p345 = scmp.ne.s32.totalorder %s328, %s344
    %p346 = scmp.eq.s32.totalorder %s32, 0
    %p347 = por %p345, %p346
    %s348 = ssub.s32 %s34, %s41
    %p349 = scmp.eq.s32.totalorder %s348, 0
    %s351 = sadd.s32 %s350, 1
    %s352 = scalar_select %p349, %s350, %s351
    %p355 = pneg %p349
    %p356 = scmp.eq.s32.totalorder %s26, 3
    %p357 = por %p355, %p356
    %p358 = scmp.ne.s32.totalorder %s350, %s353
    %p359 = scmp.eq.s32.totalorder %s26, 0
    %p360 = por %p358, %p359
    %p361 = scmp.ne.s32.totalorder %s350, %s353
    %p362 = scmp.eq.s32.totalorder %s31, 3
    %p363 = por %p361, %p362
    %p364 = scmp.ne.s32.totalorder %s353, %s354
    %p365 = scmp.eq.s32.totalorder %s31, 0
    %p366 = por %p364, %p365
    %p367 = scmp.ne.s32.totalorder %s353, %s354
    %p368 = scmp.eq.s32.totalorder %s32, 3
    %p369 = por %p367, %p368
    %p371 = scmp.ne.s32.totalorder %s354, %s370
    %p372 = scmp.eq.s32.totalorder %s32, 0
    %p373 = por %p371, %p372
    %s374 = ssub.s32 %s34, %s41
    %p375 = scmp.eq.s32.totalorder %s374, 0
    %s377 = sadd.s32 %s376, 1
    %s378 = scalar_select %p375, %s376, %s377
    %p381 = pneg %p375
    %p382 = scmp.eq.s32.totalorder %s26, 3
    %p383 = por %p381, %p382
    %p384 = scmp.ne.s32.totalorder %s376, %s379
    %p385 = scmp.eq.s32.totalorder %s26, 0
    %p386 = por %p384, %p385
    %p387 = scmp.ne.s32.totalorder %s376, %s379
    %p388 = scmp.eq.s32.totalorder %s31, 3
    %p389 = por %p387, %p388
    %p390 = scmp.ne.s32.totalorder %s379, %s380
    %p391 = scmp.eq.s32.totalorder %s31, 0
    %p392 = por %p390, %p391
    %p393 = scmp.ne.s32.totalorder %s379, %s380
    %p394 = scmp.eq.s32.totalorder %s32, 3
    %p395 = por %p393, %p394
    %p397 = scmp.ne.s32.totalorder %s380, %s396
    %p398 = scmp.eq.s32.totalorder %s32, 0
    %p399 = por %p397, %p398
    %s400 = ssub.s32 %s34, %s41
    %p401 = scmp.eq.s32.totalorder %s400, 0
    %s403 = sadd.s32 %s402, 1
    %s404 = scalar_select %p401, %s402, %s403
    %p407 = pneg %p401
    %p408 = scmp.eq.s32.totalorder %s26, 3
    %p409 = por %p407, %p408
    %p410 = scmp.ne.s32.totalorder %s402, %s405
    %p411 = scmp.eq.s32.totalorder %s26, 0
    %p412 = por %p410, %p411
    %p413 = scmp.ne.s32.totalorder %s402, %s405
    %p414 = scmp.eq.s32.totalorder %s31, 3
    %p415 = por %p413, %p414
    %p416 = scmp.ne.s32.totalorder %s405, %s406
    %p417 = scmp.eq.s32.totalorder %s31, 0
    %p418 = por %p416, %p417
    %p419 = scmp.ne.s32.totalorder %s405, %s406
    %p420 = scmp.eq.s32.totalorder %s32, 3
    %p421 = por %p419, %p420
    %p423 = scmp.ne.s32.totalorder %s406, %s422
    %p424 = scmp.eq.s32.totalorder %s32, 0
    %p425 = por %p423, %p424
    %s426 = ssub.s32 %s34, %s41
    %p427 = scmp.eq.s32.totalorder %s426, 0
    %s429 = sadd.s32 %s428, 1
    %s430 = scalar_select %p427, %s428, %s429
    %p433 = pneg %p427
    %p434 = scmp.eq.s32.totalorder %s26, 3
    %p435 = por %p433, %p434
    %p436 = scmp.ne.s32.totalorder %s428, %s431
    %p437 = scmp.eq.s32.totalorder %s26, 0
    %p438 = por %p436, %p437
    %p439 = scmp.ne.s32.totalorder %s428, %s431
    %p440 = scmp.eq.s32.totalorder %s31, 3
    %p441 = por %p439, %p440
    %p442 = scmp.ne.s32.totalorder %s431, %s432
    %p443 = scmp.eq.s32.totalorder %s31, 0
    %p444 = por %p442, %p443
    %p445 = scmp.ne.s32.totalorder %s431, %s432
    %p446 = scmp.eq.s32.totalorder %s32, 3
    %p447 = por %p445, %p446
    %p449 = scmp.ne.s32.totalorder %s432, %s448
    %p450 = scmp.eq.s32.totalorder %s32, 0
    %p451 = por %p449, %p450
    %s452 = ssub.s32 %s34, %s41
    %p453 = scmp.eq.s32.totalorder %s452, 0
    %s455 = sadd.s32 %s454, 1
    %s456 = scalar_select %p453, %s454, %s455
    %p459 = pneg %p453
    %p460 = scmp.eq.s32.totalorder %s26, 3
    %p461 = por %p459, %p460
    %p462 = scmp.ne.s32.totalorder %s454, %s457
    %p463 = scmp.eq.s32.totalorder %s26, 0
    %p464 = por %p462, %p463
    %p465 = scmp.ne.s32.totalorder %s454, %s457
    %p466 = scmp.eq.s32.totalorder %s31, 3
    %p467 = por %p465, %p466
    %p468 = scmp.ne.s32.totalorder %s457, %s458
    %p469 = scmp.eq.s32.totalorder %s31, 0
    %p470 = por %p468, %p469
    %p471 = scmp.ne.s32.totalorder %s457, %s458
    %p472 = scmp.eq.s32.totalorder %s32, 3
    %p473 = por %p471, %p472
    %p475 = scmp.ne.s32.totalorder %s458, %s474
    %p476 = scmp.eq.s32.totalorder %s32, 0
    %p477 = por %p475, %p476
    %s478 = ssub.s32 %s34, %s41
    %p479 = scmp.eq.s32.totalorder %s478, 0
    %s481 = sadd.s32 %s480, 1
    %s482 = scalar_select %p479, %s480, %s481
    %p485 = pneg %p479
    %p486 = scmp.eq.s32.totalorder %s26, 3
    %p487 = por %p485, %p486
    %p488 = scmp.ne.s32.totalorder %s480, %s483
    %p489 = scmp.eq.s32.totalorder %s26, 0
    %p490 = por %p488, %p489
    %p491 = scmp.ne.s32.totalorder %s480, %s483
    %p492 = scmp.eq.s32.totalorder %s31, 3
    %p493 = por %p491, %p492
    %p494 = scmp.ne.s32.totalorder %s483, %s484
    %p495 = scmp.eq.s32.totalorder %s31, 0
    %p496 = por %p494, %p495
    %p497 = scmp.ne.s32.totalorder %s483, %s484
    %p498 = scmp.eq.s32.totalorder %s32, 3
    %p499 = por %p497, %p498
    %p501 = scmp.ne.s32.totalorder %s484, %s500
    %p502 = scmp.eq.s32.totalorder %s32, 0
    %p503 = por %p501, %p502
    %s504 = ssub.s32 %s34, %s41
    %p505 = scmp.eq.s32.totalorder %s504, 0
    %s507 = sadd.s32 %s506, 1
    %s508 = scalar_select %p505, %s506, %s507
    %p511 = pneg %p505
    %p512 = scmp.eq.s32.totalorder %s26, 3
    %p513 = por %p511, %p512
    %p514 = scmp.ne.s32.totalorder %s506, %s509
    %p515 = scmp.eq.s32.totalorder %s26, 0
    %p516 = por %p514, %p515
    %p517 = scmp.ne.s32.totalorder %s506, %s509
    %p518 = scmp.eq.s32.totalorder %s31, 3
    %p519 = por %p517, %p518
    %p520 = scmp.ne.s32.totalorder %s509, %s510
    %p521 = scmp.eq.s32.totalorder %s31, 0
    %p522 = por %p520, %p521
    %p523 = scmp.ne.s32.totalorder %s509, %s510
    %p524 = scmp.eq.s32.totalorder %s32, 3
    %p525 = por %p523, %p524
    %p527 = scmp.ne.s32.totalorder %s510, %s526
    %p528 = scmp.eq.s32.totalorder %s32, 0
    %p529 = por %p527, %p528
    %s530 = ssub.s32 %s34, %s41
    %p531 = scmp.eq.s32.totalorder %s530, 0
    %s533 = sadd.s32 %s532, 1
    %s534 = scalar_select %p531, %s532, %s533
    %p537 = pneg %p531
    %p538 = scmp.eq.s32.totalorder %s26, 3
    %p539 = por %p537, %p538
    %p540 = scmp.ne.s32.totalorder %s532, %s535
    %p541 = scmp.eq.s32.totalorder %s26, 0
    %p542 = por %p540, %p541
    %p543 = scmp.ne.s32.totalorder %s532, %s535
    %p544 = scmp.eq.s32.totalorder %s31, 3
    %p545 = por %p543, %p544
    %p546 = scmp.ne.s32.totalorder %s535, %s536
    %p547 = scmp.eq.s32.totalorder %s31, 0
    %p548 = por %p546, %p547
    %p549 = scmp.ne.s32.totalorder %s535, %s536
    %p550 = scmp.eq.s32.totalorder %s32, 3
    %p551 = por %p549, %p550
    %p553 = scmp.ne.s32.totalorder %s536, %s552
    %p554 = scmp.eq.s32.totalorder %s32, 0
    %p555 = por %p553, %p554
    %s556 = ssub.s32 %s33, %s45
    %p557 = scmp.eq.s32.totalorder %s556, 0
    %s559 = sadd.s32 %s558, 1
    %s560 = scalar_select %p557, %s558, %s559
    %p563 = pneg %p557
    %p564 = scmp.eq.s32.totalorder %s26, 3
    %p565 = por %p563, %p564
    %p566 = scmp.ne.s32.totalorder %s558, %s561
    %p567 = scmp.eq.s32.totalorder %s26, 0
    %p568 = por %p566, %p567
    %p569 = scmp.ne.s32.totalorder %s558, %s561
    %p570 = scmp.eq.s32.totalorder %s31, 3
    %p571 = por %p569, %p570
    %p572 = scmp.ne.s32.totalorder %s561, %s562
    %p573 = scmp.eq.s32.totalorder %s31, 0
    %p574 = por %p572, %p573
    %p575 = scmp.ne.s32.totalorder %s561, %s562
    %p576 = scmp.eq.s32.totalorder %s32, 3
    %p577 = por %p575, %p576
    %p579 = scmp.ne.s32.totalorder %s562, %s578
    %p580 = scmp.eq.s32.totalorder %s32, 0
    %p581 = por %p579, %p580
    %p582 = scmp.le.s32.totalorder 1, %s26
    %p583 = scmp.lt.s32.totalorder %s26, 5
    %p584 = pnand %p582, %p583
    %p585 = pneg %p584
    // Predicated region
    $region9: #{_lambda_.6} parent=5 // pred_check
      _
    $region10: #{_lambda_.6} parent=5 // pred_check_branch
      %587 = sbr.rel (%p584) target = $region12
    $region11: #{_lambda_.6} parent=5 // pred_region
      %s588 = ssub.s32 %s26, 1
      // Predicated region
      $region13: #{_lambda_.6} parent=11 // pred_check
        %p589 = pneg %p111
      $region14: #{_lambda_.6} parent=11 // pred_check_branch
        %591 = sbr.rel (%p589) target = $region16
      $region15: #{_lambda_.6} parent=11 // pred_region
        _
      $region16: #{_lambda_.6} parent=11 // pred_fallthru
        _
      // Predicated region
      $region17: #{_lambda_.6} parent=11 // pred_check
        %p592 = pneg %p132
      $region18: #{_lambda_.6} parent=11 // pred_check_branch
        %594 = sbr.rel (%p592) target = $region20
      $region19: #{_lambda_.6} parent=11 // pred_region
        _
      $region20: #{_lambda_.6} parent=11 // pred_fallthru
        _
    $region12: #{_lambda_.6} parent=5 // pred_fallthru
      _
    %p595 = scmp.lt.s32.totalorder %s26, 4
    // Predicated region
    $region21: #{_lambda_.6} parent=5 // pred_check
      %p596 = pneg %p595
    $region22: #{_lambda_.6} parent=5 // pred_check_branch
      %598 = sbr.rel (%p596) target = $region24
    $region23: #{_lambda_.6} parent=5 // pred_region
      // Predicated region
      $region25: #{_lambda_.6} parent=23 // pred_check
        %p599 = pneg %p58
      $region26: #{_lambda_.6} parent=23 // pred_check_branch
        %601 = sbr.rel (%p599) target = $region28
      $region27: #{_lambda_.6} parent=23 // pred_region
        %p602 = scmp.lt.s32.totalorder %s33, 1
        %s603 = scalar_select %p602, %s33, 1
        %s604 = smul.addr %s603, 4
        %s605 = scalar_lea.vmem %s0, %s604
      $region28: #{_lambda_.6} parent=23 // pred_fallthru
        _
      // Predicated region
      $region29: #{_lambda_.6} parent=23 // pred_check
        %p606 = pneg %p84
      $region30: #{_lambda_.6} parent=23 // pred_check_branch
        %608 = sbr.rel (%p606) target = $region32
      $region31: #{_lambda_.6} parent=23 // pred_region
        %p609 = scmp.lt.s32.totalorder %s33, 1
        %s610 = scalar_select %p609, %s33, 1
        %s611 = scalar_lea.vmem %s1, %s610
      $region32: #{_lambda_.6} parent=23 // pred_fallthru
        _
      // Predicated region
      $region33: #{_lambda_.6} parent=23 // pred_check
        %p612 = pneg %p152
      $region34: #{_lambda_.6} parent=23 // pred_check_branch
        %614 = sbr.rel (%p612) target = $region36
      $region35: #{_lambda_.6} parent=23 // pred_region
        %s615 = smul.u32 4, %s34
        %p616 = scmp.lt.s32.totalorder %s615, 7
        %s617 = scalar_select %p616, %s615, 7
        %s618 = smul.addr %s617, 4
        %s619 = smul.addr %s618, 8
        %s620 = scalar_lea.vmem %s4, %s619
        %s621 = smul.u32 4, %s34
      $region36: #{_lambda_.6} parent=23 // pred_fallthru
        _
      // Predicated region
      $region37: #{_lambda_.6} parent=23 // pred_check
        %p622 = pneg %p178
      $region38: #{_lambda_.6} parent=23 // pred_check_branch
        %624 = sbr.rel (%p622) target = $region40
      $region39: #{_lambda_.6} parent=23 // pred_region
        %s625 = smul.u32 4, %s34
        %p626 = scmp.lt.s32.totalorder %s625, 7
        %s627 = scalar_select %p626, %s625, 7
        %s628 = scalar_lea.vmem %s5, %s627
        %s629 = smul.u32 4, %s34
      $region40: #{_lambda_.6} parent=23 // pred_fallthru
        _
      // Predicated region
      $region41: #{_lambda_.6} parent=23 // pred_check
        %p630 = pneg %p204
      $region42: #{_lambda_.6} parent=23 // pred_check_branch
        %632 = sbr.rel (%p630) target = $region44
      $region43: #{_lambda_.6} parent=23 // pred_region
        %s633 = smul.u32 4, %s34
        %p634 = scmp.lt.s32.totalorder %s633, 7
        %s635 = scalar_select %p634, %s633, 7
        %s636 = smul.addr %s635, 4
        %s637 = smul.addr %s636, 8
        %s638 = scalar_lea.vmem %s6, %s637
        %s639 = smul.u32 4, %s34
      $region44: #{_lambda_.6} parent=23 // pred_fallthru
        _
      // Predicated region
      $region45: #{_lambda_.6} parent=23 // pred_check
        %p640 = pneg %p230
      $region46: #{_lambda_.6} parent=23 // pred_check_branch
        %642 = sbr.rel (%p640) target = $region48
      $region47: #{_lambda_.6} parent=23 // pred_region
        %s643 = smul.u32 4, %s34
        %p644 = scmp.lt.s32.totalorder %s643, 7
        %s645 = scalar_select %p644, %s643, 7
        %s646 = scalar_lea.vmem %s7, %s645
        %s647 = smul.u32 4, %s34
      $region48: #{_lambda_.6} parent=23 // pred_fallthru
        _
      // Predicated region
      $region49: #{_lambda_.6} parent=23 // pred_check
        %p648 = pneg %p256
      $region50: #{_lambda_.6} parent=23 // pred_check_branch
        %650 = sbr.rel (%p648) target = $region52
      $region51: #{_lambda_.6} parent=23 // pred_region
        %s651 = smul.u32 4, %s34
        %p652 = scmp.lt.s32.totalorder %s651, 7
        %s653 = scalar_select %p652, %s651, 7
        %s654 = smul.addr %s653, 4
        %s655 = smul.addr %s654, 8
        %s656 = scalar_lea.vmem %s8, %s655
        %s657 = smul.u32 4, %s34
      $region52: #{_lambda_.6} parent=23 // pred_fallthru
        _
      // Predicated region
      $region53: #{_lambda_.6} parent=23 // pred_check
        %p658 = pneg %p282
      $region54: #{_lambda_.6} parent=23 // pred_check_branch
        %660 = sbr.rel (%p658) target = $region56
      $region55: #{_lambda_.6} parent=23 // pred_region
        %s661 = smul.u32 4, %s34
        %p662 = scmp.lt.s32.totalorder %s661, 7
        %s663 = scalar_select %p662, %s661, 7
        %s664 = scalar_lea.vmem %s9, %s663
        %s665 = smul.u32 4, %s34
      $region56: #{_lambda_.6} parent=23 // pred_fallthru
        _
      // Predicated region
      $region57: #{_lambda_.6} parent=23 // pred_check
        %p666 = pneg %p308
      $region58: #{_lambda_.6} parent=23 // pred_check_branch
        %668 = sbr.rel (%p666) target = $region60
      $region59: #{_lambda_.6} parent=23 // pred_region
        %s669 = smul.u32 4, %s34
        %p670 = scmp.lt.s32.totalorder %s669, 7
        %s671 = scalar_select %p670, %s669, 7
        %s672 = smul.addr %s671, 8
        %s673 = scalar_lea.vmem %s10, %s672
        %s674 = smul.u32 4, %s34
      $region60: #{_lambda_.6} parent=23 // pred_fallthru
        _
      // Predicated region
      $region61: #{_lambda_.6} parent=23 // pred_check
        %p675 = pneg %p334
      $region62: #{_lambda_.6} parent=23 // pred_check_branch
        %677 = sbr.rel (%p675) target = $region64
      $region63: #{_lambda_.6} parent=23 // pred_region
        %p678 = scmp.lt.s32.totalorder %s34, 1
        %s679 = scalar_select %p678, %s34, 1
        %s680 = scalar_lea.vmem %s11, %s679
      $region64: #{_lambda_.6} parent=23 // pred_fallthru
        _
      // Predicated region
      $region65: #{_lambda_.6} parent=23 // pred_check
        %p681 = pneg %p360
      $region66: #{_lambda_.6} parent=23 // pred_check_branch
        %683 = sbr.rel (%p681) target = $region68
      $region67: #{_lambda_.6} parent=23 // pred_region
        %p684 = scmp.lt.s32.totalorder %s34, 1
        %s685 = scalar_select %p684, %s34, 1
        %s686 = scalar_lea.vmem %s12, %s685
      $region68: #{_lambda_.6} parent=23 // pred_fallthru
        _
      // Predicated region
      $region69: #{_lambda_.6} parent=23 // pred_check
        %p687 = pneg %p386
      $region70: #{_lambda_.6} parent=23 // pred_check_branch
        %689 = sbr.rel (%p687) target = $region72
      $region71: #{_lambda_.6} parent=23 // pred_region
        %p690 = scmp.lt.s32.totalorder %s34, 1
        %s691 = scalar_select %p690, %s34, 1
        %s692 = scalar_lea.vmem %s13, %s691
      $region72: #{_lambda_.6} parent=23 // pred_fallthru
        _
      // Predicated region
      $region73: #{_lambda_.6} parent=23 // pred_check
        %p693 = pneg %p412
      $region74: #{_lambda_.6} parent=23 // pred_check_branch
        %695 = sbr.rel (%p693) target = $region76
      $region75: #{_lambda_.6} parent=23 // pred_region
        %p696 = scmp.lt.s32.totalorder %s34, 1
        %s697 = scalar_select %p696, %s34, 1
        %s698 = smul.addr %s697, 4
        %s699 = smul.addr %s698, 8
        %s700 = scalar_lea.vmem %s14, %s699
      $region76: #{_lambda_.6} parent=23 // pred_fallthru
        _
      // Predicated region
      $region77: #{_lambda_.6} parent=23 // pred_check
        %p701 = pneg %p438
      $region78: #{_lambda_.6} parent=23 // pred_check_branch
        %703 = sbr.rel (%p701) target = $region80
      $region79: #{_lambda_.6} parent=23 // pred_region
        %p704 = scmp.lt.s32.totalorder %s34, 1
        %s705 = scalar_select %p704, %s34, 1
        %s706 = scalar_lea.vmem %s15, %s705
      $region80: #{_lambda_.6} parent=23 // pred_fallthru
        _
      // Predicated region
      $region81: #{_lambda_.6} parent=23 // pred_check
        %p707 = pneg %p464
      $region82: #{_lambda_.6} parent=23 // pred_check_branch
        %709 = sbr.rel (%p707) target = $region84
      $region83: #{_lambda_.6} parent=23 // pred_region
        %p710 = scmp.lt.s32.totalorder %s34, 1
        %s711 = scalar_select %p710, %s34, 1
        %s712 = smul.addr %s711, 8
        %s713 = smul.addr %s712, 8
        %s714 = scalar_lea.vmem %s16, %s713
      $region84: #{_lambda_.6} parent=23 // pred_fallthru
        _
      // Predicated region
      $region85: #{_lambda_.6} parent=23 // pred_check
        %p715 = pneg %p490
      $region86: #{_lambda_.6} parent=23 // pred_check_branch
        %717 = sbr.rel (%p715) target = $region88
      $region87: #{_lambda_.6} parent=23 // pred_region
        %p718 = scmp.lt.s32.totalorder %s34, 1
        %s719 = scalar_select %p718, %s34, 1
        %s720 = scalar_lea.vmem %s17, %s719
      $region88: #{_lambda_.6} parent=23 // pred_fallthru
        _
      // Predicated region
      $region89: #{_lambda_.6} parent=23 // pred_check
        %p721 = pneg %p516
      $region90: #{_lambda_.6} parent=23 // pred_check_branch
        %723 = sbr.rel (%p721) target = $region92
      $region91: #{_lambda_.6} parent=23 // pred_region
        %p724 = scmp.lt.s32.totalorder %s34, 1
        %s725 = scalar_select %p724, %s34, 1
        %s726 = scalar_lea.vmem %s18, %s725
      $region92: #{_lambda_.6} parent=23 // pred_fallthru
        _
      // Predicated region
      $region93: #{_lambda_.6} parent=23 // pred_check
        %p727 = pneg %p542
      $region94: #{_lambda_.6} parent=23 // pred_check_branch
        %729 = sbr.rel (%p727) target = $region96
      $region95: #{_lambda_.6} parent=23 // pred_region
        %p730 = scmp.lt.s32.totalorder %s34, 1
        %s731 = scalar_select %p730, %s34, 1
        %s732 = scalar_lea.vmem %s19, %s731
      $region96: #{_lambda_.6} parent=23 // pred_fallthru
        _
    $region24: #{_lambda_.6} parent=5 // pred_fallthru
      _
    %p733 = scmp.le.s32.totalorder 1, %s26
    %p734 = scmp.lt.s32.totalorder %s26, 5
    %p735 = pnand %p733, %p734
    %p736 = pneg %p735
    // Predicated region
    $region97: #{_lambda_.6} parent=5 // pred_check
      _
    $region98: #{_lambda_.6} parent=5 // pred_check_branch
      %738 = sbr.rel (%p735) target = $region100
    $region99: #{_lambda_.6} parent=5 // pred_region
      %s739 = ssub.s32 %s26, 1
      %p740 = scmp.lt.s32.totalorder %s35, 1
      %s741 = scalar_select %p740, %s35, 1
      %s742 = smul.addr %s741, 4
      %s743 = scalar_lea.vmem %s0, %s742
      %p744 = pneg %p64
      %p745 = pneg %p61
      %p746 = scmp.lt.s32.totalorder %s35, 1
      %s747 = scalar_select %p746, %s35, 1
      %s748 = scalar_lea.vmem %s1, %s747
      %p749 = pneg %p90
      %p750 = pneg %p87
      %p751 = pneg %p111
      %p752 = pneg %p108
      %p753 = pneg %p132
      %p754 = pneg %p129
      %s755 = smul.u32 4, %s36
      %p756 = scmp.lt.s32.totalorder %s755, 7
      %s757 = scalar_select %p756, %s755, 7
      %s758 = smul.addr %s757, 4
      %s759 = smul.addr %s758, 8
      %s760 = scalar_lea.vmem %s4, %s759
      %p761 = pneg %p158
      %p762 = pneg %p155
      %s763 = smul.u32 4, %s36
      %p764 = scmp.lt.s32.totalorder %s763, 7
      %s765 = scalar_select %p764, %s763, 7
      %s766 = scalar_lea.vmem %s5, %s765
      %p767 = pneg %p184
      %p768 = pneg %p181
      %s769 = smul.u32 4, %s36
      %p770 = scmp.lt.s32.totalorder %s769, 7
      %s771 = scalar_select %p770, %s769, 7
      %s772 = smul.addr %s771, 4
      %s773 = smul.addr %s772, 8
      %s774 = scalar_lea.vmem %s6, %s773
      %p775 = pneg %p210
      %p776 = pneg %p207
      %s777 = smul.u32 4, %s36
      %p778 = scmp.lt.s32.totalorder %s777, 7
      %s779 = scalar_select %p778, %s777, 7
      %s780 = scalar_lea.vmem %s7, %s779
      %p781 = pneg %p236
      %p782 = pneg %p233
      %s783 = smul.u32 4, %s36
      %p784 = scmp.lt.s32.totalorder %s783, 7
      %s785 = scalar_select %p784, %s783, 7
      %s786 = smul.addr %s785, 4
      %s787 = smul.addr %s786, 8
      %s788 = scalar_lea.vmem %s8, %s787
      %p789 = pneg %p262
      %p790 = pneg %p259
      %s791 = smul.u32 4, %s36
      %p792 = scmp.lt.s32.totalorder %s791, 7
      %s793 = scalar_select %p792, %s791, 7
      %s794 = scalar_lea.vmem %s9, %s793
      %p795 = pneg %p288
      %p796 = pneg %p285
      %s797 = smul.u32 4, %s36
      %p798 = scmp.lt.s32.totalorder %s797, 7
      %s799 = scalar_select %p798, %s797, 7
      %s800 = smul.addr %s799, 8
      %s801 = scalar_lea.vmem %s10, %s800
      %p802 = pneg %p314
      %p803 = pneg %p311
      %p804 = scmp.lt.s32.totalorder %s36, 1
      %s805 = scalar_select %p804, %s36, 1
      %s806 = scalar_lea.vmem %s11, %s805
      %p807 = pneg %p340
      %p808 = pneg %p337
      %p809 = scmp.lt.s32.totalorder %s36, 1
      %s810 = scalar_select %p809, %s36, 1
      %s811 = scalar_lea.vmem %s12, %s810
      %p812 = pneg %p366
      %p813 = pneg %p363
      %p814 = scmp.lt.s32.totalorder %s36, 1
      %s815 = scalar_select %p814, %s36, 1
      %s816 = scalar_lea.vmem %s13, %s815
      %p817 = pneg %p392
      %p818 = pneg %p389
      %p819 = scmp.lt.s32.totalorder %s36, 1
      %s820 = scalar_select %p819, %s36, 1
      %s821 = smul.addr %s820, 4
      %s822 = smul.addr %s821, 8
      %s823 = scalar_lea.vmem %s14, %s822
      %p824 = pneg %p418
      %p825 = pneg %p415
      %p826 = scmp.lt.s32.totalorder %s36, 1
      %s827 = scalar_select %p826, %s36, 1
      %s828 = scalar_lea.vmem %s15, %s827
      %p829 = pneg %p444
      %p830 = pneg %p441
      %p831 = scmp.lt.s32.totalorder %s36, 1
      %s832 = scalar_select %p831, %s36, 1
      %s833 = smul.addr %s832, 8
      %s834 = smul.addr %s833, 8
      %s835 = scalar_lea.vmem %s16, %s834
      %p836 = pneg %p470
      %p837 = pneg %p467
      %p838 = scmp.lt.s32.totalorder %s36, 1
      %s839 = scalar_select %p838, %s36, 1
      %s840 = scalar_lea.vmem %s17, %s839
      %p841 = pneg %p496
      %p842 = pneg %p493
      %p843 = scmp.lt.s32.totalorder %s36, 1
      %s844 = scalar_select %p843, %s36, 1
      %s845 = scalar_lea.vmem %s18, %s844
      %p846 = pneg %p522
      %p847 = pneg %p519
      %p848 = scmp.lt.s32.totalorder %s36, 1
      %s849 = scalar_select %p848, %s36, 1
      %s850 = scalar_lea.vmem %s19, %s849
      %p851 = pneg %p548
      %p852 = pneg %p545
      %p853 = pneg %p574
      %p854 = pneg %p571
      %p855 = scmp.lt.s32.totalorder %s35, 1
      %s856 = scalar_select %p855, %s35, 1
      %s857 = smul.addr %s856, 4
      %s858 = scalar_lea.vmem %s20, %s857
      %p859 = scmp.lt.s32.totalorder %s35, 1
      %s860 = scalar_select %p859, %s35, 1
      %s861 = smul.addr %s860, 4
      %s862 = scalar_lea.vmem %s0, %s861
      %p863 = scmp.lt.s32.totalorder %s35, 1
      %s864 = scalar_select %p863, %s35, 1
      %s865 = scalar_lea.vmem %s1, %s864
      %s866 = smul.u32 4, %s36
      %p867 = scmp.lt.s32.totalorder %s866, 7
      %s868 = scalar_select %p867, %s866, 7
      %s869 = smul.addr %s868, 4
      %s870 = smul.addr %s869, 8
      %s871 = scalar_lea.vmem %s4, %s870
      %s872 = smul.u32 4, %s36
      %s873 = smul.u32 4, %s36
      %p874 = scmp.lt.s32.totalorder %s873, 7
      %s875 = scalar_select %p874, %s873, 7
      %s876 = scalar_lea.vmem %s5, %s875
      %s877 = smul.u32 4, %s36
      %s878 = smul.u32 4, %s36
      %p879 = scmp.lt.s32.totalorder %s878, 7
      %s880 = scalar_select %p879, %s878, 7
      %s881 = smul.addr %s880, 4
      %s882 = smul.addr %s881, 8
      %s883 = scalar_lea.vmem %s6, %s882
      %s884 = smul.u32 4, %s36
      %s885 = smul.u32 4, %s36
      %p886 = scmp.lt.s32.totalorder %s885, 7
      %s887 = scalar_select %p886, %s885, 7
      %s888 = scalar_lea.vmem %s7, %s887
      %s889 = smul.u32 4, %s36
      %s890 = smul.u32 4, %s36
      %p891 = scmp.lt.s32.totalorder %s890, 7
      %s892 = scalar_select %p891, %s890, 7
      %s893 = smul.addr %s892, 4
      %s894 = smul.addr %s893, 8
      %s895 = scalar_lea.vmem %s8, %s894
      %s896 = smul.u32 4, %s36
      %s897 = smul.u32 4, %s36
      %p898 = scmp.lt.s32.totalorder %s897, 7
      %s899 = scalar_select %p898, %s897, 7
      %s900 = scalar_lea.vmem %s9, %s899
      %s901 = smul.u32 4, %s36
      %s902 = smul.u32 4, %s36
      %p903 = scmp.lt.s32.totalorder %s902, 7
      %s904 = scalar_select %p903, %s902, 7
      %s905 = smul.addr %s904, 8
      %s906 = scalar_lea.vmem %s10, %s905
      %s907 = smul.u32 4, %s36
      %p908 = scmp.lt.s32.totalorder %s36, 1
      %s909 = scalar_select %p908, %s36, 1
      %s910 = scalar_lea.vmem %s11, %s909
      %p911 = scmp.lt.s32.totalorder %s36, 1
      %s912 = scalar_select %p911, %s36, 1
      %s913 = scalar_lea.vmem %s12, %s912
      %p914 = scmp.lt.s32.totalorder %s36, 1
      %s915 = scalar_select %p914, %s36, 1
      %s916 = scalar_lea.vmem %s13, %s915
      %p917 = scmp.lt.s32.totalorder %s36, 1
      %s918 = scalar_select %p917, %s36, 1
      %s919 = smul.addr %s918, 4
      %s920 = smul.addr %s919, 8
      %s921 = scalar_lea.vmem %s14, %s920
      %p922 = scmp.lt.s32.totalorder %s36, 1
      %s923 = scalar_select %p922, %s36, 1
      %s924 = scalar_lea.vmem %s15, %s923
      %p925 = scmp.lt.s32.totalorder %s36, 1
      %s926 = scalar_select %p925, %s36, 1
      %s927 = smul.addr %s926, 8
      %s928 = smul.addr %s927, 8
      %s929 = scalar_lea.vmem %s16, %s928
      %p930 = scmp.lt.s32.totalorder %s36, 1
      %s931 = scalar_select %p930, %s36, 1
      %s932 = scalar_lea.vmem %s17, %s931
      %p933 = scmp.lt.s32.totalorder %s36, 1
      %s934 = scalar_select %p933, %s36, 1
      %s935 = scalar_lea.vmem %s18, %s934
      %p936 = scmp.lt.s32.totalorder %s36, 1
      %s937 = scalar_select %p936, %s36, 1
      %s938 = scalar_lea.vmem %s19, %s937
      %p939 = scmp.lt.s32.totalorder %s35, 1
      %s940 = scalar_select %p939, %s35, 1
      %s941 = smul.addr %s940, 4
      %s942 = scalar_lea.vmem %s20, %s941
      %p943 = scmp.eq.s32.totalorder %s36, 0
      // Predicated region
      $region101: #{_lambda_.6} parent=99 // pred_check
        %p944 = pneg %p943
      $region102: #{_lambda_.6} parent=99 // pred_check_branch
        %946 = sbr.rel (%p944) target = $region104
      $region103: #{_lambda_.6} parent=99 // pred_region
        %v947 = vld [vmem:[%s862] sm:$0xf]
        %vm948 = vcmask 257024
        %949 = vst.msk [vmem:[#allocation2] sm:$0xf] %vm948, %v947
      $region104: #{_lambda_.6} parent=99 // pred_fallthru
        _
      %v950 = vld [vmem:[#allocation2] sm:$0xf]
      %v951 = vld [vmem:[%s871] sm:$0xff]
      %v952 = vld [vmem:[%s871 + $0x8] sm:$0xff]
      %v953 = vld [vmem:[%s871 + $0x10] sm:$0xff]
      %v954 = vld [vmem:[%s871 + $0x18] sm:$0xff]
      %v955 = vld [vmem:[%s871 + $0x20] sm:$0xff]
      %v956 = vld [vmem:[%s871 + $0x28] sm:$0xff]
      %v957 = vld [vmem:[%s871 + $0x30] sm:$0xff]
      %v958 = vld [vmem:[%s871 + $0x38] sm:$0xff]
      %v959 = vld [vmem:[%s871 + $0x40] sm:$0xff]
      %v960 = vld [vmem:[%s871 + $0x48] sm:$0xff]
      %v961 = vld [vmem:[%s871 + $0x50] sm:$0xff]
      %v962 = vld [vmem:[%s871 + $0x58] sm:$0xff]
      %v963 = vld [vmem:[%s871 + $0x60] sm:$0xff]
      %v964 = vld [vmem:[%s871 + $0x68] sm:$0xff]
      %v965 = vld [vmem:[%s871 + $0x70] sm:$0xff]
      %v966 = vld [vmem:[%s871 + $0x78] sm:$0xff]
      %vm967 = vcmask 261120
      %v969 = vsel %vm967, %v950, 0
      %971 = vmatprep.subr.mxu0 0.0
      %972 = vmatpush1.msra.mxu0 0.0
      %973 = vmatprep.subr.mxu0 0.0
      %974 = vmatpush1.msra.mxu0 0.0
      %975 = vmatprep.subr.mxu0 0.0
      %976 = vmatpush1.msra.mxu0 0.0
      %977 = vmatprep.subr.mxu0 0.0
      %978 = vmatpush1.msra.mxu0 0.0
      %979 = vmatprep.subr.mxu0 0.0
      %980 = vmatpush1.msra.mxu0 0.0
      %981 = vmatprep.subr.mxu0 0.0
      %982 = vmatpush1.msra.mxu0 0.0
      %983 = vmatprep.subr.mxu0 0.0
      %984 = vmatpush1.msra.mxu0 0.0
      %985 = vmatprep.subr.mxu0 0.0
      %986 = vmatpush1.msra.mxu0 0.0
      %987 = vmatprep.subr.mxu0 0.0
      %988 = vmatpush1.msra.mxu0 0.0
      %989 = vmatprep.subr.mxu0 0.0
      %990 = vmatpush1.msra.mxu0 0.0
      %991 = vmatprep.subr.mxu0 0.0
      %992 = vmatpush1.msra.mxu0 0.0
      %993 = vmatprep.subr.mxu0 0.0
      %994 = vmatpush1.msra.mxu0 0.0
      %995 = vmatprep.subr.mxu0 0.0
      %996 = vmatpush1.msra.mxu0 %v954
      %997 = vmatprep.subr.mxu0 0.0
      %998 = vmatpush1.msra.mxu0 %v953
      %999 = vmatprep.subr.mxu0 0.0
      %1000 = vmatpush1.msra.mxu0 %v952
      %1001 = vmatprep.subr.mxu0 0.0
      %1002 = vmatpush1.msra.mxu0 %v951
      %1003 = vmatprep.subr.mxu0 0.0
      %1004 = vmatpush2.msra.mxu0 0.0
      %1005 = vmatprep.subr.mxu0 0.0
      %1006 = vmatpush2.msra.mxu0 0.0
      %1007 = vmatprep.subr.mxu0 0.0
      %1008 = vmatpush2.msra.mxu0 0.0
      %1009 = vmatprep.subr.mxu0 0.0
      %1010 = vmatpush2.msra.mxu0 0.0
      %1011 = vmatprep.subr.mxu0 0.0
      %1012 = vmatpush2.msra.mxu0 0.0
      %1013 = vmatprep.subr.mxu0 0.0
      %1014 = vmatpush2.msra.mxu0 0.0
      %1015 = vmatprep.subr.mxu0 0.0
      %1016 = vmatpush2.msra.mxu0 0.0
      %1017 = vmatprep.subr.mxu0 0.0
      %1018 = vmatpush2.msra.mxu0 0.0
      %1019 = vmatprep.subr.mxu0 0.0
      %1020 = vmatpush2.msra.mxu0 0.0
      %1021 = vmatprep.subr.mxu0 0.0
      %1022 = vmatpush2.msra.mxu0 0.0
      %1023 = vmatprep.subr.mxu0 0.0
      %1024 = vmatpush2.msra.mxu0 0.0
      %1025 = vmatprep.subr.mxu0 0.0
      %1026 = vmatpush2.msra.mxu0 0.0
      %1027 = vmatprep.subr.mxu0 0.0
      %1028 = vmatpush2.msra.mxu0 0.0
      %1029 = vmatprep.subr.mxu0 0.0
      %1030 = vmatpush2.msra.mxu0 0.0
      %1031 = vmatprep.subr.mxu0 0.0
      %1032 = vmatpush2.msra.mxu0 0.0
      %1033 = vmatprep.subr.mxu0 0.0
      %1034 = vmatpush2.msra.mxu0 0.0
      %1035 = vmatprep.mubr.f32.mxu0 0.0
      %1036 = vmatmul.mubr.f32.gmra.mxu0 %v969
      %v1037 = vpop.f32.mrf.mxu0
      %v1038 = vadd.f32 0.0, %v1037
      %v1039 = vpop.f32.mrf.mxu0
      %1040 = vdwg.mxu0
      %1041 = vmatprep.subr.mxu0 0.0
      %1042 = vmatpush1.msra.mxu0 0.0
      %1043 = vmatprep.subr.mxu0 0.0
      %1044 = vmatpush1.msra.mxu0 0.0
      %1045 = vmatprep.subr.mxu0 0.0
      %1046 = vmatpush1.msra.mxu0 0.0
      %1047 = vmatprep.subr.mxu0 0.0
      %1048 = vmatpush1.msra.mxu0 0.0
      %1049 = vmatprep.subr.mxu0 0.0
      %1050 = vmatpush1.msra.mxu0 0.0
      %1051 = vmatprep.subr.mxu0 0.0
      %1052 = vmatpush1.msra.mxu0 0.0
      %1053 = vmatprep.subr.mxu0 0.0
      %1054 = vmatpush1.msra.mxu0 0.0
      %1055 = vmatprep.subr.mxu0 0.0
      %1056 = vmatpush1.msra.mxu0 0.0
      %1057 = vmatprep.subr.mxu0 0.0
      %1058 = vmatpush1.msra.mxu0 0.0
      %1059 = vmatprep.subr.mxu0 0.0
      %1060 = vmatpush1.msra.mxu0 0.0
      %1061 = vmatprep.subr.mxu0 0.0
      %1062 = vmatpush1.msra.mxu0 0.0
      %1063 = vmatprep.subr.mxu0 0.0
      %1064 = vmatpush1.msra.mxu0 0.0
      %1065 = vmatprep.subr.mxu0 0.0
      %1066 = vmatpush1.msra.mxu0 %v958
      %1067 = vmatprep.subr.mxu0 0.0
      %1068 = vmatpush1.msra.mxu0 %v957
      %1069 = vmatprep.subr.mxu0 0.0
      %1070 = vmatpush1.msra.mxu0 %v956
      %1071 = vmatprep.subr.mxu0 0.0
      %1072 = vmatpush1.msra.mxu0 %v955
      %1073 = vmatprep.subr.mxu0 0.0
      %1074 = vmatpush2.msra.mxu0 0.0
      %1075 = vmatprep.subr.mxu0 0.0
      %1076 = vmatpush2.msra.mxu0 0.0
      %1077 = vmatprep.subr.mxu0 0.0
      %1078 = vmatpush2.msra.mxu0 0.0
      %1079 = vmatprep.subr.mxu0 0.0
      %1080 = vmatpush2.msra.mxu0 0.0
      %1081 = vmatprep.subr.mxu0 0.0
      %1082 = vmatpush2.msra.mxu0 0.0
      %1083 = vmatprep.subr.mxu0 0.0
      %1084 = vmatpush2.msra.mxu0 0.0
      %1085 = vmatprep.subr.mxu0 0.0
      %1086 = vmatpush2.msra.mxu0 0.0
      %1087 = vmatprep.subr.mxu0 0.0
      %1088 = vmatpush2.msra.mxu0 0.0
      %1089 = vmatprep.subr.mxu0 0.0
      %1090 = vmatpush2.msra.mxu0 0.0
      %1091 = vmatprep.subr.mxu0 0.0
      %1092 = vmatpush2.msra.mxu0 0.0
      %1093 = vmatprep.subr.mxu0 0.0
      %1094 = vmatpush2.msra.mxu0 0.0
      %1095 = vmatprep.subr.mxu0 0.0
      %1096 = vmatpush2.msra.mxu0 0.0
      %1097 = vmatprep.subr.mxu0 0.0
      %1098 = vmatpush2.msra.mxu0 0.0
      %1099 = vmatprep.subr.mxu0 0.0
      %1100 = vmatpush2.msra.mxu0 0.0
      %1101 = vmatprep.subr.mxu0 0.0
      %1102 = vmatpush2.msra.mxu0 0.0
      %1103 = vmatprep.subr.mxu0 0.0
      %1104 = vmatpush2.msra.mxu0 0.0
      %1105 = vmatprep.mubr.f32.mxu0 0.0
      %1106 = vmatmul.mubr.f32.gmra.mxu0 %v969
      %v1107 = vpop.f32.mrf.mxu0
      %v1108 = vadd.f32 0.0, %v1107
      %v1109 = vpop.f32.mrf.mxu0
      %1110 = vdwg.mxu0
      %1111 = vmatprep.subr.mxu0 0.0
      %1112 = vmatpush1.msra.mxu0 0.0
      %1113 = vmatprep.subr.mxu0 0.0
      %1114 = vmatpush1.msra.mxu0 0.0
      %1115 = vmatprep.subr.mxu0 0.0
      %1116 = vmatpush1.msra.mxu0 0.0
      %1117 = vmatprep.subr.mxu0 0.0
      %1118 = vmatpush1.msra.mxu0 0.0
      %1119 = vmatprep.subr.mxu0 0.0
      %1120 = vmatpush1.msra.mxu0 0.0
      %1121 = vmatprep.subr.mxu0 0.0
      %1122 = vmatpush1.msra.mxu0 0.0
      %1123 = vmatprep.subr.mxu0 0.0
      %1124 = vmatpush1.msra.mxu0 0.0
      %1125 = vmatprep.subr.mxu0 0.0
      %1126 = vmatpush1.msra.mxu0 0.0
      %1127 = vmatprep.subr.mxu0 0.0
      %1128 = vmatpush1.msra.mxu0 0.0
      %1129 = vmatprep.subr.mxu0 0.0
      %1130 = vmatpush1.msra.mxu0 0.0
      %1131 = vmatprep.subr.mxu0 0.0
      %1132 = vmatpush1.msra.mxu0 0.0
      %1133 = vmatprep.subr.mxu0 0.0
      %1134 = vmatpush1.msra.mxu0 0.0
      %1135 = vmatprep.subr.mxu0 0.0
      %1136 = vmatpush1.msra.mxu0 %v962
      %1137 = vmatprep.subr.mxu0 0.0
      %1138 = vmatpush1.msra.mxu0 %v961
      %1139 = vmatprep.subr.mxu0 0.0
      %1140 = vmatpush1.msra.mxu0 %v960
      %1141 = vmatprep.subr.mxu0 0.0
      %1142 = vmatpush1.msra.mxu0 %v959
      %1143 = vmatprep.subr.mxu0 0.0
      %1144 = vmatpush2.msra.mxu0 0.0
      %1145 = vmatprep.subr.mxu0 0.0
      %1146 = vmatpush2.msra.mxu0 0.0
      %1147 = vmatprep.subr.mxu0 0.0
      %1148 = vmatpush2.msra.mxu0 0.0
      %1149 = vmatprep.subr.mxu0 0.0
      %1150 = vmatpush2.msra.mxu0 0.0
      %1151 = vmatprep.subr.mxu0 0.0
      %1152 = vmatpush2.msra.mxu0 0.0
      %1153 = vmatprep.subr.mxu0 0.0
      %1154 = vmatpush2.msra.mxu0 0.0
      %1155 = vmatprep.subr.mxu0 0.0
      %1156 = vmatpush2.msra.mxu0 0.0
      %1157 = vmatprep.subr.mxu0 0.0
      %1158 = vmatpush2.msra.mxu0 0.0
      %1159 = vmatprep.subr.mxu0 0.0
      %1160 = vmatpush2.msra.mxu0 0.0
      %1161 = vmatprep.subr.mxu0 0.0
      %1162 = vmatpush2.msra.mxu0 0.0
      %1163 = vmatprep.subr.mxu0 0.0
      %1164 = vmatpush2.msra.mxu0 0.0
      %1165 = vmatprep.subr.mxu0 0.0
      %1166 = vmatpush2.msra.mxu0 0.0
      %1167 = vmatprep.subr.mxu0 0.0
      %1168 = vmatpush2.msra.mxu0 0.0
      %1169 = vmatprep.subr.mxu0 0.0
      %1170 = vmatpush2.msra.mxu0 0.0
      %1171 = vmatprep.subr.mxu0 0.0
      %1172 = vmatpush2.msra.mxu0 0.0
      %1173 = vmatprep.subr.mxu0 0.0
      %1174 = vmatpush2.msra.mxu0 0.0
      %1175 = vmatprep.mubr.f32.mxu0 0.0
      %1176 = vmatmul.mubr.f32.gmra.mxu0 %v969
      %v1177 = vpop.f32.mrf.mxu0
      %v1178 = vadd.f32 0.0, %v1177
      %v1179 = vpop.f32.mrf.mxu0
      %1180 = vdwg.mxu0
      %1181 = vmatprep.subr.mxu0 0.0
      %1182 = vmatpush1.msra.mxu0 0.0
      %1183 = vmatprep.subr.mxu0 0.0
      %1184 = vmatpush1.msra.mxu0 0.0
      %1185 = vmatprep.subr.mxu0 0.0
      %1186 = vmatpush1.msra.mxu0 0.0
      %1187 = vmatprep.subr.mxu0 0.0
      %1188 = vmatpush1.msra.mxu0 0.0
      %1189 = vmatprep.subr.mxu0 0.0
      %1190 = vmatpush1.msra.mxu0 0.0
      %1191 = vmatprep.subr.mxu0 0.0
      %1192 = vmatpush1.msra.mxu0 0.0
      %1193 = vmatprep.subr.mxu0 0.0
      %1194 = vmatpush1.msra.mxu0 0.0
      %1195 = vmatprep.subr.mxu0 0.0
      %1196 = vmatpush1.msra.mxu0 0.0
      %1197 = vmatprep.subr.mxu0 0.0
      %1198 = vmatpush1.msra.mxu0 0.0
      %1199 = vmatprep.subr.mxu0 0.0
      %1200 = vmatpush1.msra.mxu0 0.0
      %1201 = vmatprep.subr.mxu0 0.0
      %1202 = vmatpush1.msra.mxu0 0.0
      %1203 = vmatprep.subr.mxu0 0.0
      %1204 = vmatpush1.msra.mxu0 0.0
      %1205 = vmatprep.subr.mxu0 0.0
      %1206 = vmatpush1.msra.mxu0 %v966
      %1207 = vmatprep.subr.mxu0 0.0
      %1208 = vmatpush1.msra.mxu0 %v965
      %1209 = vmatprep.subr.mxu0 0.0
      %1210 = vmatpush1.msra.mxu0 %v964
      %1211 = vmatprep.subr.mxu0 0.0
      %1212 = vmatpush1.msra.mxu0 %v963
      %1213 = vmatprep.subr.mxu0 0.0
      %1214 = vmatpush2.msra.mxu0 0.0
      %1215 = vmatprep.subr.mxu0 0.0
      %1216 = vmatpush2.msra.mxu0 0.0
      %1217 = vmatprep.subr.mxu0 0.0
      %1218 = vmatpush2.msra.mxu0 0.0
      %1219 = vmatprep.subr.mxu0 0.0
      %1220 = vmatpush2.msra.mxu0 0.0
      %1221 = vmatprep.subr.mxu0 0.0
      %1222 = vmatpush2.msra.mxu0 0.0
      %1223 = vmatprep.subr.mxu0 0.0
      %1224 = vmatpush2.msra.mxu0 0.0
      %1225 = vmatprep.subr.mxu0 0.0
      %1226 = vmatpush2.msra.mxu0 0.0
      %1227 = vmatprep.subr.mxu0 0.0
      %1228 = vmatpush2.msra.mxu0 0.0
      %1229 = vmatprep.subr.mxu0 0.0
      %1230 = vmatpush2.msra.mxu0 0.0
      %1231 = vmatprep.subr.mxu0 0.0
      %1232 = vmatpush2.msra.mxu0 0.0
      %1233 = vmatprep.subr.mxu0 0.0
      %1234 = vmatpush2.msra.mxu0 0.0
      %1235 = vmatprep.subr.mxu0 0.0
      %1236 = vmatpush2.msra.mxu0 0.0
      %1237 = vmatprep.subr.mxu0 0.0
      %1238 = vmatpush2.msra.mxu0 0.0
      %1239 = vmatprep.subr.mxu0 0.0
      %1240 = vmatpush2.msra.mxu0 0.0
      %1241 = vmatprep.subr.mxu0 0.0
      %1242 = vmatpush2.msra.mxu0 0.0
      %1243 = vmatprep.subr.mxu0 0.0
      %1244 = vmatpush2.msra.mxu0 0.0
      %1245 = vmatprep.mubr.f32.mxu0 0.0
      %1246 = vmatmul.mubr.f32.gmra.mxu0 %v969
      %v1247 = vpop.f32.mrf.mxu0
      %v1248 = vadd.f32 0.0, %v1247
      %v1249 = vpop.f32.mrf.mxu0
      %1250 = vdwg.mxu0
      %v1251 = vld [vmem:[%s883] sm:$0xff]
      %v1252 = vld [vmem:[%s883 + $0x8] sm:$0xff]
      %v1253 = vld [vmem:[%s883 + $0x10] sm:$0xff]
      %v1254 = vld [vmem:[%s883 + $0x18] sm:$0xff]
      %v1255 = vld [vmem:[%s883 + $0x20] sm:$0xff]
      %v1256 = vld [vmem:[%s883 + $0x28] sm:$0xff]
      %v1257 = vld [vmem:[%s883 + $0x30] sm:$0xff]
      %v1258 = vld [vmem:[%s883 + $0x38] sm:$0xff]
      %v1259 = vld [vmem:[%s883 + $0x40] sm:$0xff]
      %v1260 = vld [vmem:[%s883 + $0x48] sm:$0xff]
      %v1261 = vld [vmem:[%s883 + $0x50] sm:$0xff]
      %v1262 = vld [vmem:[%s883 + $0x58] sm:$0xff]
      %v1263 = vld [vmem:[%s883 + $0x60] sm:$0xff]
      %v1264 = vld [vmem:[%s883 + $0x68] sm:$0xff]
      %v1265 = vld [vmem:[%s883 + $0x70] sm:$0xff]
      %v1266 = vld [vmem:[%s883 + $0x78] sm:$0xff]
      %1267 = vmatprep.subr.mxu0 0.0
      %1268 = vmatpush1.msra.mxu0 0.0
      %1269 = vmatprep.subr.mxu0 0.0
      %1270 = vmatpush1.msra.mxu0 0.0
      %1271 = vmatprep.subr.mxu0 0.0
      %1272 = vmatpush1.msra.mxu0 0.0
      %1273 = vmatprep.subr.mxu0 0.0
      %1274 = vmatpush1.msra.mxu0 0.0
      %1275 = vmatprep.subr.mxu0 0.0
      %1276 = vmatpush1.msra.mxu0 0.0
      %1277 = vmatprep.subr.mxu0 0.0
      %1278 = vmatpush1.msra.mxu0 0.0
      %1279 = vmatprep.subr.mxu0 0.0
      %1280 = vmatpush1.msra.mxu0 0.0
      %1281 = vmatprep.subr.mxu0 0.0
      %1282 = vmatpush1.msra.mxu0 0.0
      %1283 = vmatprep.subr.mxu0 0.0
      %1284 = vmatpush1.msra.mxu0 0.0
      %1285 = vmatprep.subr.mxu0 0.0
      %1286 = vmatpush1.msra.mxu0 0.0
      %1287 = vmatprep.subr.mxu0 0.0
      %1288 = vmatpush1.msra.mxu0 0.0
      %1289 = vmatprep.subr.mxu0 0.0
      %1290 = vmatpush1.msra.mxu0 0.0
      %1291 = vmatprep.subr.mxu0 0.0
      %1292 = vmatpush1.msra.mxu0 %v1254
      %1293 = vmatprep.subr.mxu0 0.0
      %1294 = vmatpush1.msra.mxu0 %v1253
      %1295 = vmatprep.subr.mxu0 0.0
      %1296 = vmatpush1.msra.mxu0 %v1252
      %1297 = vmatprep.subr.mxu0 0.0
      %1298 = vmatpush1.msra.mxu0 %v1251
      %1299 = vmatprep.subr.mxu0 0.0
      %1300 = vmatpush2.msra.mxu0 0.0
      %1301 = vmatprep.subr.mxu0 0.0
      %1302 = vmatpush2.msra.mxu0 0.0
      %1303 = vmatprep.subr.mxu0 0.0
      %1304 = vmatpush2.msra.mxu0 0.0
      %1305 = vmatprep.subr.mxu0 0.0
      %1306 = vmatpush2.msra.mxu0 0.0
      %1307 = vmatprep.subr.mxu0 0.0
      %1308 = vmatpush2.msra.mxu0 0.0
      %1309 = vmatprep.subr.mxu0 0.0
      %1310 = vmatpush2.msra.mxu0 0.0
      %1311 = vmatprep.subr.mxu0 0.0
      %1312 = vmatpush2.msra.mxu0 0.0
      %1313 = vmatprep.subr.mxu0 0.0
      %1314 = vmatpush2.msra.mxu0 0.0
      %1315 = vmatprep.subr.mxu0 0.0
      %1316 = vmatpush2.msra.mxu0 0.0
      %1317 = vmatprep.subr.mxu0 0.0
      %1318 = vmatpush2.msra.mxu0 0.0
      %1319 = vmatprep.subr.mxu0 0.0
      %1320 = vmatpush2.msra.mxu0 0.0
      %1321 = vmatprep.subr.mxu0 0.0
      %1322 = vmatpush2.msra.mxu0 0.0
      %1323 = vmatprep.subr.mxu0 0.0
      %1324 = vmatpush2.msra.mxu0 0.0
      %1325 = vmatprep.subr.mxu0 0.0
      %1326 = vmatpush2.msra.mxu0 0.0
      %1327 = vmatprep.subr.mxu0 0.0
      %1328 = vmatpush2.msra.mxu0 0.0
      %1329 = vmatprep.subr.mxu0 0.0
      %1330 = vmatpush2.msra.mxu0 0.0
      %1331 = vmatprep.mubr.f32.mxu0 0.0
      %1332 = vmatmul.mubr.f32.gmra.mxu0 %v969
      %v1333 = vpop.f32.mrf.mxu0
      %v1334 = vadd.f32 0.0, %v1333
      %v1335 = vpop.f32.mrf.mxu0
      %1336 = vdwg.mxu0
      %1337 = vmatprep.subr.mxu0 0.0
      %1338 = vmatpush1.msra.mxu0 0.0
      %1339 = vmatprep.subr.mxu0 0.0
      %1340 = vmatpush1.msra.mxu0 0.0
      %1341 = vmatprep.subr.mxu0 0.0
      %1342 = vmatpush1.msra.mxu0 0.0
      %1343 = vmatprep.subr.mxu0 0.0
      %1344 = vmatpush1.msra.mxu0 0.0
      %1345 = vmatprep.subr.mxu0 0.0
      %1346 = vmatpush1.msra.mxu0 0.0
      %1347 = vmatprep.subr.mxu0 0.0
      %1348 = vmatpush1.msra.mxu0 0.0
      %1349 = vmatprep.subr.mxu0 0.0
      %1350 = vmatpush1.msra.mxu0 0.0
      %1351 = vmatprep.subr.mxu0 0.0
      %1352 = vmatpush1.msra.mxu0 0.0
      %1353 = vmatprep.subr.mxu0 0.0
      %1354 = vmatpush1.msra.mxu0 0.0
      %1355 = vmatprep.subr.mxu0 0.0
      %1356 = vmatpush1.msra.mxu0 0.0
      %1357 = vmatprep.subr.mxu0 0.0
      %1358 = vmatpush1.msra.mxu0 0.0
      %1359 = vmatprep.subr.mxu0 0.0
      %1360 = vmatpush1.msra.mxu0 0.0
      %1361 = vmatprep.subr.mxu0 0.0
      %1362 = vmatpush1.msra.mxu0 %v1258
      %1363 = vmatprep.subr.mxu0 0.0
      %1364 = vmatpush1.msra.mxu0 %v1257
      %1365 = vmatprep.subr.mxu0 0.0
      %1366 = vmatpush1.msra.mxu0 %v1256
      %1367 = vmatprep.subr.mxu0 0.0
      %1368 = vmatpush1.msra.mxu0 %v1255
      %1369 = vmatprep.subr.mxu0 0.0
      %1370 = vmatpush2.msra.mxu0 0.0
      %1371 = vmatprep.subr.mxu0 0.0
      %1372 = vmatpush2.msra.mxu0 0.0
      %1373 = vmatprep.subr.mxu0 0.0
      %1374 = vmatpush2.msra.mxu0 0.0
      %1375 = vmatprep.subr.mxu0 0.0
      %1376 = vmatpush2.msra.mxu0 0.0
      %1377 = vmatprep.subr.mxu0 0.0
      %1378 = vmatpush2.msra.mxu0 0.0
      %1379 = vmatprep.subr.mxu0 0.0
      %1380 = vmatpush2.msra.mxu0 0.0
      %1381 = vmatprep.subr.mxu0 0.0
      %1382 = vmatpush2.msra.mxu0 0.0
      %1383 = vmatprep.subr.mxu0 0.0
      %1384 = vmatpush2.msra.mxu0 0.0
      %1385 = vmatprep.subr.mxu0 0.0
      %1386 = vmatpush2.msra.mxu0 0.0
      %1387 = vmatprep.subr.mxu0 0.0
      %1388 = vmatpush2.msra.mxu0 0.0
      %1389 = vmatprep.subr.mxu0 0.0
      %1390 = vmatpush2.msra.mxu0 0.0
      %1391 = vmatprep.subr.mxu0 0.0
      %1392 = vmatpush2.msra.mxu0 0.0
      %1393 = vmatprep.subr.mxu0 0.0
      %1394 = vmatpush2.msra.mxu0 0.0
      %1395 = vmatprep.subr.mxu0 0.0
      %1396 = vmatpush2.msra.mxu0 0.0
      %1397 = vmatprep.subr.mxu0 0.0
      %1398 = vmatpush2.msra.mxu0 0.0
      %1399 = vmatprep.subr.mxu0 0.0
      %1400 = vmatpush2.msra.mxu0 0.0
      %1401 = vmatprep.mubr.f32.mxu0 0.0
      %1402 = vmatmul.mubr.f32.gmra.mxu0 %v969
      %v1403 = vpop.f32.mrf.mxu0
      %v1404 = vadd.f32 0.0, %v1403
      %v1405 = vpop.f32.mrf.mxu0
      %1406 = vdwg.mxu0
      %1407 = vmatprep.subr.mxu0 0.0
      %1408 = vmatpush1.msra.mxu0 0.0
      %1409 = vmatprep.subr.mxu0 0.0
      %1410 = vmatpush1.msra.mxu0 0.0
      %1411 = vmatprep.subr.mxu0 0.0
      %1412 = vmatpush1.msra.mxu0 0.0
      %1413 = vmatprep.subr.mxu0 0.0
      %1414 = vmatpush1.msra.mxu0 0.0
      %1415 = vmatprep.subr.mxu0 0.0
      %1416 = vmatpush1.msra.mxu0 0.0
      %1417 = vmatprep.subr.mxu0 0.0
      %1418 = vmatpush1.msra.mxu0 0.0
      %1419 = vmatprep.subr.mxu0 0.0
      %1420 = vmatpush1.msra.mxu0 0.0
      %1421 = vmatprep.subr.mxu0 0.0
      %1422 = vmatpush1.msra.mxu0 0.0
      %1423 = vmatprep.subr.mxu0 0.0
      %1424 = vmatpush1.msra.mxu0 0.0
      %1425 = vmatprep.subr.mxu0 0.0
      %1426 = vmatpush1.msra.mxu0 0.0
      %1427 = vmatprep.subr.mxu0 0.0
      %1428 = vmatpush1.msra.mxu0 0.0
      %1429 = vmatprep.subr.mxu0 0.0
      %1430 = vmatpush1.msra.mxu0 0.0
      %1431 = vmatprep.subr.mxu0 0.0
      %1432 = vmatpush1.msra.mxu0 %v1262
      %1433 = vmatprep.subr.mxu0 0.0
      %1434 = vmatpush1.msra.mxu0 %v1261
      %1435 = vmatprep.subr.mxu0 0.0
      %1436 = vmatpush1.msra.mxu0 %v1260
      %1437 = vmatprep.subr.mxu0 0.0
      %1438 = vmatpush1.msra.mxu0 %v1259
      %1439 = vmatprep.subr.mxu0 0.0
      %1440 = vmatpush2.msra.mxu0 0.0
      %1441 = vmatprep.subr.mxu0 0.0
      %1442 = vmatpush2.msra.mxu0 0.0
      %1443 = vmatprep.subr.mxu0 0.0
      %1444 = vmatpush2.msra.mxu0 0.0
      %1445 = vmatprep.subr.mxu0 0.0
      %1446 = vmatpush2.msra.mxu0 0.0
      %1447 = vmatprep.subr.mxu0 0.0
      %1448 = vmatpush2.msra.mxu0 0.0
      %1449 = vmatprep.subr.mxu0 0.0
      %1450 = vmatpush2.msra.mxu0 0.0
      %1451 = vmatprep.subr.mxu0 0.0
      %1452 = vmatpush2.msra.mxu0 0.0
      %1453 = vmatprep.subr.mxu0 0.0
      %1454 = vmatpush2.msra.mxu0 0.0
      %1455 = vmatprep.subr.mxu0 0.0
      %1456 = vmatpush2.msra.mxu0 0.0
      %1457 = vmatprep.subr.mxu0 0.0
      %1458 = vmatpush2.msra.mxu0 0.0
      %1459 = vmatprep.subr.mxu0 0.0
      %1460 = vmatpush2.msra.mxu0 0.0
      %1461 = vmatprep.subr.mxu0 0.0
      %1462 = vmatpush2.msra.mxu0 0.0
      %1463 = vmatprep.subr.mxu0 0.0
      %1464 = vmatpush2.msra.mxu0 0.0
      %1465 = vmatprep.subr.mxu0 0.0
      %1466 = vmatpush2.msra.mxu0 0.0
      %1467 = vmatprep.subr.mxu0 0.0
      %1468 = vmatpush2.msra.mxu0 0.0
      %1469 = vmatprep.subr.mxu0 0.0
      %1470 = vmatpush2.msra.mxu0 0.0
      %1471 = vmatprep.mubr.f32.mxu0 0.0
      %1472 = vmatmul.mubr.f32.gmra.mxu0 %v969
      %v1473 = vpop.f32.mrf.mxu0
      %v1474 = vadd.f32 0.0, %v1473
      %v1475 = vpop.f32.mrf.mxu0
      %1476 = vdwg.mxu0
      %1477 = vmatprep.subr.mxu0 0.0
      %1478 = vmatpush1.msra.mxu0 0.0
      %1479 = vmatprep.subr.mxu0 0.0
      %1480 = vmatpush1.msra.mxu0 0.0
      %1481 = vmatprep.subr.mxu0 0.0
      %1482 = vmatpush1.msra.mxu0 0.0
      %1483 = vmatprep.subr.mxu0 0.0
      %1484 = vmatpush1.msra.mxu0 0.0
      %1485 = vmatprep.subr.mxu0 0.0
      %1486 = vmatpush1.msra.mxu0 0.0
      %1487 = vmatprep.subr.mxu0 0.0
      %1488 = vmatpush1.msra.mxu0 0.0
      %1489 = vmatprep.subr.mxu0 0.0
      %1490 = vmatpush1.msra.mxu0 0.0
      %1491 = vmatprep.subr.mxu0 0.0
      %1492 = vmatpush1.msra.mxu0 0.0
      %1493 = vmatprep.subr.mxu0 0.0
      %1494 = vmatpush1.msra.mxu0 0.0
      %1495 = vmatprep.subr.mxu0 0.0
      %1496 = vmatpush1.msra.mxu0 0.0
      %1497 = vmatprep.subr.mxu0 0.0
      %1498 = vmatpush1.msra.mxu0 0.0
      %1499 = vmatprep.subr.mxu0 0.0
      %1500 = vmatpush1.msra.mxu0 0.0
      %1501 = vmatprep.subr.mxu0 0.0
      %1502 = vmatpush1.msra.mxu0 %v1266
      %1503 = vmatprep.subr.mxu0 0.0
      %1504 = vmatpush1.msra.mxu0 %v1265
      %1505 = vmatprep.subr.mxu0 0.0
      %1506 = vmatpush1.msra.mxu0 %v1264
      %1507 = vmatprep.subr.mxu0 0.0
      %1508 = vmatpush1.msra.mxu0 %v1263
      %1509 = vmatprep.subr.mxu0 0.0
      %1510 = vmatpush2.msra.mxu0 0.0
      %1511 = vmatprep.subr.mxu0 0.0
      %1512 = vmatpush2.msra.mxu0 0.0
      %1513 = vmatprep.subr.mxu0 0.0
      %1514 = vmatpush2.msra.mxu0 0.0
      %1515 = vmatprep.subr.mxu0 0.0
      %1516 = vmatpush2.msra.mxu0 0.0
      %1517 = vmatprep.subr.mxu0 0.0
      %1518 = vmatpush2.msra.mxu0 0.0
      %1519 = vmatprep.subr.mxu0 0.0
      %1520 = vmatpush2.msra.mxu0 0.0
      %1521 = vmatprep.subr.mxu0 0.0
      %1522 = vmatpush2.msra.mxu0 0.0
      %1523 = vmatprep.subr.mxu0 0.0
      %1524 = vmatpush2.msra.mxu0 0.0
      %1525 = vmatprep.subr.mxu0 0.0
      %1526 = vmatpush2.msra.mxu0 0.0
      %1527 = vmatprep.subr.mxu0 0.0
      %1528 = vmatpush2.msra.mxu0 0.0
      %1529 = vmatprep.subr.mxu0 0.0
      %1530 = vmatpush2.msra.mxu0 0.0
      %1531 = vmatprep.subr.mxu0 0.0
      %1532 = vmatpush2.msra.mxu0 0.0
      %1533 = vmatprep.subr.mxu0 0.0
      %1534 = vmatpush2.msra.mxu0 0.0
      %1535 = vmatprep.subr.mxu0 0.0
      %1536 = vmatpush2.msra.mxu0 0.0
      %1537 = vmatprep.subr.mxu0 0.0
      %1538 = vmatpush2.msra.mxu0 0.0
      %1539 = vmatprep.subr.mxu0 0.0
      %1540 = vmatpush2.msra.mxu0 0.0
      %1541 = vmatprep.mubr.f32.mxu0 0.0
      %1542 = vmatmul.mubr.f32.gmra.mxu0 %v969
      %v1543 = vpop.f32.mrf.mxu0
      %v1544 = vadd.f32 0.0, %v1543
      %v1545 = vpop.f32.mrf.mxu0
      %1546 = vdwg.mxu0
      %v1547 = vld [vmem:[%s895] sm:$0xff]
      %v1548 = vld [vmem:[%s895 + $0x8] sm:$0xff]
      %v1549 = vld [vmem:[%s895 + $0x10] sm:$0xff]
      %v1550 = vld [vmem:[%s895 + $0x18] sm:$0xff]
      %v1551 = vld [vmem:[%s895 + $0x20] sm:$0xff]
      %v1552 = vld [vmem:[%s895 + $0x28] sm:$0xff]
      %v1553 = vld [vmem:[%s895 + $0x30] sm:$0xff]
      %v1554 = vld [vmem:[%s895 + $0x38] sm:$0xff]
      %v1555 = vld [vmem:[%s895 + $0x40] sm:$0xff]
      %v1556 = vld [vmem:[%s895 + $0x48] sm:$0xff]
      %v1557 = vld [vmem:[%s895 + $0x50] sm:$0xff]
      %v1558 = vld [vmem:[%s895 + $0x58] sm:$0xff]
      %v1559 = vld [vmem:[%s895 + $0x60] sm:$0xff]
      %v1560 = vld [vmem:[%s895 + $0x68] sm:$0xff]
      %v1561 = vld [vmem:[%s895 + $0x70] sm:$0xff]
      %v1562 = vld [vmem:[%s895 + $0x78] sm:$0xff]
      %1563 = vmatprep.subr.mxu0 0.0
      %1564 = vmatpush1.msra.mxu0 0.0
      %1565 = vmatprep.subr.mxu0 0.0
      %1566 = vmatpush1.msra.mxu0 0.0
      %1567 = vmatprep.subr.mxu0 0.0
      %1568 = vmatpush1.msra.mxu0 0.0
      %1569 = vmatprep.subr.mxu0 0.0
      %1570 = vmatpush1.msra.mxu0 0.0
      %1571 = vmatprep.subr.mxu0 0.0
      %1572 = vmatpush1.msra.mxu0 0.0
      %1573 = vmatprep.subr.mxu0 0.0
      %1574 = vmatpush1.msra.mxu0 0.0
      %1575 = vmatprep.subr.mxu0 0.0
      %1576 = vmatpush1.msra.mxu0 0.0
      %1577 = vmatprep.subr.mxu0 0.0
      %1578 = vmatpush1.msra.mxu0 0.0
      %1579 = vmatprep.subr.mxu0 0.0
      %1580 = vmatpush1.msra.mxu0 0.0
      %1581 = vmatprep.subr.mxu0 0.0
      %1582 = vmatpush1.msra.mxu0 0.0
      %1583 = vmatprep.subr.mxu0 0.0
      %1584 = vmatpush1.msra.mxu0 0.0
      %1585 = vmatprep.subr.mxu0 0.0
      %1586 = vmatpush1.msra.mxu0 0.0
      %1587 = vmatprep.subr.mxu0 0.0
      %1588 = vmatpush1.msra.mxu0 %v1550
      %1589 = vmatprep.subr.mxu0 0.0
      %1590 = vmatpush1.msra.mxu0 %v1549
      %1591 = vmatprep.subr.mxu0 0.0
      %1592 = vmatpush1.msra.mxu0 %v1548
      %1593 = vmatprep.subr.mxu0 0.0
      %1594 = vmatpush1.msra.mxu0 %v1547
      %1595 = vmatprep.subr.mxu0 0.0
      %1596 = vmatpush2.msra.mxu0 0.0
      %1597 = vmatprep.subr.mxu0 0.0
      %1598 = vmatpush2.msra.mxu0 0.0
      %1599 = vmatprep.subr.mxu0 0.0
      %1600 = vmatpush2.msra.mxu0 0.0
      %1601 = vmatprep.subr.mxu0 0.0
      %1602 = vmatpush2.msra.mxu0 0.0
      %1603 = vmatprep.subr.mxu0 0.0
      %1604 = vmatpush2.msra.mxu0 0.0
      %1605 = vmatprep.subr.mxu0 0.0
      %1606 = vmatpush2.msra.mxu0 0.0
      %1607 = vmatprep.subr.mxu0 0.0
      %1608 = vmatpush2.msra.mxu0 0.0
      %1609 = vmatprep.subr.mxu0 0.0
      %1610 = vmatpush2.msra.mxu0 0.0
      %1611 = vmatprep.subr.mxu0 0.0
      %1612 = vmatpush2.msra.mxu0 0.0
      %1613 = vmatprep.subr.mxu0 0.0
      %1614 = vmatpush2.msra.mxu0 0.0
      %1615 = vmatprep.subr.mxu0 0.0
      %1616 = vmatpush2.msra.mxu0 0.0
      %1617 = vmatprep.subr.mxu0 0.0
      %1618 = vmatpush2.msra.mxu0 0.0
      %1619 = vmatprep.subr.mxu0 0.0
      %1620 = vmatpush2.msra.mxu0 0.0
      %1621 = vmatprep.subr.mxu0 0.0
      %1622 = vmatpush2.msra.mxu0 0.0
      %1623 = vmatprep.subr.mxu0 0.0
      %1624 = vmatpush2.msra.mxu0 0.0
      %1625 = vmatprep.subr.mxu0 0.0
      %1626 = vmatpush2.msra.mxu0 0.0
      %1627 = vmatprep.mubr.f32.mxu0 0.0
      %1628 = vmatmul.mubr.f32.gmra.mxu0 %v969
      %v1629 = vpop.f32.mrf.mxu0
      %v1630 = vadd.f32 0.0, %v1629
      %v1631 = vpop.f32.mrf.mxu0
      %1632 = vdwg.mxu0
      %1633 = vmatprep.subr.mxu0 0.0
      %1634 = vmatpush1.msra.mxu0 0.0
      %1635 = vmatprep.subr.mxu0 0.0
      %1636 = vmatpush1.msra.mxu0 0.0
      %1637 = vmatprep.subr.mxu0 0.0
      %1638 = vmatpush1.msra.mxu0 0.0
      %1639 = vmatprep.subr.mxu0 0.0
      %1640 = vmatpush1.msra.mxu0 0.0
      %1641 = vmatprep.subr.mxu0 0.0
      %1642 = vmatpush1.msra.mxu0 0.0
      %1643 = vmatprep.subr.mxu0 0.0
      %1644 = vmatpush1.msra.mxu0 0.0
      %1645 = vmatprep.subr.mxu0 0.0
      %1646 = vmatpush1.msra.mxu0 0.0
      %1647 = vmatprep.subr.mxu0 0.0
      %1648 = vmatpush1.msra.mxu0 0.0
      %1649 = vmatprep.subr.mxu0 0.0
      %1650 = vmatpush1.msra.mxu0 0.0
      %1651 = vmatprep.subr.mxu0 0.0
      %1652 = vmatpush1.msra.mxu0 0.0
      %1653 = vmatprep.subr.mxu0 0.0
      %1654 = vmatpush1.msra.mxu0 0.0
      %1655 = vmatprep.subr.mxu0 0.0
      %1656 = vmatpush1.msra.mxu0 0.0
      %1657 = vmatprep.subr.mxu0 0.0
      %1658 = vmatpush1.msra.mxu0 %v1554
      %1659 = vmatprep.subr.mxu0 0.0
      %1660 = vmatpush1.msra.mxu0 %v1553
      %1661 = vmatprep.subr.mxu0 0.0
      %1662 = vmatpush1.msra.mxu0 %v1552
      %1663 = vmatprep.subr.mxu0 0.0
      %1664 = vmatpush1.msra.mxu0 %v1551
      %1665 = vmatprep.subr.mxu0 0.0
      %1666 = vmatpush2.msra.mxu0 0.0
      %1667 = vmatprep.subr.mxu0 0.0
      %1668 = vmatpush2.msra.mxu0 0.0
      %1669 = vmatprep.subr.mxu0 0.0
      %1670 = vmatpush2.msra.mxu0 0.0
      %1671 = vmatprep.subr.mxu0 0.0
      %1672 = vmatpush2.msra.mxu0 0.0
      %1673 = vmatprep.subr.mxu0 0.0
      %1674 = vmatpush2.msra.mxu0 0.0
      %1675 = vmatprep.subr.mxu0 0.0
      %1676 = vmatpush2.msra.mxu0 0.0
      %1677 = vmatprep.subr.mxu0 0.0
      %1678 = vmatpush2.msra.mxu0 0.0
      %1679 = vmatprep.subr.mxu0 0.0
      %1680 = vmatpush2.msra.mxu0 0.0
      %1681 = vmatprep.subr.mxu0 0.0
      %1682 = vmatpush2.msra.mxu0 0.0
      %1683 = vmatprep.subr.mxu0 0.0
      %1684 = vmatpush2.msra.mxu0 0.0
      %1685 = vmatprep.subr.mxu0 0.0
      %1686 = vmatpush2.msra.mxu0 0.0
      %1687 = vmatprep.subr.mxu0 0.0
      %1688 = vmatpush2.msra.mxu0 0.0
      %1689 = vmatprep.subr.mxu0 0.0
      %1690 = vmatpush2.msra.mxu0 0.0
      %1691 = vmatprep.subr.mxu0 0.0
      %1692 = vmatpush2.msra.mxu0 0.0
      %1693 = vmatprep.subr.mxu0 0.0
      %1694 = vmatpush2.msra.mxu0 0.0
      %1695 = vmatprep.subr.mxu0 0.0
      %1696 = vmatpush2.msra.mxu0 0.0
      %1697 = vmatprep.mubr.f32.mxu0 0.0
      %1698 = vmatmul.mubr.f32.gmra.mxu0 %v969
      %v1699 = vpop.f32.mrf.mxu0
      %v1700 = vadd.f32 0.0, %v1699
      %v1701 = vpop.f32.mrf.mxu0
      %1702 = vdwg.mxu0
      %1703 = vmatprep.subr.mxu0 0.0
      %1704 = vmatpush1.msra.mxu0 0.0
      %1705 = vmatprep.subr.mxu0 0.0
      %1706 = vmatpush1.msra.mxu0 0.0
      %1707 = vmatprep.subr.mxu0 0.0
      %1708 = vmatpush1.msra.mxu0 0.0
      %1709 = vmatprep.subr.mxu0 0.0
      %1710 = vmatpush1.msra.mxu0 0.0
      %1711 = vmatprep.subr.mxu0 0.0
      %1712 = vmatpush1.msra.mxu0 0.0
      %1713 = vmatprep.subr.mxu0 0.0
      %1714 = vmatpush1.msra.mxu0 0.0
      %1715 = vmatprep.subr.mxu0 0.0
      %1716 = vmatpush1.msra.mxu0 0.0
      %1717 = vmatprep.subr.mxu0 0.0
      %1718 = vmatpush1.msra.mxu0 0.0
      %1719 = vmatprep.subr.mxu0 0.0
      %1720 = vmatpush1.msra.mxu0 0.0
      %1721 = vmatprep.subr.mxu0 0.0
      %1722 = vmatpush1.msra.mxu0 0.0
      %1723 = vmatprep.subr.mxu0 0.0
      %1724 = vmatpush1.msra.mxu0 0.0
      %1725 = vmatprep.subr.mxu0 0.0
      %1726 = vmatpush1.msra.mxu0 0.0
      %1727 = vmatprep.subr.mxu0 0.0
      %1728 = vmatpush1.msra.mxu0 %v1558
      %1729 = vmatprep.subr.mxu0 0.0
      %1730 = vmatpush1.msra.mxu0 %v1557
      %1731 = vmatprep.subr.mxu0 0.0
      %1732 = vmatpush1.msra.mxu0 %v1556
      %1733 = vmatprep.subr.mxu0 0.0
      %1734 = vmatpush1.msra.mxu0 %v1555
      %1735 = vmatprep.subr.mxu0 0.0
      %1736 = vmatpush2.msra.mxu0 0.0
      %1737 = vmatprep.subr.mxu0 0.0
      %1738 = vmatpush2.msra.mxu0 0.0
      %1739 = vmatprep.subr.mxu0 0.0
      %1740 = vmatpush2.msra.mxu0 0.0
      %1741 = vmatprep.subr.mxu0 0.0
      %1742 = vmatpush2.msra.mxu0 0.0
      %1743 = vmatprep.subr.mxu0 0.0
      %1744 = vmatpush2.msra.mxu0 0.0
      %1745 = vmatprep.subr.mxu0 0.0
      %1746 = vmatpush2.msra.mxu0 0.0
      %1747 = vmatprep.subr.mxu0 0.0
      %1748 = vmatpush2.msra.mxu0 0.0
      %1749 = vmatprep.subr.mxu0 0.0
      %1750 = vmatpush2.msra.mxu0 0.0
      %1751 = vmatprep.subr.mxu0 0.0
      %1752 = vmatpush2.msra.mxu0 0.0
      %1753 = vmatprep.subr.mxu0 0.0
      %1754 = vmatpush2.msra.mxu0 0.0
      %1755 = vmatprep.subr.mxu0 0.0
      %1756 = vmatpush2.msra.mxu0 0.0
      %1757 = vmatprep.subr.mxu0 0.0
      %1758 = vmatpush2.msra.mxu0 0.0
      %1759 = vmatprep.subr.mxu0 0.0
      %1760 = vmatpush2.msra.mxu0 0.0
      %1761 = vmatprep.subr.mxu0 0.0
      %1762 = vmatpush2.msra.mxu0 0.0
      %1763 = vmatprep.subr.mxu0 0.0
      %1764 = vmatpush2.msra.mxu0 0.0
      %1765 = vmatprep.subr.mxu0 0.0
      %1766 = vmatpush2.msra.mxu0 0.0
      %1767 = vmatprep.mubr.f32.mxu0 0.0
      %1768 = vmatmul.mubr.f32.gmra.mxu0 %v969
      %v1769 = vpop.f32.mrf.mxu0
      %v1770 = vadd.f32 0.0, %v1769
      %v1771 = vpop.f32.mrf.mxu0
      %1772 = vdwg.mxu0
      %1773 = vmatprep.subr.mxu0 0.0
      %1774 = vmatpush1.msra.mxu0 0.0
      %1775 = vmatprep.subr.mxu0 0.0
      %1776 = vmatpush1.msra.mxu0 0.0
      %1777 = vmatprep.subr.mxu0 0.0
      %1778 = vmatpush1.msra.mxu0 0.0
      %1779 = vmatprep.subr.mxu0 0.0
      %1780 = vmatpush1.msra.mxu0 0.0
      %1781 = vmatprep.subr.mxu0 0.0
      %1782 = vmatpush1.msra.mxu0 0.0
      %1783 = vmatprep.subr.mxu0 0.0
      %1784 = vmatpush1.msra.mxu0 0.0
      %1785 = vmatprep.subr.mxu0 0.0
      %1786 = vmatpush1.msra.mxu0 0.0
      %1787 = vmatprep.subr.mxu0 0.0
      %1788 = vmatpush1.msra.mxu0 0.0
      %1789 = vmatprep.subr.mxu0 0.0
      %1790 = vmatpush1.msra.mxu0 0.0
      %1791 = vmatprep.subr.mxu0 0.0
      %1792 = vmatpush1.msra.mxu0 0.0
      %1793 = vmatprep.subr.mxu0 0.0
      %1794 = vmatpush1.msra.mxu0 0.0
      %1795 = vmatprep.subr.mxu0 0.0
      %1796 = vmatpush1.msra.mxu0 0.0
      %1797 = vmatprep.subr.mxu0 0.0
      %1798 = vmatpush1.msra.mxu0 %v1562
      %1799 = vmatprep.subr.mxu0 0.0
      %1800 = vmatpush1.msra.mxu0 %v1561
      %1801 = vmatprep.subr.mxu0 0.0
      %1802 = vmatpush1.msra.mxu0 %v1560
      %1803 = vmatprep.subr.mxu0 0.0
      %1804 = vmatpush1.msra.mxu0 %v1559
      %1805 = vmatprep.subr.mxu0 0.0
      %1806 = vmatpush2.msra.mxu0 0.0
      %1807 = vmatprep.subr.mxu0 0.0
      %1808 = vmatpush2.msra.mxu0 0.0
      %1809 = vmatprep.subr.mxu0 0.0
      %1810 = vmatpush2.msra.mxu0 0.0
      %1811 = vmatprep.subr.mxu0 0.0
      %1812 = vmatpush2.msra.mxu0 0.0
      %1813 = vmatprep.subr.mxu0 0.0
      %1814 = vmatpush2.msra.mxu0 0.0
      %1815 = vmatprep.subr.mxu0 0.0
      %1816 = vmatpush2.msra.mxu0 0.0
      %1817 = vmatprep.subr.mxu0 0.0
      %1818 = vmatpush2.msra.mxu0 0.0
      %1819 = vmatprep.subr.mxu0 0.0
      %1820 = vmatpush2.msra.mxu0 0.0
      %1821 = vmatprep.subr.mxu0 0.0
      %1822 = vmatpush2.msra.mxu0 0.0
      %1823 = vmatprep.subr.mxu0 0.0
      %1824 = vmatpush2.msra.mxu0 0.0
      %1825 = vmatprep.subr.mxu0 0.0
      %1826 = vmatpush2.msra.mxu0 0.0
      %1827 = vmatprep.subr.mxu0 0.0
      %1828 = vmatpush2.msra.mxu0 0.0
      %1829 = vmatprep.subr.mxu0 0.0
      %1830 = vmatpush2.msra.mxu0 0.0
      %1831 = vmatprep.subr.mxu0 0.0
      %1832 = vmatpush2.msra.mxu0 0.0
      %1833 = vmatprep.subr.mxu0 0.0
      %1834 = vmatpush2.msra.mxu0 0.0
      %1835 = vmatprep.subr.mxu0 0.0
      %1836 = vmatpush2.msra.mxu0 0.0
      %1837 = vmatprep.mubr.f32.mxu0 0.0
      %1838 = vmatmul.mubr.f32.gmra.mxu0 %v969
      %v1839 = vpop.f32.mrf.mxu0
      %v1840 = vadd.f32 0.0, %v1839
      %v1841 = vpop.f32.mrf.mxu0
      %1842 = vdwg.mxu0
      %v1843 = vmul.f32 %v1038, 0.35355338
      %v1844 = vmul.f32 %v1108, 0.35355338
      %v1845 = vmul.f32 %v1178, 0.35355338
      %v1846 = vmul.f32 %v1248, 0.35355338
      %vm1847 = vcmask 64512
      %v1849 = vsel %vm1847, %v1843, 0
      %v1852 = vsel %vm1847, %v1334, 0
      %1854 = vmatprep.subr.mxu0 0.0
      %1855 = vmatpush1.xpose.msra.mxu0 0.0
      %1856 = vmatprep.subr.mxu0 0.0
      %1857 = vmatpush1.xpose.msra.mxu0 0.0
      %1858 = vmatprep.subr.mxu0 0.0
      %1859 = vmatpush1.xpose.msra.mxu0 0.0
      %1860 = vmatprep.subr.mxu0 0.0
      %1861 = vmatpush1.xpose.msra.mxu0 0.0
      %1862 = vmatprep.subr.mxu0 0.0
      %1863 = vmatpush1.xpose.msra.mxu0 0.0
      %1864 = vmatprep.subr.mxu0 0.0
      %1865 = vmatpush1.xpose.msra.mxu0 0.0
      %1866 = vmatprep.subr.mxu0 0.0
      %1867 = vmatpush1.xpose.msra.mxu0 0.0
      %1868 = vmatprep.subr.mxu0 0.0
      %1869 = vmatpush1.xpose.msra.mxu0 0.0
      %1870 = vmatprep.subr.mxu0 0.0
      %1871 = vmatpush1.xpose.msra.mxu0 0.0
      %1872 = vmatprep.subr.mxu0 0.0
      %1873 = vmatpush1.xpose.msra.mxu0 0.0
      %1874 = vmatprep.subr.mxu0 0.0
      %1875 = vmatpush1.xpose.msra.mxu0 0.0
      %1876 = vmatprep.subr.mxu0 0.0
      %1877 = vmatpush1.xpose.msra.mxu0 0.0
      %1878 = vmatprep.subr.mxu0 0.0
      %1879 = vmatpush1.xpose.msra.mxu0 0.0
      %1880 = vmatprep.subr.mxu0 0.0
      %1881 = vmatpush1.xpose.msra.mxu0 0.0
      %1882 = vmatprep.subr.mxu0 0.0
      %1883 = vmatpush1.xpose.msra.mxu0 0.0
      %1884 = vmatprep.subr.mxu0 0.0
      %1885 = vmatpush1.xpose.msra.mxu0 %v1852
      %1886 = vmatprep.subr.mxu0 0.0
      %1887 = vmatpush2.xpose.msra.mxu0 0.0
      %1888 = vmatprep.subr.mxu0 0.0
      %1889 = vmatpush2.xpose.msra.mxu0 0.0
      %1890 = vmatprep.subr.mxu0 0.0
      %1891 = vmatpush2.xpose.msra.mxu0 0.0
      %1892 = vmatprep.subr.mxu0 0.0
      %1893 = vmatpush2.xpose.msra.mxu0 0.0
      %1894 = vmatprep.subr.mxu0 0.0
      %1895 = vmatpush2.xpose.msra.mxu0 0.0
      %1896 = vmatprep.subr.mxu0 0.0
      %1897 = vmatpush2.xpose.msra.mxu0 0.0
      %1898 = vmatprep.subr.mxu0 0.0
      %1899 = vmatpush2.xpose.msra.mxu0 0.0
      %1900 = vmatprep.subr.mxu0 0.0
      %1901 = vmatpush2.xpose.msra.mxu0 0.0
      %1902 = vmatprep.subr.mxu0 0.0
      %1903 = vmatpush2.xpose.msra.mxu0 0.0
      %1904 = vmatprep.subr.mxu0 0.0
      %1905 = vmatpush2.xpose.msra.mxu0 0.0
      %1906 = vmatprep.subr.mxu0 0.0
      %1907 = vmatpush2.xpose.msra.mxu0 0.0
      %1908 = vmatprep.subr.mxu0 0.0
      %1909 = vmatpush2.xpose.msra.mxu0 0.0
      %1910 = vmatprep.subr.mxu0 0.0
      %1911 = vmatpush2.xpose.msra.mxu0 0.0
      %1912 = vmatprep.subr.mxu0 0.0
      %1913 = vmatpush2.xpose.msra.mxu0 0.0
      %1914 = vmatprep.subr.mxu0 0.0
      %1915 = vmatpush2.xpose.msra.mxu0 0.0
      %1916 = vmatprep.subr.mxu0 0.0
      %1917 = vmatpush2.xpose.msra.mxu0 0.0
      %1918 = vmatprep.mubr.f32.mxu0 0.0
      %1919 = vmatmul.mubr.f32.gmra.mxu0 %v1849
      %v1920 = vpop.f32.mrf.mxu0
      %v1921 = vadd.f32 0.0, %v1920
      %v1922 = vpop.f32.mrf.mxu0
      %1923 = vdwg.mxu0
      %v1925 = vsel %vm1847, %v1844, 0
      %v1928 = vsel %vm1847, %v1404, 0
      %1930 = vmatprep.subr.mxu0 0.0
      %1931 = vmatpush1.xpose.msra.mxu0 0.0
      %1932 = vmatprep.subr.mxu0 0.0
      %1933 = vmatpush1.xpose.msra.mxu0 0.0
      %1934 = vmatprep.subr.mxu0 0.0
      %1935 = vmatpush1.xpose.msra.mxu0 0.0
      %1936 = vmatprep.subr.mxu0 0.0
      %1937 = vmatpush1.xpose.msra.mxu0 0.0
      %1938 = vmatprep.subr.mxu0 0.0
      %1939 = vmatpush1.xpose.msra.mxu0 0.0
      %1940 = vmatprep.subr.mxu0 0.0
      %1941 = vmatpush1.xpose.msra.mxu0 0.0
      %1942 = vmatprep.subr.mxu0 0.0
      %1943 = vmatpush1.xpose.msra.mxu0 0.0
      %1944 = vmatprep.subr.mxu0 0.0
      %1945 = vmatpush1.xpose.msra.mxu0 0.0
      %1946 = vmatprep.subr.mxu0 0.0
      %1947 = vmatpush1.xpose.msra.mxu0 0.0
      %1948 = vmatprep.subr.mxu0 0.0
      %1949 = vmatpush1.xpose.msra.mxu0 0.0
      %1950 = vmatprep.subr.mxu0 0.0
      %1951 = vmatpush1.xpose.msra.mxu0 0.0
      %1952 = vmatprep.subr.mxu0 0.0
      %1953 = vmatpush1.xpose.msra.mxu0 0.0
      %1954 = vmatprep.subr.mxu0 0.0
      %1955 = vmatpush1.xpose.msra.mxu0 0.0
      %1956 = vmatprep.subr.mxu0 0.0
      %1957 = vmatpush1.xpose.msra.mxu0 0.0
      %1958 = vmatprep.subr.mxu0 0.0
      %1959 = vmatpush1.xpose.msra.mxu0 0.0
      %1960 = vmatprep.subr.mxu0 0.0
      %1961 = vmatpush1.xpose.msra.mxu0 %v1928
      %1962 = vmatprep.subr.mxu0 0.0
      %1963 = vmatpush2.xpose.msra.mxu0 0.0
      %1964 = vmatprep.subr.mxu0 0.0
      %1965 = vmatpush2.xpose.msra.mxu0 0.0
      %1966 = vmatprep.subr.mxu0 0.0
      %1967 = vmatpush2.xpose.msra.mxu0 0.0
      %1968 = vmatprep.subr.mxu0 0.0
      %1969 = vmatpush2.xpose.msra.mxu0 0.0
      %1970 = vmatprep.subr.mxu0 0.0
      %1971 = vmatpush2.xpose.msra.mxu0 0.0
      %1972 = vmatprep.subr.mxu0 0.0
      %1973 = vmatpush2.xpose.msra.mxu0 0.0
      %1974 = vmatprep.subr.mxu0 0.0
      %1975 = vmatpush2.xpose.msra.mxu0 0.0
      %1976 = vmatprep.subr.mxu0 0.0
      %1977 = vmatpush2.xpose.msra.mxu0 0.0
      %1978 = vmatprep.subr.mxu0 0.0
      %1979 = vmatpush2.xpose.msra.mxu0 0.0
      %1980 = vmatprep.subr.mxu0 0.0
      %1981 = vmatpush2.xpose.msra.mxu0 0.0
      %1982 = vmatprep.subr.mxu0 0.0
      %1983 = vmatpush2.xpose.msra.mxu0 0.0
      %1984 = vmatprep.subr.mxu0 0.0
      %1985 = vmatpush2.xpose.msra.mxu0 0.0
      %1986 = vmatprep.subr.mxu0 0.0
      %1987 = vmatpush2.xpose.msra.mxu0 0.0
      %1988 = vmatprep.subr.mxu0 0.0
      %1989 = vmatpush2.xpose.msra.mxu0 0.0
      %1990 = vmatprep.subr.mxu0 0.0
      %1991 = vmatpush2.xpose.msra.mxu0 0.0
      %1992 = vmatprep.subr.mxu0 0.0
      %1993 = vmatpush2.xpose.msra.mxu0 0.0
      %1994 = vmatprep.mubr.f32.mxu0 0.0
      %1995 = vmatmul.mubr.f32.gmra.mxu0 %v1925
      %v1996 = vpop.f32.mrf.mxu0
      %v1997 = vadd.f32 0.0, %v1996
      %v1998 = vpop.f32.mrf.mxu0
      %1999 = vdwg.mxu0
      %v2001 = vsel %vm1847, %v1845, 0
      %v2004 = vsel %vm1847, %v1474, 0
      %2006 = vmatprep.subr.mxu0 0.0
      %2007 = vmatpush1.xpose.msra.mxu0 0.0
      %2008 = vmatprep.subr.mxu0 0.0
      %2009 = vmatpush1.xpose.msra.mxu0 0.0
      %2010 = vmatprep.subr.mxu0 0.0
      %2011 = vmatpush1.xpose.msra.mxu0 0.0
      %2012 = vmatprep.subr.mxu0 0.0
      %2013 = vmatpush1.xpose.msra.mxu0 0.0
      %2014 = vmatprep.subr.mxu0 0.0
      %2015 = vmatpush1.xpose.msra.mxu0 0.0
      %2016 = vmatprep.subr.mxu0 0.0
      %2017 = vmatpush1.xpose.msra.mxu0 0.0
      %2018 = vmatprep.subr.mxu0 0.0
      %2019 = vmatpush1.xpose.msra.mxu0 0.0
      %2020 = vmatprep.subr.mxu0 0.0
      %2021 = vmatpush1.xpose.msra.mxu0 0.0
      %2022 = vmatprep.subr.mxu0 0.0
      %2023 = vmatpush1.xpose.msra.mxu0 0.0
      %2024 = vmatprep.subr.mxu0 0.0
      %2025 = vmatpush1.xpose.msra.mxu0 0.0
      %2026 = vmatprep.subr.mxu0 0.0
      %2027 = vmatpush1.xpose.msra.mxu0 0.0
      %2028 = vmatprep.subr.mxu0 0.0
      %2029 = vmatpush1.xpose.msra.mxu0 0.0
      %2030 = vmatprep.subr.mxu0 0.0
      %2031 = vmatpush1.xpose.msra.mxu0 0.0
      %2032 = vmatprep.subr.mxu0 0.0
      %2033 = vmatpush1.xpose.msra.mxu0 0.0
      %2034 = vmatprep.subr.mxu0 0.0
      %2035 = vmatpush1.xpose.msra.mxu0 0.0
      %2036 = vmatprep.subr.mxu0 0.0
      %2037 = vmatpush1.xpose.msra.mxu0 %v2004
      %2038 = vmatprep.subr.mxu0 0.0
      %2039 = vmatpush2.xpose.msra.mxu0 0.0
      %2040 = vmatprep.subr.mxu0 0.0
      %2041 = vmatpush2.xpose.msra.mxu0 0.0
      %2042 = vmatprep.subr.mxu0 0.0
      %2043 = vmatpush2.xpose.msra.mxu0 0.0
      %2044 = vmatprep.subr.mxu0 0.0
      %2045 = vmatpush2.xpose.msra.mxu0 0.0
      %2046 = vmatprep.subr.mxu0 0.0
      %2047 = vmatpush2.xpose.msra.mxu0 0.0
      %2048 = vmatprep.subr.mxu0 0.0
      %2049 = vmatpush2.xpose.msra.mxu0 0.0
      %2050 = vmatprep.subr.mxu0 0.0
      %2051 = vmatpush2.xpose.msra.mxu0 0.0
      %2052 = vmatprep.subr.mxu0 0.0
      %2053 = vmatpush2.xpose.msra.mxu0 0.0
      %2054 = vmatprep.subr.mxu0 0.0
      %2055 = vmatpush2.xpose.msra.mxu0 0.0
      %2056 = vmatprep.subr.mxu0 0.0
      %2057 = vmatpush2.xpose.msra.mxu0 0.0
      %2058 = vmatprep.subr.mxu0 0.0
      %2059 = vmatpush2.xpose.msra.mxu0 0.0
      %2060 = vmatprep.subr.mxu0 0.0
      %2061 = vmatpush2.xpose.msra.mxu0 0.0
      %2062 = vmatprep.subr.mxu0 0.0
      %2063 = vmatpush2.xpose.msra.mxu0 0.0
      %2064 = vmatprep.subr.mxu0 0.0
      %2065 = vmatpush2.xpose.msra.mxu0 0.0
      %2066 = vmatprep.subr.mxu0 0.0
      %2067 = vmatpush2.xpose.msra.mxu0 0.0
      %2068 = vmatprep.subr.mxu0 0.0
      %2069 = vmatpush2.xpose.msra.mxu0 0.0
      %2070 = vmatprep.mubr.f32.mxu0 0.0
      %2071 = vmatmul.mubr.f32.gmra.mxu0 %v2001
      %v2072 = vpop.f32.mrf.mxu0
      %v2073 = vadd.f32 0.0, %v2072
      %v2074 = vpop.f32.mrf.mxu0
      %2075 = vdwg.mxu0
      %v2077 = vsel %vm1847, %v1846, 0
      %v2080 = vsel %vm1847, %v1544, 0
      %2082 = vmatprep.subr.mxu0 0.0
      %2083 = vmatpush1.xpose.msra.mxu0 0.0
      %2084 = vmatprep.subr.mxu0 0.0
      %2085 = vmatpush1.xpose.msra.mxu0 0.0
      %2086 = vmatprep.subr.mxu0 0.0
      %2087 = vmatpush1.xpose.msra.mxu0 0.0
      %2088 = vmatprep.subr.mxu0 0.0
      %2089 = vmatpush1.xpose.msra.mxu0 0.0
      %2090 = vmatprep.subr.mxu0 0.0
      %2091 = vmatpush1.xpose.msra.mxu0 0.0
      %2092 = vmatprep.subr.mxu0 0.0
      %2093 = vmatpush1.xpose.msra.mxu0 0.0
      %2094 = vmatprep.subr.mxu0 0.0
      %2095 = vmatpush1.xpose.msra.mxu0 0.0
      %2096 = vmatprep.subr.mxu0 0.0
      %2097 = vmatpush1.xpose.msra.mxu0 0.0
      %2098 = vmatprep.subr.mxu0 0.0
      %2099 = vmatpush1.xpose.msra.mxu0 0.0
      %2100 = vmatprep.subr.mxu0 0.0
      %2101 = vmatpush1.xpose.msra.mxu0 0.0
      %2102 = vmatprep.subr.mxu0 0.0
      %2103 = vmatpush1.xpose.msra.mxu0 0.0
      %2104 = vmatprep.subr.mxu0 0.0
      %2105 = vmatpush1.xpose.msra.mxu0 0.0
      %2106 = vmatprep.subr.mxu0 0.0
      %2107 = vmatpush1.xpose.msra.mxu0 0.0
      %2108 = vmatprep.subr.mxu0 0.0
      %2109 = vmatpush1.xpose.msra.mxu0 0.0
      %2110 = vmatprep.subr.mxu0 0.0
      %2111 = vmatpush1.xpose.msra.mxu0 0.0
      %2112 = vmatprep.subr.mxu0 0.0
      %2113 = vmatpush1.xpose.msra.mxu0 %v2080
      %2114 = vmatprep.subr.mxu0 0.0
      %2115 = vmatpush2.xpose.msra.mxu0 0.0
      %2116 = vmatprep.subr.mxu0 0.0
      %2117 = vmatpush2.xpose.msra.mxu0 0.0
      %2118 = vmatprep.subr.mxu0 0.0
      %2119 = vmatpush2.xpose.msra.mxu0 0.0
      %2120 = vmatprep.subr.mxu0 0.0
      %2121 = vmatpush2.xpose.msra.mxu0 0.0
      %2122 = vmatprep.subr.mxu0 0.0
      %2123 = vmatpush2.xpose.msra.mxu0 0.0
      %2124 = vmatprep.subr.mxu0 0.0
      %2125 = vmatpush2.xpose.msra.mxu0 0.0
      %2126 = vmatprep.subr.mxu0 0.0
      %2127 = vmatpush2.xpose.msra.mxu0 0.0
      %2128 = vmatprep.subr.mxu0 0.0
      %2129 = vmatpush2.xpose.msra.mxu0 0.0
      %2130 = vmatprep.subr.mxu0 0.0
      %2131 = vmatpush2.xpose.msra.mxu0 0.0
      %2132 = vmatprep.subr.mxu0 0.0
      %2133 = vmatpush2.xpose.msra.mxu0 0.0
      %2134 = vmatprep.subr.mxu0 0.0
      %2135 = vmatpush2.xpose.msra.mxu0 0.0
      %2136 = vmatprep.subr.mxu0 0.0
      %2137 = vmatpush2.xpose.msra.mxu0 0.0
      %2138 = vmatprep.subr.mxu0 0.0
      %2139 = vmatpush2.xpose.msra.mxu0 0.0
      %2140 = vmatprep.subr.mxu0 0.0
      %2141 = vmatpush2.xpose.msra.mxu0 0.0
      %2142 = vmatprep.subr.mxu0 0.0
      %2143 = vmatpush2.xpose.msra.mxu0 0.0
      %2144 = vmatprep.subr.mxu0 0.0
      %2145 = vmatpush2.xpose.msra.mxu0 0.0
      %2146 = vmatprep.mubr.f32.mxu0 0.0
      %2147 = vmatmul.mubr.f32.gmra.mxu0 %v2077
      %v2148 = vpop.f32.mrf.mxu0
      %v2149 = vadd.f32 0.0, %v2148
      %v2150 = vpop.f32.mrf.mxu0
      %2151 = vdwg.mxu0
      %vm2152 = vcmask 27648
      %v2153 = vsel %vm2152, %v1921, -inf
      %2154 = vmax.xlane.f32.xlu0 %v2153
      %v2155 = vpop.xlane.xlu0 %2154
      %v2156 = vsel %vm2152, %v1997, -inf
      %2157 = vmax.xlane.f32.xlu0 %v2156
      %v2158 = vpop.xlane.xlu0 %2157
      %v2159 = vsel %vm2152, %v2073, -inf
      %2160 = vmax.xlane.f32.xlu0 %v2159
      %v2161 = vpop.xlane.xlu0 %2160
      %v2162 = vsel %vm2152, %v2149, -inf
      %2163 = vmax.xlane.f32.xlu0 %v2162
      %v2164 = vpop.xlane.xlu0 %2163
      %v2165 = vsub.f32 %v1921, %v2155
      %v2166 = vsub.f32 %v1997, %v2158
      %v2167 = vsub.f32 %v2073, %v2161
      %v2168 = vsub.f32 %v2149, %v2164
      %v2169 = vmul.f32 %v2165, 1.442695
      %v2170 = vpow.pop %v2169
      %v2171 = vmul.f32 %v2166, 1.442695
      %v2172 = vpow.pop %v2171
      %v2173 = vmul.f32 %v2167, 1.442695
      %v2174 = vpow.pop %v2173
      %v2175 = vmul.f32 %v2168, 1.442695
      %v2176 = vpow.pop %v2175
      %v2177 = vsel %vm2152, %v2170, 0.0
      %2178 = vadd.xlane.f32.xlu0 %v2177
      %v2179 = vpop.xlane.xlu0 %2178
      %v2180 = vsel %vm2152, %v2172, 0.0
      %2181 = vadd.xlane.f32.xlu0 %v2180
      %v2182 = vpop.xlane.xlu0 %2181
      %v2183 = vsel %vm2152, %v2174, 0.0
      %2184 = vadd.xlane.f32.xlu0 %v2183
      %v2185 = vpop.xlane.xlu0 %2184
      %v2186 = vsel %vm2152, %v2176, 0.0
      %2187 = vadd.xlane.f32.xlu0 %v2186
      %v2188 = vpop.xlane.xlu0 %2187
      %v2189 = vrcp.pop %v2179
      %v2190 = vrcp.pop %v2182
      %v2191 = vrcp.pop %v2185
      %v2192 = vrcp.pop %v2188
      %v2193 = vmul.f32 %v2170, %v2189
      %v2194 = vmul.f32 %v2172, %v2190
      %v2195 = vmul.f32 %v2174, %v2191
      %v2196 = vmul.f32 %v2176, %v2192
      %vm2197 = vcmask 31744
      %v2199 = vsel %vm2197, %v2193, 0
      %vm2201 = vcmask 1043456
      %v2203 = vsel %vm2201, %v1630, 0
      %2205 = vmatprep.subr.mxu0 0.0
      %2206 = vmatpush1.msra.mxu0 0.0
      %2207 = vmatprep.subr.mxu0 0.0
      %2208 = vmatpush1.msra.mxu0 0.0
      %2209 = vmatprep.subr.mxu0 0.0
      %2210 = vmatpush1.msra.mxu0 0.0
      %2211 = vmatprep.subr.mxu0 0.0
      %2212 = vmatpush1.msra.mxu0 0.0
      %2213 = vmatprep.subr.mxu0 0.0
      %2214 = vmatpush1.msra.mxu0 0.0
      %2215 = vmatprep.subr.mxu0 0.0
      %2216 = vmatpush1.msra.mxu0 0.0
      %2217 = vmatprep.subr.mxu0 0.0
      %2218 = vmatpush1.msra.mxu0 0.0
      %2219 = vmatprep.subr.mxu0 0.0
      %2220 = vmatpush1.msra.mxu0 0.0
      %2221 = vmatprep.subr.mxu0 0.0
      %2222 = vmatpush1.msra.mxu0 0.0
      %2223 = vmatprep.subr.mxu0 0.0
      %2224 = vmatpush1.msra.mxu0 0.0
      %2225 = vmatprep.subr.mxu0 0.0
      %2226 = vmatpush1.msra.mxu0 0.0
      %2227 = vmatprep.subr.mxu0 0.0
      %2228 = vmatpush1.msra.mxu0 0.0
      %2229 = vmatprep.subr.mxu0 0.0
      %2230 = vmatpush1.msra.mxu0 0.0
      %2231 = vmatprep.subr.mxu0 0.0
      %2232 = vmatpush1.msra.mxu0 0.0
      %2233 = vmatprep.subr.mxu0 0.0
      %2234 = vmatpush1.msra.mxu0 0.0
      %2235 = vmatprep.subr.mxu0 0.0
      %2236 = vmatpush1.msra.mxu0 %v2203
      %2237 = vmatprep.subr.mxu0 0.0
      %2238 = vmatpush2.msra.mxu0 0.0
      %2239 = vmatprep.subr.mxu0 0.0
      %2240 = vmatpush2.msra.mxu0 0.0
      %2241 = vmatprep.subr.mxu0 0.0
      %2242 = vmatpush2.msra.mxu0 0.0
      %2243 = vmatprep.subr.mxu0 0.0
      %2244 = vmatpush2.msra.mxu0 0.0
      %2245 = vmatprep.subr.mxu0 0.0
      %2246 = vmatpush2.msra.mxu0 0.0
      %2247 = vmatprep.subr.mxu0 0.0
      %2248 = vmatpush2.msra.mxu0 0.0
      %2249 = vmatprep.subr.mxu0 0.0
      %2250 = vmatpush2.msra.mxu0 0.0
      %2251 = vmatprep.subr.mxu0 0.0
      %2252 = vmatpush2.msra.mxu0 0.0
      %2253 = vmatprep.subr.mxu0 0.0
      %2254 = vmatpush2.msra.mxu0 0.0
      %2255 = vmatprep.subr.mxu0 0.0
      %2256 = vmatpush2.msra.mxu0 0.0
      %2257 = vmatprep.subr.mxu0 0.0
      %2258 = vmatpush2.msra.mxu0 0.0
      %2259 = vmatprep.subr.mxu0 0.0
      %2260 = vmatpush2.msra.mxu0 0.0
      %2261 = vmatprep.subr.mxu0 0.0
      %2262 = vmatpush2.msra.mxu0 0.0
      %2263 = vmatprep.subr.mxu0 0.0
      %2264 = vmatpush2.msra.mxu0 0.0
      %2265 = vmatprep.subr.mxu0 0.0
      %2266 = vmatpush2.msra.mxu0 0.0
      %2267 = vmatprep.subr.mxu0 0.0
      %2268 = vmatpush2.msra.mxu0 0.0
      %2269 = vmatprep.mubr.f32.mxu0 0.0
      %2270 = vmatmul.mubr.f32.gmra.mxu0 %v2199
      %v2271 = vpop.f32.mrf.mxu0
      %v2272 = vadd.f32 0.0, %v2271
      %v2273 = vpop.f32.mrf.mxu0
      %2274 = vdwg.mxu0
      %v2276 = vsel %vm2197, %v2194, 0
      %v2279 = vsel %vm2201, %v1700, 0
      %2281 = vmatprep.subr.mxu0 0.0
      %2282 = vmatpush1.msra.mxu0 0.0
      %2283 = vmatprep.subr.mxu0 0.0
      %2284 = vmatpush1.msra.mxu0 0.0
      %2285 = vmatprep.subr.mxu0 0.0
      %2286 = vmatpush1.msra.mxu0 0.0
      %2287 = vmatprep.subr.mxu0 0.0
      %2288 = vmatpush1.msra.mxu0 0.0
      %2289 = vmatprep.subr.mxu0 0.0
      %2290 = vmatpush1.msra.mxu0 0.0
      %2291 = vmatprep.subr.mxu0 0.0
      %2292 = vmatpush1.msra.mxu0 0.0
      %2293 = vmatprep.subr.mxu0 0.0
      %2294 = vmatpush1.msra.mxu0 0.0
      %2295 = vmatprep.subr.mxu0 0.0
      %2296 = vmatpush1.msra.mxu0 0.0
      %2297 = vmatprep.subr.mxu0 0.0
      %2298 = vmatpush1.msra.mxu0 0.0
      %2299 = vmatprep.subr.mxu0 0.0
      %2300 = vmatpush1.msra.mxu0 0.0
      %2301 = vmatprep.subr.mxu0 0.0
      %2302 = vmatpush1.msra.mxu0 0.0
      %2303 = vmatprep.subr.mxu0 0.0
      %2304 = vmatpush1.msra.mxu0 0.0
      %2305 = vmatprep.subr.mxu0 0.0
      %2306 = vmatpush1.msra.mxu0 0.0
      %2307 = vmatprep.subr.mxu0 0.0
      %2308 = vmatpush1.msra.mxu0 0.0
      %2309 = vmatprep.subr.mxu0 0.0
      %2310 = vmatpush1.msra.mxu0 0.0
      %2311 = vmatprep.subr.mxu0 0.0
      %2312 = vmatpush1.msra.mxu0 %v2279
      %2313 = vmatprep.subr.mxu0 0.0
      %2314 = vmatpush2.msra.mxu0 0.0
      %2315 = vmatprep.subr.mxu0 0.0
      %2316 = vmatpush2.msra.mxu0 0.0
      %2317 = vmatprep.subr.mxu0 0.0
      %2318 = vmatpush2.msra.mxu0 0.0
      %2319 = vmatprep.subr.mxu0 0.0
      %2320 = vmatpush2.msra.mxu0 0.0
      %2321 = vmatprep.subr.mxu0 0.0
      %2322 = vmatpush2.msra.mxu0 0.0
      %2323 = vmatprep.subr.mxu0 0.0
      %2324 = vmatpush2.msra.mxu0 0.0
      %2325 = vmatprep.subr.mxu0 0.0
      %2326 = vmatpush2.msra.mxu0 0.0
      %2327 = vmatprep.subr.mxu0 0.0
      %2328 = vmatpush2.msra.mxu0 0.0
      %2329 = vmatprep.subr.mxu0 0.0
      %2330 = vmatpush2.msra.mxu0 0.0
      %2331 = vmatprep.subr.mxu0 0.0
      %2332 = vmatpush2.msra.mxu0 0.0
      %2333 = vmatprep.subr.mxu0 0.0
      %2334 = vmatpush2.msra.mxu0 0.0
      %2335 = vmatprep.subr.mxu0 0.0
      %2336 = vmatpush2.msra.mxu0 0.0
      %2337 = vmatprep.subr.mxu0 0.0
      %2338 = vmatpush2.msra.mxu0 0.0
      %2339 = vmatprep.subr.mxu0 0.0
      %2340 = vmatpush2.msra.mxu0 0.0
      %2341 = vmatprep.subr.mxu0 0.0
      %2342 = vmatpush2.msra.mxu0 0.0
      %2343 = vmatprep.subr.mxu0 0.0
      %2344 = vmatpush2.msra.mxu0 0.0
      %2345 = vmatprep.mubr.f32.mxu0 0.0
      %2346 = vmatmul.mubr.f32.gmra.mxu0 %v2276
      %v2347 = vpop.f32.mrf.mxu0
      %v2348 = vadd.f32 0.0, %v2347
      %v2349 = vpop.f32.mrf.mxu0
      %2350 = vdwg.mxu0
      %v2352 = vsel %vm2197, %v2195, 0
      %v2355 = vsel %vm2201, %v1770, 0
      %2357 = vmatprep.subr.mxu0 0.0
      %2358 = vmatpush1.msra.mxu0 0.0
      %2359 = vmatprep.subr.mxu0 0.0
      %2360 = vmatpush1.msra.mxu0 0.0
      %2361 = vmatprep.subr.mxu0 0.0
      %2362 = vmatpush1.msra.mxu0 0.0
      %2363 = vmatprep.subr.mxu0 0.0
      %2364 = vmatpush1.msra.mxu0 0.0
      %2365 = vmatprep.subr.mxu0 0.0
      %2366 = vmatpush1.msra.mxu0 0.0
      %2367 = vmatprep.subr.mxu0 0.0
      %2368 = vmatpush1.msra.mxu0 0.0
      %2369 = vmatprep.subr.mxu0 0.0
      %2370 = vmatpush1.msra.mxu0 0.0
      %2371 = vmatprep.subr.mxu0 0.0
      %2372 = vmatpush1.msra.mxu0 0.0
      %2373 = vmatprep.subr.mxu0 0.0
      %2374 = vmatpush1.msra.mxu0 0.0
      %2375 = vmatprep.subr.mxu0 0.0
      %2376 = vmatpush1.msra.mxu0 0.0
      %2377 = vmatprep.subr.mxu0 0.0
      %2378 = vmatpush1.msra.mxu0 0.0
      %2379 = vmatprep.subr.mxu0 0.0
      %2380 = vmatpush1.msra.mxu0 0.0
      %2381 = vmatprep.subr.mxu0 0.0
      %2382 = vmatpush1.msra.mxu0 0.0
      %2383 = vmatprep.subr.mxu0 0.0
      %2384 = vmatpush1.msra.mxu0 0.0
      %2385 = vmatprep.subr.mxu0 0.0
      %2386 = vmatpush1.msra.mxu0 0.0
      %2387 = vmatprep.subr.mxu0 0.0
      %2388 = vmatpush1.msra.mxu0 %v2355
      %2389 = vmatprep.subr.mxu0 0.0
      %2390 = vmatpush2.msra.mxu0 0.0
      %2391 = vmatprep.subr.mxu0 0.0
      %2392 = vmatpush2.msra.mxu0 0.0
      %2393 = vmatprep.subr.mxu0 0.0
      %2394 = vmatpush2.msra.mxu0 0.0
      %2395 = vmatprep.subr.mxu0 0.0
      %2396 = vmatpush2.msra.mxu0 0.0
      %2397 = vmatprep.subr.mxu0 0.0
      %2398 = vmatpush2.msra.mxu0 0.0
      %2399 = vmatprep.subr.mxu0 0.0
      %2400 = vmatpush2.msra.mxu0 0.0
      %2401 = vmatprep.subr.mxu0 0.0
      %2402 = vmatpush2.msra.mxu0 0.0
      %2403 = vmatprep.subr.mxu0 0.0
      %2404 = vmatpush2.msra.mxu0 0.0
      %2405 = vmatprep.subr.mxu0 0.0
      %2406 = vmatpush2.msra.mxu0 0.0
      %2407 = vmatprep.subr.mxu0 0.0
      %2408 = vmatpush2.msra.mxu0 0.0
      %2409 = vmatprep.subr.mxu0 0.0
      %2410 = vmatpush2.msra.mxu0 0.0
      %2411 = vmatprep.subr.mxu0 0.0
      %2412 = vmatpush2.msra.mxu0 0.0
      %2413 = vmatprep.subr.mxu0 0.0
      %2414 = vmatpush2.msra.mxu0 0.0
      %2415 = vmatprep.subr.mxu0 0.0
      %2416 = vmatpush2.msra.mxu0 0.0
      %2417 = vmatprep.subr.mxu0 0.0
      %2418 = vmatpush2.msra.mxu0 0.0
      %2419 = vmatprep.subr.mxu0 0.0
      %2420 = vmatpush2.msra.mxu0 0.0
      %2421 = vmatprep.mubr.f32.mxu0 0.0
      %2422 = vmatmul.mubr.f32.gmra.mxu0 %v2352
      %v2423 = vpop.f32.mrf.mxu0
      %v2424 = vadd.f32 0.0, %v2423
      %v2425 = vpop.f32.mrf.mxu0
      %2426 = vdwg.mxu0
      %v2428 = vsel %vm2197, %v2196, 0
      %v2431 = vsel %vm2201, %v1840, 0
      %2433 = vmatprep.subr.mxu0 0.0
      %2434 = vmatpush1.msra.mxu0 0.0
      %2435 = vmatprep.subr.mxu0 0.0
      %2436 = vmatpush1.msra.mxu0 0.0
      %2437 = vmatprep.subr.mxu0 0.0
      %2438 = vmatpush1.msra.mxu0 0.0
      %2439 = vmatprep.subr.mxu0 0.0
      %2440 = vmatpush1.msra.mxu0 0.0
      %2441 = vmatprep.subr.mxu0 0.0
      %2442 = vmatpush1.msra.mxu0 0.0
      %2443 = vmatprep.subr.mxu0 0.0
      %2444 = vmatpush1.msra.mxu0 0.0
      %2445 = vmatprep.subr.mxu0 0.0
      %2446 = vmatpush1.msra.mxu0 0.0
      %2447 = vmatprep.subr.mxu0 0.0
      %2448 = vmatpush1.msra.mxu0 0.0
      %2449 = vmatprep.subr.mxu0 0.0
      %2450 = vmatpush1.msra.mxu0 0.0
      %2451 = vmatprep.subr.mxu0 0.0
      %2452 = vmatpush1.msra.mxu0 0.0
      %2453 = vmatprep.subr.mxu0 0.0
      %2454 = vmatpush1.msra.mxu0 0.0
      %2455 = vmatprep.subr.mxu0 0.0
      %2456 = vmatpush1.msra.mxu0 0.0
      %2457 = vmatprep.subr.mxu0 0.0
      %2458 = vmatpush1.msra.mxu0 0.0
      %2459 = vmatprep.subr.mxu0 0.0
      %2460 = vmatpush1.msra.mxu0 0.0
      %2461 = vmatprep.subr.mxu0 0.0
      %2462 = vmatpush1.msra.mxu0 0.0
      %2463 = vmatprep.subr.mxu0 0.0
      %2464 = vmatpush1.msra.mxu0 %v2431
      %2465 = vmatprep.subr.mxu0 0.0
      %2466 = vmatpush2.msra.mxu0 0.0
      %2467 = vmatprep.subr.mxu0 0.0
      %2468 = vmatpush2.msra.mxu0 0.0
      %2469 = vmatprep.subr.mxu0 0.0
      %2470 = vmatpush2.msra.mxu0 0.0
      %2471 = vmatprep.subr.mxu0 0.0
      %2472 = vmatpush2.msra.mxu0 0.0
      %2473 = vmatprep.subr.mxu0 0.0
      %2474 = vmatpush2.msra.mxu0 0.0
      %2475 = vmatprep.subr.mxu0 0.0
      %2476 = vmatpush2.msra.mxu0 0.0
      %2477 = vmatprep.subr.mxu0 0.0
      %2478 = vmatpush2.msra.mxu0 0.0
      %2479 = vmatprep.subr.mxu0 0.0
      %2480 = vmatpush2.msra.mxu0 0.0
      %2481 = vmatprep.subr.mxu0 0.0
      %2482 = vmatpush2.msra.mxu0 0.0
      %2483 = vmatprep.subr.mxu0 0.0
      %2484 = vmatpush2.msra.mxu0 0.0
      %2485 = vmatprep.subr.mxu0 0.0
      %2486 = vmatpush2.msra.mxu0 0.0
      %2487 = vmatprep.subr.mxu0 0.0
      %2488 = vmatpush2.msra.mxu0 0.0
      %2489 = vmatprep.subr.mxu0 0.0
      %2490 = vmatpush2.msra.mxu0 0.0
      %2491 = vmatprep.subr.mxu0 0.0
      %2492 = vmatpush2.msra.mxu0 0.0
      %2493 = vmatprep.subr.mxu0 0.0
      %2494 = vmatpush2.msra.mxu0 0.0
      %2495 = vmatprep.subr.mxu0 0.0
      %2496 = vmatpush2.msra.mxu0 0.0
      %2497 = vmatprep.mubr.f32.mxu0 0.0
      %2498 = vmatmul.mubr.f32.gmra.mxu0 %v2428
      %v2499 = vpop.f32.mrf.mxu0
      %v2500 = vadd.f32 0.0, %v2499
      %v2501 = vpop.f32.mrf.mxu0
      %2502 = vdwg.mxu0
      %v2503 = vld [vmem:[%s906] sm:$0xff]
      %v2504 = vld [vmem:[%s906 + $0x8] sm:$0xff]
      %v2505 = vld [vmem:[%s906 + $0x10] sm:$0xff]
      %v2506 = vld [vmem:[%s906 + $0x18] sm:$0xff]
      %v2508 = vsel %vm1847, %v2272, 0
      %2510 = vmatprep.subr.mxu0 0.0
      %2511 = vmatpush1.msra.mxu0 0.0
      %2512 = vmatprep.subr.mxu0 0.0
      %2513 = vmatpush1.msra.mxu0 0.0
      %2514 = vmatprep.subr.mxu0 0.0
      %2515 = vmatpush1.msra.mxu0 0.0
      %2516 = vmatprep.subr.mxu0 0.0
      %2517 = vmatpush1.msra.mxu0 0.0
      %2518 = vmatprep.subr.mxu0 0.0
      %2519 = vmatpush1.msra.mxu0 0.0
      %2520 = vmatprep.subr.mxu0 0.0
      %2521 = vmatpush1.msra.mxu0 0.0
      %2522 = vmatprep.subr.mxu0 0.0
      %2523 = vmatpush1.msra.mxu0 0.0
      %2524 = vmatprep.subr.mxu0 0.0
      %2525 = vmatpush1.msra.mxu0 0.0
      %2526 = vmatprep.subr.mxu0 0.0
      %2527 = vmatpush1.msra.mxu0 0.0
      %2528 = vmatprep.subr.mxu0 0.0
      %2529 = vmatpush1.msra.mxu0 0.0
      %2530 = vmatprep.subr.mxu0 0.0
      %2531 = vmatpush1.msra.mxu0 0.0
      %2532 = vmatprep.subr.mxu0 0.0
      %2533 = vmatpush1.msra.mxu0 0.0
      %2534 = vmatprep.subr.mxu0 0.0
      %2535 = vmatpush1.msra.mxu0 0.0
      %2536 = vmatprep.subr.mxu0 0.0
      %2537 = vmatpush1.msra.mxu0 0.0
      %2538 = vmatprep.subr.mxu0 0.0
      %2539 = vmatpush1.msra.mxu0 0.0
      %2540 = vmatprep.subr.mxu0 0.0
      %2541 = vmatpush1.msra.mxu0 %v2503
      %2542 = vmatprep.subr.mxu0 0.0
      %2543 = vmatpush2.msra.mxu0 0.0
      %2544 = vmatprep.subr.mxu0 0.0
      %2545 = vmatpush2.msra.mxu0 0.0
      %2546 = vmatprep.subr.mxu0 0.0
      %2547 = vmatpush2.msra.mxu0 0.0
      %2548 = vmatprep.subr.mxu0 0.0
      %2549 = vmatpush2.msra.mxu0 0.0
      %2550 = vmatprep.subr.mxu0 0.0
      %2551 = vmatpush2.msra.mxu0 0.0
      %2552 = vmatprep.subr.mxu0 0.0
      %2553 = vmatpush2.msra.mxu0 0.0
      %2554 = vmatprep.subr.mxu0 0.0
      %2555 = vmatpush2.msra.mxu0 0.0
      %2556 = vmatprep.subr.mxu0 0.0
      %2557 = vmatpush2.msra.mxu0 0.0
      %2558 = vmatprep.subr.mxu0 0.0
      %2559 = vmatpush2.msra.mxu0 0.0
      %2560 = vmatprep.subr.mxu0 0.0
      %2561 = vmatpush2.msra.mxu0 0.0
      %2562 = vmatprep.subr.mxu0 0.0
      %2563 = vmatpush2.msra.mxu0 0.0
      %2564 = vmatprep.subr.mxu0 0.0
      %2565 = vmatpush2.msra.mxu0 0.0
      %2566 = vmatprep.subr.mxu0 0.0
      %2567 = vmatpush2.msra.mxu0 0.0
      %2568 = vmatprep.subr.mxu0 0.0
      %2569 = vmatpush2.msra.mxu0 0.0
      %2570 = vmatprep.subr.mxu0 0.0
      %2571 = vmatpush2.msra.mxu0 0.0
      %2572 = vmatprep.subr.mxu0 0.0
      %2573 = vmatpush2.msra.mxu0 0.0
      %2574 = vmatprep.mubr.f32.mxu0 0.0
      %2575 = vmatmul.mubr.f32.gmra.mxu0 %v2508
      %v2576 = vpop.f32.mrf.mxu0
      %v2577 = vadd.f32 0.0, %v2576
      %v2578 = vpop.f32.mrf.mxu0
      %2579 = vdwg.mxu0
      %v2581 = vsel %vm1847, %v2348, 0
      %2583 = vmatprep.subr.mxu0 0.0
      %2584 = vmatpush1.msra.mxu0 0.0
      %2585 = vmatprep.subr.mxu0 0.0
      %2586 = vmatpush1.msra.mxu0 0.0
      %2587 = vmatprep.subr.mxu0 0.0
      %2588 = vmatpush1.msra.mxu0 0.0
      %2589 = vmatprep.subr.mxu0 0.0
      %2590 = vmatpush1.msra.mxu0 0.0
      %2591 = vmatprep.subr.mxu0 0.0
      %2592 = vmatpush1.msra.mxu0 0.0
      %2593 = vmatprep.subr.mxu0 0.0
      %2594 = vmatpush1.msra.mxu0 0.0
      %2595 = vmatprep.subr.mxu0 0.0
      %2596 = vmatpush1.msra.mxu0 0.0
      %2597 = vmatprep.subr.mxu0 0.0
      %2598 = vmatpush1.msra.mxu0 0.0
      %2599 = vmatprep.subr.mxu0 0.0
      %2600 = vmatpush1.msra.mxu0 0.0
      %2601 = vmatprep.subr.mxu0 0.0
      %2602 = vmatpush1.msra.mxu0 0.0
      %2603 = vmatprep.subr.mxu0 0.0
      %2604 = vmatpush1.msra.mxu0 0.0
      %2605 = vmatprep.subr.mxu0 0.0
      %2606 = vmatpush1.msra.mxu0 0.0
      %2607 = vmatprep.subr.mxu0 0.0
      %2608 = vmatpush1.msra.mxu0 0.0
      %2609 = vmatprep.subr.mxu0 0.0
      %2610 = vmatpush1.msra.mxu0 0.0
      %2611 = vmatprep.subr.mxu0 0.0
      %2612 = vmatpush1.msra.mxu0 0.0
      %2613 = vmatprep.subr.mxu0 0.0
      %2614 = vmatpush1.msra.mxu0 %v2504
      %2615 = vmatprep.subr.mxu0 0.0
      %2616 = vmatpush2.msra.mxu0 0.0
      %2617 = vmatprep.subr.mxu0 0.0
      %2618 = vmatpush2.msra.mxu0 0.0
      %2619 = vmatprep.subr.mxu0 0.0
      %2620 = vmatpush2.msra.mxu0 0.0
      %2621 = vmatprep.subr.mxu0 0.0
      %2622 = vmatpush2.msra.mxu0 0.0
      %2623 = vmatprep.subr.mxu0 0.0
      %2624 = vmatpush2.msra.mxu0 0.0
      %2625 = vmatprep.subr.mxu0 0.0
      %2626 = vmatpush2.msra.mxu0 0.0
      %2627 = vmatprep.subr.mxu0 0.0
      %2628 = vmatpush2.msra.mxu0 0.0
      %2629 = vmatprep.subr.mxu0 0.0
      %2630 = vmatpush2.msra.mxu0 0.0
      %2631 = vmatprep.subr.mxu0 0.0
      %2632 = vmatpush2.msra.mxu0 0.0
      %2633 = vmatprep.subr.mxu0 0.0
      %2634 = vmatpush2.msra.mxu0 0.0
      %2635 = vmatprep.subr.mxu0 0.0
      %2636 = vmatpush2.msra.mxu0 0.0
      %2637 = vmatprep.subr.mxu0 0.0
      %2638 = vmatpush2.msra.mxu0 0.0
      %2639 = vmatprep.subr.mxu0 0.0
      %2640 = vmatpush2.msra.mxu0 0.0
      %2641 = vmatprep.subr.mxu0 0.0
      %2642 = vmatpush2.msra.mxu0 0.0
      %2643 = vmatprep.subr.mxu0 0.0
      %2644 = vmatpush2.msra.mxu0 0.0
      %2645 = vmatprep.subr.mxu0 0.0
      %2646 = vmatpush2.msra.mxu0 0.0
      %2647 = vmatprep.mubr.f32.mxu0 0.0
      %2648 = vmatmul.mubr.f32.gmra.mxu0 %v2581
      %v2649 = vpop.f32.mrf.mxu0
      %v2650 = vadd.f32 0.0, %v2649
      %v2651 = vpop.f32.mrf.mxu0
      %2652 = vdwg.mxu0
      %v2654 = vsel %vm1847, %v2424, 0
      %2656 = vmatprep.subr.mxu0 0.0
      %2657 = vmatpush1.msra.mxu0 0.0
      %2658 = vmatprep.subr.mxu0 0.0
      %2659 = vmatpush1.msra.mxu0 0.0
      %2660 = vmatprep.subr.mxu0 0.0
      %2661 = vmatpush1.msra.mxu0 0.0
      %2662 = vmatprep.subr.mxu0 0.0
      %2663 = vmatpush1.msra.mxu0 0.0
      %2664 = vmatprep.subr.mxu0 0.0
      %2665 = vmatpush1.msra.mxu0 0.0
      %2666 = vmatprep.subr.mxu0 0.0
      %2667 = vmatpush1.msra.mxu0 0.0
      %2668 = vmatprep.subr.mxu0 0.0
      %2669 = vmatpush1.msra.mxu0 0.0
      %2670 = vmatprep.subr.mxu0 0.0
      %2671 = vmatpush1.msra.mxu0 0.0
      %2672 = vmatprep.subr.mxu0 0.0
      %2673 = vmatpush1.msra.mxu0 0.0
      %2674 = vmatprep.subr.mxu0 0.0
      %2675 = vmatpush1.msra.mxu0 0.0
      %2676 = vmatprep.subr.mxu0 0.0
      %2677 = vmatpush1.msra.mxu0 0.0
      %2678 = vmatprep.subr.mxu0 0.0
      %2679 = vmatpush1.msra.mxu0 0.0
      %2680 = vmatprep.subr.mxu0 0.0
      %2681 = vmatpush1.msra.mxu0 0.0
      %2682 = vmatprep.subr.mxu0 0.0
      %2683 = vmatpush1.msra.mxu0 0.0
      %2684 = vmatprep.subr.mxu0 0.0
      %2685 = vmatpush1.msra.mxu0 0.0
      %2686 = vmatprep.subr.mxu0 0.0
      %2687 = vmatpush1.msra.mxu0 %v2505
      %2688 = vmatprep.subr.mxu0 0.0
      %2689 = vmatpush2.msra.mxu0 0.0
      %2690 = vmatprep.subr.mxu0 0.0
      %2691 = vmatpush2.msra.mxu0 0.0
      %2692 = vmatprep.subr.mxu0 0.0
      %2693 = vmatpush2.msra.mxu0 0.0
      %2694 = vmatprep.subr.mxu0 0.0
      %2695 = vmatpush2.msra.mxu0 0.0
      %2696 = vmatprep.subr.mxu0 0.0
      %2697 = vmatpush2.msra.mxu0 0.0
      %2698 = vmatprep.subr.mxu0 0.0
      %2699 = vmatpush2.msra.mxu0 0.0
      %2700 = vmatprep.subr.mxu0 0.0
      %2701 = vmatpush2.msra.mxu0 0.0
      %2702 = vmatprep.subr.mxu0 0.0
      %2703 = vmatpush2.msra.mxu0 0.0
      %2704 = vmatprep.subr.mxu0 0.0
      %2705 = vmatpush2.msra.mxu0 0.0
      %2706 = vmatprep.subr.mxu0 0.0
      %2707 = vmatpush2.msra.mxu0 0.0
      %2708 = vmatprep.subr.mxu0 0.0
      %2709 = vmatpush2.msra.mxu0 0.0
      %2710 = vmatprep.subr.mxu0 0.0
      %2711 = vmatpush2.msra.mxu0 0.0
      %2712 = vmatprep.subr.mxu0 0.0
      %2713 = vmatpush2.msra.mxu0 0.0
      %2714 = vmatprep.subr.mxu0 0.0
      %2715 = vmatpush2.msra.mxu0 0.0
      %2716 = vmatprep.subr.mxu0 0.0
      %2717 = vmatpush2.msra.mxu0 0.0
      %2718 = vmatprep.subr.mxu0 0.0
      %2719 = vmatpush2.msra.mxu0 0.0
      %2720 = vmatprep.mubr.f32.mxu0 0.0
      %2721 = vmatmul.mubr.f32.gmra.mxu0 %v2654
      %v2722 = vpop.f32.mrf.mxu0
      %v2723 = vadd.f32 0.0, %v2722
      %v2724 = vpop.f32.mrf.mxu0
      %2725 = vdwg.mxu0
      %v2727 = vsel %vm1847, %v2500, 0
      %2729 = vmatprep.subr.mxu0 0.0
      %2730 = vmatpush1.msra.mxu0 0.0
      %2731 = vmatprep.subr.mxu0 0.0
      %2732 = vmatpush1.msra.mxu0 0.0
      %2733 = vmatprep.subr.mxu0 0.0
      %2734 = vmatpush1.msra.mxu0 0.0
      %2735 = vmatprep.subr.mxu0 0.0
      %2736 = vmatpush1.msra.mxu0 0.0
      %2737 = vmatprep.subr.mxu0 0.0
      %2738 = vmatpush1.msra.mxu0 0.0
      %2739 = vmatprep.subr.mxu0 0.0
      %2740 = vmatpush1.msra.mxu0 0.0
      %2741 = vmatprep.subr.mxu0 0.0
      %2742 = vmatpush1.msra.mxu0 0.0
      %2743 = vmatprep.subr.mxu0 0.0
      %2744 = vmatpush1.msra.mxu0 0.0
      %2745 = vmatprep.subr.mxu0 0.0
      %2746 = vmatpush1.msra.mxu0 0.0
      %2747 = vmatprep.subr.mxu0 0.0
      %2748 = vmatpush1.msra.mxu0 0.0
      %2749 = vmatprep.subr.mxu0 0.0
      %2750 = vmatpush1.msra.mxu0 0.0
      %2751 = vmatprep.subr.mxu0 0.0
      %2752 = vmatpush1.msra.mxu0 0.0
      %2753 = vmatprep.subr.mxu0 0.0
      %2754 = vmatpush1.msra.mxu0 0.0
      %2755 = vmatprep.subr.mxu0 0.0
      %2756 = vmatpush1.msra.mxu0 0.0
      %2757 = vmatprep.subr.mxu0 0.0
      %2758 = vmatpush1.msra.mxu0 0.0
      %2759 = vmatprep.subr.mxu0 0.0
      %2760 = vmatpush1.msra.mxu0 %v2506
      %2761 = vmatprep.subr.mxu0 0.0
      %2762 = vmatpush2.msra.mxu0 0.0
      %2763 = vmatprep.subr.mxu0 0.0
      %2764 = vmatpush2.msra.mxu0 0.0
      %2765 = vmatprep.subr.mxu0 0.0
      %2766 = vmatpush2.msra.mxu0 0.0
      %2767 = vmatprep.subr.mxu0 0.0
      %2768 = vmatpush2.msra.mxu0 0.0
      %2769 = vmatprep.subr.mxu0 0.0
      %2770 = vmatpush2.msra.mxu0 0.0
      %2771 = vmatprep.subr.mxu0 0.0
      %2772 = vmatpush2.msra.mxu0 0.0
      %2773 = vmatprep.subr.mxu0 0.0
      %2774 = vmatpush2.msra.mxu0 0.0
      %2775 = vmatprep.subr.mxu0 0.0
      %2776 = vmatpush2.msra.mxu0 0.0
      %2777 = vmatprep.subr.mxu0 0.0
      %2778 = vmatpush2.msra.mxu0 0.0
      %2779 = vmatprep.subr.mxu0 0.0
      %2780 = vmatpush2.msra.mxu0 0.0
      %2781 = vmatprep.subr.mxu0 0.0
      %2782 = vmatpush2.msra.mxu0 0.0
      %2783 = vmatprep.subr.mxu0 0.0
      %2784 = vmatpush2.msra.mxu0 0.0
      %2785 = vmatprep.subr.mxu0 0.0
      %2786 = vmatpush2.msra.mxu0 0.0
      %2787 = vmatprep.subr.mxu0 0.0
      %2788 = vmatpush2.msra.mxu0 0.0
      %2789 = vmatprep.subr.mxu0 0.0
      %2790 = vmatpush2.msra.mxu0 0.0
      %2791 = vmatprep.subr.mxu0 0.0
      %2792 = vmatpush2.msra.mxu0 0.0
      %2793 = vmatprep.mubr.f32.mxu0 0.0
      %2794 = vmatmul.mubr.f32.gmra.mxu0 %v2727
      %v2795 = vpop.f32.mrf.mxu0
      %v2796 = vadd.f32 0.0, %v2795
      %v2797 = vpop.f32.mrf.mxu0
      %2798 = vdwg.mxu0
      %vm2799 = vcmask 257024
      %v2800 = vsel %vm2799, %v2577, 0.0
      %v2801 = vsel %vm2799, %v2650, 0.0
      %v2802 = vadd.f32 %v2800, %v2801
      %v2803 = vsel %vm2799, %v2723, 0.0
      %v2804 = vadd.f32 %v2802, %v2803
      %v2805 = vsel %vm2799, %v2796, 0.0
      %v2806 = vadd.f32 %v2804, %v2805
      %v2807 = vadd.f32 %v2806, %v950
      %v2808 = vld [vmem:[%s913] sm:$0x1]
      %v2809 = vld [vmem:[%s916] sm:$0x1]
      %v2810 = vsel %vm2799, %v2807, 0.0
      %2811 = vadd.xlane.f32.xlu0 %v2810
      %v2812 = vpop.xlane.xlu0 %2811
      %v2813 = vrcp.pop 32.0
      %v2814 = vmul.f32 %v2812, %v2813
      %v2815 = vsub.f32 %v2807, %v2814
      %v2816 = vmul.f32 %v2815, %v2815
      %v2817 = vsel %vm2799, %v2816, 0.0
      %2818 = vadd.xlane.f32.xlu0 %v2817
      %v2819 = vpop.xlane.xlu0 %2818
      %v2820 = vmul.f32 %v2819, %v2813
      %v2821 = vadd.f32 %v2820, 1e-06
      %v2822 = vrsqrt.pop %v2821
      %v2823 = vmul.f32 %v2815, %v2822
      %v2825 = vlaneseq
      %v2826 = vshrl.u32 %v2825, 7
      %v2827 = vsub.s32 0, %v2826
      %v2828 = vrot.slane %v2808, %v2827
      %v2830 = vmul.f32 %v2823, %v2828
      %v2832 = vlaneseq
      %v2833 = vshrl.u32 %v2832, 7
      %v2834 = vsub.s32 0, %v2833
      %v2835 = vrot.slane %v2809, %v2834
      %v2837 = vadd.f32 %v2830, %v2835
      %v2838 = vld [vmem:[%s921] sm:$0xff]
      %v2839 = vld [vmem:[%s921 + $0x8] sm:$0xff]
      %v2840 = vld [vmem:[%s921 + $0x10] sm:$0xff]
      %v2841 = vld [vmem:[%s921 + $0x18] sm:$0xff]
      %v2842 = vld [vmem:[%s924] sm:$0x1]
      %v2844 = vlaneseq
      %v2845 = vshrl.u32 %v2844, 7
      %v2846 = vsub.s32 0, %v2845
      %v2847 = vrot.slane %v2842, %v2846
      %v2850 = vsel %vm967, %v2837, 0
      %2852 = vmatprep.subr.mxu0 0.0
      %2853 = vmatpush1.msra.mxu0 0.0
      %2854 = vmatprep.subr.mxu0 0.0
      %2855 = vmatpush1.msra.mxu0 0.0
      %2856 = vmatprep.subr.mxu0 0.0
      %2857 = vmatpush1.msra.mxu0 0.0
      %2858 = vmatprep.subr.mxu0 0.0
      %2859 = vmatpush1.msra.mxu0 0.0
      %2860 = vmatprep.subr.mxu0 0.0
      %2861 = vmatpush1.msra.mxu0 0.0
      %2862 = vmatprep.subr.mxu0 0.0
      %2863 = vmatpush1.msra.mxu0 0.0
      %2864 = vmatprep.subr.mxu0 0.0
      %2865 = vmatpush1.msra.mxu0 0.0
      %2866 = vmatprep.subr.mxu0 0.0
      %2867 = vmatpush1.msra.mxu0 0.0
      %2868 = vmatprep.subr.mxu0 0.0
      %2869 = vmatpush1.msra.mxu0 0.0
      %2870 = vmatprep.subr.mxu0 0.0
      %2871 = vmatpush1.msra.mxu0 0.0
      %2872 = vmatprep.subr.mxu0 0.0
      %2873 = vmatpush1.msra.mxu0 0.0
      %2874 = vmatprep.subr.mxu0 0.0
      %2875 = vmatpush1.msra.mxu0 0.0
      %2876 = vmatprep.subr.mxu0 0.0
      %2877 = vmatpush1.msra.mxu0 %v2841
      %2878 = vmatprep.subr.mxu0 0.0
      %2879 = vmatpush1.msra.mxu0 %v2840
      %2880 = vmatprep.subr.mxu0 0.0
      %2881 = vmatpush1.msra.mxu0 %v2839
      %2882 = vmatprep.subr.mxu0 0.0
      %2883 = vmatpush1.msra.mxu0 %v2838
      %2884 = vmatprep.subr.mxu0 0.0
      %2885 = vmatpush2.msra.mxu0 0.0
      %2886 = vmatprep.subr.mxu0 0.0
      %2887 = vmatpush2.msra.mxu0 0.0
      %2888 = vmatprep.subr.mxu0 0.0
      %2889 = vmatpush2.msra.mxu0 0.0
      %2890 = vmatprep.subr.mxu0 0.0
      %2891 = vmatpush2.msra.mxu0 0.0
      %2892 = vmatprep.subr.mxu0 0.0
      %2893 = vmatpush2.msra.mxu0 0.0
      %2894 = vmatprep.subr.mxu0 0.0
      %2895 = vmatpush2.msra.mxu0 0.0
      %2896 = vmatprep.subr.mxu0 0.0
      %2897 = vmatpush2.msra.mxu0 0.0
      %2898 = vmatprep.subr.mxu0 0.0
      %2899 = vmatpush2.msra.mxu0 0.0
      %2900 = vmatprep.subr.mxu0 0.0
      %2901 = vmatpush2.msra.mxu0 0.0
      %2902 = vmatprep.subr.mxu0 0.0
      %2903 = vmatpush2.msra.mxu0 0.0
      %2904 = vmatprep.subr.mxu0 0.0
      %2905 = vmatpush2.msra.mxu0 0.0
      %2906 = vmatprep.subr.mxu0 0.0
      %2907 = vmatpush2.msra.mxu0 0.0
      %2908 = vmatprep.subr.mxu0 0.0
      %2909 = vmatpush2.msra.mxu0 0.0
      %2910 = vmatprep.subr.mxu0 0.0
      %2911 = vmatpush2.msra.mxu0 0.0
      %2912 = vmatprep.subr.mxu0 0.0
      %2913 = vmatpush2.msra.mxu0 0.0
      %2914 = vmatprep.subr.mxu0 0.0
      %2915 = vmatpush2.msra.mxu0 0.0
      %2916 = vmatprep.mubr.f32.mxu0 0.0
      %2917 = vmatmul.mubr.f32.gmra.mxu0 %v2850
      %v2918 = vpop.f32.mrf.mxu0
      %v2919 = vadd.f32 %v2847, %v2918
      %v2920 = vpop.f32.mrf.mxu0
      %2921 = vdwg.mxu0
      %v2922 = vmax.f32 %v2919, 0.0
      %v2923 = vld [vmem:[%s929] sm:$0xff]
      %v2924 = vld [vmem:[%s929 + $0x8] sm:$0xff]
      %v2925 = vld [vmem:[%s929 + $0x10] sm:$0xff]
      %v2926 = vld [vmem:[%s929 + $0x18] sm:$0xff]
      %v2927 = vld [vmem:[%s929 + $0x20] sm:$0xff]
      %v2928 = vld [vmem:[%s929 + $0x28] sm:$0xff]
      %v2929 = vld [vmem:[%s929 + $0x30] sm:$0xff]
      %v2930 = vld [vmem:[%s929 + $0x38] sm:$0xff]
      %v2931 = vld [vmem:[%s932] sm:$0x1]
      %v2933 = vlaneseq
      %v2934 = vshrl.u32 %v2933, 7
      %v2935 = vsub.s32 0, %v2934
      %v2936 = vrot.slane %v2931, %v2935
      %vm2938 = vcmask 523264
      %v2940 = vsel %vm2938, %v2922, 0
      %2942 = vmatprep.subr.mxu0 0.0
      %2943 = vmatpush1.msra.mxu0 0.0
      %2944 = vmatprep.subr.mxu0 0.0
      %2945 = vmatpush1.msra.mxu0 0.0
      %2946 = vmatprep.subr.mxu0 0.0
      %2947 = vmatpush1.msra.mxu0 0.0
      %2948 = vmatprep.subr.mxu0 0.0
      %2949 = vmatpush1.msra.mxu0 0.0
      %2950 = vmatprep.subr.mxu0 0.0
      %2951 = vmatpush1.msra.mxu0 0.0
      %2952 = vmatprep.subr.mxu0 0.0
      %2953 = vmatpush1.msra.mxu0 0.0
      %2954 = vmatprep.subr.mxu0 0.0
      %2955 = vmatpush1.msra.mxu0 0.0
      %2956 = vmatprep.subr.mxu0 0.0
      %2957 = vmatpush1.msra.mxu0 0.0
      %2958 = vmatprep.subr.mxu0 0.0
      %2959 = vmatpush1.msra.mxu0 %v2930
      %2960 = vmatprep.subr.mxu0 0.0
      %2961 = vmatpush1.msra.mxu0 %v2929
      %2962 = vmatprep.subr.mxu0 0.0
      %2963 = vmatpush1.msra.mxu0 %v2928
      %2964 = vmatprep.subr.mxu0 0.0
      %2965 = vmatpush1.msra.mxu0 %v2927
      %2966 = vmatprep.subr.mxu0 0.0
      %2967 = vmatpush1.msra.mxu0 %v2926
      %2968 = vmatprep.subr.mxu0 0.0
      %2969 = vmatpush1.msra.mxu0 %v2925
      %2970 = vmatprep.subr.mxu0 0.0
      %2971 = vmatpush1.msra.mxu0 %v2924
      %2972 = vmatprep.subr.mxu0 0.0
      %2973 = vmatpush1.msra.mxu0 %v2923
      %2974 = vmatprep.subr.mxu0 0.0
      %2975 = vmatpush2.msra.mxu0 0.0
      %2976 = vmatprep.subr.mxu0 0.0
      %2977 = vmatpush2.msra.mxu0 0.0
      %2978 = vmatprep.subr.mxu0 0.0
      %2979 = vmatpush2.msra.mxu0 0.0
      %2980 = vmatprep.subr.mxu0 0.0
      %2981 = vmatpush2.msra.mxu0 0.0
      %2982 = vmatprep.subr.mxu0 0.0
      %2983 = vmatpush2.msra.mxu0 0.0
      %2984 = vmatprep.subr.mxu0 0.0
      %2985 = vmatpush2.msra.mxu0 0.0
      %2986 = vmatprep.subr.mxu0 0.0
      %2987 = vmatpush2.msra.mxu0 0.0
      %2988 = vmatprep.subr.mxu0 0.0
      %2989 = vmatpush2.msra.mxu0 0.0
      %2990 = vmatprep.subr.mxu0 0.0
      %2991 = vmatpush2.msra.mxu0 0.0
      %2992 = vmatprep.subr.mxu0 0.0
      %2993 = vmatpush2.msra.mxu0 0.0
      %2994 = vmatprep.subr.mxu0 0.0
      %2995 = vmatpush2.msra.mxu0 0.0
      %2996 = vmatprep.subr.mxu0 0.0
      %2997 = vmatpush2.msra.mxu0 0.0
      %2998 = vmatprep.subr.mxu0 0.0
      %2999 = vmatpush2.msra.mxu0 0.0
      %3000 = vmatprep.subr.mxu0 0.0
      %3001 = vmatpush2.msra.mxu0 0.0
      %3002 = vmatprep.subr.mxu0 0.0
      %3003 = vmatpush2.msra.mxu0 0.0
      %3004 = vmatprep.subr.mxu0 0.0
      %3005 = vmatpush2.msra.mxu0 0.0
      %3006 = vmatprep.mubr.f32.mxu0 0.0
      %3007 = vmatmul.mubr.f32.gmra.mxu0 %v2940
      %v3008 = vpop.f32.mrf.mxu0
      %v3009 = vadd.f32 %v2936, %v3008
      %v3010 = vpop.f32.mrf.mxu0
      %3011 = vdwg.mxu0
      %v3012 = vadd.f32 %v3009, %v2837
      %v3013 = vld [vmem:[%s935] sm:$0x1]
      %v3014 = vld [vmem:[%s938] sm:$0x1]
      %v3015 = vsel %vm2799, %v3012, 0.0
      %3016 = vadd.xlane.f32.xlu0 %v3015
      %v3017 = vpop.xlane.xlu0 %3016
      %v3018 = vmul.f32 %v3017, %v2813
      %v3019 = vsub.f32 %v3012, %v3018
      %v3020 = vmul.f32 %v3019, %v3019
      %v3021 = vsel %vm2799, %v3020, 0.0
      %3022 = vadd.xlane.f32.xlu0 %v3021
      %v3023 = vpop.xlane.xlu0 %3022
      %v3024 = vmul.f32 %v3023, %v2813
      %v3025 = vadd.f32 %v3024, 1e-06
      %v3026 = vrsqrt.pop %v3025
      %v3027 = vmul.f32 %v3019, %v3026
      %v3029 = vlaneseq
      %v3030 = vshrl.u32 %v3029, 7
      %v3031 = vsub.s32 0, %v3030
      %v3032 = vrot.slane %v3013, %v3031
      %v3034 = vmul.f32 %v3027, %v3032
      %v3036 = vlaneseq
      %v3037 = vshrl.u32 %v3036, 7
      %v3038 = vsub.s32 0, %v3037
      %v3039 = vrot.slane %v3014, %v3038
      %v3041 = vadd.f32 %v3034, %v3039
      %3042 = vst.msk [vmem:[#allocation2] sm:$0xf] %vm2799, %v3041
      %p3043 = scmp.eq.s32.totalorder %s36, 1
      // Predicated region
      $region105: #{_lambda_.6} parent=99 // pred_check
        %p3044 = pneg %p3043
      $region106: #{_lambda_.6} parent=99 // pred_check_branch
        %3046 = sbr.rel (%p3044) target = $region108
      $region107: #{_lambda_.6} parent=99 // pred_region
        %3047 = vst.msk [vmem:[%s942] sm:$0xf] %vm2799, %v3041
      $region108: #{_lambda_.6} parent=99 // pred_fallthru
        _
      %p3048 = scmp.lt.s32.totalorder %s35, 1
      %s3049 = scalar_select %p3048, %s35, 1
      %s3050 = smul.addr %s3049, 4
      %s3051 = scalar_lea.vmem %s20, %s3050
      // Predicated region
      $region109: #{_lambda_.6} parent=99 // pred_check
        %p3052 = pneg %p571
      $region110: #{_lambda_.6} parent=99 // pred_check_branch
        %3054 = sbr.rel (%p3052) target = $region112
      $region111: #{_lambda_.6} parent=99 // pred_region
        _
      $region112: #{_lambda_.6} parent=99 // pred_fallthru
        _
    $region100: #{_lambda_.6} parent=5 // pred_fallthru
      _
    %p3055 = scmp.le.s32.totalorder 2, %s26
    // Predicated region
    $region113: #{_lambda_.6} parent=5 // pred_check
      %p3056 = pneg %p3055
    $region114: #{_lambda_.6} parent=5 // pred_check_branch
      %3058 = sbr.rel (%p3056) target = $region116
    $region115: #{_lambda_.6} parent=5 // pred_region
      %s3059 = ssub.s32 %s26, 2
      // Predicated region
      $region117: #{_lambda_.6} parent=115 // pred_check
        %p3060 = pneg %p577
      $region118: #{_lambda_.6} parent=115 // pred_check_branch
        %3062 = sbr.rel (%p3060) target = $region120
      $region119: #{_lambda_.6} parent=115 // pred_region
        %p3063 = scmp.lt.s32.totalorder %s37, 1
        %s3064 = scalar_select %p3063, %s37, 1
        %s3065 = smul.addr %s3064, 4
        %s3066 = scalar_lea.vmem %s20, %s3065
      $region120: #{_lambda_.6} parent=115 // pred_fallthru
        _
    $region116: #{_lambda_.6} parent=5 // pred_fallthru
      _
  $region6: #{_lambda_.6} parent=0 // loop_footer
    %s30 = sadd.s32 1, %s26
  $region7: #{_lambda_.6} parent=0 // loop_footer_branch
    %25 = sbr.rel target = $region3
  $region8: #{_lambda_.6} parent=0 // loop_exit
    _

</llo_original>
